<compile_context>
chip_gen: v5e
topology: v5e:2x2
jax: 0.10.0
libtpu: 0.0.40
codegen_flags: <defaults>
</compile_context>

<pallas_src>
import jax
import jax.numpy as jnp
from jax import lax
from jax.experimental import pallas as pl
from jax.experimental.pallas import tpu as pltpu


def mlp_kernel(x_ref, w1_ref, b1_ref, w2_ref, b2_ref, w3_ref, b3_ref, o_ref):
    """Forward pass for one batch tile, batch on the lane axis.

    x_ref : [Bt, D]   (native row-major layout)
    w1_ref: [16, D]   b1_ref: [16, 1]
    w2_ref: [8, 16]   b2_ref: [8, 1]
    w3_ref: [1, 8]    b3_ref: [1, 1]
    o_ref : [1, Bt]   (lane-dense output slab)
    """
    x = x_ref[...]                                            # [Bt, D]

    # fc1 + ReLU: contract D of W with D of x -> [16, Bt] (f32 accumulate).
    h1 = lax.dot_general(
        w1_ref[...], x,
        dimension_numbers=(((1,), (1,)), ((), ())),
        preferred_element_type=jnp.float32) + b1_ref[...]
    h1 = jnp.maximum(h1, 0.0)

    # fc2 + ReLU: [8, 16] @ [16, Bt] -> [8, Bt]
    h2 = jnp.dot(w2_ref[...], h1,
                 preferred_element_type=jnp.float32) + b2_ref[...]
    h2 = jnp.maximum(h2, 0.0)

    # fc3 + Sigmoid: [1, 8] @ [8, Bt] -> [1, Bt]  (sigmoid's exp/recip land on
    # the EUP slot -> free in this mem-bound regime).
    z = jnp.dot(w3_ref[...], h2,
                preferred_element_type=jnp.float32) + b3_ref[...]
    o_ref[...] = jax.nn.sigmoid(z).astype(o_ref.dtype)


def neural_network_forward(x, params, *, batch_tile=8192):
    """x: [B, input_size] float32 -> [B, 1] float32.

    params are in the native PyTorch nn.Linear layout: w [out, in], b [out].
    """
    w1, b1, w2, b2, w3, b3 = params
    B, D = x.shape

    # If the whole batch fits in one tile, use a full-array block (any B is
    # legal when block dims equal array dims); otherwise keep batch_tile a
    # multiple of 128 so the lane-dense output block is unmasked.
    bt = B if B <= batch_tile else batch_tile
    n_tiles = pl.cdiv(B, bt)

    b1c = b1.reshape(-1, 1).astype(jnp.float32)          # [16, 1]
    b2c = b2.reshape(-1, 1).astype(jnp.float32)          # [8, 1]
    b3c = b3.reshape(-1, 1).astype(jnp.float32)          # [1, 1]

    # Weights/biases: same block every grid step -> stay VMEM-resident.
    full = lambda shape: pl.BlockSpec(shape, lambda i: (0, 0))

    out_t = pl.pallas_call(
        mlp_kernel,
        out_shape=jax.ShapeDtypeStruct((1, B), jnp.float32),
        grid=(n_tiles,),
        in_specs=[
            pl.BlockSpec((bt, D), lambda i: (i, 0)),     # x: native-layout tile
            full(w1.shape), full(b1c.shape),             # fc1
            full(w2.shape), full(b2c.shape),             # fc2
            full(w3.shape), full(b3c.shape),             # fc3
        ],
        out_specs=pl.BlockSpec((1, bt), lambda i: (0, i)),
        compiler_params=pltpu.CompilerParams(
            dimension_semantics=("parallel",)),          # batch axis shardable
    )(x, w1, b1c, w2, b2c, w3, b3c)

    return out_t.T                                       # [B, 1]


def init_params(key, input_size):
    """Deterministic init matching nn.Linear's layout: w [out, in], b [out]."""
    k1, k2, k3, k4, k5, k6 = jax.random.split(key, 6)

    def lin(kw, kb, fan_in, fan_out):
        bound = 1.0 / jnp.sqrt(fan_in)
        w = jax.random.uniform(kw, (fan_out, fan_in), jnp.float32, -bound, bound)
        b = jax.random.uniform(kb, (fan_out,), jnp.float32, -bound, bound)
        return w, b

    w1, b1 = lin(k1, k2, input_size, 16)
    w2, b2 = lin(k3, k4, 16, 8)
    w3, b3 = lin(k5, k6, 8, 1)
    return (w1, b1, w2, b2, w3, b3)


if __name__ == "__main__":
    input_size = 32
    batch = 16384          # 2 grid steps at batch_tile=8192 -> even step count
    batch_tile = 8192      # keeps both v7x TensorCores busy

    key = jax.random.PRNGKey(0)
    kx, kp = jax.random.split(key)

    x = jax.random.normal(kx, (batch, input_size), dtype=jnp.float32)
    params = init_params(kp, input_size)

    out = neural_network_forward(x, params, batch_tile=batch_tile)
    out = jax.block_until_ready(out)

    # Plain-JAX reference of the same forward pass (PyTorch layout: y = x W^T + b).
    w1, b1, w2, b2, w3, b3 = params
    ref = jnp.maximum(x @ w1.T + b1, 0.0)
    ref = jnp.maximum(ref @ w2.T + b2, 0.0)
    ref = jax.nn.sigmoid(ref @ w3.T + b3)

    assert out.shape == (batch, 1)
    assert jnp.allclose(out, ref, atol=1e-5, rtol=1e-5)

    print("KERNEL_OK")
</pallas_src>

<mosaic_0001>
module attributes {stable_mosaic.version = 11 : i64} {
  func.func @mlp_kernel(%arg0: i32, %arg1: memref<8192x32xf32, #tpu.memory_space<vmem>>, %arg2: memref<16x32xf32, #tpu.memory_space<vmem>>, %arg3: memref<16x1xf32, #tpu.memory_space<vmem>>, %arg4: memref<8x16xf32, #tpu.memory_space<vmem>>, %arg5: memref<8x1xf32, #tpu.memory_space<vmem>>, %arg6: memref<1x8xf32, #tpu.memory_space<vmem>>, %arg7: memref<1x1xf32, #tpu.memory_space<vmem>>, %arg8: memref<1x8192xf32, #tpu.memory_space<vmem>>) attributes {dimension_semantics = [#tpu.dimension_semantics<parallel>], iteration_bounds = array<i64: 2>, scalar_prefetch = 0 : i64, scratch_operands = 0 : i64, tpu.core_type = #tpu.core_type<tc>, window_params = [{transform_indices = @transform_0, window_bounds = array<i64: 8192, 32>}, {pipeline_mode = #tpu.pipeline_mode<synchronous>, transform_indices = @transform_1, window_bounds = array<i64: 16, 32>}, {pipeline_mode = #tpu.pipeline_mode<synchronous>, transform_indices = @transform_2, window_bounds = array<i64: 16, 1>}, {pipeline_mode = #tpu.pipeline_mode<synchronous>, transform_indices = @transform_3, window_bounds = array<i64: 8, 16>}, {pipeline_mode = #tpu.pipeline_mode<synchronous>, transform_indices = @transform_4, window_bounds = array<i64: 8, 1>}, {pipeline_mode = #tpu.pipeline_mode<synchronous>, transform_indices = @transform_5, window_bounds = array<i64: 1, 8>}, {pipeline_mode = #tpu.pipeline_mode<synchronous>, transform_indices = @transform_6, window_bounds = array<i64: 1, 1>}, {transform_indices = @transform_7, window_bounds = array<i64: 1, 8192>}]} {
    %c0 = arith.constant 0 : index
    %c0_0 = arith.constant 0 : index
    %0 = vector.load %arg1[%c0, %c0_0] : memref<8192x32xf32, #tpu.memory_space<vmem>>, vector<8192x32xf32>
    %c0_1 = arith.constant 0 : index
    %c0_2 = arith.constant 0 : index
    %1 = vector.load %arg2[%c0_1, %c0_2] : memref<16x32xf32, #tpu.memory_space<vmem>>, vector<16x32xf32>
    %cst = arith.constant dense<0.000000e+00> : vector<16x8192xf32>
    %2 = tpu.matmul %1, %0, %cst {dimension_numbers = #tpu.dot_dimension_numbers<[1], [1], [0], [0], [0, 0, 1, 0], [], []>} : vector<16x32xf32>, vector<8192x32xf32>, vector<16x8192xf32> -> vector<16x8192xf32>
    %c0_3 = arith.constant 0 : index
    %c0_4 = arith.constant 0 : index
    %3 = vector.load %arg3[%c0_3, %c0_4] : memref<16x1xf32, #tpu.memory_space<vmem>>, vector<16x1xf32>
    %4 = vector.broadcast %3 : vector<16x1xf32> to vector<16x8192xf32>
    %5 = arith.addf %2, %4 : vector<16x8192xf32>
    %cst_5 = arith.constant 0.000000e+00 : f32
    %6 = vector.broadcast %cst_5 : f32 to vector<16x8192xf32>
    %7 = arith.maximumf %5, %6 : vector<16x8192xf32>
    %c0_6 = arith.constant 0 : index
    %c0_7 = arith.constant 0 : index
    %8 = vector.load %arg4[%c0_6, %c0_7] : memref<8x16xf32, #tpu.memory_space<vmem>>, vector<8x16xf32>
    %cst_8 = arith.constant dense<0.000000e+00> : vector<8x8192xf32>
    %9 = tpu.matmul %8, %7, %cst_8 {dimension_numbers = #tpu.dot_dimension_numbers<[1], [0], [0], [1], [0, 0, 1, 1], [], []>} : vector<8x16xf32>, vector<16x8192xf32>, vector<8x8192xf32> -> vector<8x8192xf32>
    %c0_9 = arith.constant 0 : index
    %c0_10 = arith.constant 0 : index
    %10 = vector.load %arg5[%c0_9, %c0_10] : memref<8x1xf32, #tpu.memory_space<vmem>>, vector<8x1xf32>
    %11 = vector.broadcast %10 : vector<8x1xf32> to vector<8x8192xf32>
    %12 = arith.addf %9, %11 : vector<8x8192xf32>
    %cst_11 = arith.constant 0.000000e+00 : f32
    %13 = vector.broadcast %cst_11 : f32 to vector<8x8192xf32>
    %14 = arith.maximumf %12, %13 : vector<8x8192xf32>
    %c0_12 = arith.constant 0 : index
    %c0_13 = arith.constant 0 : index
    %15 = vector.load %arg6[%c0_12, %c0_13] : memref<1x8xf32, #tpu.memory_space<vmem>>, vector<1x8xf32>
    %cst_14 = arith.constant dense<0.000000e+00> : vector<1x8192xf32>
    %16 = tpu.matmul %15, %14, %cst_14 {dimension_numbers = #tpu.dot_dimension_numbers<[1], [0], [0], [1], [0, 0, 1, 1], [], []>} : vector<1x8xf32>, vector<8x8192xf32>, vector<1x8192xf32> -> vector<1x8192xf32>
    %c0_15 = arith.constant 0 : index
    %c0_16 = arith.constant 0 : index
    %17 = vector.load %arg7[%c0_15, %c0_16] : memref<1x1xf32, #tpu.memory_space<vmem>>, vector<1x1xf32>
    %18 = vector.broadcast %17 : vector<1x1xf32> to vector<1x8192xf32>
    %19 = arith.addf %16, %18 : vector<1x8192xf32>
    %20 = arith.negf %19 : vector<1x8192xf32>
    %21 = math.exp %20 : vector<1x8192xf32>
    %cst_17 = arith.constant 1.000000e+00 : f32
    %22 = vector.broadcast %cst_17 : f32 to vector<1x8192xf32>
    %23 = arith.addf %22, %21 : vector<1x8192xf32>
    %24 = arith.divf %22, %23 : vector<1x8192xf32>
    %c0_18 = arith.constant 0 : index
    %c0_19 = arith.constant 0 : index
    %25 = vector.load %arg8[%c0_18, %c0_19] : memref<1x8192xf32, #tpu.memory_space<vmem>>, vector<1x8192xf32>
    tpu.vector_store %arg8[%c0_18, %c0_19], %24 {strides = array<i32>} : memref<1x8192xf32, #tpu.memory_space<vmem>>, vector<1x8192xf32>,
    return
  }
  func.func @transform_0(%arg0: i32) -> (i32, i32) {
    %c0_i32 = arith.constant 0 : i32
    %c0_i32_0 = arith.constant 0 : i32
    return %arg0, %c0_i32 : i32, i32
  }
  func.func @transform_1(%arg0: i32) -> (i32, i32) {
    %c0_i32 = arith.constant 0 : i32
    %c0_i32_0 = arith.constant 0 : i32
    %c0_i32_1 = arith.constant 0 : i32
    return %c0_i32, %c0_i32_0 : i32, i32
  }
  func.func @transform_2(%arg0: i32) -> (i32, i32) {
    %c0_i32 = arith.constant 0 : i32
    %c0_i32_0 = arith.constant 0 : i32
    %c0_i32_1 = arith.constant 0 : i32
    return %c0_i32, %c0_i32_0 : i32, i32
  }
  func.func @transform_3(%arg0: i32) -> (i32, i32) {
    %c0_i32 = arith.constant 0 : i32
    %c0_i32_0 = arith.constant 0 : i32
    %c0_i32_1 = arith.constant 0 : i32
    return %c0_i32, %c0_i32_0 : i32, i32
  }
  func.func @transform_4(%arg0: i32) -> (i32, i32) {
    %c0_i32 = arith.constant 0 : i32
    %c0_i32_0 = arith.constant 0 : i32
    %c0_i32_1 = arith.constant 0 : i32
    return %c0_i32, %c0_i32_0 : i32, i32
  }
  func.func @transform_5(%arg0: i32) -> (i32, i32) {
    %c0_i32 = arith.constant 0 : i32
    %c0_i32_0 = arith.constant 0 : i32
    %c0_i32_1 = arith.constant 0 : i32
    return %c0_i32, %c0_i32_0 : i32, i32
  }
  func.func @transform_6(%arg0: i32) -> (i32, i32) {
    %c0_i32 = arith.constant 0 : i32
    %c0_i32_0 = arith.constant 0 : i32
    %c0_i32_1 = arith.constant 0 : i32
    return %c0_i32, %c0_i32_0 : i32, i32
  }
  func.func @transform_7(%arg0: i32) -> (i32, i32) {
    %c0_i32 = arith.constant 0 : i32
    %c0_i32_0 = arith.constant 0 : i32
    return %c0_i32, %arg0 : i32, i32
  }
}

</mosaic_0001>

<llo_original>
// kernel: tpu_custom_call.1
$region0: #{tpu_custom_call.1}
  #allocation0 [shape = 'u32[]', space=smem, size = 0x4, offset = 0x4, fixed_abs, tag = 'smem constant byte address 0x4 - core index']
  #allocation1 [shape = 'u32[72,128]{1,0:T(1,128)}', space=vmem, size = 0x9000, scoped, tag = 'internal scratch']
  #allocation2 [shape = 'f32[1,1]{1,0:T(1,128)S(1)}', space=vmem, size = 0x200, scoped, tag = 'scoped memory for tpu_custom_call.1']
  %s0 = inlined_call_operand.vmem [shape: f32[16384,32], index: 0, kind: input, shape index: {}]
  %s1 = inlined_call_operand.vmem [shape: f32[16,32], index: 1, kind: input, shape index: {}]
  %s2 = inlined_call_operand.vmem [shape: f32[16,1], index: 2, kind: input, shape index: {}]
  %s3 = inlined_call_operand.vmem [shape: f32[8,16], index: 3, kind: input, shape index: {}]
  %s4 = inlined_call_operand.vmem [shape: f32[8,1], index: 4, kind: input, shape index: {}]
  %s5 = inlined_call_operand.vmem [shape: f32[1,8], index: 5, kind: input, shape index: {}]
  %s6 = inlined_call_operand.<no memory space> [shape: f32[1,1], index: 6, kind: input, shape index: {}]
  %s7 = inlined_call_operand.hbm [shape: f32[1,16384], index: 7, kind: output, shape index: {}]
  %s8 = sld [smem:[#allocation0]]
  $region61: #{tpu_custom_call.1} parent=0
    _
  %s10 = ssub.s32 1, %s8
  %s11 = scalar_select 0, %s10, %s8
  %v12 = vstv %s6
  %13 = vst [vmem:[#allocation2] sm:$0x1] %v12
  $region1: #{tpu_custom_call.1} parent=0
    #allocation3 [shape = 'u8[65536]{0}', space=vmem, size = 0x10000, scoped, tag = 'output window, operand 0']
    #allocation4 [shape = 's32[2]{0}', space=sflag, size = 0x8, scoped, tag = 'scoped memory for tpu_custom_call.1']
    %14 = vsyncpa [#allocation4], 0
    %s15 = scalar_lea.sflag [#allocation4], 1
    %16 = vsyncpa %s15, 0
    loop: start=0, step=1, limit=4
    $region2: #{tpu_custom_call.1} parent=1 // loop_pre_header
      _
    $region3: #{tpu_custom_call.1} parent=1 // loop_header
      %s18 = sphi 0, %s22
      %p19 = scmp.ge.s32.totalorder %s18, 4
      %s28 = sphi 0, %s30
      %s31 = sphi 0, %s28
      %s32 = sphi 0, %s31
      %s48 = sphi 0, %s32
      %s52 = sphi 0, %s52
      %s54 = sphi 0, %s52
      %s55 = sphi 0, %s54
      %s69 = sphi 0, %s55
      %s73 = sphi 0, %s73
      %s75 = sphi 0, %s73
      %s76 = sphi 0, %s75
      %s90 = sphi 0, %s76
      %s94 = sphi 0, %s94
      %s96 = sphi 0, %s94
      %s97 = sphi 0, %s96
      %s111 = sphi 0, %s97
      %s115 = sphi 0, %s115
      %s117 = sphi 0, %s115
      %s118 = sphi 0, %s117
      %s132 = sphi 0, %s118
      %s136 = sphi 0, %s136
      %s138 = sphi 0, %s136
      %s139 = sphi 0, %s138
      %s153 = sphi 0, %s139
      %s157 = sphi 0, %s157
      %s159 = sphi 0, %s157
      %s160 = sphi 0, %s159
      %s174 = sphi 0, %s160
      %s180 = sphi 0, %s182
      %s183 = sphi 0, %s180
      %s184 = sphi 0, %s183
      %s200 = sphi 0, %s184
    $region4: #{tpu_custom_call.1} parent=1 // loop_header_branch
      %21 = sbr.rel (%p19) target = $region8
    $region5: #{tpu_custom_call.1} parent=1 // loop_body
      %s23 = ssub.s32 %s18, 1
      %s24 = ssub.s32 %s18, 2
      %s25 = sadd.s32 %s18, 1
      %s26 = ssub.s32 %s18, %s25
      %p27 = scmp.eq.s32.totalorder %s26, 0
      %s29 = sadd.s32 %s28, 1
      %s30 = scalar_select %p27, %s28, %s29
      %p33 = pneg %p27
      %p34 = scmp.eq.s32.totalorder %s18, 1
      %p35 = por %p33, %p34
      %p36 = scmp.ne.s32.totalorder %s28, %s31
      %p37 = scmp.eq.s32.totalorder %s18, 0
      %p38 = por %p36, %p37
      %p39 = scmp.ne.s32.totalorder %s28, %s31
      %p40 = scmp.eq.s32.totalorder %s23, 1
      %p41 = por %p39, %p40
      %p42 = scmp.ne.s32.totalorder %s31, %s32
      %p43 = scmp.eq.s32.totalorder %s23, 0
      %p44 = por %p42, %p43
      %p45 = scmp.ne.s32.totalorder %s31, %s32
      %p46 = scmp.eq.s32.totalorder %s24, 1
      %p47 = por %p45, %p46
      %p49 = scmp.ne.s32.totalorder %s32, %s48
      %p50 = scmp.eq.s32.totalorder %s24, 0
      %p51 = por %p49, %p50
      %s53 = sadd.s32 %s52, 1
      %p56 = scmp.eq.s32.totalorder %s18, 1
      %p57 = scmp.ne.s32.totalorder %s52, %s54
      %p58 = scmp.eq.s32.totalorder %s18, 0
      %p59 = por %p57, %p58
      %p60 = scmp.ne.s32.totalorder %s52, %s54
      %p61 = scmp.eq.s32.totalorder %s23, 1
      %p62 = por %p60, %p61
      %p63 = scmp.ne.s32.totalorder %s54, %s55
      %p64 = scmp.eq.s32.totalorder %s23, 0
      %p65 = por %p63, %p64
      %p66 = scmp.ne.s32.totalorder %s54, %s55
      %p67 = scmp.eq.s32.totalorder %s24, 1
      %p68 = por %p66, %p67
      %p70 = scmp.ne.s32.totalorder %s55, %s69
      %p71 = scmp.eq.s32.totalorder %s24, 0
      %p72 = por %p70, %p71
      %s74 = sadd.s32 %s73, 1
      %p77 = scmp.eq.s32.totalorder %s18, 1
      %p78 = scmp.ne.s32.totalorder %s73, %s75
      %p79 = scmp.eq.s32.totalorder %s18, 0
      %p80 = por %p78, %p79
      %p81 = scmp.ne.s32.totalorder %s73, %s75
      %p82 = scmp.eq.s32.totalorder %s23, 1
      %p83 = por %p81, %p82
      %p84 = scmp.ne.s32.totalorder %s75, %s76
      %p85 = scmp.eq.s32.totalorder %s23, 0
      %p86 = por %p84, %p85
      %p87 = scmp.ne.s32.totalorder %s75, %s76
      %p88 = scmp.eq.s32.totalorder %s24, 1
      %p89 = por %p87, %p88
      %p91 = scmp.ne.s32.totalorder %s76, %s90
      %p92 = scmp.eq.s32.totalorder %s24, 0
      %p93 = por %p91, %p92
      %s95 = sadd.s32 %s94, 1
      %p98 = scmp.eq.s32.totalorder %s18, 1
      %p99 = scmp.ne.s32.totalorder %s94, %s96
      %p100 = scmp.eq.s32.totalorder %s18, 0
      %p101 = por %p99, %p100
      %p102 = scmp.ne.s32.totalorder %s94, %s96
      %p103 = scmp.eq.s32.totalorder %s23, 1
      %p104 = por %p102, %p103
      %p105 = scmp.ne.s32.totalorder %s96, %s97
      %p106 = scmp.eq.s32.totalorder %s23, 0
      %p107 = por %p105, %p106
      %p108 = scmp.ne.s32.totalorder %s96, %s97
      %p109 = scmp.eq.s32.totalorder %s24, 1
      %p110 = por %p108, %p109
      %p112 = scmp.ne.s32.totalorder %s97, %s111
      %p113 = scmp.eq.s32.totalorder %s24, 0
      %p114 = por %p112, %p113
      %s116 = sadd.s32 %s115, 1
      %p119 = scmp.eq.s32.totalorder %s18, 1
      %p120 = scmp.ne.s32.totalorder %s115, %s117
      %p121 = scmp.eq.s32.totalorder %s18, 0
      %p122 = por %p120, %p121
      %p123 = scmp.ne.s32.totalorder %s115, %s117
      %p124 = scmp.eq.s32.totalorder %s23, 1
      %p125 = por %p123, %p124
      %p126 = scmp.ne.s32.totalorder %s117, %s118
      %p127 = scmp.eq.s32.totalorder %s23, 0
      %p128 = por %p126, %p127
      %p129 = scmp.ne.s32.totalorder %s117, %s118
      %p130 = scmp.eq.s32.totalorder %s24, 1
      %p131 = por %p129, %p130
      %p133 = scmp.ne.s32.totalorder %s118, %s132
      %p134 = scmp.eq.s32.totalorder %s24, 0
      %p135 = por %p133, %p134
      %s137 = sadd.s32 %s136, 1
      %p140 = scmp.eq.s32.totalorder %s18, 1
      %p141 = scmp.ne.s32.totalorder %s136, %s138
      %p142 = scmp.eq.s32.totalorder %s18, 0
      %p143 = por %p141, %p142
      %p144 = scmp.ne.s32.totalorder %s136, %s138
      %p145 = scmp.eq.s32.totalorder %s23, 1
      %p146 = por %p144, %p145
      %p147 = scmp.ne.s32.totalorder %s138, %s139
      %p148 = scmp.eq.s32.totalorder %s23, 0
      %p149 = por %p147, %p148
      %p150 = scmp.ne.s32.totalorder %s138, %s139
      %p151 = scmp.eq.s32.totalorder %s24, 1
      %p152 = por %p150, %p151
      %p154 = scmp.ne.s32.totalorder %s139, %s153
      %p155 = scmp.eq.s32.totalorder %s24, 0
      %p156 = por %p154, %p155
      %s158 = sadd.s32 %s157, 1
      %p161 = scmp.eq.s32.totalorder %s18, 1
      %p162 = scmp.ne.s32.totalorder %s157, %s159
      %p163 = scmp.eq.s32.totalorder %s18, 0
      %p164 = por %p162, %p163
      %p165 = scmp.ne.s32.totalorder %s157, %s159
      %p166 = scmp.eq.s32.totalorder %s23, 1
      %p167 = por %p165, %p166
      %p168 = scmp.ne.s32.totalorder %s159, %s160
      %p169 = scmp.eq.s32.totalorder %s23, 0
      %p170 = por %p168, %p169
      %p171 = scmp.ne.s32.totalorder %s159, %s160
      %p172 = scmp.eq.s32.totalorder %s24, 1
      %p173 = por %p171, %p172
      %p175 = scmp.ne.s32.totalorder %s160, %s174
      %p176 = scmp.eq.s32.totalorder %s24, 0
      %p177 = por %p175, %p176
      %s178 = ssub.s32 %s18, %s25
      %p179 = scmp.eq.s32.totalorder %s178, 0
      %s181 = sadd.s32 %s180, 1
      %s182 = scalar_select %p179, %s180, %s181
      %p185 = pneg %p179
      %p186 = scmp.eq.s32.totalorder %s18, 1
      %p187 = por %p185, %p186
      %p188 = scmp.ne.s32.totalorder %s180, %s183
      %p189 = scmp.eq.s32.totalorder %s18, 0
      %p190 = por %p188, %p189
      %p191 = scmp.ne.s32.totalorder %s180, %s183
      %p192 = scmp.eq.s32.totalorder %s23, 1
      %p193 = por %p191, %p192
      %p194 = scmp.ne.s32.totalorder %s183, %s184
      %p195 = scmp.eq.s32.totalorder %s23, 0
      %p196 = por %p194, %p195
      %p197 = scmp.ne.s32.totalorder %s183, %s184
      %p198 = scmp.eq.s32.totalorder %s24, 1
      %p199 = por %p197, %p198
      %p201 = scmp.ne.s32.totalorder %s184, %s200
      %p202 = scmp.eq.s32.totalorder %s24, 0
      %p203 = por %p201, %p202
      %p204 = scmp.le.s32.totalorder 1, %s18
      %p205 = scmp.lt.s32.totalorder %s18, 3
      %p206 = pnand %p204, %p205
      %p207 = pneg %p206
      // Predicated region
      $region9: #{tpu_custom_call.1} parent=5 // pred_check
        _
      $region10: #{tpu_custom_call.1} parent=5 // pred_check_branch
        %209 = sbr.rel (%p206) target = $region12
      $region11: #{tpu_custom_call.1} parent=5 // pred_region
        %s210 = ssub.s32 %s18, 1
        // Predicated region
        $region13: #{tpu_custom_call.1} parent=11 // pred_check
          %p211 = pneg %p65
        $region14: #{tpu_custom_call.1} parent=11 // pred_check_branch
          %213 = sbr.rel (%p211) target = $region16
        $region15: #{tpu_custom_call.1} parent=11 // pred_region
          _
        $region16: #{tpu_custom_call.1} parent=11 // pred_fallthru
          _
        // Predicated region
        $region17: #{tpu_custom_call.1} parent=11 // pred_check
          %p214 = pneg %p86
        $region18: #{tpu_custom_call.1} parent=11 // pred_check_branch
          %216 = sbr.rel (%p214) target = $region20
        $region19: #{tpu_custom_call.1} parent=11 // pred_region
          _
        $region20: #{tpu_custom_call.1} parent=11 // pred_fallthru
          _
        // Predicated region
        $region21: #{tpu_custom_call.1} parent=11 // pred_check
          %p217 = pneg %p107
        $region22: #{tpu_custom_call.1} parent=11 // pred_check_branch
          %219 = sbr.rel (%p217) target = $region24
        $region23: #{tpu_custom_call.1} parent=11 // pred_region
          _
        $region24: #{tpu_custom_call.1} parent=11 // pred_fallthru
          _
        // Predicated region
        $region25: #{tpu_custom_call.1} parent=11 // pred_check
          %p220 = pneg %p128
        $region26: #{tpu_custom_call.1} parent=11 // pred_check_branch
          %222 = sbr.rel (%p220) target = $region28
        $region27: #{tpu_custom_call.1} parent=11 // pred_region
          _
        $region28: #{tpu_custom_call.1} parent=11 // pred_fallthru
          _
        // Predicated region
        $region29: #{tpu_custom_call.1} parent=11 // pred_check
          %p223 = pneg %p149
        $region30: #{tpu_custom_call.1} parent=11 // pred_check_branch
          %225 = sbr.rel (%p223) target = $region32
        $region31: #{tpu_custom_call.1} parent=11 // pred_region
          _
        $region32: #{tpu_custom_call.1} parent=11 // pred_fallthru
          _
        // Predicated region
        $region33: #{tpu_custom_call.1} parent=11 // pred_check
          %p226 = pneg %p170
        $region34: #{tpu_custom_call.1} parent=11 // pred_check_branch
          %228 = sbr.rel (%p226) target = $region36
        $region35: #{tpu_custom_call.1} parent=11 // pred_region
          _
        $region36: #{tpu_custom_call.1} parent=11 // pred_fallthru
          _
      $region12: #{tpu_custom_call.1} parent=5 // pred_fallthru
        _
      %p229 = scmp.lt.s32.totalorder %s18, 2
      // Predicated region
      $region37: #{tpu_custom_call.1} parent=5 // pred_check
        %p230 = pneg %p229
      $region38: #{tpu_custom_call.1} parent=5 // pred_check_branch
        %232 = sbr.rel (%p230) target = $region40
      $region39: #{tpu_custom_call.1} parent=5 // pred_region
        // Predicated region
        $region41: #{tpu_custom_call.1} parent=39 // pred_check
          %p233 = pneg %p38
        $region42: #{tpu_custom_call.1} parent=39 // pred_check_branch
          %235 = sbr.rel (%p233) target = $region44
        $region43: #{tpu_custom_call.1} parent=39 // pred_region
          %s236 = smul.u32 1024, %s18
          %p237 = scmp.lt.s32.totalorder %s236, 2047
          %s238 = scalar_select %p237, %s236, 2047
          %s239 = smul.addr %s238, 8
          %s240 = scalar_lea.vmem %s0, %s239
          %s241 = smul.u32 1024, %s18
        $region44: #{tpu_custom_call.1} parent=39 // pred_fallthru
          _
      $region40: #{tpu_custom_call.1} parent=5 // pred_fallthru
        _
      %p242 = scmp.le.s32.totalorder 1, %s18
      %p243 = scmp.lt.s32.totalorder %s18, 3
      %p244 = pnand %p242, %p243
      %p245 = pneg %p244
      // Predicated region
      $region45: #{tpu_custom_call.1} parent=5 // pred_check
        _
      $region46: #{tpu_custom_call.1} parent=5 // pred_check_branch
        %247 = sbr.rel (%p244) target = $region48
      $region47: #{tpu_custom_call.1} parent=5 // pred_region
        %s248 = ssub.s32 %s18, 1
        %s249 = smul.u32 1024, %s23
        %p250 = scmp.lt.s32.totalorder %s249, 2047
        %s251 = scalar_select %p250, %s249, 2047
        %s252 = smul.addr %s251, 8
        %s253 = scalar_lea.vmem %s0, %s252
        %p254 = pneg %p44
        %p255 = pneg %p41
        %p256 = pneg %p65
        %p257 = pneg %p62
        %p258 = pneg %p86
        %p259 = pneg %p83
        %p260 = pneg %p107
        %p261 = pneg %p104
        %p262 = pneg %p128
        %p263 = pneg %p125
        %p264 = pneg %p149
        %p265 = pneg %p146
        %p266 = pneg %p170
        %p267 = pneg %p167
        %p268 = pneg %p196
        %p269 = pneg %p193
        %s270 = sand.u32 %s183, 1
        %s271 = scalar_lea.sflag [#allocation4], %s270
        %s272 = sand.u32 %s183, 1
        %s273 = smul.addr %s272, 64
        %s274 = scalar_lea.vmem [#allocation3], %s273
        %s275 = smul.u32 1024, %s23
        %p276 = scmp.lt.s32.totalorder %s275, 2047
        %s277 = scalar_select %p276, %s275, 2047
        %s278 = smul.addr %s277, 8
        %s279 = scalar_lea.vmem %s0, %s278
        %s280 = smul.u32 1024, %s23
        %s281 = smul.u32 64, %s23
        %v282 = vld [vmem:[%s279] sm:$0xff]
        %v283 = vld [vmem:[%s279 + $0x8] sm:$0xff]
        %v284 = vld [vmem:[%s279 + $0x10] sm:$0xff]
        %v285 = vld [vmem:[%s279 + $0x18] sm:$0xff]
        %v286 = vld [vmem:[%s279 + $0x20] sm:$0xff]
        %v287 = vld [vmem:[%s279 + $0x28] sm:$0xff]
        %v288 = vld [vmem:[%s279 + $0x30] sm:$0xff]
        %v289 = vld [vmem:[%s279 + $0x38] sm:$0xff]
        %v290 = vld [vmem:[%s279 + $0x40] sm:$0xff]
        %v291 = vld [vmem:[%s279 + $0x48] sm:$0xff]
        %v292 = vld [vmem:[%s279 + $0x50] sm:$0xff]
        %v293 = vld [vmem:[%s279 + $0x58] sm:$0xff]
        %v294 = vld [vmem:[%s279 + $0x60] sm:$0xff]
        %v295 = vld [vmem:[%s279 + $0x68] sm:$0xff]
        %v296 = vld [vmem:[%s279 + $0x70] sm:$0xff]
        %v297 = vld [vmem:[%s279 + $0x78] sm:$0xff]
        %v298 = vld [vmem:[%s279 + $0x80] sm:$0xff]
        %v299 = vld [vmem:[%s279 + $0x88] sm:$0xff]
        %v300 = vld [vmem:[%s279 + $0x90] sm:$0xff]
        %v301 = vld [vmem:[%s279 + $0x98] sm:$0xff]
        %v302 = vld [vmem:[%s279 + $0xa0] sm:$0xff]
        %v303 = vld [vmem:[%s279 + $0xa8] sm:$0xff]
        %v304 = vld [vmem:[%s279 + $0xb0] sm:$0xff]
        %v305 = vld [vmem:[%s279 + $0xb8] sm:$0xff]
        %v306 = vld [vmem:[%s279 + $0xc0] sm:$0xff]
        %v307 = vld [vmem:[%s279 + $0xc8] sm:$0xff]
        %v308 = vld [vmem:[%s279 + $0xd0] sm:$0xff]
        %v309 = vld [vmem:[%s279 + $0xd8] sm:$0xff]
        %v310 = vld [vmem:[%s279 + $0xe0] sm:$0xff]
        %v311 = vld [vmem:[%s279 + $0xe8] sm:$0xff]
        %v312 = vld [vmem:[%s279 + $0xf0] sm:$0xff]
        %v313 = vld [vmem:[%s279 + $0xf8] sm:$0xff]
        %v314 = vld [vmem:[%s279 + $0x100] sm:$0xff]
        %v315 = vld [vmem:[%s279 + $0x108] sm:$0xff]
        %v316 = vld [vmem:[%s279 + $0x110] sm:$0xff]
        %v317 = vld [vmem:[%s279 + $0x118] sm:$0xff]
        %v318 = vld [vmem:[%s279 + $0x120] sm:$0xff]
        %v319 = vld [vmem:[%s279 + $0x128] sm:$0xff]
        %v320 = vld [vmem:[%s279 + $0x130] sm:$0xff]
        %v321 = vld [vmem:[%s279 + $0x138] sm:$0xff]
        %v322 = vld [vmem:[%s279 + $0x140] sm:$0xff]
        %v323 = vld [vmem:[%s279 + $0x148] sm:$0xff]
        %v324 = vld [vmem:[%s279 + $0x150] sm:$0xff]
        %v325 = vld [vmem:[%s279 + $0x158] sm:$0xff]
        %v326 = vld [vmem:[%s279 + $0x160] sm:$0xff]
        %v327 = vld [vmem:[%s279 + $0x168] sm:$0xff]
        %v328 = vld [vmem:[%s279 + $0x170] sm:$0xff]
        %v329 = vld [vmem:[%s279 + $0x178] sm:$0xff]
        %v330 = vld [vmem:[%s279 + $0x180] sm:$0xff]
        %v331 = vld [vmem:[%s279 + $0x188] sm:$0xff]
        %v332 = vld [vmem:[%s279 + $0x190] sm:$0xff]
        %v333 = vld [vmem:[%s279 + $0x198] sm:$0xff]
        %v334 = vld [vmem:[%s279 + $0x1a0] sm:$0xff]
        %v335 = vld [vmem:[%s279 + $0x1a8] sm:$0xff]
        %v336 = vld [vmem:[%s279 + $0x1b0] sm:$0xff]
        %v337 = vld [vmem:[%s279 + $0x1b8] sm:$0xff]
        %v338 = vld [vmem:[%s279 + $0x1c0] sm:$0xff]
        %v339 = vld [vmem:[%s279 + $0x1c8] sm:$0xff]
        %v340 = vld [vmem:[%s279 + $0x1d0] sm:$0xff]
        %v341 = vld [vmem:[%s279 + $0x1d8] sm:$0xff]
        %v342 = vld [vmem:[%s279 + $0x1e0] sm:$0xff]
        %v343 = vld [vmem:[%s279 + $0x1e8] sm:$0xff]
        %v344 = vld [vmem:[%s279 + $0x1f0] sm:$0xff]
        %v345 = vld [vmem:[%s279 + $0x1f8] sm:$0xff]
        %v346 = vld [vmem:[%s279 + $0x200] sm:$0xff]
        %v347 = vld [vmem:[%s279 + $0x208] sm:$0xff]
        %v348 = vld [vmem:[%s279 + $0x210] sm:$0xff]
        %v349 = vld [vmem:[%s279 + $0x218] sm:$0xff]
        %v350 = vld [vmem:[%s279 + $0x220] sm:$0xff]
        %v351 = vld [vmem:[%s279 + $0x228] sm:$0xff]
        %v352 = vld [vmem:[%s279 + $0x230] sm:$0xff]
        %v353 = vld [vmem:[%s279 + $0x238] sm:$0xff]
        %v354 = vld [vmem:[%s279 + $0x240] sm:$0xff]
        %v355 = vld [vmem:[%s279 + $0x248] sm:$0xff]
        %v356 = vld [vmem:[%s279 + $0x250] sm:$0xff]
        %v357 = vld [vmem:[%s279 + $0x258] sm:$0xff]
        %v358 = vld [vmem:[%s279 + $0x260] sm:$0xff]
        %v359 = vld [vmem:[%s279 + $0x268] sm:$0xff]
        %v360 = vld [vmem:[%s279 + $0x270] sm:$0xff]
        %v361 = vld [vmem:[%s279 + $0x278] sm:$0xff]
        %v362 = vld [vmem:[%s279 + $0x280] sm:$0xff]
        %v363 = vld [vmem:[%s279 + $0x288] sm:$0xff]
        %v364 = vld [vmem:[%s279 + $0x290] sm:$0xff]
        %v365 = vld [vmem:[%s279 + $0x298] sm:$0xff]
        %v366 = vld [vmem:[%s279 + $0x2a0] sm:$0xff]
        %v367 = vld [vmem:[%s279 + $0x2a8] sm:$0xff]
        %v368 = vld [vmem:[%s279 + $0x2b0] sm:$0xff]
        %v369 = vld [vmem:[%s279 + $0x2b8] sm:$0xff]
        %v370 = vld [vmem:[%s279 + $0x2c0] sm:$0xff]
        %v371 = vld [vmem:[%s279 + $0x2c8] sm:$0xff]
        %v372 = vld [vmem:[%s279 + $0x2d0] sm:$0xff]
        %v373 = vld [vmem:[%s279 + $0x2d8] sm:$0xff]
        %v374 = vld [vmem:[%s279 + $0x2e0] sm:$0xff]
        %v375 = vld [vmem:[%s279 + $0x2e8] sm:$0xff]
        %v376 = vld [vmem:[%s279 + $0x2f0] sm:$0xff]
        %v377 = vld [vmem:[%s279 + $0x2f8] sm:$0xff]
        %v378 = vld [vmem:[%s279 + $0x300] sm:$0xff]
        %v379 = vld [vmem:[%s279 + $0x308] sm:$0xff]
        %v380 = vld [vmem:[%s279 + $0x310] sm:$0xff]
        %v381 = vld [vmem:[%s279 + $0x318] sm:$0xff]
        %v382 = vld [vmem:[%s279 + $0x320] sm:$0xff]
        %v383 = vld [vmem:[%s279 + $0x328] sm:$0xff]
        %v384 = vld [vmem:[%s279 + $0x330] sm:$0xff]
        %v385 = vld [vmem:[%s279 + $0x338] sm:$0xff]
        %v386 = vld [vmem:[%s279 + $0x340] sm:$0xff]
        %v387 = vld [vmem:[%s279 + $0x348] sm:$0xff]
        %v388 = vld [vmem:[%s279 + $0x350] sm:$0xff]
        %v389 = vld [vmem:[%s279 + $0x358] sm:$0xff]
        %v390 = vld [vmem:[%s279 + $0x360] sm:$0xff]
        %v391 = vld [vmem:[%s279 + $0x368] sm:$0xff]
        %v392 = vld [vmem:[%s279 + $0x370] sm:$0xff]
        %v393 = vld [vmem:[%s279 + $0x378] sm:$0xff]
        %v394 = vld [vmem:[%s279 + $0x380] sm:$0xff]
        %v395 = vld [vmem:[%s279 + $0x388] sm:$0xff]
        %v396 = vld [vmem:[%s279 + $0x390] sm:$0xff]
        %v397 = vld [vmem:[%s279 + $0x398] sm:$0xff]
        %v398 = vld [vmem:[%s279 + $0x3a0] sm:$0xff]
        %v399 = vld [vmem:[%s279 + $0x3a8] sm:$0xff]
        %v400 = vld [vmem:[%s279 + $0x3b0] sm:$0xff]
        %v401 = vld [vmem:[%s279 + $0x3b8] sm:$0xff]
        %v402 = vld [vmem:[%s279 + $0x3c0] sm:$0xff]
        %v403 = vld [vmem:[%s279 + $0x3c8] sm:$0xff]
        %v404 = vld [vmem:[%s279 + $0x3d0] sm:$0xff]
        %v405 = vld [vmem:[%s279 + $0x3d8] sm:$0xff]
        %v406 = vld [vmem:[%s279 + $0x3e0] sm:$0xff]
        %v407 = vld [vmem:[%s279 + $0x3e8] sm:$0xff]
        %v408 = vld [vmem:[%s279 + $0x3f0] sm:$0xff]
        %v409 = vld [vmem:[%s279 + $0x3f8] sm:$0xff]
        %v410 = vld [vmem:[%s279 + $0x400] sm:$0xff]
        %v411 = vld [vmem:[%s279 + $0x408] sm:$0xff]
        %v412 = vld [vmem:[%s279 + $0x410] sm:$0xff]
        %v413 = vld [vmem:[%s279 + $0x418] sm:$0xff]
        %v414 = vld [vmem:[%s279 + $0x420] sm:$0xff]
        %v415 = vld [vmem:[%s279 + $0x428] sm:$0xff]
        %v416 = vld [vmem:[%s279 + $0x430] sm:$0xff]
        %v417 = vld [vmem:[%s279 + $0x438] sm:$0xff]
        %v418 = vld [vmem:[%s279 + $0x440] sm:$0xff]
        %v419 = vld [vmem:[%s279 + $0x448] sm:$0xff]
        %v420 = vld [vmem:[%s279 + $0x450] sm:$0xff]
        %v421 = vld [vmem:[%s279 + $0x458] sm:$0xff]
        %v422 = vld [vmem:[%s279 + $0x460] sm:$0xff]
        %v423 = vld [vmem:[%s279 + $0x468] sm:$0xff]
        %v424 = vld [vmem:[%s279 + $0x470] sm:$0xff]
        %v425 = vld [vmem:[%s279 + $0x478] sm:$0xff]
        %v426 = vld [vmem:[%s279 + $0x480] sm:$0xff]
        %v427 = vld [vmem:[%s279 + $0x488] sm:$0xff]
        %v428 = vld [vmem:[%s279 + $0x490] sm:$0xff]
        %v429 = vld [vmem:[%s279 + $0x498] sm:$0xff]
        %v430 = vld [vmem:[%s279 + $0x4a0] sm:$0xff]
        %v431 = vld [vmem:[%s279 + $0x4a8] sm:$0xff]
        %v432 = vld [vmem:[%s279 + $0x4b0] sm:$0xff]
        %v433 = vld [vmem:[%s279 + $0x4b8] sm:$0xff]
        %v434 = vld [vmem:[%s279 + $0x4c0] sm:$0xff]
        %v435 = vld [vmem:[%s279 + $0x4c8] sm:$0xff]
        %v436 = vld [vmem:[%s279 + $0x4d0] sm:$0xff]
        %v437 = vld [vmem:[%s279 + $0x4d8] sm:$0xff]
        %v438 = vld [vmem:[%s279 + $0x4e0] sm:$0xff]
        %v439 = vld [vmem:[%s279 + $0x4e8] sm:$0xff]
        %v440 = vld [vmem:[%s279 + $0x4f0] sm:$0xff]
        %v441 = vld [vmem:[%s279 + $0x4f8] sm:$0xff]
        %v442 = vld [vmem:[%s279 + $0x500] sm:$0xff]
        %v443 = vld [vmem:[%s279 + $0x508] sm:$0xff]
        %v444 = vld [vmem:[%s279 + $0x510] sm:$0xff]
        %v445 = vld [vmem:[%s279 + $0x518] sm:$0xff]
        %v446 = vld [vmem:[%s279 + $0x520] sm:$0xff]
        %v447 = vld [vmem:[%s279 + $0x528] sm:$0xff]
        %v448 = vld [vmem:[%s279 + $0x530] sm:$0xff]
        %v449 = vld [vmem:[%s279 + $0x538] sm:$0xff]
        %v450 = vld [vmem:[%s279 + $0x540] sm:$0xff]
        %v451 = vld [vmem:[%s279 + $0x548] sm:$0xff]
        %v452 = vld [vmem:[%s279 + $0x550] sm:$0xff]
        %v453 = vld [vmem:[%s279 + $0x558] sm:$0xff]
        %v454 = vld [vmem:[%s279 + $0x560] sm:$0xff]
        %v455 = vld [vmem:[%s279 + $0x568] sm:$0xff]
        %v456 = vld [vmem:[%s279 + $0x570] sm:$0xff]
        %v457 = vld [vmem:[%s279 + $0x578] sm:$0xff]
        %v458 = vld [vmem:[%s279 + $0x580] sm:$0xff]
        %v459 = vld [vmem:[%s279 + $0x588] sm:$0xff]
        %v460 = vld [vmem:[%s279 + $0x590] sm:$0xff]
        %v461 = vld [vmem:[%s279 + $0x598] sm:$0xff]
        %v462 = vld [vmem:[%s279 + $0x5a0] sm:$0xff]
        %v463 = vld [vmem:[%s279 + $0x5a8] sm:$0xff]
        %v464 = vld [vmem:[%s279 + $0x5b0] sm:$0xff]
        %v465 = vld [vmem:[%s279 + $0x5b8] sm:$0xff]
        %v466 = vld [vmem:[%s279 + $0x5c0] sm:$0xff]
        %v467 = vld [vmem:[%s279 + $0x5c8] sm:$0xff]
        %v468 = vld [vmem:[%s279 + $0x5d0] sm:$0xff]
        %v469 = vld [vmem:[%s279 + $0x5d8] sm:$0xff]
        %v470 = vld [vmem:[%s279 + $0x5e0] sm:$0xff]
        %v471 = vld [vmem:[%s279 + $0x5e8] sm:$0xff]
        %v472 = vld [vmem:[%s279 + $0x5f0] sm:$0xff]
        %v473 = vld [vmem:[%s279 + $0x5f8] sm:$0xff]
        %v474 = vld [vmem:[%s279 + $0x600] sm:$0xff]
        %v475 = vld [vmem:[%s279 + $0x608] sm:$0xff]
        %v476 = vld [vmem:[%s279 + $0x610] sm:$0xff]
        %v477 = vld [vmem:[%s279 + $0x618] sm:$0xff]
        %v478 = vld [vmem:[%s279 + $0x620] sm:$0xff]
        %v479 = vld [vmem:[%s279 + $0x628] sm:$0xff]
        %v480 = vld [vmem:[%s279 + $0x630] sm:$0xff]
        %v481 = vld [vmem:[%s279 + $0x638] sm:$0xff]
        %v482 = vld [vmem:[%s279 + $0x640] sm:$0xff]
        %v483 = vld [vmem:[%s279 + $0x648] sm:$0xff]
        %v484 = vld [vmem:[%s279 + $0x650] sm:$0xff]
        %v485 = vld [vmem:[%s279 + $0x658] sm:$0xff]
        %v486 = vld [vmem:[%s279 + $0x660] sm:$0xff]
        %v487 = vld [vmem:[%s279 + $0x668] sm:$0xff]
        %v488 = vld [vmem:[%s279 + $0x670] sm:$0xff]
        %v489 = vld [vmem:[%s279 + $0x678] sm:$0xff]
        %v490 = vld [vmem:[%s279 + $0x680] sm:$0xff]
        %v491 = vld [vmem:[%s279 + $0x688] sm:$0xff]
        %v492 = vld [vmem:[%s279 + $0x690] sm:$0xff]
        %v493 = vld [vmem:[%s279 + $0x698] sm:$0xff]
        %v494 = vld [vmem:[%s279 + $0x6a0] sm:$0xff]
        %v495 = vld [vmem:[%s279 + $0x6a8] sm:$0xff]
        %v496 = vld [vmem:[%s279 + $0x6b0] sm:$0xff]
        %v497 = vld [vmem:[%s279 + $0x6b8] sm:$0xff]
        %v498 = vld [vmem:[%s279 + $0x6c0] sm:$0xff]
        %v499 = vld [vmem:[%s279 + $0x6c8] sm:$0xff]
        %v500 = vld [vmem:[%s279 + $0x6d0] sm:$0xff]
        %v501 = vld [vmem:[%s279 + $0x6d8] sm:$0xff]
        %v502 = vld [vmem:[%s279 + $0x6e0] sm:$0xff]
        %v503 = vld [vmem:[%s279 + $0x6e8] sm:$0xff]
        %v504 = vld [vmem:[%s279 + $0x6f0] sm:$0xff]
        %v505 = vld [vmem:[%s279 + $0x6f8] sm:$0xff]
        %v506 = vld [vmem:[%s279 + $0x700] sm:$0xff]
        %v507 = vld [vmem:[%s279 + $0x708] sm:$0xff]
        %v508 = vld [vmem:[%s279 + $0x710] sm:$0xff]
        %v509 = vld [vmem:[%s279 + $0x718] sm:$0xff]
        %v510 = vld [vmem:[%s279 + $0x720] sm:$0xff]
        %v511 = vld [vmem:[%s279 + $0x728] sm:$0xff]
        %v512 = vld [vmem:[%s279 + $0x730] sm:$0xff]
        %v513 = vld [vmem:[%s279 + $0x738] sm:$0xff]
        %v514 = vld [vmem:[%s279 + $0x740] sm:$0xff]
        %v515 = vld [vmem:[%s279 + $0x748] sm:$0xff]
        %v516 = vld [vmem:[%s279 + $0x750] sm:$0xff]
        %v517 = vld [vmem:[%s279 + $0x758] sm:$0xff]
        %v518 = vld [vmem:[%s279 + $0x760] sm:$0xff]
        %v519 = vld [vmem:[%s279 + $0x768] sm:$0xff]
        %v520 = vld [vmem:[%s279 + $0x770] sm:$0xff]
        %v521 = vld [vmem:[%s279 + $0x778] sm:$0xff]
        %v522 = vld [vmem:[%s279 + $0x780] sm:$0xff]
        %v523 = vld [vmem:[%s279 + $0x788] sm:$0xff]
        %v524 = vld [vmem:[%s279 + $0x790] sm:$0xff]
        %v525 = vld [vmem:[%s279 + $0x798] sm:$0xff]
        %v526 = vld [vmem:[%s279 + $0x7a0] sm:$0xff]
        %v527 = vld [vmem:[%s279 + $0x7a8] sm:$0xff]
        %v528 = vld [vmem:[%s279 + $0x7b0] sm:$0xff]
        %v529 = vld [vmem:[%s279 + $0x7b8] sm:$0xff]
        %v530 = vld [vmem:[%s279 + $0x7c0] sm:$0xff]
        %v531 = vld [vmem:[%s279 + $0x7c8] sm:$0xff]
        %v532 = vld [vmem:[%s279 + $0x7d0] sm:$0xff]
        %v533 = vld [vmem:[%s279 + $0x7d8] sm:$0xff]
        %v534 = vld [vmem:[%s279 + $0x7e0] sm:$0xff]
        %v535 = vld [vmem:[%s279 + $0x7e8] sm:$0xff]
        %v536 = vld [vmem:[%s279 + $0x7f0] sm:$0xff]
        %v537 = vld [vmem:[%s279 + $0x7f8] sm:$0xff]
        %v538 = vld [vmem:[%s279 + $0x800] sm:$0xff]
        %v539 = vld [vmem:[%s279 + $0x808] sm:$0xff]
        %v540 = vld [vmem:[%s279 + $0x810] sm:$0xff]
        %v541 = vld [vmem:[%s279 + $0x818] sm:$0xff]
        %v542 = vld [vmem:[%s279 + $0x820] sm:$0xff]
        %v543 = vld [vmem:[%s279 + $0x828] sm:$0xff]
        %v544 = vld [vmem:[%s279 + $0x830] sm:$0xff]
        %v545 = vld [vmem:[%s279 + $0x838] sm:$0xff]
        %v546 = vld [vmem:[%s279 + $0x840] sm:$0xff]
        %v547 = vld [vmem:[%s279 + $0x848] sm:$0xff]
        %v548 = vld [vmem:[%s279 + $0x850] sm:$0xff]
        %v549 = vld [vmem:[%s279 + $0x858] sm:$0xff]
        %v550 = vld [vmem:[%s279 + $0x860] sm:$0xff]
        %v551 = vld [vmem:[%s279 + $0x868] sm:$0xff]
        %v552 = vld [vmem:[%s279 + $0x870] sm:$0xff]
        %v553 = vld [vmem:[%s279 + $0x878] sm:$0xff]
        %v554 = vld [vmem:[%s279 + $0x880] sm:$0xff]
        %v555 = vld [vmem:[%s279 + $0x888] sm:$0xff]
        %v556 = vld [vmem:[%s279 + $0x890] sm:$0xff]
        %v557 = vld [vmem:[%s279 + $0x898] sm:$0xff]
        %v558 = vld [vmem:[%s279 + $0x8a0] sm:$0xff]
        %v559 = vld [vmem:[%s279 + $0x8a8] sm:$0xff]
        %v560 = vld [vmem:[%s279 + $0x8b0] sm:$0xff]
        %v561 = vld [vmem:[%s279 + $0x8b8] sm:$0xff]
        %v562 = vld [vmem:[%s279 + $0x8c0] sm:$0xff]
        %v563 = vld [vmem:[%s279 + $0x8c8] sm:$0xff]
        %v564 = vld [vmem:[%s279 + $0x8d0] sm:$0xff]
        %v565 = vld [vmem:[%s279 + $0x8d8] sm:$0xff]
        %v566 = vld [vmem:[%s279 + $0x8e0] sm:$0xff]
        %v567 = vld [vmem:[%s279 + $0x8e8] sm:$0xff]
        %v568 = vld [vmem:[%s279 + $0x8f0] sm:$0xff]
        %v569 = vld [vmem:[%s279 + $0x8f8] sm:$0xff]
        %v570 = vld [vmem:[%s279 + $0x900] sm:$0xff]
        %v571 = vld [vmem:[%s279 + $0x908] sm:$0xff]
        %v572 = vld [vmem:[%s279 + $0x910] sm:$0xff]
        %v573 = vld [vmem:[%s279 + $0x918] sm:$0xff]
        %v574 = vld [vmem:[%s279 + $0x920] sm:$0xff]
        %v575 = vld [vmem:[%s279 + $0x928] sm:$0xff]
        %v576 = vld [vmem:[%s279 + $0x930] sm:$0xff]
        %v577 = vld [vmem:[%s279 + $0x938] sm:$0xff]
        %v578 = vld [vmem:[%s279 + $0x940] sm:$0xff]
        %v579 = vld [vmem:[%s279 + $0x948] sm:$0xff]
        %v580 = vld [vmem:[%s279 + $0x950] sm:$0xff]
        %v581 = vld [vmem:[%s279 + $0x958] sm:$0xff]
        %v582 = vld [vmem:[%s279 + $0x960] sm:$0xff]
        %v583 = vld [vmem:[%s279 + $0x968] sm:$0xff]
        %v584 = vld [vmem:[%s279 + $0x970] sm:$0xff]
        %v585 = vld [vmem:[%s279 + $0x978] sm:$0xff]
        %v586 = vld [vmem:[%s279 + $0x980] sm:$0xff]
        %v587 = vld [vmem:[%s279 + $0x988] sm:$0xff]
        %v588 = vld [vmem:[%s279 + $0x990] sm:$0xff]
        %v589 = vld [vmem:[%s279 + $0x998] sm:$0xff]
        %v590 = vld [vmem:[%s279 + $0x9a0] sm:$0xff]
        %v591 = vld [vmem:[%s279 + $0x9a8] sm:$0xff]
        %v592 = vld [vmem:[%s279 + $0x9b0] sm:$0xff]
        %v593 = vld [vmem:[%s279 + $0x9b8] sm:$0xff]
        %v594 = vld [vmem:[%s279 + $0x9c0] sm:$0xff]
        %v595 = vld [vmem:[%s279 + $0x9c8] sm:$0xff]
        %v596 = vld [vmem:[%s279 + $0x9d0] sm:$0xff]
        %v597 = vld [vmem:[%s279 + $0x9d8] sm:$0xff]
        %v598 = vld [vmem:[%s279 + $0x9e0] sm:$0xff]
        %v599 = vld [vmem:[%s279 + $0x9e8] sm:$0xff]
        %v600 = vld [vmem:[%s279 + $0x9f0] sm:$0xff]
        %v601 = vld [vmem:[%s279 + $0x9f8] sm:$0xff]
        %v602 = vld [vmem:[%s279 + $0xa00] sm:$0xff]
        %v603 = vld [vmem:[%s279 + $0xa08] sm:$0xff]
        %v604 = vld [vmem:[%s279 + $0xa10] sm:$0xff]
        %v605 = vld [vmem:[%s279 + $0xa18] sm:$0xff]
        %v606 = vld [vmem:[%s279 + $0xa20] sm:$0xff]
        %v607 = vld [vmem:[%s279 + $0xa28] sm:$0xff]
        %v608 = vld [vmem:[%s279 + $0xa30] sm:$0xff]
        %v609 = vld [vmem:[%s279 + $0xa38] sm:$0xff]
        %v610 = vld [vmem:[%s279 + $0xa40] sm:$0xff]
        %v611 = vld [vmem:[%s279 + $0xa48] sm:$0xff]
        %v612 = vld [vmem:[%s279 + $0xa50] sm:$0xff]
        %v613 = vld [vmem:[%s279 + $0xa58] sm:$0xff]
        %v614 = vld [vmem:[%s279 + $0xa60] sm:$0xff]
        %v615 = vld [vmem:[%s279 + $0xa68] sm:$0xff]
        %v616 = vld [vmem:[%s279 + $0xa70] sm:$0xff]
        %v617 = vld [vmem:[%s279 + $0xa78] sm:$0xff]
        %v618 = vld [vmem:[%s279 + $0xa80] sm:$0xff]
        %v619 = vld [vmem:[%s279 + $0xa88] sm:$0xff]
        %v620 = vld [vmem:[%s279 + $0xa90] sm:$0xff]
        %v621 = vld [vmem:[%s279 + $0xa98] sm:$0xff]
        %v622 = vld [vmem:[%s279 + $0xaa0] sm:$0xff]
        %v623 = vld [vmem:[%s279 + $0xaa8] sm:$0xff]
        %v624 = vld [vmem:[%s279 + $0xab0] sm:$0xff]
        %v625 = vld [vmem:[%s279 + $0xab8] sm:$0xff]
        %v626 = vld [vmem:[%s279 + $0xac0] sm:$0xff]
        %v627 = vld [vmem:[%s279 + $0xac8] sm:$0xff]
        %v628 = vld [vmem:[%s279 + $0xad0] sm:$0xff]
        %v629 = vld [vmem:[%s279 + $0xad8] sm:$0xff]
        %v630 = vld [vmem:[%s279 + $0xae0] sm:$0xff]
        %v631 = vld [vmem:[%s279 + $0xae8] sm:$0xff]
        %v632 = vld [vmem:[%s279 + $0xaf0] sm:$0xff]
        %v633 = vld [vmem:[%s279 + $0xaf8] sm:$0xff]
        %v634 = vld [vmem:[%s279 + $0xb00] sm:$0xff]
        %v635 = vld [vmem:[%s279 + $0xb08] sm:$0xff]
        %v636 = vld [vmem:[%s279 + $0xb10] sm:$0xff]
        %v637 = vld [vmem:[%s279 + $0xb18] sm:$0xff]
        %v638 = vld [vmem:[%s279 + $0xb20] sm:$0xff]
        %v639 = vld [vmem:[%s279 + $0xb28] sm:$0xff]
        %v640 = vld [vmem:[%s279 + $0xb30] sm:$0xff]
        %v641 = vld [vmem:[%s279 + $0xb38] sm:$0xff]
        %v642 = vld [vmem:[%s279 + $0xb40] sm:$0xff]
        %v643 = vld [vmem:[%s279 + $0xb48] sm:$0xff]
        %v644 = vld [vmem:[%s279 + $0xb50] sm:$0xff]
        %v645 = vld [vmem:[%s279 + $0xb58] sm:$0xff]
        %v646 = vld [vmem:[%s279 + $0xb60] sm:$0xff]
        %v647 = vld [vmem:[%s279 + $0xb68] sm:$0xff]
        %v648 = vld [vmem:[%s279 + $0xb70] sm:$0xff]
        %v649 = vld [vmem:[%s279 + $0xb78] sm:$0xff]
        %v650 = vld [vmem:[%s279 + $0xb80] sm:$0xff]
        %v651 = vld [vmem:[%s279 + $0xb88] sm:$0xff]
        %v652 = vld [vmem:[%s279 + $0xb90] sm:$0xff]
        %v653 = vld [vmem:[%s279 + $0xb98] sm:$0xff]
        %v654 = vld [vmem:[%s279 + $0xba0] sm:$0xff]
        %v655 = vld [vmem:[%s279 + $0xba8] sm:$0xff]
        %v656 = vld [vmem:[%s279 + $0xbb0] sm:$0xff]
        %v657 = vld [vmem:[%s279 + $0xbb8] sm:$0xff]
        %v658 = vld [vmem:[%s279 + $0xbc0] sm:$0xff]
        %v659 = vld [vmem:[%s279 + $0xbc8] sm:$0xff]
        %v660 = vld [vmem:[%s279 + $0xbd0] sm:$0xff]
        %v661 = vld [vmem:[%s279 + $0xbd8] sm:$0xff]
        %v662 = vld [vmem:[%s279 + $0xbe0] sm:$0xff]
        %v663 = vld [vmem:[%s279 + $0xbe8] sm:$0xff]
        %v664 = vld [vmem:[%s279 + $0xbf0] sm:$0xff]
        %v665 = vld [vmem:[%s279 + $0xbf8] sm:$0xff]
        %v666 = vld [vmem:[%s279 + $0xc00] sm:$0xff]
        %v667 = vld [vmem:[%s279 + $0xc08] sm:$0xff]
        %v668 = vld [vmem:[%s279 + $0xc10] sm:$0xff]
        %v669 = vld [vmem:[%s279 + $0xc18] sm:$0xff]
        %v670 = vld [vmem:[%s279 + $0xc20] sm:$0xff]
        %v671 = vld [vmem:[%s279 + $0xc28] sm:$0xff]
        %v672 = vld [vmem:[%s279 + $0xc30] sm:$0xff]
        %v673 = vld [vmem:[%s279 + $0xc38] sm:$0xff]
        %v674 = vld [vmem:[%s279 + $0xc40] sm:$0xff]
        %v675 = vld [vmem:[%s279 + $0xc48] sm:$0xff]
        %v676 = vld [vmem:[%s279 + $0xc50] sm:$0xff]
        %v677 = vld [vmem:[%s279 + $0xc58] sm:$0xff]
        %v678 = vld [vmem:[%s279 + $0xc60] sm:$0xff]
        %v679 = vld [vmem:[%s279 + $0xc68] sm:$0xff]
        %v680 = vld [vmem:[%s279 + $0xc70] sm:$0xff]
        %v681 = vld [vmem:[%s279 + $0xc78] sm:$0xff]
        %v682 = vld [vmem:[%s279 + $0xc80] sm:$0xff]
        %v683 = vld [vmem:[%s279 + $0xc88] sm:$0xff]
        %v684 = vld [vmem:[%s279 + $0xc90] sm:$0xff]
        %v685 = vld [vmem:[%s279 + $0xc98] sm:$0xff]
        %v686 = vld [vmem:[%s279 + $0xca0] sm:$0xff]
        %v687 = vld [vmem:[%s279 + $0xca8] sm:$0xff]
        %v688 = vld [vmem:[%s279 + $0xcb0] sm:$0xff]
        %v689 = vld [vmem:[%s279 + $0xcb8] sm:$0xff]
        %v690 = vld [vmem:[%s279 + $0xcc0] sm:$0xff]
        %v691 = vld [vmem:[%s279 + $0xcc8] sm:$0xff]
        %v692 = vld [vmem:[%s279 + $0xcd0] sm:$0xff]
        %v693 = vld [vmem:[%s279 + $0xcd8] sm:$0xff]
        %v694 = vld [vmem:[%s279 + $0xce0] sm:$0xff]
        %v695 = vld [vmem:[%s279 + $0xce8] sm:$0xff]
        %v696 = vld [vmem:[%s279 + $0xcf0] sm:$0xff]
        %v697 = vld [vmem:[%s279 + $0xcf8] sm:$0xff]
        %v698 = vld [vmem:[%s279 + $0xd00] sm:$0xff]
        %v699 = vld [vmem:[%s279 + $0xd08] sm:$0xff]
        %v700 = vld [vmem:[%s279 + $0xd10] sm:$0xff]
        %v701 = vld [vmem:[%s279 + $0xd18] sm:$0xff]
        %v702 = vld [vmem:[%s279 + $0xd20] sm:$0xff]
        %v703 = vld [vmem:[%s279 + $0xd28] sm:$0xff]
        %v704 = vld [vmem:[%s279 + $0xd30] sm:$0xff]
        %v705 = vld [vmem:[%s279 + $0xd38] sm:$0xff]
        %v706 = vld [vmem:[%s279 + $0xd40] sm:$0xff]
        %v707 = vld [vmem:[%s279 + $0xd48] sm:$0xff]
        %v708 = vld [vmem:[%s279 + $0xd50] sm:$0xff]
        %v709 = vld [vmem:[%s279 + $0xd58] sm:$0xff]
        %v710 = vld [vmem:[%s279 + $0xd60] sm:$0xff]
        %v711 = vld [vmem:[%s279 + $0xd68] sm:$0xff]
        %v712 = vld [vmem:[%s279 + $0xd70] sm:$0xff]
        %v713 = vld [vmem:[%s279 + $0xd78] sm:$0xff]
        %v714 = vld [vmem:[%s279 + $0xd80] sm:$0xff]
        %v715 = vld [vmem:[%s279 + $0xd88] sm:$0xff]
        %v716 = vld [vmem:[%s279 + $0xd90] sm:$0xff]
        %v717 = vld [vmem:[%s279 + $0xd98] sm:$0xff]
        %v718 = vld [vmem:[%s279 + $0xda0] sm:$0xff]
        %v719 = vld [vmem:[%s279 + $0xda8] sm:$0xff]
        %v720 = vld [vmem:[%s279 + $0xdb0] sm:$0xff]
        %v721 = vld [vmem:[%s279 + $0xdb8] sm:$0xff]
        %v722 = vld [vmem:[%s279 + $0xdc0] sm:$0xff]
        %v723 = vld [vmem:[%s279 + $0xdc8] sm:$0xff]
        %v724 = vld [vmem:[%s279 + $0xdd0] sm:$0xff]
        %v725 = vld [vmem:[%s279 + $0xdd8] sm:$0xff]
        %v726 = vld [vmem:[%s279 + $0xde0] sm:$0xff]
        %v727 = vld [vmem:[%s279 + $0xde8] sm:$0xff]
        %v728 = vld [vmem:[%s279 + $0xdf0] sm:$0xff]
        %v729 = vld [vmem:[%s279 + $0xdf8] sm:$0xff]
        %v730 = vld [vmem:[%s279 + $0xe00] sm:$0xff]
        %v731 = vld [vmem:[%s279 + $0xe08] sm:$0xff]
        %v732 = vld [vmem:[%s279 + $0xe10] sm:$0xff]
        %v733 = vld [vmem:[%s279 + $0xe18] sm:$0xff]
        %v734 = vld [vmem:[%s279 + $0xe20] sm:$0xff]
        %v735 = vld [vmem:[%s279 + $0xe28] sm:$0xff]
        %v736 = vld [vmem:[%s279 + $0xe30] sm:$0xff]
        %v737 = vld [vmem:[%s279 + $0xe38] sm:$0xff]
        %v738 = vld [vmem:[%s279 + $0xe40] sm:$0xff]
        %v739 = vld [vmem:[%s279 + $0xe48] sm:$0xff]
        %v740 = vld [vmem:[%s279 + $0xe50] sm:$0xff]
        %v741 = vld [vmem:[%s279 + $0xe58] sm:$0xff]
        %v742 = vld [vmem:[%s279 + $0xe60] sm:$0xff]
        %v743 = vld [vmem:[%s279 + $0xe68] sm:$0xff]
        %v744 = vld [vmem:[%s279 + $0xe70] sm:$0xff]
        %v745 = vld [vmem:[%s279 + $0xe78] sm:$0xff]
        %v746 = vld [vmem:[%s279 + $0xe80] sm:$0xff]
        %v747 = vld [vmem:[%s279 + $0xe88] sm:$0xff]
        %v748 = vld [vmem:[%s279 + $0xe90] sm:$0xff]
        %v749 = vld [vmem:[%s279 + $0xe98] sm:$0xff]
        %v750 = vld [vmem:[%s279 + $0xea0] sm:$0xff]
        %v751 = vld [vmem:[%s279 + $0xea8] sm:$0xff]
        %v752 = vld [vmem:[%s279 + $0xeb0] sm:$0xff]
        %v753 = vld [vmem:[%s279 + $0xeb8] sm:$0xff]
        %v754 = vld [vmem:[%s279 + $0xec0] sm:$0xff]
        %v755 = vld [vmem:[%s279 + $0xec8] sm:$0xff]
        %v756 = vld [vmem:[%s279 + $0xed0] sm:$0xff]
        %v757 = vld [vmem:[%s279 + $0xed8] sm:$0xff]
        %v758 = vld [vmem:[%s279 + $0xee0] sm:$0xff]
        %v759 = vld [vmem:[%s279 + $0xee8] sm:$0xff]
        %v760 = vld [vmem:[%s279 + $0xef0] sm:$0xff]
        %v761 = vld [vmem:[%s279 + $0xef8] sm:$0xff]
        %v762 = vld [vmem:[%s279 + $0xf00] sm:$0xff]
        %v763 = vld [vmem:[%s279 + $0xf08] sm:$0xff]
        %v764 = vld [vmem:[%s279 + $0xf10] sm:$0xff]
        %v765 = vld [vmem:[%s279 + $0xf18] sm:$0xff]
        %v766 = vld [vmem:[%s279 + $0xf20] sm:$0xff]
        %v767 = vld [vmem:[%s279 + $0xf28] sm:$0xff]
        %v768 = vld [vmem:[%s279 + $0xf30] sm:$0xff]
        %v769 = vld [vmem:[%s279 + $0xf38] sm:$0xff]
        %v770 = vld [vmem:[%s279 + $0xf40] sm:$0xff]
        %v771 = vld [vmem:[%s279 + $0xf48] sm:$0xff]
        %v772 = vld [vmem:[%s279 + $0xf50] sm:$0xff]
        %v773 = vld [vmem:[%s279 + $0xf58] sm:$0xff]
        %v774 = vld [vmem:[%s279 + $0xf60] sm:$0xff]
        %v775 = vld [vmem:[%s279 + $0xf68] sm:$0xff]
        %v776 = vld [vmem:[%s279 + $0xf70] sm:$0xff]
        %v777 = vld [vmem:[%s279 + $0xf78] sm:$0xff]
        %v778 = vld [vmem:[%s279 + $0xf80] sm:$0xff]
        %v779 = vld [vmem:[%s279 + $0xf88] sm:$0xff]
        %v780 = vld [vmem:[%s279 + $0xf90] sm:$0xff]
        %v781 = vld [vmem:[%s279 + $0xf98] sm:$0xff]
        %v782 = vld [vmem:[%s279 + $0xfa0] sm:$0xff]
        %v783 = vld [vmem:[%s279 + $0xfa8] sm:$0xff]
        %v784 = vld [vmem:[%s279 + $0xfb0] sm:$0xff]
        %v785 = vld [vmem:[%s279 + $0xfb8] sm:$0xff]
        %v786 = vld [vmem:[%s279 + $0xfc0] sm:$0xff]
        %v787 = vld [vmem:[%s279 + $0xfc8] sm:$0xff]
        %v788 = vld [vmem:[%s279 + $0xfd0] sm:$0xff]
        %v789 = vld [vmem:[%s279 + $0xfd8] sm:$0xff]
        %v790 = vld [vmem:[%s279 + $0xfe0] sm:$0xff]
        %v791 = vld [vmem:[%s279 + $0xfe8] sm:$0xff]
        %v792 = vld [vmem:[%s279 + $0xff0] sm:$0xff]
        %v793 = vld [vmem:[%s279 + $0xff8] sm:$0xff]
        %v794 = vld [vmem:[%s279 + $0x1000] sm:$0xff]
        %v795 = vld [vmem:[%s279 + $0x1008] sm:$0xff]
        %v796 = vld [vmem:[%s279 + $0x1010] sm:$0xff]
        %v797 = vld [vmem:[%s279 + $0x1018] sm:$0xff]
        %v798 = vld [vmem:[%s279 + $0x1020] sm:$0xff]
        %v799 = vld [vmem:[%s279 + $0x1028] sm:$0xff]
        %v800 = vld [vmem:[%s279 + $0x1030] sm:$0xff]
        %v801 = vld [vmem:[%s279 + $0x1038] sm:$0xff]
        %v802 = vld [vmem:[%s279 + $0x1040] sm:$0xff]
        %v803 = vld [vmem:[%s279 + $0x1048] sm:$0xff]
        %v804 = vld [vmem:[%s279 + $0x1050] sm:$0xff]
        %v805 = vld [vmem:[%s279 + $0x1058] sm:$0xff]
        %v806 = vld [vmem:[%s279 + $0x1060] sm:$0xff]
        %v807 = vld [vmem:[%s279 + $0x1068] sm:$0xff]
        %v808 = vld [vmem:[%s279 + $0x1070] sm:$0xff]
        %v809 = vld [vmem:[%s279 + $0x1078] sm:$0xff]
        %v810 = vld [vmem:[%s279 + $0x1080] sm:$0xff]
        %v811 = vld [vmem:[%s279 + $0x1088] sm:$0xff]
        %v812 = vld [vmem:[%s279 + $0x1090] sm:$0xff]
        %v813 = vld [vmem:[%s279 + $0x1098] sm:$0xff]
        %v814 = vld [vmem:[%s279 + $0x10a0] sm:$0xff]
        %v815 = vld [vmem:[%s279 + $0x10a8] sm:$0xff]
        %v816 = vld [vmem:[%s279 + $0x10b0] sm:$0xff]
        %v817 = vld [vmem:[%s279 + $0x10b8] sm:$0xff]
        %v818 = vld [vmem:[%s279 + $0x10c0] sm:$0xff]
        %v819 = vld [vmem:[%s279 + $0x10c8] sm:$0xff]
        %v820 = vld [vmem:[%s279 + $0x10d0] sm:$0xff]
        %v821 = vld [vmem:[%s279 + $0x10d8] sm:$0xff]
        %v822 = vld [vmem:[%s279 + $0x10e0] sm:$0xff]
        %v823 = vld [vmem:[%s279 + $0x10e8] sm:$0xff]
        %v824 = vld [vmem:[%s279 + $0x10f0] sm:$0xff]
        %v825 = vld [vmem:[%s279 + $0x10f8] sm:$0xff]
        %v826 = vld [vmem:[%s279 + $0x1100] sm:$0xff]
        %v827 = vld [vmem:[%s279 + $0x1108] sm:$0xff]
        %v828 = vld [vmem:[%s279 + $0x1110] sm:$0xff]
        %v829 = vld [vmem:[%s279 + $0x1118] sm:$0xff]
        %v830 = vld [vmem:[%s279 + $0x1120] sm:$0xff]
        %v831 = vld [vmem:[%s279 + $0x1128] sm:$0xff]
        %v832 = vld [vmem:[%s279 + $0x1130] sm:$0xff]
        %v833 = vld [vmem:[%s279 + $0x1138] sm:$0xff]
        %v834 = vld [vmem:[%s279 + $0x1140] sm:$0xff]
        %v835 = vld [vmem:[%s279 + $0x1148] sm:$0xff]
        %v836 = vld [vmem:[%s279 + $0x1150] sm:$0xff]
        %v837 = vld [vmem:[%s279 + $0x1158] sm:$0xff]
        %v838 = vld [vmem:[%s279 + $0x1160] sm:$0xff]
        %v839 = vld [vmem:[%s279 + $0x1168] sm:$0xff]
        %v840 = vld [vmem:[%s279 + $0x1170] sm:$0xff]
        %v841 = vld [vmem:[%s279 + $0x1178] sm:$0xff]
        %v842 = vld [vmem:[%s279 + $0x1180] sm:$0xff]
        %v843 = vld [vmem:[%s279 + $0x1188] sm:$0xff]
        %v844 = vld [vmem:[%s279 + $0x1190] sm:$0xff]
        %v845 = vld [vmem:[%s279 + $0x1198] sm:$0xff]
        %v846 = vld [vmem:[%s279 + $0x11a0] sm:$0xff]
        %v847 = vld [vmem:[%s279 + $0x11a8] sm:$0xff]
        %v848 = vld [vmem:[%s279 + $0x11b0] sm:$0xff]
        %v849 = vld [vmem:[%s279 + $0x11b8] sm:$0xff]
        %v850 = vld [vmem:[%s279 + $0x11c0] sm:$0xff]
        %v851 = vld [vmem:[%s279 + $0x11c8] sm:$0xff]
        %v852 = vld [vmem:[%s279 + $0x11d0] sm:$0xff]
        %v853 = vld [vmem:[%s279 + $0x11d8] sm:$0xff]
        %v854 = vld [vmem:[%s279 + $0x11e0] sm:$0xff]
        %v855 = vld [vmem:[%s279 + $0x11e8] sm:$0xff]
        %v856 = vld [vmem:[%s279 + $0x11f0] sm:$0xff]
        %v857 = vld [vmem:[%s279 + $0x11f8] sm:$0xff]
        %v858 = vld [vmem:[%s279 + $0x1200] sm:$0xff]
        %v859 = vld [vmem:[%s279 + $0x1208] sm:$0xff]
        %v860 = vld [vmem:[%s279 + $0x1210] sm:$0xff]
        %v861 = vld [vmem:[%s279 + $0x1218] sm:$0xff]
        %v862 = vld [vmem:[%s279 + $0x1220] sm:$0xff]
        %v863 = vld [vmem:[%s279 + $0x1228] sm:$0xff]
        %v864 = vld [vmem:[%s279 + $0x1230] sm:$0xff]
        %v865 = vld [vmem:[%s279 + $0x1238] sm:$0xff]
        %v866 = vld [vmem:[%s279 + $0x1240] sm:$0xff]
        %v867 = vld [vmem:[%s279 + $0x1248] sm:$0xff]
        %v868 = vld [vmem:[%s279 + $0x1250] sm:$0xff]
        %v869 = vld [vmem:[%s279 + $0x1258] sm:$0xff]
        %v870 = vld [vmem:[%s279 + $0x1260] sm:$0xff]
        %v871 = vld [vmem:[%s279 + $0x1268] sm:$0xff]
        %v872 = vld [vmem:[%s279 + $0x1270] sm:$0xff]
        %v873 = vld [vmem:[%s279 + $0x1278] sm:$0xff]
        %v874 = vld [vmem:[%s279 + $0x1280] sm:$0xff]
        %v875 = vld [vmem:[%s279 + $0x1288] sm:$0xff]
        %v876 = vld [vmem:[%s279 + $0x1290] sm:$0xff]
        %v877 = vld [vmem:[%s279 + $0x1298] sm:$0xff]
        %v878 = vld [vmem:[%s279 + $0x12a0] sm:$0xff]
        %v879 = vld [vmem:[%s279 + $0x12a8] sm:$0xff]
        %v880 = vld [vmem:[%s279 + $0x12b0] sm:$0xff]
        %v881 = vld [vmem:[%s279 + $0x12b8] sm:$0xff]
        %v882 = vld [vmem:[%s279 + $0x12c0] sm:$0xff]
        %v883 = vld [vmem:[%s279 + $0x12c8] sm:$0xff]
        %v884 = vld [vmem:[%s279 + $0x12d0] sm:$0xff]
        %v885 = vld [vmem:[%s279 + $0x12d8] sm:$0xff]
        %v886 = vld [vmem:[%s279 + $0x12e0] sm:$0xff]
        %v887 = vld [vmem:[%s279 + $0x12e8] sm:$0xff]
        %v888 = vld [vmem:[%s279 + $0x12f0] sm:$0xff]
        %v889 = vld [vmem:[%s279 + $0x12f8] sm:$0xff]
        %v890 = vld [vmem:[%s279 + $0x1300] sm:$0xff]
        %v891 = vld [vmem:[%s279 + $0x1308] sm:$0xff]
        %v892 = vld [vmem:[%s279 + $0x1310] sm:$0xff]
        %v893 = vld [vmem:[%s279 + $0x1318] sm:$0xff]
        %v894 = vld [vmem:[%s279 + $0x1320] sm:$0xff]
        %v895 = vld [vmem:[%s279 + $0x1328] sm:$0xff]
        %v896 = vld [vmem:[%s279 + $0x1330] sm:$0xff]
        %v897 = vld [vmem:[%s279 + $0x1338] sm:$0xff]
        %v898 = vld [vmem:[%s279 + $0x1340] sm:$0xff]
        %v899 = vld [vmem:[%s279 + $0x1348] sm:$0xff]
        %v900 = vld [vmem:[%s279 + $0x1350] sm:$0xff]
        %v901 = vld [vmem:[%s279 + $0x1358] sm:$0xff]
        %v902 = vld [vmem:[%s279 + $0x1360] sm:$0xff]
        %v903 = vld [vmem:[%s279 + $0x1368] sm:$0xff]
        %v904 = vld [vmem:[%s279 + $0x1370] sm:$0xff]
        %v905 = vld [vmem:[%s279 + $0x1378] sm:$0xff]
        %v906 = vld [vmem:[%s279 + $0x1380] sm:$0xff]
        %v907 = vld [vmem:[%s279 + $0x1388] sm:$0xff]
        %v908 = vld [vmem:[%s279 + $0x1390] sm:$0xff]
        %v909 = vld [vmem:[%s279 + $0x1398] sm:$0xff]
        %v910 = vld [vmem:[%s279 + $0x13a0] sm:$0xff]
        %v911 = vld [vmem:[%s279 + $0x13a8] sm:$0xff]
        %v912 = vld [vmem:[%s279 + $0x13b0] sm:$0xff]
        %v913 = vld [vmem:[%s279 + $0x13b8] sm:$0xff]
        %v914 = vld [vmem:[%s279 + $0x13c0] sm:$0xff]
        %v915 = vld [vmem:[%s279 + $0x13c8] sm:$0xff]
        %v916 = vld [vmem:[%s279 + $0x13d0] sm:$0xff]
        %v917 = vld [vmem:[%s279 + $0x13d8] sm:$0xff]
        %v918 = vld [vmem:[%s279 + $0x13e0] sm:$0xff]
        %v919 = vld [vmem:[%s279 + $0x13e8] sm:$0xff]
        %v920 = vld [vmem:[%s279 + $0x13f0] sm:$0xff]
        %v921 = vld [vmem:[%s279 + $0x13f8] sm:$0xff]
        %v922 = vld [vmem:[%s279 + $0x1400] sm:$0xff]
        %v923 = vld [vmem:[%s279 + $0x1408] sm:$0xff]
        %v924 = vld [vmem:[%s279 + $0x1410] sm:$0xff]
        %v925 = vld [vmem:[%s279 + $0x1418] sm:$0xff]
        %v926 = vld [vmem:[%s279 + $0x1420] sm:$0xff]
        %v927 = vld [vmem:[%s279 + $0x1428] sm:$0xff]
        %v928 = vld [vmem:[%s279 + $0x1430] sm:$0xff]
        %v929 = vld [vmem:[%s279 + $0x1438] sm:$0xff]
        %v930 = vld [vmem:[%s279 + $0x1440] sm:$0xff]
        %v931 = vld [vmem:[%s279 + $0x1448] sm:$0xff]
        %v932 = vld [vmem:[%s279 + $0x1450] sm:$0xff]
        %v933 = vld [vmem:[%s279 + $0x1458] sm:$0xff]
        %v934 = vld [vmem:[%s279 + $0x1460] sm:$0xff]
        %v935 = vld [vmem:[%s279 + $0x1468] sm:$0xff]
        %v936 = vld [vmem:[%s279 + $0x1470] sm:$0xff]
        %v937 = vld [vmem:[%s279 + $0x1478] sm:$0xff]
        %v938 = vld [vmem:[%s279 + $0x1480] sm:$0xff]
        %v939 = vld [vmem:[%s279 + $0x1488] sm:$0xff]
        %v940 = vld [vmem:[%s279 + $0x1490] sm:$0xff]
        %v941 = vld [vmem:[%s279 + $0x1498] sm:$0xff]
        %v942 = vld [vmem:[%s279 + $0x14a0] sm:$0xff]
        %v943 = vld [vmem:[%s279 + $0x14a8] sm:$0xff]
        %v944 = vld [vmem:[%s279 + $0x14b0] sm:$0xff]
        %v945 = vld [vmem:[%s279 + $0x14b8] sm:$0xff]
        %v946 = vld [vmem:[%s279 + $0x14c0] sm:$0xff]
        %v947 = vld [vmem:[%s279 + $0x14c8] sm:$0xff]
        %v948 = vld [vmem:[%s279 + $0x14d0] sm:$0xff]
        %v949 = vld [vmem:[%s279 + $0x14d8] sm:$0xff]
        %v950 = vld [vmem:[%s279 + $0x14e0] sm:$0xff]
        %v951 = vld [vmem:[%s279 + $0x14e8] sm:$0xff]
        %v952 = vld [vmem:[%s279 + $0x14f0] sm:$0xff]
        %v953 = vld [vmem:[%s279 + $0x14f8] sm:$0xff]
        %v954 = vld [vmem:[%s279 + $0x1500] sm:$0xff]
        %v955 = vld [vmem:[%s279 + $0x1508] sm:$0xff]
        %v956 = vld [vmem:[%s279 + $0x1510] sm:$0xff]
        %v957 = vld [vmem:[%s279 + $0x1518] sm:$0xff]
        %v958 = vld [vmem:[%s279 + $0x1520] sm:$0xff]
        %v959 = vld [vmem:[%s279 + $0x1528] sm:$0xff]
        %v960 = vld [vmem:[%s279 + $0x1530] sm:$0xff]
        %v961 = vld [vmem:[%s279 + $0x1538] sm:$0xff]
        %v962 = vld [vmem:[%s279 + $0x1540] sm:$0xff]
        %v963 = vld [vmem:[%s279 + $0x1548] sm:$0xff]
        %v964 = vld [vmem:[%s279 + $0x1550] sm:$0xff]
        %v965 = vld [vmem:[%s279 + $0x1558] sm:$0xff]
        %v966 = vld [vmem:[%s279 + $0x1560] sm:$0xff]
        %v967 = vld [vmem:[%s279 + $0x1568] sm:$0xff]
        %v968 = vld [vmem:[%s279 + $0x1570] sm:$0xff]
        %v969 = vld [vmem:[%s279 + $0x1578] sm:$0xff]
        %v970 = vld [vmem:[%s279 + $0x1580] sm:$0xff]
        %v971 = vld [vmem:[%s279 + $0x1588] sm:$0xff]
        %v972 = vld [vmem:[%s279 + $0x1590] sm:$0xff]
        %v973 = vld [vmem:[%s279 + $0x1598] sm:$0xff]
        %v974 = vld [vmem:[%s279 + $0x15a0] sm:$0xff]
        %v975 = vld [vmem:[%s279 + $0x15a8] sm:$0xff]
        %v976 = vld [vmem:[%s279 + $0x15b0] sm:$0xff]
        %v977 = vld [vmem:[%s279 + $0x15b8] sm:$0xff]
        %v978 = vld [vmem:[%s279 + $0x15c0] sm:$0xff]
        %v979 = vld [vmem:[%s279 + $0x15c8] sm:$0xff]
        %v980 = vld [vmem:[%s279 + $0x15d0] sm:$0xff]
        %v981 = vld [vmem:[%s279 + $0x15d8] sm:$0xff]
        %v982 = vld [vmem:[%s279 + $0x15e0] sm:$0xff]
        %v983 = vld [vmem:[%s279 + $0x15e8] sm:$0xff]
        %v984 = vld [vmem:[%s279 + $0x15f0] sm:$0xff]
        %v985 = vld [vmem:[%s279 + $0x15f8] sm:$0xff]
        %v986 = vld [vmem:[%s279 + $0x1600] sm:$0xff]
        %v987 = vld [vmem:[%s279 + $0x1608] sm:$0xff]
        %v988 = vld [vmem:[%s279 + $0x1610] sm:$0xff]
        %v989 = vld [vmem:[%s279 + $0x1618] sm:$0xff]
        %v990 = vld [vmem:[%s279 + $0x1620] sm:$0xff]
        %v991 = vld [vmem:[%s279 + $0x1628] sm:$0xff]
        %v992 = vld [vmem:[%s279 + $0x1630] sm:$0xff]
        %v993 = vld [vmem:[%s279 + $0x1638] sm:$0xff]
        %v994 = vld [vmem:[%s279 + $0x1640] sm:$0xff]
        %v995 = vld [vmem:[%s279 + $0x1648] sm:$0xff]
        %v996 = vld [vmem:[%s279 + $0x1650] sm:$0xff]
        %v997 = vld [vmem:[%s279 + $0x1658] sm:$0xff]
        %v998 = vld [vmem:[%s279 + $0x1660] sm:$0xff]
        %v999 = vld [vmem:[%s279 + $0x1668] sm:$0xff]
        %v1000 = vld [vmem:[%s279 + $0x1670] sm:$0xff]
        %v1001 = vld [vmem:[%s279 + $0x1678] sm:$0xff]
        %v1002 = vld [vmem:[%s279 + $0x1680] sm:$0xff]
        %v1003 = vld [vmem:[%s279 + $0x1688] sm:$0xff]
        %v1004 = vld [vmem:[%s279 + $0x1690] sm:$0xff]
        %v1005 = vld [vmem:[%s279 + $0x1698] sm:$0xff]
        %v1006 = vld [vmem:[%s279 + $0x16a0] sm:$0xff]
        %v1007 = vld [vmem:[%s279 + $0x16a8] sm:$0xff]
        %v1008 = vld [vmem:[%s279 + $0x16b0] sm:$0xff]
        %v1009 = vld [vmem:[%s279 + $0x16b8] sm:$0xff]
        %v1010 = vld [vmem:[%s279 + $0x16c0] sm:$0xff]
        %v1011 = vld [vmem:[%s279 + $0x16c8] sm:$0xff]
        %v1012 = vld [vmem:[%s279 + $0x16d0] sm:$0xff]
        %v1013 = vld [vmem:[%s279 + $0x16d8] sm:$0xff]
        %v1014 = vld [vmem:[%s279 + $0x16e0] sm:$0xff]
        %v1015 = vld [vmem:[%s279 + $0x16e8] sm:$0xff]
        %v1016 = vld [vmem:[%s279 + $0x16f0] sm:$0xff]
        %v1017 = vld [vmem:[%s279 + $0x16f8] sm:$0xff]
        %v1018 = vld [vmem:[%s279 + $0x1700] sm:$0xff]
        %v1019 = vld [vmem:[%s279 + $0x1708] sm:$0xff]
        %v1020 = vld [vmem:[%s279 + $0x1710] sm:$0xff]
        %v1021 = vld [vmem:[%s279 + $0x1718] sm:$0xff]
        %v1022 = vld [vmem:[%s279 + $0x1720] sm:$0xff]
        %v1023 = vld [vmem:[%s279 + $0x1728] sm:$0xff]
        %v1024 = vld [vmem:[%s279 + $0x1730] sm:$0xff]
        %v1025 = vld [vmem:[%s279 + $0x1738] sm:$0xff]
        %v1026 = vld [vmem:[%s279 + $0x1740] sm:$0xff]
        %v1027 = vld [vmem:[%s279 + $0x1748] sm:$0xff]
        %v1028 = vld [vmem:[%s279 + $0x1750] sm:$0xff]
        %v1029 = vld [vmem:[%s279 + $0x1758] sm:$0xff]
        %v1030 = vld [vmem:[%s279 + $0x1760] sm:$0xff]
        %v1031 = vld [vmem:[%s279 + $0x1768] sm:$0xff]
        %v1032 = vld [vmem:[%s279 + $0x1770] sm:$0xff]
        %v1033 = vld [vmem:[%s279 + $0x1778] sm:$0xff]
        %v1034 = vld [vmem:[%s279 + $0x1780] sm:$0xff]
        %v1035 = vld [vmem:[%s279 + $0x1788] sm:$0xff]
        %v1036 = vld [vmem:[%s279 + $0x1790] sm:$0xff]
        %v1037 = vld [vmem:[%s279 + $0x1798] sm:$0xff]
        %v1038 = vld [vmem:[%s279 + $0x17a0] sm:$0xff]
        %v1039 = vld [vmem:[%s279 + $0x17a8] sm:$0xff]
        %v1040 = vld [vmem:[%s279 + $0x17b0] sm:$0xff]
        %v1041 = vld [vmem:[%s279 + $0x17b8] sm:$0xff]
        %v1042 = vld [vmem:[%s279 + $0x17c0] sm:$0xff]
        %v1043 = vld [vmem:[%s279 + $0x17c8] sm:$0xff]
        %v1044 = vld [vmem:[%s279 + $0x17d0] sm:$0xff]
        %v1045 = vld [vmem:[%s279 + $0x17d8] sm:$0xff]
        %v1046 = vld [vmem:[%s279 + $0x17e0] sm:$0xff]
        %v1047 = vld [vmem:[%s279 + $0x17e8] sm:$0xff]
        %v1048 = vld [vmem:[%s279 + $0x17f0] sm:$0xff]
        %v1049 = vld [vmem:[%s279 + $0x17f8] sm:$0xff]
        %v1050 = vld [vmem:[%s279 + $0x1800] sm:$0xff]
        %v1051 = vld [vmem:[%s279 + $0x1808] sm:$0xff]
        %v1052 = vld [vmem:[%s279 + $0x1810] sm:$0xff]
        %v1053 = vld [vmem:[%s279 + $0x1818] sm:$0xff]
        %v1054 = vld [vmem:[%s279 + $0x1820] sm:$0xff]
        %v1055 = vld [vmem:[%s279 + $0x1828] sm:$0xff]
        %v1056 = vld [vmem:[%s279 + $0x1830] sm:$0xff]
        %v1057 = vld [vmem:[%s279 + $0x1838] sm:$0xff]
        %v1058 = vld [vmem:[%s279 + $0x1840] sm:$0xff]
        %v1059 = vld [vmem:[%s279 + $0x1848] sm:$0xff]
        %v1060 = vld [vmem:[%s279 + $0x1850] sm:$0xff]
        %v1061 = vld [vmem:[%s279 + $0x1858] sm:$0xff]
        %v1062 = vld [vmem:[%s279 + $0x1860] sm:$0xff]
        %v1063 = vld [vmem:[%s279 + $0x1868] sm:$0xff]
        %v1064 = vld [vmem:[%s279 + $0x1870] sm:$0xff]
        %v1065 = vld [vmem:[%s279 + $0x1878] sm:$0xff]
        %v1066 = vld [vmem:[%s279 + $0x1880] sm:$0xff]
        %v1067 = vld [vmem:[%s279 + $0x1888] sm:$0xff]
        %v1068 = vld [vmem:[%s279 + $0x1890] sm:$0xff]
        %v1069 = vld [vmem:[%s279 + $0x1898] sm:$0xff]
        %v1070 = vld [vmem:[%s279 + $0x18a0] sm:$0xff]
        %v1071 = vld [vmem:[%s279 + $0x18a8] sm:$0xff]
        %v1072 = vld [vmem:[%s279 + $0x18b0] sm:$0xff]
        %v1073 = vld [vmem:[%s279 + $0x18b8] sm:$0xff]
        %v1074 = vld [vmem:[%s279 + $0x18c0] sm:$0xff]
        %v1075 = vld [vmem:[%s279 + $0x18c8] sm:$0xff]
        %v1076 = vld [vmem:[%s279 + $0x18d0] sm:$0xff]
        %v1077 = vld [vmem:[%s279 + $0x18d8] sm:$0xff]
        %v1078 = vld [vmem:[%s279 + $0x18e0] sm:$0xff]
        %v1079 = vld [vmem:[%s279 + $0x18e8] sm:$0xff]
        %v1080 = vld [vmem:[%s279 + $0x18f0] sm:$0xff]
        %v1081 = vld [vmem:[%s279 + $0x18f8] sm:$0xff]
        %v1082 = vld [vmem:[%s279 + $0x1900] sm:$0xff]
        %v1083 = vld [vmem:[%s279 + $0x1908] sm:$0xff]
        %v1084 = vld [vmem:[%s279 + $0x1910] sm:$0xff]
        %v1085 = vld [vmem:[%s279 + $0x1918] sm:$0xff]
        %v1086 = vld [vmem:[%s279 + $0x1920] sm:$0xff]
        %v1087 = vld [vmem:[%s279 + $0x1928] sm:$0xff]
        %v1088 = vld [vmem:[%s279 + $0x1930] sm:$0xff]
        %v1089 = vld [vmem:[%s279 + $0x1938] sm:$0xff]
        %v1090 = vld [vmem:[%s279 + $0x1940] sm:$0xff]
        %v1091 = vld [vmem:[%s279 + $0x1948] sm:$0xff]
        %v1092 = vld [vmem:[%s279 + $0x1950] sm:$0xff]
        %v1093 = vld [vmem:[%s279 + $0x1958] sm:$0xff]
        %v1094 = vld [vmem:[%s279 + $0x1960] sm:$0xff]
        %v1095 = vld [vmem:[%s279 + $0x1968] sm:$0xff]
        %v1096 = vld [vmem:[%s279 + $0x1970] sm:$0xff]
        %v1097 = vld [vmem:[%s279 + $0x1978] sm:$0xff]
        %v1098 = vld [vmem:[%s279 + $0x1980] sm:$0xff]
        %v1099 = vld [vmem:[%s279 + $0x1988] sm:$0xff]
        %v1100 = vld [vmem:[%s279 + $0x1990] sm:$0xff]
        %v1101 = vld [vmem:[%s279 + $0x1998] sm:$0xff]
        %v1102 = vld [vmem:[%s279 + $0x19a0] sm:$0xff]
        %v1103 = vld [vmem:[%s279 + $0x19a8] sm:$0xff]
        %v1104 = vld [vmem:[%s279 + $0x19b0] sm:$0xff]
        %v1105 = vld [vmem:[%s279 + $0x19b8] sm:$0xff]
        %v1106 = vld [vmem:[%s279 + $0x19c0] sm:$0xff]
        %v1107 = vld [vmem:[%s279 + $0x19c8] sm:$0xff]
        %v1108 = vld [vmem:[%s279 + $0x19d0] sm:$0xff]
        %v1109 = vld [vmem:[%s279 + $0x19d8] sm:$0xff]
        %v1110 = vld [vmem:[%s279 + $0x19e0] sm:$0xff]
        %v1111 = vld [vmem:[%s279 + $0x19e8] sm:$0xff]
        %v1112 = vld [vmem:[%s279 + $0x19f0] sm:$0xff]
        %v1113 = vld [vmem:[%s279 + $0x19f8] sm:$0xff]
        %v1114 = vld [vmem:[%s279 + $0x1a00] sm:$0xff]
        %v1115 = vld [vmem:[%s279 + $0x1a08] sm:$0xff]
        %v1116 = vld [vmem:[%s279 + $0x1a10] sm:$0xff]
        %v1117 = vld [vmem:[%s279 + $0x1a18] sm:$0xff]
        %v1118 = vld [vmem:[%s279 + $0x1a20] sm:$0xff]
        %v1119 = vld [vmem:[%s279 + $0x1a28] sm:$0xff]
        %v1120 = vld [vmem:[%s279 + $0x1a30] sm:$0xff]
        %v1121 = vld [vmem:[%s279 + $0x1a38] sm:$0xff]
        %v1122 = vld [vmem:[%s279 + $0x1a40] sm:$0xff]
        %v1123 = vld [vmem:[%s279 + $0x1a48] sm:$0xff]
        %v1124 = vld [vmem:[%s279 + $0x1a50] sm:$0xff]
        %v1125 = vld [vmem:[%s279 + $0x1a58] sm:$0xff]
        %v1126 = vld [vmem:[%s279 + $0x1a60] sm:$0xff]
        %v1127 = vld [vmem:[%s279 + $0x1a68] sm:$0xff]
        %v1128 = vld [vmem:[%s279 + $0x1a70] sm:$0xff]
        %v1129 = vld [vmem:[%s279 + $0x1a78] sm:$0xff]
        %v1130 = vld [vmem:[%s279 + $0x1a80] sm:$0xff]
        %v1131 = vld [vmem:[%s279 + $0x1a88] sm:$0xff]
        %v1132 = vld [vmem:[%s279 + $0x1a90] sm:$0xff]
        %v1133 = vld [vmem:[%s279 + $0x1a98] sm:$0xff]
        %v1134 = vld [vmem:[%s279 + $0x1aa0] sm:$0xff]
        %v1135 = vld [vmem:[%s279 + $0x1aa8] sm:$0xff]
        %v1136 = vld [vmem:[%s279 + $0x1ab0] sm:$0xff]
        %v1137 = vld [vmem:[%s279 + $0x1ab8] sm:$0xff]
        %v1138 = vld [vmem:[%s279 + $0x1ac0] sm:$0xff]
        %v1139 = vld [vmem:[%s279 + $0x1ac8] sm:$0xff]
        %v1140 = vld [vmem:[%s279 + $0x1ad0] sm:$0xff]
        %v1141 = vld [vmem:[%s279 + $0x1ad8] sm:$0xff]
        %v1142 = vld [vmem:[%s279 + $0x1ae0] sm:$0xff]
        %v1143 = vld [vmem:[%s279 + $0x1ae8] sm:$0xff]
        %v1144 = vld [vmem:[%s279 + $0x1af0] sm:$0xff]
        %v1145 = vld [vmem:[%s279 + $0x1af8] sm:$0xff]
        %v1146 = vld [vmem:[%s279 + $0x1b00] sm:$0xff]
        %v1147 = vld [vmem:[%s279 + $0x1b08] sm:$0xff]
        %v1148 = vld [vmem:[%s279 + $0x1b10] sm:$0xff]
        %v1149 = vld [vmem:[%s279 + $0x1b18] sm:$0xff]
        %v1150 = vld [vmem:[%s279 + $0x1b20] sm:$0xff]
        %v1151 = vld [vmem:[%s279 + $0x1b28] sm:$0xff]
        %v1152 = vld [vmem:[%s279 + $0x1b30] sm:$0xff]
        %v1153 = vld [vmem:[%s279 + $0x1b38] sm:$0xff]
        %v1154 = vld [vmem:[%s279 + $0x1b40] sm:$0xff]
        %v1155 = vld [vmem:[%s279 + $0x1b48] sm:$0xff]
        %v1156 = vld [vmem:[%s279 + $0x1b50] sm:$0xff]
        %v1157 = vld [vmem:[%s279 + $0x1b58] sm:$0xff]
        %v1158 = vld [vmem:[%s279 + $0x1b60] sm:$0xff]
        %v1159 = vld [vmem:[%s279 + $0x1b68] sm:$0xff]
        %v1160 = vld [vmem:[%s279 + $0x1b70] sm:$0xff]
        %v1161 = vld [vmem:[%s279 + $0x1b78] sm:$0xff]
        %v1162 = vld [vmem:[%s279 + $0x1b80] sm:$0xff]
        %v1163 = vld [vmem:[%s279 + $0x1b88] sm:$0xff]
        %v1164 = vld [vmem:[%s279 + $0x1b90] sm:$0xff]
        %v1165 = vld [vmem:[%s279 + $0x1b98] sm:$0xff]
        %v1166 = vld [vmem:[%s279 + $0x1ba0] sm:$0xff]
        %v1167 = vld [vmem:[%s279 + $0x1ba8] sm:$0xff]
        %v1168 = vld [vmem:[%s279 + $0x1bb0] sm:$0xff]
        %v1169 = vld [vmem:[%s279 + $0x1bb8] sm:$0xff]
        %v1170 = vld [vmem:[%s279 + $0x1bc0] sm:$0xff]
        %v1171 = vld [vmem:[%s279 + $0x1bc8] sm:$0xff]
        %v1172 = vld [vmem:[%s279 + $0x1bd0] sm:$0xff]
        %v1173 = vld [vmem:[%s279 + $0x1bd8] sm:$0xff]
        %v1174 = vld [vmem:[%s279 + $0x1be0] sm:$0xff]
        %v1175 = vld [vmem:[%s279 + $0x1be8] sm:$0xff]
        %v1176 = vld [vmem:[%s279 + $0x1bf0] sm:$0xff]
        %v1177 = vld [vmem:[%s279 + $0x1bf8] sm:$0xff]
        %v1178 = vld [vmem:[%s279 + $0x1c00] sm:$0xff]
        %v1179 = vld [vmem:[%s279 + $0x1c08] sm:$0xff]
        %v1180 = vld [vmem:[%s279 + $0x1c10] sm:$0xff]
        %v1181 = vld [vmem:[%s279 + $0x1c18] sm:$0xff]
        %v1182 = vld [vmem:[%s279 + $0x1c20] sm:$0xff]
        %v1183 = vld [vmem:[%s279 + $0x1c28] sm:$0xff]
        %v1184 = vld [vmem:[%s279 + $0x1c30] sm:$0xff]
        %v1185 = vld [vmem:[%s279 + $0x1c38] sm:$0xff]
        %v1186 = vld [vmem:[%s279 + $0x1c40] sm:$0xff]
        %v1187 = vld [vmem:[%s279 + $0x1c48] sm:$0xff]
        %v1188 = vld [vmem:[%s279 + $0x1c50] sm:$0xff]
        %v1189 = vld [vmem:[%s279 + $0x1c58] sm:$0xff]
        %v1190 = vld [vmem:[%s279 + $0x1c60] sm:$0xff]
        %v1191 = vld [vmem:[%s279 + $0x1c68] sm:$0xff]
        %v1192 = vld [vmem:[%s279 + $0x1c70] sm:$0xff]
        %v1193 = vld [vmem:[%s279 + $0x1c78] sm:$0xff]
        %v1194 = vld [vmem:[%s279 + $0x1c80] sm:$0xff]
        %v1195 = vld [vmem:[%s279 + $0x1c88] sm:$0xff]
        %v1196 = vld [vmem:[%s279 + $0x1c90] sm:$0xff]
        %v1197 = vld [vmem:[%s279 + $0x1c98] sm:$0xff]
        %v1198 = vld [vmem:[%s279 + $0x1ca0] sm:$0xff]
        %v1199 = vld [vmem:[%s279 + $0x1ca8] sm:$0xff]
        %v1200 = vld [vmem:[%s279 + $0x1cb0] sm:$0xff]
        %v1201 = vld [vmem:[%s279 + $0x1cb8] sm:$0xff]
        %v1202 = vld [vmem:[%s279 + $0x1cc0] sm:$0xff]
        %v1203 = vld [vmem:[%s279 + $0x1cc8] sm:$0xff]
        %v1204 = vld [vmem:[%s279 + $0x1cd0] sm:$0xff]
        %v1205 = vld [vmem:[%s279 + $0x1cd8] sm:$0xff]
        %v1206 = vld [vmem:[%s279 + $0x1ce0] sm:$0xff]
        %v1207 = vld [vmem:[%s279 + $0x1ce8] sm:$0xff]
        %v1208 = vld [vmem:[%s279 + $0x1cf0] sm:$0xff]
        %v1209 = vld [vmem:[%s279 + $0x1cf8] sm:$0xff]
        %v1210 = vld [vmem:[%s279 + $0x1d00] sm:$0xff]
        %v1211 = vld [vmem:[%s279 + $0x1d08] sm:$0xff]
        %v1212 = vld [vmem:[%s279 + $0x1d10] sm:$0xff]
        %v1213 = vld [vmem:[%s279 + $0x1d18] sm:$0xff]
        %v1214 = vld [vmem:[%s279 + $0x1d20] sm:$0xff]
        %v1215 = vld [vmem:[%s279 + $0x1d28] sm:$0xff]
        %v1216 = vld [vmem:[%s279 + $0x1d30] sm:$0xff]
        %v1217 = vld [vmem:[%s279 + $0x1d38] sm:$0xff]
        %v1218 = vld [vmem:[%s279 + $0x1d40] sm:$0xff]
        %v1219 = vld [vmem:[%s279 + $0x1d48] sm:$0xff]
        %v1220 = vld [vmem:[%s279 + $0x1d50] sm:$0xff]
        %v1221 = vld [vmem:[%s279 + $0x1d58] sm:$0xff]
        %v1222 = vld [vmem:[%s279 + $0x1d60] sm:$0xff]
        %v1223 = vld [vmem:[%s279 + $0x1d68] sm:$0xff]
        %v1224 = vld [vmem:[%s279 + $0x1d70] sm:$0xff]
        %v1225 = vld [vmem:[%s279 + $0x1d78] sm:$0xff]
        %v1226 = vld [vmem:[%s279 + $0x1d80] sm:$0xff]
        %v1227 = vld [vmem:[%s279 + $0x1d88] sm:$0xff]
        %v1228 = vld [vmem:[%s279 + $0x1d90] sm:$0xff]
        %v1229 = vld [vmem:[%s279 + $0x1d98] sm:$0xff]
        %v1230 = vld [vmem:[%s279 + $0x1da0] sm:$0xff]
        %v1231 = vld [vmem:[%s279 + $0x1da8] sm:$0xff]
        %v1232 = vld [vmem:[%s279 + $0x1db0] sm:$0xff]
        %v1233 = vld [vmem:[%s279 + $0x1db8] sm:$0xff]
        %v1234 = vld [vmem:[%s279 + $0x1dc0] sm:$0xff]
        %v1235 = vld [vmem:[%s279 + $0x1dc8] sm:$0xff]
        %v1236 = vld [vmem:[%s279 + $0x1dd0] sm:$0xff]
        %v1237 = vld [vmem:[%s279 + $0x1dd8] sm:$0xff]
        %v1238 = vld [vmem:[%s279 + $0x1de0] sm:$0xff]
        %v1239 = vld [vmem:[%s279 + $0x1de8] sm:$0xff]
        %v1240 = vld [vmem:[%s279 + $0x1df0] sm:$0xff]
        %v1241 = vld [vmem:[%s279 + $0x1df8] sm:$0xff]
        %v1242 = vld [vmem:[%s279 + $0x1e00] sm:$0xff]
        %v1243 = vld [vmem:[%s279 + $0x1e08] sm:$0xff]
        %v1244 = vld [vmem:[%s279 + $0x1e10] sm:$0xff]
        %v1245 = vld [vmem:[%s279 + $0x1e18] sm:$0xff]
        %v1246 = vld [vmem:[%s279 + $0x1e20] sm:$0xff]
        %v1247 = vld [vmem:[%s279 + $0x1e28] sm:$0xff]
        %v1248 = vld [vmem:[%s279 + $0x1e30] sm:$0xff]
        %v1249 = vld [vmem:[%s279 + $0x1e38] sm:$0xff]
        %v1250 = vld [vmem:[%s279 + $0x1e40] sm:$0xff]
        %v1251 = vld [vmem:[%s279 + $0x1e48] sm:$0xff]
        %v1252 = vld [vmem:[%s279 + $0x1e50] sm:$0xff]
        %v1253 = vld [vmem:[%s279 + $0x1e58] sm:$0xff]
        %v1254 = vld [vmem:[%s279 + $0x1e60] sm:$0xff]
        %v1255 = vld [vmem:[%s279 + $0x1e68] sm:$0xff]
        %v1256 = vld [vmem:[%s279 + $0x1e70] sm:$0xff]
        %v1257 = vld [vmem:[%s279 + $0x1e78] sm:$0xff]
        %v1258 = vld [vmem:[%s279 + $0x1e80] sm:$0xff]
        %v1259 = vld [vmem:[%s279 + $0x1e88] sm:$0xff]
        %v1260 = vld [vmem:[%s279 + $0x1e90] sm:$0xff]
        %v1261 = vld [vmem:[%s279 + $0x1e98] sm:$0xff]
        %v1262 = vld [vmem:[%s279 + $0x1ea0] sm:$0xff]
        %v1263 = vld [vmem:[%s279 + $0x1ea8] sm:$0xff]
        %v1264 = vld [vmem:[%s279 + $0x1eb0] sm:$0xff]
        %v1265 = vld [vmem:[%s279 + $0x1eb8] sm:$0xff]
        %v1266 = vld [vmem:[%s279 + $0x1ec0] sm:$0xff]
        %v1267 = vld [vmem:[%s279 + $0x1ec8] sm:$0xff]
        %v1268 = vld [vmem:[%s279 + $0x1ed0] sm:$0xff]
        %v1269 = vld [vmem:[%s279 + $0x1ed8] sm:$0xff]
        %v1270 = vld [vmem:[%s279 + $0x1ee0] sm:$0xff]
        %v1271 = vld [vmem:[%s279 + $0x1ee8] sm:$0xff]
        %v1272 = vld [vmem:[%s279 + $0x1ef0] sm:$0xff]
        %v1273 = vld [vmem:[%s279 + $0x1ef8] sm:$0xff]
        %v1274 = vld [vmem:[%s279 + $0x1f00] sm:$0xff]
        %v1275 = vld [vmem:[%s279 + $0x1f08] sm:$0xff]
        %v1276 = vld [vmem:[%s279 + $0x1f10] sm:$0xff]
        %v1277 = vld [vmem:[%s279 + $0x1f18] sm:$0xff]
        %v1278 = vld [vmem:[%s279 + $0x1f20] sm:$0xff]
        %v1279 = vld [vmem:[%s279 + $0x1f28] sm:$0xff]
        %v1280 = vld [vmem:[%s279 + $0x1f30] sm:$0xff]
        %v1281 = vld [vmem:[%s279 + $0x1f38] sm:$0xff]
        %v1282 = vld [vmem:[%s279 + $0x1f40] sm:$0xff]
        %v1283 = vld [vmem:[%s279 + $0x1f48] sm:$0xff]
        %v1284 = vld [vmem:[%s279 + $0x1f50] sm:$0xff]
        %v1285 = vld [vmem:[%s279 + $0x1f58] sm:$0xff]
        %v1286 = vld [vmem:[%s279 + $0x1f60] sm:$0xff]
        %v1287 = vld [vmem:[%s279 + $0x1f68] sm:$0xff]
        %v1288 = vld [vmem:[%s279 + $0x1f70] sm:$0xff]
        %v1289 = vld [vmem:[%s279 + $0x1f78] sm:$0xff]
        %v1290 = vld [vmem:[%s279 + $0x1f80] sm:$0xff]
        %v1291 = vld [vmem:[%s279 + $0x1f88] sm:$0xff]
        %v1292 = vld [vmem:[%s279 + $0x1f90] sm:$0xff]
        %v1293 = vld [vmem:[%s279 + $0x1f98] sm:$0xff]
        %v1294 = vld [vmem:[%s279 + $0x1fa0] sm:$0xff]
        %v1295 = vld [vmem:[%s279 + $0x1fa8] sm:$0xff]
        %v1296 = vld [vmem:[%s279 + $0x1fb0] sm:$0xff]
        %v1297 = vld [vmem:[%s279 + $0x1fb8] sm:$0xff]
        %v1298 = vld [vmem:[%s279 + $0x1fc0] sm:$0xff]
        %v1299 = vld [vmem:[%s279 + $0x1fc8] sm:$0xff]
        %v1300 = vld [vmem:[%s279 + $0x1fd0] sm:$0xff]
        %v1301 = vld [vmem:[%s279 + $0x1fd8] sm:$0xff]
        %v1302 = vld [vmem:[%s279 + $0x1fe0] sm:$0xff]
        %v1303 = vld [vmem:[%s279 + $0x1fe8] sm:$0xff]
        %v1304 = vld [vmem:[%s279 + $0x1ff0] sm:$0xff]
        %v1305 = vld [vmem:[%s279 + $0x1ff8] sm:$0xff]
        %v1306 = vld [vmem:[%s1] sm:$0xff]
        %v1307 = vld [vmem:[%s1 + $0x8] sm:$0xff]
        %v1308 = vld [vmem:[%s2] sm:$0xff]
        %v1309 = vld [vmem:[%s2 + $0x8] sm:$0xff]
        %1311 = vset.pattern.permute.xlu0 0
        %1312 = vperm.xlu0 %1311, %v1308
        %v1313 = vpop.permute.xlu0 %1312
        %1316 = vset.pattern.permute.xlu0 0
        %1317 = vperm.xlu0 %1316, %v1309
        %v1318 = vpop.permute.xlu0 %1317
        %vm1320 = vcmask 261120
        %v1322 = vsel %vm1320, %v1306, 0
        %v1325 = vsel %vm1320, %v1307, 0
        %v1328 = vsel %vm1320, %v282, 0
        %v1331 = vsel %vm1320, %v283, 0
        %v1334 = vsel %vm1320, %v284, 0
        %v1337 = vsel %vm1320, %v285, 0
        %v1340 = vsel %vm1320, %v286, 0
        %v1343 = vsel %vm1320, %v287, 0
        %v1346 = vsel %vm1320, %v288, 0
        %v1349 = vsel %vm1320, %v289, 0
        %v1352 = vsel %vm1320, %v290, 0
        %v1355 = vsel %vm1320, %v291, 0
        %v1358 = vsel %vm1320, %v292, 0
        %v1361 = vsel %vm1320, %v293, 0
        %v1364 = vsel %vm1320, %v294, 0
        %v1367 = vsel %vm1320, %v295, 0
        %v1370 = vsel %vm1320, %v296, 0
        %v1373 = vsel %vm1320, %v297, 0
        %v1376 = vsel %vm1320, %v298, 0
        %v1379 = vsel %vm1320, %v299, 0
        %v1382 = vsel %vm1320, %v300, 0
        %v1385 = vsel %vm1320, %v301, 0
        %v1388 = vsel %vm1320, %v302, 0
        %v1391 = vsel %vm1320, %v303, 0
        %v1394 = vsel %vm1320, %v304, 0
        %v1397 = vsel %vm1320, %v305, 0
        %v1400 = vsel %vm1320, %v306, 0
        %v1403 = vsel %vm1320, %v307, 0
        %v1406 = vsel %vm1320, %v308, 0
        %v1409 = vsel %vm1320, %v309, 0
        %v1412 = vsel %vm1320, %v310, 0
        %v1415 = vsel %vm1320, %v311, 0
        %v1418 = vsel %vm1320, %v312, 0
        %v1421 = vsel %vm1320, %v313, 0
        %v1424 = vsel %vm1320, %v314, 0
        %v1427 = vsel %vm1320, %v315, 0
        %v1430 = vsel %vm1320, %v316, 0
        %v1433 = vsel %vm1320, %v317, 0
        %v1436 = vsel %vm1320, %v318, 0
        %v1439 = vsel %vm1320, %v319, 0
        %v1442 = vsel %vm1320, %v320, 0
        %v1445 = vsel %vm1320, %v321, 0
        %v1448 = vsel %vm1320, %v322, 0
        %v1451 = vsel %vm1320, %v323, 0
        %v1454 = vsel %vm1320, %v324, 0
        %v1457 = vsel %vm1320, %v325, 0
        %v1460 = vsel %vm1320, %v326, 0
        %v1463 = vsel %vm1320, %v327, 0
        %v1466 = vsel %vm1320, %v328, 0
        %v1469 = vsel %vm1320, %v329, 0
        %v1472 = vsel %vm1320, %v330, 0
        %v1475 = vsel %vm1320, %v331, 0
        %v1478 = vsel %vm1320, %v332, 0
        %v1481 = vsel %vm1320, %v333, 0
        %v1484 = vsel %vm1320, %v334, 0
        %v1487 = vsel %vm1320, %v335, 0
        %v1490 = vsel %vm1320, %v336, 0
        %v1493 = vsel %vm1320, %v337, 0
        %v1496 = vsel %vm1320, %v338, 0
        %v1499 = vsel %vm1320, %v339, 0
        %v1502 = vsel %vm1320, %v340, 0
        %v1505 = vsel %vm1320, %v341, 0
        %v1508 = vsel %vm1320, %v342, 0
        %v1511 = vsel %vm1320, %v343, 0
        %v1514 = vsel %vm1320, %v344, 0
        %v1517 = vsel %vm1320, %v345, 0
        %v1520 = vsel %vm1320, %v346, 0
        %v1523 = vsel %vm1320, %v347, 0
        %v1526 = vsel %vm1320, %v348, 0
        %v1529 = vsel %vm1320, %v349, 0
        %v1532 = vsel %vm1320, %v350, 0
        %v1535 = vsel %vm1320, %v351, 0
        %v1538 = vsel %vm1320, %v352, 0
        %v1541 = vsel %vm1320, %v353, 0
        %v1544 = vsel %vm1320, %v354, 0
        %v1547 = vsel %vm1320, %v355, 0
        %v1550 = vsel %vm1320, %v356, 0
        %v1553 = vsel %vm1320, %v357, 0
        %v1556 = vsel %vm1320, %v358, 0
        %v1559 = vsel %vm1320, %v359, 0
        %v1562 = vsel %vm1320, %v360, 0
        %v1565 = vsel %vm1320, %v361, 0
        %v1568 = vsel %vm1320, %v362, 0
        %v1571 = vsel %vm1320, %v363, 0
        %v1574 = vsel %vm1320, %v364, 0
        %v1577 = vsel %vm1320, %v365, 0
        %v1580 = vsel %vm1320, %v366, 0
        %v1583 = vsel %vm1320, %v367, 0
        %v1586 = vsel %vm1320, %v368, 0
        %v1589 = vsel %vm1320, %v369, 0
        %v1592 = vsel %vm1320, %v370, 0
        %v1595 = vsel %vm1320, %v371, 0
        %v1598 = vsel %vm1320, %v372, 0
        %v1601 = vsel %vm1320, %v373, 0
        %v1604 = vsel %vm1320, %v374, 0
        %v1607 = vsel %vm1320, %v375, 0
        %v1610 = vsel %vm1320, %v376, 0
        %v1613 = vsel %vm1320, %v377, 0
        %v1616 = vsel %vm1320, %v378, 0
        %v1619 = vsel %vm1320, %v379, 0
        %v1622 = vsel %vm1320, %v380, 0
        %v1625 = vsel %vm1320, %v381, 0
        %v1628 = vsel %vm1320, %v382, 0
        %v1631 = vsel %vm1320, %v383, 0
        %v1634 = vsel %vm1320, %v384, 0
        %v1637 = vsel %vm1320, %v385, 0
        %v1640 = vsel %vm1320, %v386, 0
        %v1643 = vsel %vm1320, %v387, 0
        %v1646 = vsel %vm1320, %v388, 0
        %v1649 = vsel %vm1320, %v389, 0
        %v1652 = vsel %vm1320, %v390, 0
        %v1655 = vsel %vm1320, %v391, 0
        %v1658 = vsel %vm1320, %v392, 0
        %v1661 = vsel %vm1320, %v393, 0
        %v1664 = vsel %vm1320, %v394, 0
        %v1667 = vsel %vm1320, %v395, 0
        %v1670 = vsel %vm1320, %v396, 0
        %v1673 = vsel %vm1320, %v397, 0
        %v1676 = vsel %vm1320, %v398, 0
        %v1679 = vsel %vm1320, %v399, 0
        %v1682 = vsel %vm1320, %v400, 0
        %v1685 = vsel %vm1320, %v401, 0
        %v1688 = vsel %vm1320, %v402, 0
        %v1691 = vsel %vm1320, %v403, 0
        %v1694 = vsel %vm1320, %v404, 0
        %v1697 = vsel %vm1320, %v405, 0
        %v1700 = vsel %vm1320, %v406, 0
        %v1703 = vsel %vm1320, %v407, 0
        %v1706 = vsel %vm1320, %v408, 0
        %v1709 = vsel %vm1320, %v409, 0
        %v1712 = vsel %vm1320, %v410, 0
        %v1715 = vsel %vm1320, %v411, 0
        %v1718 = vsel %vm1320, %v412, 0
        %v1721 = vsel %vm1320, %v413, 0
        %v1724 = vsel %vm1320, %v414, 0
        %v1727 = vsel %vm1320, %v415, 0
        %v1730 = vsel %vm1320, %v416, 0
        %v1733 = vsel %vm1320, %v417, 0
        %v1736 = vsel %vm1320, %v418, 0
        %v1739 = vsel %vm1320, %v419, 0
        %v1742 = vsel %vm1320, %v420, 0
        %v1745 = vsel %vm1320, %v421, 0
        %v1748 = vsel %vm1320, %v422, 0
        %v1751 = vsel %vm1320, %v423, 0
        %v1754 = vsel %vm1320, %v424, 0
        %v1757 = vsel %vm1320, %v425, 0
        %v1760 = vsel %vm1320, %v426, 0
        %v1763 = vsel %vm1320, %v427, 0
        %v1766 = vsel %vm1320, %v428, 0
        %v1769 = vsel %vm1320, %v429, 0
        %v1772 = vsel %vm1320, %v430, 0
        %v1775 = vsel %vm1320, %v431, 0
        %v1778 = vsel %vm1320, %v432, 0
        %v1781 = vsel %vm1320, %v433, 0
        %v1784 = vsel %vm1320, %v434, 0
        %v1787 = vsel %vm1320, %v435, 0
        %v1790 = vsel %vm1320, %v436, 0
        %v1793 = vsel %vm1320, %v437, 0
        %v1796 = vsel %vm1320, %v438, 0
        %v1799 = vsel %vm1320, %v439, 0
        %v1802 = vsel %vm1320, %v440, 0
        %v1805 = vsel %vm1320, %v441, 0
        %v1808 = vsel %vm1320, %v442, 0
        %v1811 = vsel %vm1320, %v443, 0
        %v1814 = vsel %vm1320, %v444, 0
        %v1817 = vsel %vm1320, %v445, 0
        %v1820 = vsel %vm1320, %v446, 0
        %v1823 = vsel %vm1320, %v447, 0
        %v1826 = vsel %vm1320, %v448, 0
        %v1829 = vsel %vm1320, %v449, 0
        %v1832 = vsel %vm1320, %v450, 0
        %v1835 = vsel %vm1320, %v451, 0
        %v1838 = vsel %vm1320, %v452, 0
        %v1841 = vsel %vm1320, %v453, 0
        %v1844 = vsel %vm1320, %v454, 0
        %v1847 = vsel %vm1320, %v455, 0
        %v1850 = vsel %vm1320, %v456, 0
        %v1853 = vsel %vm1320, %v457, 0
        %v1856 = vsel %vm1320, %v458, 0
        %v1859 = vsel %vm1320, %v459, 0
        %v1862 = vsel %vm1320, %v460, 0
        %v1865 = vsel %vm1320, %v461, 0
        %v1868 = vsel %vm1320, %v462, 0
        %v1871 = vsel %vm1320, %v463, 0
        %v1874 = vsel %vm1320, %v464, 0
        %v1877 = vsel %vm1320, %v465, 0
        %v1880 = vsel %vm1320, %v466, 0
        %v1883 = vsel %vm1320, %v467, 0
        %v1886 = vsel %vm1320, %v468, 0
        %v1889 = vsel %vm1320, %v469, 0
        %v1892 = vsel %vm1320, %v470, 0
        %v1895 = vsel %vm1320, %v471, 0
        %v1898 = vsel %vm1320, %v472, 0
        %v1901 = vsel %vm1320, %v473, 0
        %v1904 = vsel %vm1320, %v474, 0
        %v1907 = vsel %vm1320, %v475, 0
        %v1910 = vsel %vm1320, %v476, 0
        %v1913 = vsel %vm1320, %v477, 0
        %v1916 = vsel %vm1320, %v478, 0
        %v1919 = vsel %vm1320, %v479, 0
        %v1922 = vsel %vm1320, %v480, 0
        %v1925 = vsel %vm1320, %v481, 0
        %v1928 = vsel %vm1320, %v482, 0
        %v1931 = vsel %vm1320, %v483, 0
        %v1934 = vsel %vm1320, %v484, 0
        %v1937 = vsel %vm1320, %v485, 0
        %v1940 = vsel %vm1320, %v486, 0
        %v1943 = vsel %vm1320, %v487, 0
        %v1946 = vsel %vm1320, %v488, 0
        %v1949 = vsel %vm1320, %v489, 0
        %v1952 = vsel %vm1320, %v490, 0
        %v1955 = vsel %vm1320, %v491, 0
        %v1958 = vsel %vm1320, %v492, 0
        %v1961 = vsel %vm1320, %v493, 0
        %v1964 = vsel %vm1320, %v494, 0
        %v1967 = vsel %vm1320, %v495, 0
        %v1970 = vsel %vm1320, %v496, 0
        %v1973 = vsel %vm1320, %v497, 0
        %v1976 = vsel %vm1320, %v498, 0
        %v1979 = vsel %vm1320, %v499, 0
        %v1982 = vsel %vm1320, %v500, 0
        %v1985 = vsel %vm1320, %v501, 0
        %v1988 = vsel %vm1320, %v502, 0
        %v1991 = vsel %vm1320, %v503, 0
        %v1994 = vsel %vm1320, %v504, 0
        %v1997 = vsel %vm1320, %v505, 0
        %v2000 = vsel %vm1320, %v506, 0
        %v2003 = vsel %vm1320, %v507, 0
        %v2006 = vsel %vm1320, %v508, 0
        %v2009 = vsel %vm1320, %v509, 0
        %v2012 = vsel %vm1320, %v510, 0
        %v2015 = vsel %vm1320, %v511, 0
        %v2018 = vsel %vm1320, %v512, 0
        %v2021 = vsel %vm1320, %v513, 0
        %v2024 = vsel %vm1320, %v514, 0
        %v2027 = vsel %vm1320, %v515, 0
        %v2030 = vsel %vm1320, %v516, 0
        %v2033 = vsel %vm1320, %v517, 0
        %v2036 = vsel %vm1320, %v518, 0
        %v2039 = vsel %vm1320, %v519, 0
        %v2042 = vsel %vm1320, %v520, 0
        %v2045 = vsel %vm1320, %v521, 0
        %v2048 = vsel %vm1320, %v522, 0
        %v2051 = vsel %vm1320, %v523, 0
        %v2054 = vsel %vm1320, %v524, 0
        %v2057 = vsel %vm1320, %v525, 0
        %v2060 = vsel %vm1320, %v526, 0
        %v2063 = vsel %vm1320, %v527, 0
        %v2066 = vsel %vm1320, %v528, 0
        %v2069 = vsel %vm1320, %v529, 0
        %v2072 = vsel %vm1320, %v530, 0
        %v2075 = vsel %vm1320, %v531, 0
        %v2078 = vsel %vm1320, %v532, 0
        %v2081 = vsel %vm1320, %v533, 0
        %v2084 = vsel %vm1320, %v534, 0
        %v2087 = vsel %vm1320, %v535, 0
        %v2090 = vsel %vm1320, %v536, 0
        %v2093 = vsel %vm1320, %v537, 0
        %v2096 = vsel %vm1320, %v538, 0
        %v2099 = vsel %vm1320, %v539, 0
        %v2102 = vsel %vm1320, %v540, 0
        %v2105 = vsel %vm1320, %v541, 0
        %v2108 = vsel %vm1320, %v542, 0
        %v2111 = vsel %vm1320, %v543, 0
        %v2114 = vsel %vm1320, %v544, 0
        %v2117 = vsel %vm1320, %v545, 0
        %v2120 = vsel %vm1320, %v546, 0
        %v2123 = vsel %vm1320, %v547, 0
        %v2126 = vsel %vm1320, %v548, 0
        %v2129 = vsel %vm1320, %v549, 0
        %v2132 = vsel %vm1320, %v550, 0
        %v2135 = vsel %vm1320, %v551, 0
        %v2138 = vsel %vm1320, %v552, 0
        %v2141 = vsel %vm1320, %v553, 0
        %v2144 = vsel %vm1320, %v554, 0
        %v2147 = vsel %vm1320, %v555, 0
        %v2150 = vsel %vm1320, %v556, 0
        %v2153 = vsel %vm1320, %v557, 0
        %v2156 = vsel %vm1320, %v558, 0
        %v2159 = vsel %vm1320, %v559, 0
        %v2162 = vsel %vm1320, %v560, 0
        %v2165 = vsel %vm1320, %v561, 0
        %v2168 = vsel %vm1320, %v562, 0
        %v2171 = vsel %vm1320, %v563, 0
        %v2174 = vsel %vm1320, %v564, 0
        %v2177 = vsel %vm1320, %v565, 0
        %v2180 = vsel %vm1320, %v566, 0
        %v2183 = vsel %vm1320, %v567, 0
        %v2186 = vsel %vm1320, %v568, 0
        %v2189 = vsel %vm1320, %v569, 0
        %v2192 = vsel %vm1320, %v570, 0
        %v2195 = vsel %vm1320, %v571, 0
        %v2198 = vsel %vm1320, %v572, 0
        %v2201 = vsel %vm1320, %v573, 0
        %v2204 = vsel %vm1320, %v574, 0
        %v2207 = vsel %vm1320, %v575, 0
        %v2210 = vsel %vm1320, %v576, 0
        %v2213 = vsel %vm1320, %v577, 0
        %v2216 = vsel %vm1320, %v578, 0
        %v2219 = vsel %vm1320, %v579, 0
        %v2222 = vsel %vm1320, %v580, 0
        %v2225 = vsel %vm1320, %v581, 0
        %v2228 = vsel %vm1320, %v582, 0
        %v2231 = vsel %vm1320, %v583, 0
        %v2234 = vsel %vm1320, %v584, 0
        %v2237 = vsel %vm1320, %v585, 0
        %v2240 = vsel %vm1320, %v586, 0
        %v2243 = vsel %vm1320, %v587, 0
        %v2246 = vsel %vm1320, %v588, 0
        %v2249 = vsel %vm1320, %v589, 0
        %v2252 = vsel %vm1320, %v590, 0
        %v2255 = vsel %vm1320, %v591, 0
        %v2258 = vsel %vm1320, %v592, 0
        %v2261 = vsel %vm1320, %v593, 0
        %v2264 = vsel %vm1320, %v594, 0
        %v2267 = vsel %vm1320, %v595, 0
        %v2270 = vsel %vm1320, %v596, 0
        %v2273 = vsel %vm1320, %v597, 0
        %v2276 = vsel %vm1320, %v598, 0
        %v2279 = vsel %vm1320, %v599, 0
        %v2282 = vsel %vm1320, %v600, 0
        %v2285 = vsel %vm1320, %v601, 0
        %v2288 = vsel %vm1320, %v602, 0
        %v2291 = vsel %vm1320, %v603, 0
        %v2294 = vsel %vm1320, %v604, 0
        %v2297 = vsel %vm1320, %v605, 0
        %v2300 = vsel %vm1320, %v606, 0
        %v2303 = vsel %vm1320, %v607, 0
        %v2306 = vsel %vm1320, %v608, 0
        %v2309 = vsel %vm1320, %v609, 0
        %v2312 = vsel %vm1320, %v610, 0
        %v2315 = vsel %vm1320, %v611, 0
        %v2318 = vsel %vm1320, %v612, 0
        %v2321 = vsel %vm1320, %v613, 0
        %v2324 = vsel %vm1320, %v614, 0
        %v2327 = vsel %vm1320, %v615, 0
        %v2330 = vsel %vm1320, %v616, 0
        %v2333 = vsel %vm1320, %v617, 0
        %v2336 = vsel %vm1320, %v618, 0
        %v2339 = vsel %vm1320, %v619, 0
        %v2342 = vsel %vm1320, %v620, 0
        %v2345 = vsel %vm1320, %v621, 0
        %v2348 = vsel %vm1320, %v622, 0
        %v2351 = vsel %vm1320, %v623, 0
        %v2354 = vsel %vm1320, %v624, 0
        %v2357 = vsel %vm1320, %v625, 0
        %v2360 = vsel %vm1320, %v626, 0
        %v2363 = vsel %vm1320, %v627, 0
        %v2366 = vsel %vm1320, %v628, 0
        %v2369 = vsel %vm1320, %v629, 0
        %v2372 = vsel %vm1320, %v630, 0
        %v2375 = vsel %vm1320, %v631, 0
        %v2378 = vsel %vm1320, %v632, 0
        %v2381 = vsel %vm1320, %v633, 0
        %v2384 = vsel %vm1320, %v634, 0
        %v2387 = vsel %vm1320, %v635, 0
        %v2390 = vsel %vm1320, %v636, 0
        %v2393 = vsel %vm1320, %v637, 0
        %v2396 = vsel %vm1320, %v638, 0
        %v2399 = vsel %vm1320, %v639, 0
        %v2402 = vsel %vm1320, %v640, 0
        %v2405 = vsel %vm1320, %v641, 0
        %v2408 = vsel %vm1320, %v642, 0
        %v2411 = vsel %vm1320, %v643, 0
        %v2414 = vsel %vm1320, %v644, 0
        %v2417 = vsel %vm1320, %v645, 0
        %v2420 = vsel %vm1320, %v646, 0
        %v2423 = vsel %vm1320, %v647, 0
        %v2426 = vsel %vm1320, %v648, 0
        %v2429 = vsel %vm1320, %v649, 0
        %v2432 = vsel %vm1320, %v650, 0
        %v2435 = vsel %vm1320, %v651, 0
        %v2438 = vsel %vm1320, %v652, 0
        %v2441 = vsel %vm1320, %v653, 0
        %v2444 = vsel %vm1320, %v654, 0
        %v2447 = vsel %vm1320, %v655, 0
        %v2450 = vsel %vm1320, %v656, 0
        %v2453 = vsel %vm1320, %v657, 0
        %v2456 = vsel %vm1320, %v658, 0
        %v2459 = vsel %vm1320, %v659, 0
        %v2462 = vsel %vm1320, %v660, 0
        %v2465 = vsel %vm1320, %v661, 0
        %v2468 = vsel %vm1320, %v662, 0
        %v2471 = vsel %vm1320, %v663, 0
        %v2474 = vsel %vm1320, %v664, 0
        %v2477 = vsel %vm1320, %v665, 0
        %v2480 = vsel %vm1320, %v666, 0
        %v2483 = vsel %vm1320, %v667, 0
        %v2486 = vsel %vm1320, %v668, 0
        %v2489 = vsel %vm1320, %v669, 0
        %v2492 = vsel %vm1320, %v670, 0
        %v2495 = vsel %vm1320, %v671, 0
        %v2498 = vsel %vm1320, %v672, 0
        %v2501 = vsel %vm1320, %v673, 0
        %v2504 = vsel %vm1320, %v674, 0
        %v2507 = vsel %vm1320, %v675, 0
        %v2510 = vsel %vm1320, %v676, 0
        %v2513 = vsel %vm1320, %v677, 0
        %v2516 = vsel %vm1320, %v678, 0
        %v2519 = vsel %vm1320, %v679, 0
        %v2522 = vsel %vm1320, %v680, 0
        %v2525 = vsel %vm1320, %v681, 0
        %v2528 = vsel %vm1320, %v682, 0
        %v2531 = vsel %vm1320, %v683, 0
        %v2534 = vsel %vm1320, %v684, 0
        %v2537 = vsel %vm1320, %v685, 0
        %v2540 = vsel %vm1320, %v686, 0
        %v2543 = vsel %vm1320, %v687, 0
        %v2546 = vsel %vm1320, %v688, 0
        %v2549 = vsel %vm1320, %v689, 0
        %v2552 = vsel %vm1320, %v690, 0
        %v2555 = vsel %vm1320, %v691, 0
        %v2558 = vsel %vm1320, %v692, 0
        %v2561 = vsel %vm1320, %v693, 0
        %v2564 = vsel %vm1320, %v694, 0
        %v2567 = vsel %vm1320, %v695, 0
        %v2570 = vsel %vm1320, %v696, 0
        %v2573 = vsel %vm1320, %v697, 0
        %v2576 = vsel %vm1320, %v698, 0
        %v2579 = vsel %vm1320, %v699, 0
        %v2582 = vsel %vm1320, %v700, 0
        %v2585 = vsel %vm1320, %v701, 0
        %v2588 = vsel %vm1320, %v702, 0
        %v2591 = vsel %vm1320, %v703, 0
        %v2594 = vsel %vm1320, %v704, 0
        %v2597 = vsel %vm1320, %v705, 0
        %v2600 = vsel %vm1320, %v706, 0
        %v2603 = vsel %vm1320, %v707, 0
        %v2606 = vsel %vm1320, %v708, 0
        %v2609 = vsel %vm1320, %v709, 0
        %v2612 = vsel %vm1320, %v710, 0
        %v2615 = vsel %vm1320, %v711, 0
        %v2618 = vsel %vm1320, %v712, 0
        %v2621 = vsel %vm1320, %v713, 0
        %v2624 = vsel %vm1320, %v714, 0
        %v2627 = vsel %vm1320, %v715, 0
        %v2630 = vsel %vm1320, %v716, 0
        %v2633 = vsel %vm1320, %v717, 0
        %v2636 = vsel %vm1320, %v718, 0
        %v2639 = vsel %vm1320, %v719, 0
        %v2642 = vsel %vm1320, %v720, 0
        %v2645 = vsel %vm1320, %v721, 0
        %v2648 = vsel %vm1320, %v722, 0
        %v2651 = vsel %vm1320, %v723, 0
        %v2654 = vsel %vm1320, %v724, 0
        %v2657 = vsel %vm1320, %v725, 0
        %v2660 = vsel %vm1320, %v726, 0
        %v2663 = vsel %vm1320, %v727, 0
        %v2666 = vsel %vm1320, %v728, 0
        %v2669 = vsel %vm1320, %v729, 0
        %v2672 = vsel %vm1320, %v730, 0
        %v2675 = vsel %vm1320, %v731, 0
        %v2678 = vsel %vm1320, %v732, 0
        %v2681 = vsel %vm1320, %v733, 0
        %v2684 = vsel %vm1320, %v734, 0
        %v2687 = vsel %vm1320, %v735, 0
        %v2690 = vsel %vm1320, %v736, 0
        %v2693 = vsel %vm1320, %v737, 0
        %v2696 = vsel %vm1320, %v738, 0
        %v2699 = vsel %vm1320, %v739, 0
        %v2702 = vsel %vm1320, %v740, 0
        %v2705 = vsel %vm1320, %v741, 0
        %v2708 = vsel %vm1320, %v742, 0
        %v2711 = vsel %vm1320, %v743, 0
        %v2714 = vsel %vm1320, %v744, 0
        %v2717 = vsel %vm1320, %v745, 0
        %v2720 = vsel %vm1320, %v746, 0
        %v2723 = vsel %vm1320, %v747, 0
        %v2726 = vsel %vm1320, %v748, 0
        %v2729 = vsel %vm1320, %v749, 0
        %v2732 = vsel %vm1320, %v750, 0
        %v2735 = vsel %vm1320, %v751, 0
        %v2738 = vsel %vm1320, %v752, 0
        %v2741 = vsel %vm1320, %v753, 0
        %v2744 = vsel %vm1320, %v754, 0
        %v2747 = vsel %vm1320, %v755, 0
        %v2750 = vsel %vm1320, %v756, 0
        %v2753 = vsel %vm1320, %v757, 0
        %v2756 = vsel %vm1320, %v758, 0
        %v2759 = vsel %vm1320, %v759, 0
        %v2762 = vsel %vm1320, %v760, 0
        %v2765 = vsel %vm1320, %v761, 0
        %v2768 = vsel %vm1320, %v762, 0
        %v2771 = vsel %vm1320, %v763, 0
        %v2774 = vsel %vm1320, %v764, 0
        %v2777 = vsel %vm1320, %v765, 0
        %v2780 = vsel %vm1320, %v766, 0
        %v2783 = vsel %vm1320, %v767, 0
        %v2786 = vsel %vm1320, %v768, 0
        %v2789 = vsel %vm1320, %v769, 0
        %v2792 = vsel %vm1320, %v770, 0
        %v2795 = vsel %vm1320, %v771, 0
        %v2798 = vsel %vm1320, %v772, 0
        %v2801 = vsel %vm1320, %v773, 0
        %v2804 = vsel %vm1320, %v774, 0
        %v2807 = vsel %vm1320, %v775, 0
        %v2810 = vsel %vm1320, %v776, 0
        %v2813 = vsel %vm1320, %v777, 0
        %v2816 = vsel %vm1320, %v778, 0
        %v2819 = vsel %vm1320, %v779, 0
        %v2822 = vsel %vm1320, %v780, 0
        %v2825 = vsel %vm1320, %v781, 0
        %v2828 = vsel %vm1320, %v782, 0
        %v2831 = vsel %vm1320, %v783, 0
        %v2834 = vsel %vm1320, %v784, 0
        %v2837 = vsel %vm1320, %v785, 0
        %v2840 = vsel %vm1320, %v786, 0
        %v2843 = vsel %vm1320, %v787, 0
        %v2846 = vsel %vm1320, %v788, 0
        %v2849 = vsel %vm1320, %v789, 0
        %v2852 = vsel %vm1320, %v790, 0
        %v2855 = vsel %vm1320, %v791, 0
        %v2858 = vsel %vm1320, %v792, 0
        %v2861 = vsel %vm1320, %v793, 0
        %v2864 = vsel %vm1320, %v794, 0
        %v2867 = vsel %vm1320, %v795, 0
        %v2870 = vsel %vm1320, %v796, 0
        %v2873 = vsel %vm1320, %v797, 0
        %v2876 = vsel %vm1320, %v798, 0
        %v2879 = vsel %vm1320, %v799, 0
        %v2882 = vsel %vm1320, %v800, 0
        %v2885 = vsel %vm1320, %v801, 0
        %v2888 = vsel %vm1320, %v802, 0
        %v2891 = vsel %vm1320, %v803, 0
        %v2894 = vsel %vm1320, %v804, 0
        %v2897 = vsel %vm1320, %v805, 0
        %v2900 = vsel %vm1320, %v806, 0
        %v2903 = vsel %vm1320, %v807, 0
        %v2906 = vsel %vm1320, %v808, 0
        %v2909 = vsel %vm1320, %v809, 0
        %v2912 = vsel %vm1320, %v810, 0
        %v2915 = vsel %vm1320, %v811, 0
        %v2918 = vsel %vm1320, %v812, 0
        %v2921 = vsel %vm1320, %v813, 0
        %v2924 = vsel %vm1320, %v814, 0
        %v2927 = vsel %vm1320, %v815, 0
        %v2930 = vsel %vm1320, %v816, 0
        %v2933 = vsel %vm1320, %v817, 0
        %v2936 = vsel %vm1320, %v818, 0
        %v2939 = vsel %vm1320, %v819, 0
        %v2942 = vsel %vm1320, %v820, 0
        %v2945 = vsel %vm1320, %v821, 0
        %v2948 = vsel %vm1320, %v822, 0
        %v2951 = vsel %vm1320, %v823, 0
        %v2954 = vsel %vm1320, %v824, 0
        %v2957 = vsel %vm1320, %v825, 0
        %v2960 = vsel %vm1320, %v826, 0
        %v2963 = vsel %vm1320, %v827, 0
        %v2966 = vsel %vm1320, %v828, 0
        %v2969 = vsel %vm1320, %v829, 0
        %v2972 = vsel %vm1320, %v830, 0
        %v2975 = vsel %vm1320, %v831, 0
        %v2978 = vsel %vm1320, %v832, 0
        %v2981 = vsel %vm1320, %v833, 0
        %v2984 = vsel %vm1320, %v834, 0
        %v2987 = vsel %vm1320, %v835, 0
        %v2990 = vsel %vm1320, %v836, 0
        %v2993 = vsel %vm1320, %v837, 0
        %v2996 = vsel %vm1320, %v838, 0
        %v2999 = vsel %vm1320, %v839, 0
        %v3002 = vsel %vm1320, %v840, 0
        %v3005 = vsel %vm1320, %v841, 0
        %v3008 = vsel %vm1320, %v842, 0
        %v3011 = vsel %vm1320, %v843, 0
        %v3014 = vsel %vm1320, %v844, 0
        %v3017 = vsel %vm1320, %v845, 0
        %v3020 = vsel %vm1320, %v846, 0
        %v3023 = vsel %vm1320, %v847, 0
        %v3026 = vsel %vm1320, %v848, 0
        %v3029 = vsel %vm1320, %v849, 0
        %v3032 = vsel %vm1320, %v850, 0
        %v3035 = vsel %vm1320, %v851, 0
        %v3038 = vsel %vm1320, %v852, 0
        %v3041 = vsel %vm1320, %v853, 0
        %v3044 = vsel %vm1320, %v854, 0
        %v3047 = vsel %vm1320, %v855, 0
        %v3050 = vsel %vm1320, %v856, 0
        %v3053 = vsel %vm1320, %v857, 0
        %v3056 = vsel %vm1320, %v858, 0
        %v3059 = vsel %vm1320, %v859, 0
        %v3062 = vsel %vm1320, %v860, 0
        %v3065 = vsel %vm1320, %v861, 0
        %v3068 = vsel %vm1320, %v862, 0
        %v3071 = vsel %vm1320, %v863, 0
        %v3074 = vsel %vm1320, %v864, 0
        %v3077 = vsel %vm1320, %v865, 0
        %v3080 = vsel %vm1320, %v866, 0
        %v3083 = vsel %vm1320, %v867, 0
        %v3086 = vsel %vm1320, %v868, 0
        %v3089 = vsel %vm1320, %v869, 0
        %v3092 = vsel %vm1320, %v870, 0
        %v3095 = vsel %vm1320, %v871, 0
        %v3098 = vsel %vm1320, %v872, 0
        %v3101 = vsel %vm1320, %v873, 0
        %v3104 = vsel %vm1320, %v874, 0
        %v3107 = vsel %vm1320, %v875, 0
        %v3110 = vsel %vm1320, %v876, 0
        %v3113 = vsel %vm1320, %v877, 0
        %v3116 = vsel %vm1320, %v878, 0
        %v3119 = vsel %vm1320, %v879, 0
        %v3122 = vsel %vm1320, %v880, 0
        %v3125 = vsel %vm1320, %v881, 0
        %v3128 = vsel %vm1320, %v882, 0
        %v3131 = vsel %vm1320, %v883, 0
        %v3134 = vsel %vm1320, %v884, 0
        %v3137 = vsel %vm1320, %v885, 0
        %v3140 = vsel %vm1320, %v886, 0
        %v3143 = vsel %vm1320, %v887, 0
        %v3146 = vsel %vm1320, %v888, 0
        %v3149 = vsel %vm1320, %v889, 0
        %v3152 = vsel %vm1320, %v890, 0
        %v3155 = vsel %vm1320, %v891, 0
        %v3158 = vsel %vm1320, %v892, 0
        %v3161 = vsel %vm1320, %v893, 0
        %v3164 = vsel %vm1320, %v894, 0
        %v3167 = vsel %vm1320, %v895, 0
        %v3170 = vsel %vm1320, %v896, 0
        %v3173 = vsel %vm1320, %v897, 0
        %v3176 = vsel %vm1320, %v898, 0
        %v3179 = vsel %vm1320, %v899, 0
        %v3182 = vsel %vm1320, %v900, 0
        %v3185 = vsel %vm1320, %v901, 0
        %v3188 = vsel %vm1320, %v902, 0
        %v3191 = vsel %vm1320, %v903, 0
        %v3194 = vsel %vm1320, %v904, 0
        %v3197 = vsel %vm1320, %v905, 0
        %v3200 = vsel %vm1320, %v906, 0
        %v3203 = vsel %vm1320, %v907, 0
        %v3206 = vsel %vm1320, %v908, 0
        %v3209 = vsel %vm1320, %v909, 0
        %v3212 = vsel %vm1320, %v910, 0
        %v3215 = vsel %vm1320, %v911, 0
        %v3218 = vsel %vm1320, %v912, 0
        %v3221 = vsel %vm1320, %v913, 0
        %v3224 = vsel %vm1320, %v914, 0
        %v3227 = vsel %vm1320, %v915, 0
        %v3230 = vsel %vm1320, %v916, 0
        %v3233 = vsel %vm1320, %v917, 0
        %v3236 = vsel %vm1320, %v918, 0
        %v3239 = vsel %vm1320, %v919, 0
        %v3242 = vsel %vm1320, %v920, 0
        %v3245 = vsel %vm1320, %v921, 0
        %v3248 = vsel %vm1320, %v922, 0
        %v3251 = vsel %vm1320, %v923, 0
        %v3254 = vsel %vm1320, %v924, 0
        %v3257 = vsel %vm1320, %v925, 0
        %v3260 = vsel %vm1320, %v926, 0
        %v3263 = vsel %vm1320, %v927, 0
        %v3266 = vsel %vm1320, %v928, 0
        %v3269 = vsel %vm1320, %v929, 0
        %v3272 = vsel %vm1320, %v930, 0
        %v3275 = vsel %vm1320, %v931, 0
        %v3278 = vsel %vm1320, %v932, 0
        %v3281 = vsel %vm1320, %v933, 0
        %v3284 = vsel %vm1320, %v934, 0
        %v3287 = vsel %vm1320, %v935, 0
        %v3290 = vsel %vm1320, %v936, 0
        %v3293 = vsel %vm1320, %v937, 0
        %v3296 = vsel %vm1320, %v938, 0
        %v3299 = vsel %vm1320, %v939, 0
        %v3302 = vsel %vm1320, %v940, 0
        %v3305 = vsel %vm1320, %v941, 0
        %v3308 = vsel %vm1320, %v942, 0
        %v3311 = vsel %vm1320, %v943, 0
        %v3314 = vsel %vm1320, %v944, 0
        %v3317 = vsel %vm1320, %v945, 0
        %v3320 = vsel %vm1320, %v946, 0
        %v3323 = vsel %vm1320, %v947, 0
        %v3326 = vsel %vm1320, %v948, 0
        %v3329 = vsel %vm1320, %v949, 0
        %v3332 = vsel %vm1320, %v950, 0
        %v3335 = vsel %vm1320, %v951, 0
        %v3338 = vsel %vm1320, %v952, 0
        %v3341 = vsel %vm1320, %v953, 0
        %v3344 = vsel %vm1320, %v954, 0
        %v3347 = vsel %vm1320, %v955, 0
        %v3350 = vsel %vm1320, %v956, 0
        %v3353 = vsel %vm1320, %v957, 0
        %v3356 = vsel %vm1320, %v958, 0
        %v3359 = vsel %vm1320, %v959, 0
        %v3362 = vsel %vm1320, %v960, 0
        %v3365 = vsel %vm1320, %v961, 0
        %v3368 = vsel %vm1320, %v962, 0
        %v3371 = vsel %vm1320, %v963, 0
        %v3374 = vsel %vm1320, %v964, 0
        %v3377 = vsel %vm1320, %v965, 0
        %v3380 = vsel %vm1320, %v966, 0
        %v3383 = vsel %vm1320, %v967, 0
        %v3386 = vsel %vm1320, %v968, 0
        %v3389 = vsel %vm1320, %v969, 0
        %v3392 = vsel %vm1320, %v970, 0
        %v3395 = vsel %vm1320, %v971, 0
        %v3398 = vsel %vm1320, %v972, 0
        %v3401 = vsel %vm1320, %v973, 0
        %v3404 = vsel %vm1320, %v974, 0
        %v3407 = vsel %vm1320, %v975, 0
        %v3410 = vsel %vm1320, %v976, 0
        %v3413 = vsel %vm1320, %v977, 0
        %v3416 = vsel %vm1320, %v978, 0
        %v3419 = vsel %vm1320, %v979, 0
        %v3422 = vsel %vm1320, %v980, 0
        %v3425 = vsel %vm1320, %v981, 0
        %v3428 = vsel %vm1320, %v982, 0
        %v3431 = vsel %vm1320, %v983, 0
        %v3434 = vsel %vm1320, %v984, 0
        %v3437 = vsel %vm1320, %v985, 0
        %v3440 = vsel %vm1320, %v986, 0
        %v3443 = vsel %vm1320, %v987, 0
        %v3446 = vsel %vm1320, %v988, 0
        %v3449 = vsel %vm1320, %v989, 0
        %v3452 = vsel %vm1320, %v990, 0
        %v3455 = vsel %vm1320, %v991, 0
        %v3458 = vsel %vm1320, %v992, 0
        %v3461 = vsel %vm1320, %v993, 0
        %v3464 = vsel %vm1320, %v994, 0
        %v3467 = vsel %vm1320, %v995, 0
        %v3470 = vsel %vm1320, %v996, 0
        %v3473 = vsel %vm1320, %v997, 0
        %v3476 = vsel %vm1320, %v998, 0
        %v3479 = vsel %vm1320, %v999, 0
        %v3482 = vsel %vm1320, %v1000, 0
        %v3485 = vsel %vm1320, %v1001, 0
        %v3488 = vsel %vm1320, %v1002, 0
        %v3491 = vsel %vm1320, %v1003, 0
        %v3494 = vsel %vm1320, %v1004, 0
        %v3497 = vsel %vm1320, %v1005, 0
        %v3500 = vsel %vm1320, %v1006, 0
        %v3503 = vsel %vm1320, %v1007, 0
        %v3506 = vsel %vm1320, %v1008, 0
        %v3509 = vsel %vm1320, %v1009, 0
        %v3512 = vsel %vm1320, %v1010, 0
        %v3515 = vsel %vm1320, %v1011, 0
        %v3518 = vsel %vm1320, %v1012, 0
        %v3521 = vsel %vm1320, %v1013, 0
        %v3524 = vsel %vm1320, %v1014, 0
        %v3527 = vsel %vm1320, %v1015, 0
        %v3530 = vsel %vm1320, %v1016, 0
        %v3533 = vsel %vm1320, %v1017, 0
        %v3536 = vsel %vm1320, %v1018, 0
        %v3539 = vsel %vm1320, %v1019, 0
        %v3542 = vsel %vm1320, %v1020, 0
        %v3545 = vsel %vm1320, %v1021, 0
        %v3548 = vsel %vm1320, %v1022, 0
        %v3551 = vsel %vm1320, %v1023, 0
        %v3554 = vsel %vm1320, %v1024, 0
        %v3557 = vsel %vm1320, %v1025, 0
        %v3560 = vsel %vm1320, %v1026, 0
        %v3563 = vsel %vm1320, %v1027, 0
        %v3566 = vsel %vm1320, %v1028, 0
        %v3569 = vsel %vm1320, %v1029, 0
        %v3572 = vsel %vm1320, %v1030, 0
        %v3575 = vsel %vm1320, %v1031, 0
        %v3578 = vsel %vm1320, %v1032, 0
        %v3581 = vsel %vm1320, %v1033, 0
        %v3584 = vsel %vm1320, %v1034, 0
        %v3587 = vsel %vm1320, %v1035, 0
        %v3590 = vsel %vm1320, %v1036, 0
        %v3593 = vsel %vm1320, %v1037, 0
        %v3596 = vsel %vm1320, %v1038, 0
        %v3599 = vsel %vm1320, %v1039, 0
        %v3602 = vsel %vm1320, %v1040, 0
        %v3605 = vsel %vm1320, %v1041, 0
        %v3608 = vsel %vm1320, %v1042, 0
        %v3611 = vsel %vm1320, %v1043, 0
        %v3614 = vsel %vm1320, %v1044, 0
        %v3617 = vsel %vm1320, %v1045, 0
        %v3620 = vsel %vm1320, %v1046, 0
        %v3623 = vsel %vm1320, %v1047, 0
        %v3626 = vsel %vm1320, %v1048, 0
        %v3629 = vsel %vm1320, %v1049, 0
        %v3632 = vsel %vm1320, %v1050, 0
        %v3635 = vsel %vm1320, %v1051, 0
        %v3638 = vsel %vm1320, %v1052, 0
        %v3641 = vsel %vm1320, %v1053, 0
        %v3644 = vsel %vm1320, %v1054, 0
        %v3647 = vsel %vm1320, %v1055, 0
        %v3650 = vsel %vm1320, %v1056, 0
        %v3653 = vsel %vm1320, %v1057, 0
        %v3656 = vsel %vm1320, %v1058, 0
        %v3659 = vsel %vm1320, %v1059, 0
        %v3662 = vsel %vm1320, %v1060, 0
        %v3665 = vsel %vm1320, %v1061, 0
        %v3668 = vsel %vm1320, %v1062, 0
        %v3671 = vsel %vm1320, %v1063, 0
        %v3674 = vsel %vm1320, %v1064, 0
        %v3677 = vsel %vm1320, %v1065, 0
        %v3680 = vsel %vm1320, %v1066, 0
        %v3683 = vsel %vm1320, %v1067, 0
        %v3686 = vsel %vm1320, %v1068, 0
        %v3689 = vsel %vm1320, %v1069, 0
        %v3692 = vsel %vm1320, %v1070, 0
        %v3695 = vsel %vm1320, %v1071, 0
        %v3698 = vsel %vm1320, %v1072, 0
        %v3701 = vsel %vm1320, %v1073, 0
        %v3704 = vsel %vm1320, %v1074, 0
        %v3707 = vsel %vm1320, %v1075, 0
        %v3710 = vsel %vm1320, %v1076, 0
        %v3713 = vsel %vm1320, %v1077, 0
        %v3716 = vsel %vm1320, %v1078, 0
        %v3719 = vsel %vm1320, %v1079, 0
        %v3722 = vsel %vm1320, %v1080, 0
        %v3725 = vsel %vm1320, %v1081, 0
        %v3728 = vsel %vm1320, %v1082, 0
        %v3731 = vsel %vm1320, %v1083, 0
        %v3734 = vsel %vm1320, %v1084, 0
        %v3737 = vsel %vm1320, %v1085, 0
        %v3740 = vsel %vm1320, %v1086, 0
        %v3743 = vsel %vm1320, %v1087, 0
        %v3746 = vsel %vm1320, %v1088, 0
        %v3749 = vsel %vm1320, %v1089, 0
        %v3752 = vsel %vm1320, %v1090, 0
        %v3755 = vsel %vm1320, %v1091, 0
        %v3758 = vsel %vm1320, %v1092, 0
        %v3761 = vsel %vm1320, %v1093, 0
        %v3764 = vsel %vm1320, %v1094, 0
        %v3767 = vsel %vm1320, %v1095, 0
        %v3770 = vsel %vm1320, %v1096, 0
        %v3773 = vsel %vm1320, %v1097, 0
        %v3776 = vsel %vm1320, %v1098, 0
        %v3779 = vsel %vm1320, %v1099, 0
        %v3782 = vsel %vm1320, %v1100, 0
        %v3785 = vsel %vm1320, %v1101, 0
        %v3788 = vsel %vm1320, %v1102, 0
        %v3791 = vsel %vm1320, %v1103, 0
        %v3794 = vsel %vm1320, %v1104, 0
        %v3797 = vsel %vm1320, %v1105, 0
        %v3800 = vsel %vm1320, %v1106, 0
        %v3803 = vsel %vm1320, %v1107, 0
        %v3806 = vsel %vm1320, %v1108, 0
        %v3809 = vsel %vm1320, %v1109, 0
        %v3812 = vsel %vm1320, %v1110, 0
        %v3815 = vsel %vm1320, %v1111, 0
        %v3818 = vsel %vm1320, %v1112, 0
        %v3821 = vsel %vm1320, %v1113, 0
        %v3824 = vsel %vm1320, %v1114, 0
        %v3827 = vsel %vm1320, %v1115, 0
        %v3830 = vsel %vm1320, %v1116, 0
        %v3833 = vsel %vm1320, %v1117, 0
        %v3836 = vsel %vm1320, %v1118, 0
        %v3839 = vsel %vm1320, %v1119, 0
        %v3842 = vsel %vm1320, %v1120, 0
        %v3845 = vsel %vm1320, %v1121, 0
        %v3848 = vsel %vm1320, %v1122, 0
        %v3851 = vsel %vm1320, %v1123, 0
        %v3854 = vsel %vm1320, %v1124, 0
        %v3857 = vsel %vm1320, %v1125, 0
        %v3860 = vsel %vm1320, %v1126, 0
        %v3863 = vsel %vm1320, %v1127, 0
        %v3866 = vsel %vm1320, %v1128, 0
        %v3869 = vsel %vm1320, %v1129, 0
        %v3872 = vsel %vm1320, %v1130, 0
        %v3875 = vsel %vm1320, %v1131, 0
        %v3878 = vsel %vm1320, %v1132, 0
        %v3881 = vsel %vm1320, %v1133, 0
        %v3884 = vsel %vm1320, %v1134, 0
        %v3887 = vsel %vm1320, %v1135, 0
        %v3890 = vsel %vm1320, %v1136, 0
        %v3893 = vsel %vm1320, %v1137, 0
        %v3896 = vsel %vm1320, %v1138, 0
        %v3899 = vsel %vm1320, %v1139, 0
        %v3902 = vsel %vm1320, %v1140, 0
        %v3905 = vsel %vm1320, %v1141, 0
        %v3908 = vsel %vm1320, %v1142, 0
        %v3911 = vsel %vm1320, %v1143, 0
        %v3914 = vsel %vm1320, %v1144, 0
        %v3917 = vsel %vm1320, %v1145, 0
        %v3920 = vsel %vm1320, %v1146, 0
        %v3923 = vsel %vm1320, %v1147, 0
        %v3926 = vsel %vm1320, %v1148, 0
        %v3929 = vsel %vm1320, %v1149, 0
        %v3932 = vsel %vm1320, %v1150, 0
        %v3935 = vsel %vm1320, %v1151, 0
        %v3938 = vsel %vm1320, %v1152, 0
        %v3941 = vsel %vm1320, %v1153, 0
        %v3944 = vsel %vm1320, %v1154, 0
        %v3947 = vsel %vm1320, %v1155, 0
        %v3950 = vsel %vm1320, %v1156, 0
        %v3953 = vsel %vm1320, %v1157, 0
        %v3956 = vsel %vm1320, %v1158, 0
        %v3959 = vsel %vm1320, %v1159, 0
        %v3962 = vsel %vm1320, %v1160, 0
        %v3965 = vsel %vm1320, %v1161, 0
        %v3968 = vsel %vm1320, %v1162, 0
        %v3971 = vsel %vm1320, %v1163, 0
        %v3974 = vsel %vm1320, %v1164, 0
        %v3977 = vsel %vm1320, %v1165, 0
        %v3980 = vsel %vm1320, %v1166, 0
        %v3983 = vsel %vm1320, %v1167, 0
        %v3986 = vsel %vm1320, %v1168, 0
        %v3989 = vsel %vm1320, %v1169, 0
        %v3992 = vsel %vm1320, %v1170, 0
        %v3995 = vsel %vm1320, %v1171, 0
        %v3998 = vsel %vm1320, %v1172, 0
        %v4001 = vsel %vm1320, %v1173, 0
        %v4004 = vsel %vm1320, %v1174, 0
        %v4007 = vsel %vm1320, %v1175, 0
        %v4010 = vsel %vm1320, %v1176, 0
        %v4013 = vsel %vm1320, %v1177, 0
        %v4016 = vsel %vm1320, %v1178, 0
        %v4019 = vsel %vm1320, %v1179, 0
        %v4022 = vsel %vm1320, %v1180, 0
        %v4025 = vsel %vm1320, %v1181, 0
        %v4028 = vsel %vm1320, %v1182, 0
        %v4031 = vsel %vm1320, %v1183, 0
        %v4034 = vsel %vm1320, %v1184, 0
        %v4037 = vsel %vm1320, %v1185, 0
        %v4040 = vsel %vm1320, %v1186, 0
        %v4043 = vsel %vm1320, %v1187, 0
        %v4046 = vsel %vm1320, %v1188, 0
        %v4049 = vsel %vm1320, %v1189, 0
        %v4052 = vsel %vm1320, %v1190, 0
        %v4055 = vsel %vm1320, %v1191, 0
        %v4058 = vsel %vm1320, %v1192, 0
        %v4061 = vsel %vm1320, %v1193, 0
        %v4064 = vsel %vm1320, %v1194, 0
        %v4067 = vsel %vm1320, %v1195, 0
        %v4070 = vsel %vm1320, %v1196, 0
        %v4073 = vsel %vm1320, %v1197, 0
        %v4076 = vsel %vm1320, %v1198, 0
        %v4079 = vsel %vm1320, %v1199, 0
        %v4082 = vsel %vm1320, %v1200, 0
        %v4085 = vsel %vm1320, %v1201, 0
        %v4088 = vsel %vm1320, %v1202, 0
        %v4091 = vsel %vm1320, %v1203, 0
        %v4094 = vsel %vm1320, %v1204, 0
        %v4097 = vsel %vm1320, %v1205, 0
        %v4100 = vsel %vm1320, %v1206, 0
        %v4103 = vsel %vm1320, %v1207, 0
        %v4106 = vsel %vm1320, %v1208, 0
        %v4109 = vsel %vm1320, %v1209, 0
        %v4112 = vsel %vm1320, %v1210, 0
        %v4115 = vsel %vm1320, %v1211, 0
        %v4118 = vsel %vm1320, %v1212, 0
        %v4121 = vsel %vm1320, %v1213, 0
        %v4124 = vsel %vm1320, %v1214, 0
        %v4127 = vsel %vm1320, %v1215, 0
        %v4130 = vsel %vm1320, %v1216, 0
        %v4133 = vsel %vm1320, %v1217, 0
        %v4136 = vsel %vm1320, %v1218, 0
        %v4139 = vsel %vm1320, %v1219, 0
        %v4142 = vsel %vm1320, %v1220, 0
        %v4145 = vsel %vm1320, %v1221, 0
        %v4148 = vsel %vm1320, %v1222, 0
        %v4151 = vsel %vm1320, %v1223, 0
        %v4154 = vsel %vm1320, %v1224, 0
        %v4157 = vsel %vm1320, %v1225, 0
        %v4160 = vsel %vm1320, %v1226, 0
        %v4163 = vsel %vm1320, %v1227, 0
        %v4166 = vsel %vm1320, %v1228, 0
        %v4169 = vsel %vm1320, %v1229, 0
        %v4172 = vsel %vm1320, %v1230, 0
        %v4175 = vsel %vm1320, %v1231, 0
        %v4178 = vsel %vm1320, %v1232, 0
        %v4181 = vsel %vm1320, %v1233, 0
        %v4184 = vsel %vm1320, %v1234, 0
        %v4187 = vsel %vm1320, %v1235, 0
        %v4190 = vsel %vm1320, %v1236, 0
        %v4193 = vsel %vm1320, %v1237, 0
        %v4196 = vsel %vm1320, %v1238, 0
        %v4199 = vsel %vm1320, %v1239, 0
        %v4202 = vsel %vm1320, %v1240, 0
        %v4205 = vsel %vm1320, %v1241, 0
        %v4208 = vsel %vm1320, %v1242, 0
        %v4211 = vsel %vm1320, %v1243, 0
        %v4214 = vsel %vm1320, %v1244, 0
        %v4217 = vsel %vm1320, %v1245, 0
        %v4220 = vsel %vm1320, %v1246, 0
        %v4223 = vsel %vm1320, %v1247, 0
        %v4226 = vsel %vm1320, %v1248, 0
        %v4229 = vsel %vm1320, %v1249, 0
        %v4232 = vsel %vm1320, %v1250, 0
        %v4235 = vsel %vm1320, %v1251, 0
        %v4238 = vsel %vm1320, %v1252, 0
        %v4241 = vsel %vm1320, %v1253, 0
        %v4244 = vsel %vm1320, %v1254, 0
        %v4247 = vsel %vm1320, %v1255, 0
        %v4250 = vsel %vm1320, %v1256, 0
        %v4253 = vsel %vm1320, %v1257, 0
        %v4256 = vsel %vm1320, %v1258, 0
        %v4259 = vsel %vm1320, %v1259, 0
        %v4262 = vsel %vm1320, %v1260, 0
        %v4265 = vsel %vm1320, %v1261, 0
        %v4268 = vsel %vm1320, %v1262, 0
        %v4271 = vsel %vm1320, %v1263, 0
        %v4274 = vsel %vm1320, %v1264, 0
        %v4277 = vsel %vm1320, %v1265, 0
        %v4280 = vsel %vm1320, %v1266, 0
        %v4283 = vsel %vm1320, %v1267, 0
        %v4286 = vsel %vm1320, %v1268, 0
        %v4289 = vsel %vm1320, %v1269, 0
        %v4292 = vsel %vm1320, %v1270, 0
        %v4295 = vsel %vm1320, %v1271, 0
        %v4298 = vsel %vm1320, %v1272, 0
        %v4301 = vsel %vm1320, %v1273, 0
        %v4304 = vsel %vm1320, %v1274, 0
        %v4307 = vsel %vm1320, %v1275, 0
        %v4310 = vsel %vm1320, %v1276, 0
        %v4313 = vsel %vm1320, %v1277, 0
        %v4316 = vsel %vm1320, %v1278, 0
        %v4319 = vsel %vm1320, %v1279, 0
        %v4322 = vsel %vm1320, %v1280, 0
        %v4325 = vsel %vm1320, %v1281, 0
        %v4328 = vsel %vm1320, %v1282, 0
        %v4331 = vsel %vm1320, %v1283, 0
        %v4334 = vsel %vm1320, %v1284, 0
        %v4337 = vsel %vm1320, %v1285, 0
        %v4340 = vsel %vm1320, %v1286, 0
        %v4343 = vsel %vm1320, %v1287, 0
        %v4346 = vsel %vm1320, %v1288, 0
        %v4349 = vsel %vm1320, %v1289, 0
        %v4352 = vsel %vm1320, %v1290, 0
        %v4355 = vsel %vm1320, %v1291, 0
        %v4358 = vsel %vm1320, %v1292, 0
        %v4361 = vsel %vm1320, %v1293, 0
        %v4364 = vsel %vm1320, %v1294, 0
        %v4367 = vsel %vm1320, %v1295, 0
        %v4370 = vsel %vm1320, %v1296, 0
        %v4373 = vsel %vm1320, %v1297, 0
        %v4376 = vsel %vm1320, %v1298, 0
        %v4379 = vsel %vm1320, %v1299, 0
        %v4382 = vsel %vm1320, %v1300, 0
        %v4385 = vsel %vm1320, %v1301, 0
        %v4388 = vsel %vm1320, %v1302, 0
        %v4391 = vsel %vm1320, %v1303, 0
        %v4394 = vsel %vm1320, %v1304, 0
        %v4397 = vsel %vm1320, %v1305, 0
        %4399 = vmatpush.xpose.msra.mxu0 %v1373
        %4400 = vmatpush.xpose.msra.mxu0 %v1370
        %4401 = vmatpush.xpose.msra.mxu0 %v1367
        %4402 = vmatpush.xpose.msra.mxu0 %v1364
        %4403 = vmatpush.xpose.msra.mxu0 %v1361
        %4404 = vmatpush.xpose.msra.mxu0 %v1358
        %4405 = vmatpush.xpose.msra.mxu0 %v1355
        %4406 = vmatpush.xpose.msra.mxu0 %v1352
        %4407 = vmatpush.xpose.msra.mxu0 %v1349
        %4408 = vmatpush.xpose.msra.mxu0 %v1346
        %4409 = vmatpush.xpose.msra.mxu0 %v1343
        %4410 = vmatpush.xpose.msra.mxu0 %v1340
        %4411 = vmatpush.xpose.msra.mxu0 %v1337
        %4412 = vmatpush.xpose.msra.mxu0 %v1334
        %4413 = vmatpush.xpose.msra.mxu0 %v1331
        %4414 = vmatpush.xpose.msra.mxu0 %v1328
        %4415 = vmatmul.f32.gmra.mxu0 %v1322
        %v4416 = vpop.f32.mrf.mxu0
        %v4417 = vadd.f32 %v1313, %v4416
        %4418 = vmatmul.f32.gmra.mxu0 %v1325
        %v4419 = vpop.f32.mrf.mxu0
        %v4420 = vadd.f32 %v1318, %v4419
        %4421 = vdwg.mxu0
        %4422 = vmatpush.xpose.msra.mxu0 %v1421
        %4423 = vmatpush.xpose.msra.mxu0 %v1418
        %4424 = vmatpush.xpose.msra.mxu0 %v1415
        %4425 = vmatpush.xpose.msra.mxu0 %v1412
        %4426 = vmatpush.xpose.msra.mxu0 %v1409
        %4427 = vmatpush.xpose.msra.mxu0 %v1406
        %4428 = vmatpush.xpose.msra.mxu0 %v1403
        %4429 = vmatpush.xpose.msra.mxu0 %v1400
        %4430 = vmatpush.xpose.msra.mxu0 %v1397
        %4431 = vmatpush.xpose.msra.mxu0 %v1394
        %4432 = vmatpush.xpose.msra.mxu0 %v1391
        %4433 = vmatpush.xpose.msra.mxu0 %v1388
        %4434 = vmatpush.xpose.msra.mxu0 %v1385
        %4435 = vmatpush.xpose.msra.mxu0 %v1382
        %4436 = vmatpush.xpose.msra.mxu0 %v1379
        %4437 = vmatpush.xpose.msra.mxu0 %v1376
        %4438 = vmatmul.f32.gmra.mxu0 %v1322
        %v4439 = vpop.f32.mrf.mxu0
        %v4440 = vadd.f32 %v1313, %v4439
        %4441 = vmatmul.f32.gmra.mxu0 %v1325
        %v4442 = vpop.f32.mrf.mxu0
        %v4443 = vadd.f32 %v1318, %v4442
        %4444 = vdwg.mxu0
        %4445 = vmatpush.xpose.msra.mxu0 %v1469
        %4446 = vmatpush.xpose.msra.mxu0 %v1466
        %4447 = vmatpush.xpose.msra.mxu0 %v1463
        %4448 = vmatpush.xpose.msra.mxu0 %v1460
        %4449 = vmatpush.xpose.msra.mxu0 %v1457
        %4450 = vmatpush.xpose.msra.mxu0 %v1454
        %4451 = vmatpush.xpose.msra.mxu0 %v1451
        %4452 = vmatpush.xpose.msra.mxu0 %v1448
        %4453 = vmatpush.xpose.msra.mxu0 %v1445
        %4454 = vmatpush.xpose.msra.mxu0 %v1442
        %4455 = vmatpush.xpose.msra.mxu0 %v1439
        %4456 = vmatpush.xpose.msra.mxu0 %v1436
        %4457 = vmatpush.xpose.msra.mxu0 %v1433
        %4458 = vmatpush.xpose.msra.mxu0 %v1430
        %4459 = vmatpush.xpose.msra.mxu0 %v1427
        %4460 = vmatpush.xpose.msra.mxu0 %v1424
        %4461 = vmatmul.f32.gmra.mxu0 %v1322
        %v4462 = vpop.f32.mrf.mxu0
        %v4463 = vadd.f32 %v1313, %v4462
        %4464 = vmatmul.f32.gmra.mxu0 %v1325
        %v4465 = vpop.f32.mrf.mxu0
        %v4466 = vadd.f32 %v1318, %v4465
        %4467 = vdwg.mxu0
        %4468 = vmatpush.xpose.msra.mxu0 %v1517
        %4469 = vmatpush.xpose.msra.mxu0 %v1514
        %4470 = vmatpush.xpose.msra.mxu0 %v1511
        %4471 = vmatpush.xpose.msra.mxu0 %v1508
        %4472 = vmatpush.xpose.msra.mxu0 %v1505
        %4473 = vmatpush.xpose.msra.mxu0 %v1502
        %4474 = vmatpush.xpose.msra.mxu0 %v1499
        %4475 = vmatpush.xpose.msra.mxu0 %v1496
        %4476 = vmatpush.xpose.msra.mxu0 %v1493
        %4477 = vmatpush.xpose.msra.mxu0 %v1490
        %4478 = vmatpush.xpose.msra.mxu0 %v1487
        %4479 = vmatpush.xpose.msra.mxu0 %v1484
        %4480 = vmatpush.xpose.msra.mxu0 %v1481
        %4481 = vmatpush.xpose.msra.mxu0 %v1478
        %4482 = vmatpush.xpose.msra.mxu0 %v1475
        %4483 = vmatpush.xpose.msra.mxu0 %v1472
        %4484 = vmatmul.f32.gmra.mxu0 %v1322
        %v4485 = vpop.f32.mrf.mxu0
        %v4486 = vadd.f32 %v1313, %v4485
        %4487 = vmatmul.f32.gmra.mxu0 %v1325
        %v4488 = vpop.f32.mrf.mxu0
        %v4489 = vadd.f32 %v1318, %v4488
        %4490 = vdwg.mxu0
        %4491 = vmatpush.xpose.msra.mxu0 %v1565
        %4492 = vmatpush.xpose.msra.mxu0 %v1562
        %4493 = vmatpush.xpose.msra.mxu0 %v1559
        %4494 = vmatpush.xpose.msra.mxu0 %v1556
        %4495 = vmatpush.xpose.msra.mxu0 %v1553
        %4496 = vmatpush.xpose.msra.mxu0 %v1550
        %4497 = vmatpush.xpose.msra.mxu0 %v1547
        %4498 = vmatpush.xpose.msra.mxu0 %v1544
        %4499 = vmatpush.xpose.msra.mxu0 %v1541
        %4500 = vmatpush.xpose.msra.mxu0 %v1538
        %4501 = vmatpush.xpose.msra.mxu0 %v1535
        %4502 = vmatpush.xpose.msra.mxu0 %v1532
        %4503 = vmatpush.xpose.msra.mxu0 %v1529
        %4504 = vmatpush.xpose.msra.mxu0 %v1526
        %4505 = vmatpush.xpose.msra.mxu0 %v1523
        %4506 = vmatpush.xpose.msra.mxu0 %v1520
        %4507 = vmatmul.f32.gmra.mxu0 %v1322
        %v4508 = vpop.f32.mrf.mxu0
        %v4509 = vadd.f32 %v1313, %v4508
        %4510 = vmatmul.f32.gmra.mxu0 %v1325
        %v4511 = vpop.f32.mrf.mxu0
        %v4512 = vadd.f32 %v1318, %v4511
        %4513 = vdwg.mxu0
        %4514 = vmatpush.xpose.msra.mxu0 %v1613
        %4515 = vmatpush.xpose.msra.mxu0 %v1610
        %4516 = vmatpush.xpose.msra.mxu0 %v1607
        %4517 = vmatpush.xpose.msra.mxu0 %v1604
        %4518 = vmatpush.xpose.msra.mxu0 %v1601
        %4519 = vmatpush.xpose.msra.mxu0 %v1598
        %4520 = vmatpush.xpose.msra.mxu0 %v1595
        %4521 = vmatpush.xpose.msra.mxu0 %v1592
        %4522 = vmatpush.xpose.msra.mxu0 %v1589
        %4523 = vmatpush.xpose.msra.mxu0 %v1586
        %4524 = vmatpush.xpose.msra.mxu0 %v1583
        %4525 = vmatpush.xpose.msra.mxu0 %v1580
        %4526 = vmatpush.xpose.msra.mxu0 %v1577
        %4527 = vmatpush.xpose.msra.mxu0 %v1574
        %4528 = vmatpush.xpose.msra.mxu0 %v1571
        %4529 = vmatpush.xpose.msra.mxu0 %v1568
        %4530 = vmatmul.f32.gmra.mxu0 %v1322
        %v4531 = vpop.f32.mrf.mxu0
        %v4532 = vadd.f32 %v1313, %v4531
        %4533 = vmatmul.f32.gmra.mxu0 %v1325
        %v4534 = vpop.f32.mrf.mxu0
        %v4535 = vadd.f32 %v1318, %v4534
        %4536 = vdwg.mxu0
        %4537 = vmatpush.xpose.msra.mxu0 %v1661
        %4538 = vmatpush.xpose.msra.mxu0 %v1658
        %4539 = vmatpush.xpose.msra.mxu0 %v1655
        %4540 = vmatpush.xpose.msra.mxu0 %v1652
        %4541 = vmatpush.xpose.msra.mxu0 %v1649
        %4542 = vmatpush.xpose.msra.mxu0 %v1646
        %4543 = vmatpush.xpose.msra.mxu0 %v1643
        %4544 = vmatpush.xpose.msra.mxu0 %v1640
        %4545 = vmatpush.xpose.msra.mxu0 %v1637
        %4546 = vmatpush.xpose.msra.mxu0 %v1634
        %4547 = vmatpush.xpose.msra.mxu0 %v1631
        %4548 = vmatpush.xpose.msra.mxu0 %v1628
        %4549 = vmatpush.xpose.msra.mxu0 %v1625
        %4550 = vmatpush.xpose.msra.mxu0 %v1622
        %4551 = vmatpush.xpose.msra.mxu0 %v1619
        %4552 = vmatpush.xpose.msra.mxu0 %v1616
        %4553 = vmatmul.f32.gmra.mxu0 %v1322
        %v4554 = vpop.f32.mrf.mxu0
        %v4555 = vadd.f32 %v1313, %v4554
        %4556 = vmatmul.f32.gmra.mxu0 %v1325
        %v4557 = vpop.f32.mrf.mxu0
        %v4558 = vadd.f32 %v1318, %v4557
        %4559 = vdwg.mxu0
        %4560 = vmatpush.xpose.msra.mxu0 %v1709
        %4561 = vmatpush.xpose.msra.mxu0 %v1706
        %4562 = vmatpush.xpose.msra.mxu0 %v1703
        %4563 = vmatpush.xpose.msra.mxu0 %v1700
        %4564 = vmatpush.xpose.msra.mxu0 %v1697
        %4565 = vmatpush.xpose.msra.mxu0 %v1694
        %4566 = vmatpush.xpose.msra.mxu0 %v1691
        %4567 = vmatpush.xpose.msra.mxu0 %v1688
        %4568 = vmatpush.xpose.msra.mxu0 %v1685
        %4569 = vmatpush.xpose.msra.mxu0 %v1682
        %4570 = vmatpush.xpose.msra.mxu0 %v1679
        %4571 = vmatpush.xpose.msra.mxu0 %v1676
        %4572 = vmatpush.xpose.msra.mxu0 %v1673
        %4573 = vmatpush.xpose.msra.mxu0 %v1670
        %4574 = vmatpush.xpose.msra.mxu0 %v1667
        %4575 = vmatpush.xpose.msra.mxu0 %v1664
        %4576 = vmatmul.f32.gmra.mxu0 %v1322
        %v4577 = vpop.f32.mrf.mxu0
        %v4578 = vadd.f32 %v1313, %v4577
        %4579 = vmatmul.f32.gmra.mxu0 %v1325
        %v4580 = vpop.f32.mrf.mxu0
        %v4581 = vadd.f32 %v1318, %v4580
        %4582 = vdwg.mxu0
        %4583 = vmatpush.xpose.msra.mxu0 %v1757
        %4584 = vmatpush.xpose.msra.mxu0 %v1754
        %4585 = vmatpush.xpose.msra.mxu0 %v1751
        %4586 = vmatpush.xpose.msra.mxu0 %v1748
        %4587 = vmatpush.xpose.msra.mxu0 %v1745
        %4588 = vmatpush.xpose.msra.mxu0 %v1742
        %4589 = vmatpush.xpose.msra.mxu0 %v1739
        %4590 = vmatpush.xpose.msra.mxu0 %v1736
        %4591 = vmatpush.xpose.msra.mxu0 %v1733
        %4592 = vmatpush.xpose.msra.mxu0 %v1730
        %4593 = vmatpush.xpose.msra.mxu0 %v1727
        %4594 = vmatpush.xpose.msra.mxu0 %v1724
        %4595 = vmatpush.xpose.msra.mxu0 %v1721
        %4596 = vmatpush.xpose.msra.mxu0 %v1718
        %4597 = vmatpush.xpose.msra.mxu0 %v1715
        %4598 = vmatpush.xpose.msra.mxu0 %v1712
        %4599 = vmatmul.f32.gmra.mxu0 %v1322
        %v4600 = vpop.f32.mrf.mxu0
        %v4601 = vadd.f32 %v1313, %v4600
        %4602 = vmatmul.f32.gmra.mxu0 %v1325
        %v4603 = vpop.f32.mrf.mxu0
        %v4604 = vadd.f32 %v1318, %v4603
        %4605 = vdwg.mxu0
        %4606 = vmatpush.xpose.msra.mxu0 %v1805
        %4607 = vmatpush.xpose.msra.mxu0 %v1802
        %4608 = vmatpush.xpose.msra.mxu0 %v1799
        %4609 = vmatpush.xpose.msra.mxu0 %v1796
        %4610 = vmatpush.xpose.msra.mxu0 %v1793
        %4611 = vmatpush.xpose.msra.mxu0 %v1790
        %4612 = vmatpush.xpose.msra.mxu0 %v1787
        %4613 = vmatpush.xpose.msra.mxu0 %v1784
        %4614 = vmatpush.xpose.msra.mxu0 %v1781
        %4615 = vmatpush.xpose.msra.mxu0 %v1778
        %4616 = vmatpush.xpose.msra.mxu0 %v1775
        %4617 = vmatpush.xpose.msra.mxu0 %v1772
        %4618 = vmatpush.xpose.msra.mxu0 %v1769
        %4619 = vmatpush.xpose.msra.mxu0 %v1766
        %4620 = vmatpush.xpose.msra.mxu0 %v1763
        %4621 = vmatpush.xpose.msra.mxu0 %v1760
        %4622 = vmatmul.f32.gmra.mxu0 %v1322
        %v4623 = vpop.f32.mrf.mxu0
        %v4624 = vadd.f32 %v1313, %v4623
        %4625 = vmatmul.f32.gmra.mxu0 %v1325
        %v4626 = vpop.f32.mrf.mxu0
        %v4627 = vadd.f32 %v1318, %v4626
        %4628 = vdwg.mxu0
        %4629 = vmatpush.xpose.msra.mxu0 %v1853
        %4630 = vmatpush.xpose.msra.mxu0 %v1850
        %4631 = vmatpush.xpose.msra.mxu0 %v1847
        %4632 = vmatpush.xpose.msra.mxu0 %v1844
        %4633 = vmatpush.xpose.msra.mxu0 %v1841
        %4634 = vmatpush.xpose.msra.mxu0 %v1838
        %4635 = vmatpush.xpose.msra.mxu0 %v1835
        %4636 = vmatpush.xpose.msra.mxu0 %v1832
        %4637 = vmatpush.xpose.msra.mxu0 %v1829
        %4638 = vmatpush.xpose.msra.mxu0 %v1826
        %4639 = vmatpush.xpose.msra.mxu0 %v1823
        %4640 = vmatpush.xpose.msra.mxu0 %v1820
        %4641 = vmatpush.xpose.msra.mxu0 %v1817
        %4642 = vmatpush.xpose.msra.mxu0 %v1814
        %4643 = vmatpush.xpose.msra.mxu0 %v1811
        %4644 = vmatpush.xpose.msra.mxu0 %v1808
        %4645 = vmatmul.f32.gmra.mxu0 %v1322
        %v4646 = vpop.f32.mrf.mxu0
        %v4647 = vadd.f32 %v1313, %v4646
        %4648 = vmatmul.f32.gmra.mxu0 %v1325
        %v4649 = vpop.f32.mrf.mxu0
        %v4650 = vadd.f32 %v1318, %v4649
        %4651 = vdwg.mxu0
        %4652 = vmatpush.xpose.msra.mxu0 %v1901
        %4653 = vmatpush.xpose.msra.mxu0 %v1898
        %4654 = vmatpush.xpose.msra.mxu0 %v1895
        %4655 = vmatpush.xpose.msra.mxu0 %v1892
        %4656 = vmatpush.xpose.msra.mxu0 %v1889
        %4657 = vmatpush.xpose.msra.mxu0 %v1886
        %4658 = vmatpush.xpose.msra.mxu0 %v1883
        %4659 = vmatpush.xpose.msra.mxu0 %v1880
        %4660 = vmatpush.xpose.msra.mxu0 %v1877
        %4661 = vmatpush.xpose.msra.mxu0 %v1874
        %4662 = vmatpush.xpose.msra.mxu0 %v1871
        %4663 = vmatpush.xpose.msra.mxu0 %v1868
        %4664 = vmatpush.xpose.msra.mxu0 %v1865
        %4665 = vmatpush.xpose.msra.mxu0 %v1862
        %4666 = vmatpush.xpose.msra.mxu0 %v1859
        %4667 = vmatpush.xpose.msra.mxu0 %v1856
        %4668 = vmatmul.f32.gmra.mxu0 %v1322
        %v4669 = vpop.f32.mrf.mxu0
        %v4670 = vadd.f32 %v1313, %v4669
        %4671 = vmatmul.f32.gmra.mxu0 %v1325
        %v4672 = vpop.f32.mrf.mxu0
        %v4673 = vadd.f32 %v1318, %v4672
        %4674 = vdwg.mxu0
        %4675 = vmatpush.xpose.msra.mxu0 %v1949
        %4676 = vmatpush.xpose.msra.mxu0 %v1946
        %4677 = vmatpush.xpose.msra.mxu0 %v1943
        %4678 = vmatpush.xpose.msra.mxu0 %v1940
        %4679 = vmatpush.xpose.msra.mxu0 %v1937
        %4680 = vmatpush.xpose.msra.mxu0 %v1934
        %4681 = vmatpush.xpose.msra.mxu0 %v1931
        %4682 = vmatpush.xpose.msra.mxu0 %v1928
        %4683 = vmatpush.xpose.msra.mxu0 %v1925
        %4684 = vmatpush.xpose.msra.mxu0 %v1922
        %4685 = vmatpush.xpose.msra.mxu0 %v1919
        %4686 = vmatpush.xpose.msra.mxu0 %v1916
        %4687 = vmatpush.xpose.msra.mxu0 %v1913
        %4688 = vmatpush.xpose.msra.mxu0 %v1910
        %4689 = vmatpush.xpose.msra.mxu0 %v1907
        %4690 = vmatpush.xpose.msra.mxu0 %v1904
        %4691 = vmatmul.f32.gmra.mxu0 %v1322
        %v4692 = vpop.f32.mrf.mxu0
        %v4693 = vadd.f32 %v1313, %v4692
        %4694 = vmatmul.f32.gmra.mxu0 %v1325
        %v4695 = vpop.f32.mrf.mxu0
        %v4696 = vadd.f32 %v1318, %v4695
        %4697 = vdwg.mxu0
        %4698 = vmatpush.xpose.msra.mxu0 %v1997
        %4699 = vmatpush.xpose.msra.mxu0 %v1994
        %4700 = vmatpush.xpose.msra.mxu0 %v1991
        %4701 = vmatpush.xpose.msra.mxu0 %v1988
        %4702 = vmatpush.xpose.msra.mxu0 %v1985
        %4703 = vmatpush.xpose.msra.mxu0 %v1982
        %4704 = vmatpush.xpose.msra.mxu0 %v1979
        %4705 = vmatpush.xpose.msra.mxu0 %v1976
        %4706 = vmatpush.xpose.msra.mxu0 %v1973
        %4707 = vmatpush.xpose.msra.mxu0 %v1970
        %4708 = vmatpush.xpose.msra.mxu0 %v1967
        %4709 = vmatpush.xpose.msra.mxu0 %v1964
        %4710 = vmatpush.xpose.msra.mxu0 %v1961
        %4711 = vmatpush.xpose.msra.mxu0 %v1958
        %4712 = vmatpush.xpose.msra.mxu0 %v1955
        %4713 = vmatpush.xpose.msra.mxu0 %v1952
        %4714 = vmatmul.f32.gmra.mxu0 %v1322
        %v4715 = vpop.f32.mrf.mxu0
        %v4716 = vadd.f32 %v1313, %v4715
        %4717 = vmatmul.f32.gmra.mxu0 %v1325
        %v4718 = vpop.f32.mrf.mxu0
        %v4719 = vadd.f32 %v1318, %v4718
        %4720 = vdwg.mxu0
        %4721 = vmatpush.xpose.msra.mxu0 %v2045
        %4722 = vmatpush.xpose.msra.mxu0 %v2042
        %4723 = vmatpush.xpose.msra.mxu0 %v2039
        %4724 = vmatpush.xpose.msra.mxu0 %v2036
        %4725 = vmatpush.xpose.msra.mxu0 %v2033
        %4726 = vmatpush.xpose.msra.mxu0 %v2030
        %4727 = vmatpush.xpose.msra.mxu0 %v2027
        %4728 = vmatpush.xpose.msra.mxu0 %v2024
        %4729 = vmatpush.xpose.msra.mxu0 %v2021
        %4730 = vmatpush.xpose.msra.mxu0 %v2018
        %4731 = vmatpush.xpose.msra.mxu0 %v2015
        %4732 = vmatpush.xpose.msra.mxu0 %v2012
        %4733 = vmatpush.xpose.msra.mxu0 %v2009
        %4734 = vmatpush.xpose.msra.mxu0 %v2006
        %4735 = vmatpush.xpose.msra.mxu0 %v2003
        %4736 = vmatpush.xpose.msra.mxu0 %v2000
        %4737 = vmatmul.f32.gmra.mxu0 %v1322
        %v4738 = vpop.f32.mrf.mxu0
        %v4739 = vadd.f32 %v1313, %v4738
        %4740 = vmatmul.f32.gmra.mxu0 %v1325
        %v4741 = vpop.f32.mrf.mxu0
        %v4742 = vadd.f32 %v1318, %v4741
        %4743 = vdwg.mxu0
        %4744 = vmatpush.xpose.msra.mxu0 %v2093
        %4745 = vmatpush.xpose.msra.mxu0 %v2090
        %4746 = vmatpush.xpose.msra.mxu0 %v2087
        %4747 = vmatpush.xpose.msra.mxu0 %v2084
        %4748 = vmatpush.xpose.msra.mxu0 %v2081
        %4749 = vmatpush.xpose.msra.mxu0 %v2078
        %4750 = vmatpush.xpose.msra.mxu0 %v2075
        %4751 = vmatpush.xpose.msra.mxu0 %v2072
        %4752 = vmatpush.xpose.msra.mxu0 %v2069
        %4753 = vmatpush.xpose.msra.mxu0 %v2066
        %4754 = vmatpush.xpose.msra.mxu0 %v2063
        %4755 = vmatpush.xpose.msra.mxu0 %v2060
        %4756 = vmatpush.xpose.msra.mxu0 %v2057
        %4757 = vmatpush.xpose.msra.mxu0 %v2054
        %4758 = vmatpush.xpose.msra.mxu0 %v2051
        %4759 = vmatpush.xpose.msra.mxu0 %v2048
        %4760 = vmatmul.f32.gmra.mxu0 %v1322
        %v4761 = vpop.f32.mrf.mxu0
        %v4762 = vadd.f32 %v1313, %v4761
        %4763 = vmatmul.f32.gmra.mxu0 %v1325
        %v4764 = vpop.f32.mrf.mxu0
        %v4765 = vadd.f32 %v1318, %v4764
        %4766 = vdwg.mxu0
        %4767 = vmatpush.xpose.msra.mxu0 %v2141
        %4768 = vmatpush.xpose.msra.mxu0 %v2138
        %4769 = vmatpush.xpose.msra.mxu0 %v2135
        %4770 = vmatpush.xpose.msra.mxu0 %v2132
        %4771 = vmatpush.xpose.msra.mxu0 %v2129
        %4772 = vmatpush.xpose.msra.mxu0 %v2126
        %4773 = vmatpush.xpose.msra.mxu0 %v2123
        %4774 = vmatpush.xpose.msra.mxu0 %v2120
        %4775 = vmatpush.xpose.msra.mxu0 %v2117
        %4776 = vmatpush.xpose.msra.mxu0 %v2114
        %4777 = vmatpush.xpose.msra.mxu0 %v2111
        %4778 = vmatpush.xpose.msra.mxu0 %v2108
        %4779 = vmatpush.xpose.msra.mxu0 %v2105
        %4780 = vmatpush.xpose.msra.mxu0 %v2102
        %4781 = vmatpush.xpose.msra.mxu0 %v2099
        %4782 = vmatpush.xpose.msra.mxu0 %v2096
        %4783 = vmatmul.f32.gmra.mxu0 %v1322
        %v4784 = vpop.f32.mrf.mxu0
        %v4785 = vadd.f32 %v1313, %v4784
        %4786 = vmatmul.f32.gmra.mxu0 %v1325
        %v4787 = vpop.f32.mrf.mxu0
        %v4788 = vadd.f32 %v1318, %v4787
        %4789 = vdwg.mxu0
        %4790 = vmatpush.xpose.msra.mxu0 %v2189
        %4791 = vmatpush.xpose.msra.mxu0 %v2186
        %4792 = vmatpush.xpose.msra.mxu0 %v2183
        %4793 = vmatpush.xpose.msra.mxu0 %v2180
        %4794 = vmatpush.xpose.msra.mxu0 %v2177
        %4795 = vmatpush.xpose.msra.mxu0 %v2174
        %4796 = vmatpush.xpose.msra.mxu0 %v2171
        %4797 = vmatpush.xpose.msra.mxu0 %v2168
        %4798 = vmatpush.xpose.msra.mxu0 %v2165
        %4799 = vmatpush.xpose.msra.mxu0 %v2162
        %4800 = vmatpush.xpose.msra.mxu0 %v2159
        %4801 = vmatpush.xpose.msra.mxu0 %v2156
        %4802 = vmatpush.xpose.msra.mxu0 %v2153
        %4803 = vmatpush.xpose.msra.mxu0 %v2150
        %4804 = vmatpush.xpose.msra.mxu0 %v2147
        %4805 = vmatpush.xpose.msra.mxu0 %v2144
        %4806 = vmatmul.f32.gmra.mxu0 %v1322
        %v4807 = vpop.f32.mrf.mxu0
        %v4808 = vadd.f32 %v1313, %v4807
        %4809 = vmatmul.f32.gmra.mxu0 %v1325
        %v4810 = vpop.f32.mrf.mxu0
        %v4811 = vadd.f32 %v1318, %v4810
        %4812 = vdwg.mxu0
        %4813 = vmatpush.xpose.msra.mxu0 %v2237
        %4814 = vmatpush.xpose.msra.mxu0 %v2234
        %4815 = vmatpush.xpose.msra.mxu0 %v2231
        %4816 = vmatpush.xpose.msra.mxu0 %v2228
        %4817 = vmatpush.xpose.msra.mxu0 %v2225
        %4818 = vmatpush.xpose.msra.mxu0 %v2222
        %4819 = vmatpush.xpose.msra.mxu0 %v2219
        %4820 = vmatpush.xpose.msra.mxu0 %v2216
        %4821 = vmatpush.xpose.msra.mxu0 %v2213
        %4822 = vmatpush.xpose.msra.mxu0 %v2210
        %4823 = vmatpush.xpose.msra.mxu0 %v2207
        %4824 = vmatpush.xpose.msra.mxu0 %v2204
        %4825 = vmatpush.xpose.msra.mxu0 %v2201
        %4826 = vmatpush.xpose.msra.mxu0 %v2198
        %4827 = vmatpush.xpose.msra.mxu0 %v2195
        %4828 = vmatpush.xpose.msra.mxu0 %v2192
        %4829 = vmatmul.f32.gmra.mxu0 %v1322
        %v4830 = vpop.f32.mrf.mxu0
        %v4831 = vadd.f32 %v1313, %v4830
        %4832 = vmatmul.f32.gmra.mxu0 %v1325
        %v4833 = vpop.f32.mrf.mxu0
        %v4834 = vadd.f32 %v1318, %v4833
        %4835 = vdwg.mxu0
        %4836 = vmatpush.xpose.msra.mxu0 %v2285
        %4837 = vmatpush.xpose.msra.mxu0 %v2282
        %4838 = vmatpush.xpose.msra.mxu0 %v2279
        %4839 = vmatpush.xpose.msra.mxu0 %v2276
        %4840 = vmatpush.xpose.msra.mxu0 %v2273
        %4841 = vmatpush.xpose.msra.mxu0 %v2270
        %4842 = vmatpush.xpose.msra.mxu0 %v2267
        %4843 = vmatpush.xpose.msra.mxu0 %v2264
        %4844 = vmatpush.xpose.msra.mxu0 %v2261
        %4845 = vmatpush.xpose.msra.mxu0 %v2258
        %4846 = vmatpush.xpose.msra.mxu0 %v2255
        %4847 = vmatpush.xpose.msra.mxu0 %v2252
        %4848 = vmatpush.xpose.msra.mxu0 %v2249
        %4849 = vmatpush.xpose.msra.mxu0 %v2246
        %4850 = vmatpush.xpose.msra.mxu0 %v2243
        %4851 = vmatpush.xpose.msra.mxu0 %v2240
        %4852 = vmatmul.f32.gmra.mxu0 %v1322
        %v4853 = vpop.f32.mrf.mxu0
        %v4854 = vadd.f32 %v1313, %v4853
        %4855 = vmatmul.f32.gmra.mxu0 %v1325
        %v4856 = vpop.f32.mrf.mxu0
        %v4857 = vadd.f32 %v1318, %v4856
        %4858 = vdwg.mxu0
        %4859 = vmatpush.xpose.msra.mxu0 %v2333
        %4860 = vmatpush.xpose.msra.mxu0 %v2330
        %4861 = vmatpush.xpose.msra.mxu0 %v2327
        %4862 = vmatpush.xpose.msra.mxu0 %v2324
        %4863 = vmatpush.xpose.msra.mxu0 %v2321
        %4864 = vmatpush.xpose.msra.mxu0 %v2318
        %4865 = vmatpush.xpose.msra.mxu0 %v2315
        %4866 = vmatpush.xpose.msra.mxu0 %v2312
        %4867 = vmatpush.xpose.msra.mxu0 %v2309
        %4868 = vmatpush.xpose.msra.mxu0 %v2306
        %4869 = vmatpush.xpose.msra.mxu0 %v2303
        %4870 = vmatpush.xpose.msra.mxu0 %v2300
        %4871 = vmatpush.xpose.msra.mxu0 %v2297
        %4872 = vmatpush.xpose.msra.mxu0 %v2294
        %4873 = vmatpush.xpose.msra.mxu0 %v2291
        %4874 = vmatpush.xpose.msra.mxu0 %v2288
        %4875 = vmatmul.f32.gmra.mxu0 %v1322
        %v4876 = vpop.f32.mrf.mxu0
        %v4877 = vadd.f32 %v1313, %v4876
        %4878 = vmatmul.f32.gmra.mxu0 %v1325
        %v4879 = vpop.f32.mrf.mxu0
        %v4880 = vadd.f32 %v1318, %v4879
        %4881 = vdwg.mxu0
        %4882 = vmatpush.xpose.msra.mxu0 %v2381
        %4883 = vmatpush.xpose.msra.mxu0 %v2378
        %4884 = vmatpush.xpose.msra.mxu0 %v2375
        %4885 = vmatpush.xpose.msra.mxu0 %v2372
        %4886 = vmatpush.xpose.msra.mxu0 %v2369
        %4887 = vmatpush.xpose.msra.mxu0 %v2366
        %4888 = vmatpush.xpose.msra.mxu0 %v2363
        %4889 = vmatpush.xpose.msra.mxu0 %v2360
        %4890 = vmatpush.xpose.msra.mxu0 %v2357
        %4891 = vmatpush.xpose.msra.mxu0 %v2354
        %4892 = vmatpush.xpose.msra.mxu0 %v2351
        %4893 = vmatpush.xpose.msra.mxu0 %v2348
        %4894 = vmatpush.xpose.msra.mxu0 %v2345
        %4895 = vmatpush.xpose.msra.mxu0 %v2342
        %4896 = vmatpush.xpose.msra.mxu0 %v2339
        %4897 = vmatpush.xpose.msra.mxu0 %v2336
        %4898 = vmatmul.f32.gmra.mxu0 %v1322
        %v4899 = vpop.f32.mrf.mxu0
        %v4900 = vadd.f32 %v1313, %v4899
        %4901 = vmatmul.f32.gmra.mxu0 %v1325
        %v4902 = vpop.f32.mrf.mxu0
        %v4903 = vadd.f32 %v1318, %v4902
        %4904 = vdwg.mxu0
        %4905 = vmatpush.xpose.msra.mxu0 %v2429
        %4906 = vmatpush.xpose.msra.mxu0 %v2426
        %4907 = vmatpush.xpose.msra.mxu0 %v2423
        %4908 = vmatpush.xpose.msra.mxu0 %v2420
        %4909 = vmatpush.xpose.msra.mxu0 %v2417
        %4910 = vmatpush.xpose.msra.mxu0 %v2414
        %4911 = vmatpush.xpose.msra.mxu0 %v2411
        %4912 = vmatpush.xpose.msra.mxu0 %v2408
        %4913 = vmatpush.xpose.msra.mxu0 %v2405
        %4914 = vmatpush.xpose.msra.mxu0 %v2402
        %4915 = vmatpush.xpose.msra.mxu0 %v2399
        %4916 = vmatpush.xpose.msra.mxu0 %v2396
        %4917 = vmatpush.xpose.msra.mxu0 %v2393
        %4918 = vmatpush.xpose.msra.mxu0 %v2390
        %4919 = vmatpush.xpose.msra.mxu0 %v2387
        %4920 = vmatpush.xpose.msra.mxu0 %v2384
        %4921 = vmatmul.f32.gmra.mxu0 %v1322
        %v4922 = vpop.f32.mrf.mxu0
        %v4923 = vadd.f32 %v1313, %v4922
        %4924 = vmatmul.f32.gmra.mxu0 %v1325
        %v4925 = vpop.f32.mrf.mxu0
        %v4926 = vadd.f32 %v1318, %v4925
        %4927 = vdwg.mxu0
        %4928 = vmatpush.xpose.msra.mxu0 %v2477
        %4929 = vmatpush.xpose.msra.mxu0 %v2474
        %4930 = vmatpush.xpose.msra.mxu0 %v2471
        %4931 = vmatpush.xpose.msra.mxu0 %v2468
        %4932 = vmatpush.xpose.msra.mxu0 %v2465
        %4933 = vmatpush.xpose.msra.mxu0 %v2462
        %4934 = vmatpush.xpose.msra.mxu0 %v2459
        %4935 = vmatpush.xpose.msra.mxu0 %v2456
        %4936 = vmatpush.xpose.msra.mxu0 %v2453
        %4937 = vmatpush.xpose.msra.mxu0 %v2450
        %4938 = vmatpush.xpose.msra.mxu0 %v2447
        %4939 = vmatpush.xpose.msra.mxu0 %v2444
        %4940 = vmatpush.xpose.msra.mxu0 %v2441
        %4941 = vmatpush.xpose.msra.mxu0 %v2438
        %4942 = vmatpush.xpose.msra.mxu0 %v2435
        %4943 = vmatpush.xpose.msra.mxu0 %v2432
        %4944 = vmatmul.f32.gmra.mxu0 %v1322
        %v4945 = vpop.f32.mrf.mxu0
        %v4946 = vadd.f32 %v1313, %v4945
        %4947 = vmatmul.f32.gmra.mxu0 %v1325
        %v4948 = vpop.f32.mrf.mxu0
        %v4949 = vadd.f32 %v1318, %v4948
        %4950 = vdwg.mxu0
        %4951 = vmatpush.xpose.msra.mxu0 %v2525
        %4952 = vmatpush.xpose.msra.mxu0 %v2522
        %4953 = vmatpush.xpose.msra.mxu0 %v2519
        %4954 = vmatpush.xpose.msra.mxu0 %v2516
        %4955 = vmatpush.xpose.msra.mxu0 %v2513
        %4956 = vmatpush.xpose.msra.mxu0 %v2510
        %4957 = vmatpush.xpose.msra.mxu0 %v2507
        %4958 = vmatpush.xpose.msra.mxu0 %v2504
        %4959 = vmatpush.xpose.msra.mxu0 %v2501
        %4960 = vmatpush.xpose.msra.mxu0 %v2498
        %4961 = vmatpush.xpose.msra.mxu0 %v2495
        %4962 = vmatpush.xpose.msra.mxu0 %v2492
        %4963 = vmatpush.xpose.msra.mxu0 %v2489
        %4964 = vmatpush.xpose.msra.mxu0 %v2486
        %4965 = vmatpush.xpose.msra.mxu0 %v2483
        %4966 = vmatpush.xpose.msra.mxu0 %v2480
        %4967 = vmatmul.f32.gmra.mxu0 %v1322
        %v4968 = vpop.f32.mrf.mxu0
        %v4969 = vadd.f32 %v1313, %v4968
        %4970 = vmatmul.f32.gmra.mxu0 %v1325
        %v4971 = vpop.f32.mrf.mxu0
        %v4972 = vadd.f32 %v1318, %v4971
        %4973 = vdwg.mxu0
        %4974 = vmatpush.xpose.msra.mxu0 %v2573
        %4975 = vmatpush.xpose.msra.mxu0 %v2570
        %4976 = vmatpush.xpose.msra.mxu0 %v2567
        %4977 = vmatpush.xpose.msra.mxu0 %v2564
        %4978 = vmatpush.xpose.msra.mxu0 %v2561
        %4979 = vmatpush.xpose.msra.mxu0 %v2558
        %4980 = vmatpush.xpose.msra.mxu0 %v2555
        %4981 = vmatpush.xpose.msra.mxu0 %v2552
        %4982 = vmatpush.xpose.msra.mxu0 %v2549
        %4983 = vmatpush.xpose.msra.mxu0 %v2546
        %4984 = vmatpush.xpose.msra.mxu0 %v2543
        %4985 = vmatpush.xpose.msra.mxu0 %v2540
        %4986 = vmatpush.xpose.msra.mxu0 %v2537
        %4987 = vmatpush.xpose.msra.mxu0 %v2534
        %4988 = vmatpush.xpose.msra.mxu0 %v2531
        %4989 = vmatpush.xpose.msra.mxu0 %v2528
        %4990 = vmatmul.f32.gmra.mxu0 %v1322
        %v4991 = vpop.f32.mrf.mxu0
        %v4992 = vadd.f32 %v1313, %v4991
        %4993 = vmatmul.f32.gmra.mxu0 %v1325
        %v4994 = vpop.f32.mrf.mxu0
        %v4995 = vadd.f32 %v1318, %v4994
        %4996 = vdwg.mxu0
        %4997 = vmatpush.xpose.msra.mxu0 %v2621
        %4998 = vmatpush.xpose.msra.mxu0 %v2618
        %4999 = vmatpush.xpose.msra.mxu0 %v2615
        %5000 = vmatpush.xpose.msra.mxu0 %v2612
        %5001 = vmatpush.xpose.msra.mxu0 %v2609
        %5002 = vmatpush.xpose.msra.mxu0 %v2606
        %5003 = vmatpush.xpose.msra.mxu0 %v2603
        %5004 = vmatpush.xpose.msra.mxu0 %v2600
        %5005 = vmatpush.xpose.msra.mxu0 %v2597
        %5006 = vmatpush.xpose.msra.mxu0 %v2594
        %5007 = vmatpush.xpose.msra.mxu0 %v2591
        %5008 = vmatpush.xpose.msra.mxu0 %v2588
        %5009 = vmatpush.xpose.msra.mxu0 %v2585
        %5010 = vmatpush.xpose.msra.mxu0 %v2582
        %5011 = vmatpush.xpose.msra.mxu0 %v2579
        %5012 = vmatpush.xpose.msra.mxu0 %v2576
        %5013 = vmatmul.f32.gmra.mxu0 %v1322
        %v5014 = vpop.f32.mrf.mxu0
        %v5015 = vadd.f32 %v1313, %v5014
        %5016 = vmatmul.f32.gmra.mxu0 %v1325
        %v5017 = vpop.f32.mrf.mxu0
        %v5018 = vadd.f32 %v1318, %v5017
        %5019 = vdwg.mxu0
        %5020 = vmatpush.xpose.msra.mxu0 %v2669
        %5021 = vmatpush.xpose.msra.mxu0 %v2666
        %5022 = vmatpush.xpose.msra.mxu0 %v2663
        %5023 = vmatpush.xpose.msra.mxu0 %v2660
        %5024 = vmatpush.xpose.msra.mxu0 %v2657
        %5025 = vmatpush.xpose.msra.mxu0 %v2654
        %5026 = vmatpush.xpose.msra.mxu0 %v2651
        %5027 = vmatpush.xpose.msra.mxu0 %v2648
        %5028 = vmatpush.xpose.msra.mxu0 %v2645
        %5029 = vmatpush.xpose.msra.mxu0 %v2642
        %5030 = vmatpush.xpose.msra.mxu0 %v2639
        %5031 = vmatpush.xpose.msra.mxu0 %v2636
        %5032 = vmatpush.xpose.msra.mxu0 %v2633
        %5033 = vmatpush.xpose.msra.mxu0 %v2630
        %5034 = vmatpush.xpose.msra.mxu0 %v2627
        %5035 = vmatpush.xpose.msra.mxu0 %v2624
        %5036 = vmatmul.f32.gmra.mxu0 %v1322
        %v5037 = vpop.f32.mrf.mxu0
        %v5038 = vadd.f32 %v1313, %v5037
        %5039 = vmatmul.f32.gmra.mxu0 %v1325
        %v5040 = vpop.f32.mrf.mxu0
        %v5041 = vadd.f32 %v1318, %v5040
        %5042 = vdwg.mxu0
        %5043 = vmatpush.xpose.msra.mxu0 %v2717
        %5044 = vmatpush.xpose.msra.mxu0 %v2714
        %5045 = vmatpush.xpose.msra.mxu0 %v2711
        %5046 = vmatpush.xpose.msra.mxu0 %v2708
        %5047 = vmatpush.xpose.msra.mxu0 %v2705
        %5048 = vmatpush.xpose.msra.mxu0 %v2702
        %5049 = vmatpush.xpose.msra.mxu0 %v2699
        %5050 = vmatpush.xpose.msra.mxu0 %v2696
        %5051 = vmatpush.xpose.msra.mxu0 %v2693
        %5052 = vmatpush.xpose.msra.mxu0 %v2690
        %5053 = vmatpush.xpose.msra.mxu0 %v2687
        %5054 = vmatpush.xpose.msra.mxu0 %v2684
        %5055 = vmatpush.xpose.msra.mxu0 %v2681
        %5056 = vmatpush.xpose.msra.mxu0 %v2678
        %5057 = vmatpush.xpose.msra.mxu0 %v2675
        %5058 = vmatpush.xpose.msra.mxu0 %v2672
        %5059 = vmatmul.f32.gmra.mxu0 %v1322
        %v5060 = vpop.f32.mrf.mxu0
        %v5061 = vadd.f32 %v1313, %v5060
        %5062 = vmatmul.f32.gmra.mxu0 %v1325
        %v5063 = vpop.f32.mrf.mxu0
        %v5064 = vadd.f32 %v1318, %v5063
        %5065 = vdwg.mxu0
        %5066 = vmatpush.xpose.msra.mxu0 %v2765
        %5067 = vmatpush.xpose.msra.mxu0 %v2762
        %5068 = vmatpush.xpose.msra.mxu0 %v2759
        %5069 = vmatpush.xpose.msra.mxu0 %v2756
        %5070 = vmatpush.xpose.msra.mxu0 %v2753
        %5071 = vmatpush.xpose.msra.mxu0 %v2750
        %5072 = vmatpush.xpose.msra.mxu0 %v2747
        %5073 = vmatpush.xpose.msra.mxu0 %v2744
        %5074 = vmatpush.xpose.msra.mxu0 %v2741
        %5075 = vmatpush.xpose.msra.mxu0 %v2738
        %5076 = vmatpush.xpose.msra.mxu0 %v2735
        %5077 = vmatpush.xpose.msra.mxu0 %v2732
        %5078 = vmatpush.xpose.msra.mxu0 %v2729
        %5079 = vmatpush.xpose.msra.mxu0 %v2726
        %5080 = vmatpush.xpose.msra.mxu0 %v2723
        %5081 = vmatpush.xpose.msra.mxu0 %v2720
        %5082 = vmatmul.f32.gmra.mxu0 %v1322
        %v5083 = vpop.f32.mrf.mxu0
        %v5084 = vadd.f32 %v1313, %v5083
        %5085 = vmatmul.f32.gmra.mxu0 %v1325
        %v5086 = vpop.f32.mrf.mxu0
        %v5087 = vadd.f32 %v1318, %v5086
        %5088 = vdwg.mxu0
        %5089 = vmatpush.xpose.msra.mxu0 %v2813
        %5090 = vmatpush.xpose.msra.mxu0 %v2810
        %5091 = vmatpush.xpose.msra.mxu0 %v2807
        %5092 = vmatpush.xpose.msra.mxu0 %v2804
        %5093 = vmatpush.xpose.msra.mxu0 %v2801
        %5094 = vmatpush.xpose.msra.mxu0 %v2798
        %5095 = vmatpush.xpose.msra.mxu0 %v2795
        %5096 = vmatpush.xpose.msra.mxu0 %v2792
        %5097 = vmatpush.xpose.msra.mxu0 %v2789
        %5098 = vmatpush.xpose.msra.mxu0 %v2786
        %5099 = vmatpush.xpose.msra.mxu0 %v2783
        %5100 = vmatpush.xpose.msra.mxu0 %v2780
        %5101 = vmatpush.xpose.msra.mxu0 %v2777
        %5102 = vmatpush.xpose.msra.mxu0 %v2774
        %5103 = vmatpush.xpose.msra.mxu0 %v2771
        %5104 = vmatpush.xpose.msra.mxu0 %v2768
        %5105 = vmatmul.f32.gmra.mxu0 %v1322
        %v5106 = vpop.f32.mrf.mxu0
        %v5107 = vadd.f32 %v1313, %v5106
        %5108 = vmatmul.f32.gmra.mxu0 %v1325
        %v5109 = vpop.f32.mrf.mxu0
        %v5110 = vadd.f32 %v1318, %v5109
        %5111 = vdwg.mxu0
        %5112 = vmatpush.xpose.msra.mxu0 %v2861
        %5113 = vmatpush.xpose.msra.mxu0 %v2858
        %5114 = vmatpush.xpose.msra.mxu0 %v2855
        %5115 = vmatpush.xpose.msra.mxu0 %v2852
        %5116 = vmatpush.xpose.msra.mxu0 %v2849
        %5117 = vmatpush.xpose.msra.mxu0 %v2846
        %5118 = vmatpush.xpose.msra.mxu0 %v2843
        %5119 = vmatpush.xpose.msra.mxu0 %v2840
        %5120 = vmatpush.xpose.msra.mxu0 %v2837
        %5121 = vmatpush.xpose.msra.mxu0 %v2834
        %5122 = vmatpush.xpose.msra.mxu0 %v2831
        %5123 = vmatpush.xpose.msra.mxu0 %v2828
        %5124 = vmatpush.xpose.msra.mxu0 %v2825
        %5125 = vmatpush.xpose.msra.mxu0 %v2822
        %5126 = vmatpush.xpose.msra.mxu0 %v2819
        %5127 = vmatpush.xpose.msra.mxu0 %v2816
        %5128 = vmatmul.f32.gmra.mxu0 %v1322
        %v5129 = vpop.f32.mrf.mxu0
        %v5130 = vadd.f32 %v1313, %v5129
        %5131 = vmatmul.f32.gmra.mxu0 %v1325
        %v5132 = vpop.f32.mrf.mxu0
        %v5133 = vadd.f32 %v1318, %v5132
        %5134 = vdwg.mxu0
        %5135 = vmatpush.xpose.msra.mxu0 %v2909
        %5136 = vmatpush.xpose.msra.mxu0 %v2906
        %5137 = vmatpush.xpose.msra.mxu0 %v2903
        %5138 = vmatpush.xpose.msra.mxu0 %v2900
        %5139 = vmatpush.xpose.msra.mxu0 %v2897
        %5140 = vmatpush.xpose.msra.mxu0 %v2894
        %5141 = vmatpush.xpose.msra.mxu0 %v2891
        %5142 = vmatpush.xpose.msra.mxu0 %v2888
        %5143 = vmatpush.xpose.msra.mxu0 %v2885
        %5144 = vmatpush.xpose.msra.mxu0 %v2882
        %5145 = vmatpush.xpose.msra.mxu0 %v2879
        %5146 = vmatpush.xpose.msra.mxu0 %v2876
        %5147 = vmatpush.xpose.msra.mxu0 %v2873
        %5148 = vmatpush.xpose.msra.mxu0 %v2870
        %5149 = vmatpush.xpose.msra.mxu0 %v2867
        %5150 = vmatpush.xpose.msra.mxu0 %v2864
        %5151 = vmatmul.f32.gmra.mxu0 %v1322
        %v5152 = vpop.f32.mrf.mxu0
        %v5153 = vadd.f32 %v1313, %v5152
        %5154 = vmatmul.f32.gmra.mxu0 %v1325
        %v5155 = vpop.f32.mrf.mxu0
        %v5156 = vadd.f32 %v1318, %v5155
        %5157 = vdwg.mxu0
        %5158 = vmatpush.xpose.msra.mxu0 %v2957
        %5159 = vmatpush.xpose.msra.mxu0 %v2954
        %5160 = vmatpush.xpose.msra.mxu0 %v2951
        %5161 = vmatpush.xpose.msra.mxu0 %v2948
        %5162 = vmatpush.xpose.msra.mxu0 %v2945
        %5163 = vmatpush.xpose.msra.mxu0 %v2942
        %5164 = vmatpush.xpose.msra.mxu0 %v2939
        %5165 = vmatpush.xpose.msra.mxu0 %v2936
        %5166 = vmatpush.xpose.msra.mxu0 %v2933
        %5167 = vmatpush.xpose.msra.mxu0 %v2930
        %5168 = vmatpush.xpose.msra.mxu0 %v2927
        %5169 = vmatpush.xpose.msra.mxu0 %v2924
        %5170 = vmatpush.xpose.msra.mxu0 %v2921
        %5171 = vmatpush.xpose.msra.mxu0 %v2918
        %5172 = vmatpush.xpose.msra.mxu0 %v2915
        %5173 = vmatpush.xpose.msra.mxu0 %v2912
        %5174 = vmatmul.f32.gmra.mxu0 %v1322
        %v5175 = vpop.f32.mrf.mxu0
        %v5176 = vadd.f32 %v1313, %v5175
        %5177 = vmatmul.f32.gmra.mxu0 %v1325
        %v5178 = vpop.f32.mrf.mxu0
        %v5179 = vadd.f32 %v1318, %v5178
        %5180 = vdwg.mxu0
        %5181 = vmatpush.xpose.msra.mxu0 %v3005
        %5182 = vmatpush.xpose.msra.mxu0 %v3002
        %5183 = vmatpush.xpose.msra.mxu0 %v2999
        %5184 = vmatpush.xpose.msra.mxu0 %v2996
        %5185 = vmatpush.xpose.msra.mxu0 %v2993
        %5186 = vmatpush.xpose.msra.mxu0 %v2990
        %5187 = vmatpush.xpose.msra.mxu0 %v2987
        %5188 = vmatpush.xpose.msra.mxu0 %v2984
        %5189 = vmatpush.xpose.msra.mxu0 %v2981
        %5190 = vmatpush.xpose.msra.mxu0 %v2978
        %5191 = vmatpush.xpose.msra.mxu0 %v2975
        %5192 = vmatpush.xpose.msra.mxu0 %v2972
        %5193 = vmatpush.xpose.msra.mxu0 %v2969
        %5194 = vmatpush.xpose.msra.mxu0 %v2966
        %5195 = vmatpush.xpose.msra.mxu0 %v2963
        %5196 = vmatpush.xpose.msra.mxu0 %v2960
        %5197 = vmatmul.f32.gmra.mxu0 %v1322
        %v5198 = vpop.f32.mrf.mxu0
        %v5199 = vadd.f32 %v1313, %v5198
        %5200 = vmatmul.f32.gmra.mxu0 %v1325
        %v5201 = vpop.f32.mrf.mxu0
        %v5202 = vadd.f32 %v1318, %v5201
        %5203 = vdwg.mxu0
        %5204 = vmatpush.xpose.msra.mxu0 %v3053
        %5205 = vmatpush.xpose.msra.mxu0 %v3050
        %5206 = vmatpush.xpose.msra.mxu0 %v3047
        %5207 = vmatpush.xpose.msra.mxu0 %v3044
        %5208 = vmatpush.xpose.msra.mxu0 %v3041
        %5209 = vmatpush.xpose.msra.mxu0 %v3038
        %5210 = vmatpush.xpose.msra.mxu0 %v3035
        %5211 = vmatpush.xpose.msra.mxu0 %v3032
        %5212 = vmatpush.xpose.msra.mxu0 %v3029
        %5213 = vmatpush.xpose.msra.mxu0 %v3026
        %5214 = vmatpush.xpose.msra.mxu0 %v3023
        %5215 = vmatpush.xpose.msra.mxu0 %v3020
        %5216 = vmatpush.xpose.msra.mxu0 %v3017
        %5217 = vmatpush.xpose.msra.mxu0 %v3014
        %5218 = vmatpush.xpose.msra.mxu0 %v3011
        %5219 = vmatpush.xpose.msra.mxu0 %v3008
        %5220 = vmatmul.f32.gmra.mxu0 %v1322
        %v5221 = vpop.f32.mrf.mxu0
        %v5222 = vadd.f32 %v1313, %v5221
        %5223 = vmatmul.f32.gmra.mxu0 %v1325
        %v5224 = vpop.f32.mrf.mxu0
        %v5225 = vadd.f32 %v1318, %v5224
        %5226 = vdwg.mxu0
        %5227 = vmatpush.xpose.msra.mxu0 %v3101
        %5228 = vmatpush.xpose.msra.mxu0 %v3098
        %5229 = vmatpush.xpose.msra.mxu0 %v3095
        %5230 = vmatpush.xpose.msra.mxu0 %v3092
        %5231 = vmatpush.xpose.msra.mxu0 %v3089
        %5232 = vmatpush.xpose.msra.mxu0 %v3086
        %5233 = vmatpush.xpose.msra.mxu0 %v3083
        %5234 = vmatpush.xpose.msra.mxu0 %v3080
        %5235 = vmatpush.xpose.msra.mxu0 %v3077
        %5236 = vmatpush.xpose.msra.mxu0 %v3074
        %5237 = vmatpush.xpose.msra.mxu0 %v3071
        %5238 = vmatpush.xpose.msra.mxu0 %v3068
        %5239 = vmatpush.xpose.msra.mxu0 %v3065
        %5240 = vmatpush.xpose.msra.mxu0 %v3062
        %5241 = vmatpush.xpose.msra.mxu0 %v3059
        %5242 = vmatpush.xpose.msra.mxu0 %v3056
        %5243 = vmatmul.f32.gmra.mxu0 %v1322
        %v5244 = vpop.f32.mrf.mxu0
        %v5245 = vadd.f32 %v1313, %v5244
        %5246 = vmatmul.f32.gmra.mxu0 %v1325
        %v5247 = vpop.f32.mrf.mxu0
        %v5248 = vadd.f32 %v1318, %v5247
        %5249 = vdwg.mxu0
        %5250 = vmatpush.xpose.msra.mxu0 %v3149
        %5251 = vmatpush.xpose.msra.mxu0 %v3146
        %5252 = vmatpush.xpose.msra.mxu0 %v3143
        %5253 = vmatpush.xpose.msra.mxu0 %v3140
        %5254 = vmatpush.xpose.msra.mxu0 %v3137
        %5255 = vmatpush.xpose.msra.mxu0 %v3134
        %5256 = vmatpush.xpose.msra.mxu0 %v3131
        %5257 = vmatpush.xpose.msra.mxu0 %v3128
        %5258 = vmatpush.xpose.msra.mxu0 %v3125
        %5259 = vmatpush.xpose.msra.mxu0 %v3122
        %5260 = vmatpush.xpose.msra.mxu0 %v3119
        %5261 = vmatpush.xpose.msra.mxu0 %v3116
        %5262 = vmatpush.xpose.msra.mxu0 %v3113
        %5263 = vmatpush.xpose.msra.mxu0 %v3110
        %5264 = vmatpush.xpose.msra.mxu0 %v3107
        %5265 = vmatpush.xpose.msra.mxu0 %v3104
        %5266 = vmatmul.f32.gmra.mxu0 %v1322
        %v5267 = vpop.f32.mrf.mxu0
        %v5268 = vadd.f32 %v1313, %v5267
        %5269 = vmatmul.f32.gmra.mxu0 %v1325
        %v5270 = vpop.f32.mrf.mxu0
        %v5271 = vadd.f32 %v1318, %v5270
        %5272 = vdwg.mxu0
        %5273 = vmatpush.xpose.msra.mxu0 %v3197
        %5274 = vmatpush.xpose.msra.mxu0 %v3194
        %5275 = vmatpush.xpose.msra.mxu0 %v3191
        %5276 = vmatpush.xpose.msra.mxu0 %v3188
        %5277 = vmatpush.xpose.msra.mxu0 %v3185
        %5278 = vmatpush.xpose.msra.mxu0 %v3182
        %5279 = vmatpush.xpose.msra.mxu0 %v3179
        %5280 = vmatpush.xpose.msra.mxu0 %v3176
        %5281 = vmatpush.xpose.msra.mxu0 %v3173
        %5282 = vmatpush.xpose.msra.mxu0 %v3170
        %5283 = vmatpush.xpose.msra.mxu0 %v3167
        %5284 = vmatpush.xpose.msra.mxu0 %v3164
        %5285 = vmatpush.xpose.msra.mxu0 %v3161
        %5286 = vmatpush.xpose.msra.mxu0 %v3158
        %5287 = vmatpush.xpose.msra.mxu0 %v3155
        %5288 = vmatpush.xpose.msra.mxu0 %v3152
        %5289 = vmatmul.f32.gmra.mxu0 %v1322
        %v5290 = vpop.f32.mrf.mxu0
        %v5291 = vadd.f32 %v1313, %v5290
        %5292 = vmatmul.f32.gmra.mxu0 %v1325
        %v5293 = vpop.f32.mrf.mxu0
        %v5294 = vadd.f32 %v1318, %v5293
        %5295 = vdwg.mxu0
        %5296 = vmatpush.xpose.msra.mxu0 %v3245
        %5297 = vmatpush.xpose.msra.mxu0 %v3242
        %5298 = vmatpush.xpose.msra.mxu0 %v3239
        %5299 = vmatpush.xpose.msra.mxu0 %v3236
        %5300 = vmatpush.xpose.msra.mxu0 %v3233
        %5301 = vmatpush.xpose.msra.mxu0 %v3230
        %5302 = vmatpush.xpose.msra.mxu0 %v3227
        %5303 = vmatpush.xpose.msra.mxu0 %v3224
        %5304 = vmatpush.xpose.msra.mxu0 %v3221
        %5305 = vmatpush.xpose.msra.mxu0 %v3218
        %5306 = vmatpush.xpose.msra.mxu0 %v3215
        %5307 = vmatpush.xpose.msra.mxu0 %v3212
        %5308 = vmatpush.xpose.msra.mxu0 %v3209
        %5309 = vmatpush.xpose.msra.mxu0 %v3206
        %5310 = vmatpush.xpose.msra.mxu0 %v3203
        %5311 = vmatpush.xpose.msra.mxu0 %v3200
        %5312 = vmatmul.f32.gmra.mxu0 %v1322
        %v5313 = vpop.f32.mrf.mxu0
        %v5314 = vadd.f32 %v1313, %v5313
        %5315 = vmatmul.f32.gmra.mxu0 %v1325
        %v5316 = vpop.f32.mrf.mxu0
        %v5317 = vadd.f32 %v1318, %v5316
        %5318 = vdwg.mxu0
        %5319 = vmatpush.xpose.msra.mxu0 %v3293
        %5320 = vmatpush.xpose.msra.mxu0 %v3290
        %5321 = vmatpush.xpose.msra.mxu0 %v3287
        %5322 = vmatpush.xpose.msra.mxu0 %v3284
        %5323 = vmatpush.xpose.msra.mxu0 %v3281
        %5324 = vmatpush.xpose.msra.mxu0 %v3278
        %5325 = vmatpush.xpose.msra.mxu0 %v3275
        %5326 = vmatpush.xpose.msra.mxu0 %v3272
        %5327 = vmatpush.xpose.msra.mxu0 %v3269
        %5328 = vmatpush.xpose.msra.mxu0 %v3266
        %5329 = vmatpush.xpose.msra.mxu0 %v3263
        %5330 = vmatpush.xpose.msra.mxu0 %v3260
        %5331 = vmatpush.xpose.msra.mxu0 %v3257
        %5332 = vmatpush.xpose.msra.mxu0 %v3254
        %5333 = vmatpush.xpose.msra.mxu0 %v3251
        %5334 = vmatpush.xpose.msra.mxu0 %v3248
        %5335 = vmatmul.f32.gmra.mxu0 %v1322
        %v5336 = vpop.f32.mrf.mxu0
        %v5337 = vadd.f32 %v1313, %v5336
        %5338 = vmatmul.f32.gmra.mxu0 %v1325
        %v5339 = vpop.f32.mrf.mxu0
        %v5340 = vadd.f32 %v1318, %v5339
        %5341 = vdwg.mxu0
        %5342 = vmatpush.xpose.msra.mxu0 %v3341
        %5343 = vmatpush.xpose.msra.mxu0 %v3338
        %5344 = vmatpush.xpose.msra.mxu0 %v3335
        %5345 = vmatpush.xpose.msra.mxu0 %v3332
        %5346 = vmatpush.xpose.msra.mxu0 %v3329
        %5347 = vmatpush.xpose.msra.mxu0 %v3326
        %5348 = vmatpush.xpose.msra.mxu0 %v3323
        %5349 = vmatpush.xpose.msra.mxu0 %v3320
        %5350 = vmatpush.xpose.msra.mxu0 %v3317
        %5351 = vmatpush.xpose.msra.mxu0 %v3314
        %5352 = vmatpush.xpose.msra.mxu0 %v3311
        %5353 = vmatpush.xpose.msra.mxu0 %v3308
        %5354 = vmatpush.xpose.msra.mxu0 %v3305
        %5355 = vmatpush.xpose.msra.mxu0 %v3302
        %5356 = vmatpush.xpose.msra.mxu0 %v3299
        %5357 = vmatpush.xpose.msra.mxu0 %v3296
        %5358 = vmatmul.f32.gmra.mxu0 %v1322
        %v5359 = vpop.f32.mrf.mxu0
        %v5360 = vadd.f32 %v1313, %v5359
        %5361 = vmatmul.f32.gmra.mxu0 %v1325
        %v5362 = vpop.f32.mrf.mxu0
        %v5363 = vadd.f32 %v1318, %v5362
        %5364 = vdwg.mxu0
        %5365 = vmatpush.xpose.msra.mxu0 %v3389
        %5366 = vmatpush.xpose.msra.mxu0 %v3386
        %5367 = vmatpush.xpose.msra.mxu0 %v3383
        %5368 = vmatpush.xpose.msra.mxu0 %v3380
        %5369 = vmatpush.xpose.msra.mxu0 %v3377
        %5370 = vmatpush.xpose.msra.mxu0 %v3374
        %5371 = vmatpush.xpose.msra.mxu0 %v3371
        %5372 = vmatpush.xpose.msra.mxu0 %v3368
        %5373 = vmatpush.xpose.msra.mxu0 %v3365
        %5374 = vmatpush.xpose.msra.mxu0 %v3362
        %5375 = vmatpush.xpose.msra.mxu0 %v3359
        %5376 = vmatpush.xpose.msra.mxu0 %v3356
        %5377 = vmatpush.xpose.msra.mxu0 %v3353
        %5378 = vmatpush.xpose.msra.mxu0 %v3350
        %5379 = vmatpush.xpose.msra.mxu0 %v3347
        %5380 = vmatpush.xpose.msra.mxu0 %v3344
        %5381 = vmatmul.f32.gmra.mxu0 %v1322
        %v5382 = vpop.f32.mrf.mxu0
        %v5383 = vadd.f32 %v1313, %v5382
        %5384 = vmatmul.f32.gmra.mxu0 %v1325
        %v5385 = vpop.f32.mrf.mxu0
        %v5386 = vadd.f32 %v1318, %v5385
        %5387 = vdwg.mxu0
        %5388 = vmatpush.xpose.msra.mxu0 %v3437
        %5389 = vmatpush.xpose.msra.mxu0 %v3434
        %5390 = vmatpush.xpose.msra.mxu0 %v3431
        %5391 = vmatpush.xpose.msra.mxu0 %v3428
        %5392 = vmatpush.xpose.msra.mxu0 %v3425
        %5393 = vmatpush.xpose.msra.mxu0 %v3422
        %5394 = vmatpush.xpose.msra.mxu0 %v3419
        %5395 = vmatpush.xpose.msra.mxu0 %v3416
        %5396 = vmatpush.xpose.msra.mxu0 %v3413
        %5397 = vmatpush.xpose.msra.mxu0 %v3410
        %5398 = vmatpush.xpose.msra.mxu0 %v3407
        %5399 = vmatpush.xpose.msra.mxu0 %v3404
        %5400 = vmatpush.xpose.msra.mxu0 %v3401
        %5401 = vmatpush.xpose.msra.mxu0 %v3398
        %5402 = vmatpush.xpose.msra.mxu0 %v3395
        %5403 = vmatpush.xpose.msra.mxu0 %v3392
        %5404 = vmatmul.f32.gmra.mxu0 %v1322
        %v5405 = vpop.f32.mrf.mxu0
        %v5406 = vadd.f32 %v1313, %v5405
        %5407 = vmatmul.f32.gmra.mxu0 %v1325
        %v5408 = vpop.f32.mrf.mxu0
        %v5409 = vadd.f32 %v1318, %v5408
        %5410 = vdwg.mxu0
        %5411 = vmatpush.xpose.msra.mxu0 %v3485
        %5412 = vmatpush.xpose.msra.mxu0 %v3482
        %5413 = vmatpush.xpose.msra.mxu0 %v3479
        %5414 = vmatpush.xpose.msra.mxu0 %v3476
        %5415 = vmatpush.xpose.msra.mxu0 %v3473
        %5416 = vmatpush.xpose.msra.mxu0 %v3470
        %5417 = vmatpush.xpose.msra.mxu0 %v3467
        %5418 = vmatpush.xpose.msra.mxu0 %v3464
        %5419 = vmatpush.xpose.msra.mxu0 %v3461
        %5420 = vmatpush.xpose.msra.mxu0 %v3458
        %5421 = vmatpush.xpose.msra.mxu0 %v3455
        %5422 = vmatpush.xpose.msra.mxu0 %v3452
        %5423 = vmatpush.xpose.msra.mxu0 %v3449
        %5424 = vmatpush.xpose.msra.mxu0 %v3446
        %5425 = vmatpush.xpose.msra.mxu0 %v3443
        %5426 = vmatpush.xpose.msra.mxu0 %v3440
        %5427 = vmatmul.f32.gmra.mxu0 %v1322
        %v5428 = vpop.f32.mrf.mxu0
        %v5429 = vadd.f32 %v1313, %v5428
        %5430 = vmatmul.f32.gmra.mxu0 %v1325
        %v5431 = vpop.f32.mrf.mxu0
        %v5432 = vadd.f32 %v1318, %v5431
        %5433 = vdwg.mxu0
        %5434 = vmatpush.xpose.msra.mxu0 %v3533
        %5435 = vmatpush.xpose.msra.mxu0 %v3530
        %5436 = vmatpush.xpose.msra.mxu0 %v3527
        %5437 = vmatpush.xpose.msra.mxu0 %v3524
        %5438 = vmatpush.xpose.msra.mxu0 %v3521
        %5439 = vmatpush.xpose.msra.mxu0 %v3518
        %5440 = vmatpush.xpose.msra.mxu0 %v3515
        %5441 = vmatpush.xpose.msra.mxu0 %v3512
        %5442 = vmatpush.xpose.msra.mxu0 %v3509
        %5443 = vmatpush.xpose.msra.mxu0 %v3506
        %5444 = vmatpush.xpose.msra.mxu0 %v3503
        %5445 = vmatpush.xpose.msra.mxu0 %v3500
        %5446 = vmatpush.xpose.msra.mxu0 %v3497
        %5447 = vmatpush.xpose.msra.mxu0 %v3494
        %5448 = vmatpush.xpose.msra.mxu0 %v3491
        %5449 = vmatpush.xpose.msra.mxu0 %v3488
        %5450 = vmatmul.f32.gmra.mxu0 %v1322
        %v5451 = vpop.f32.mrf.mxu0
        %v5452 = vadd.f32 %v1313, %v5451
        %5453 = vmatmul.f32.gmra.mxu0 %v1325
        %v5454 = vpop.f32.mrf.mxu0
        %v5455 = vadd.f32 %v1318, %v5454
        %5456 = vdwg.mxu0
        %5457 = vmatpush.xpose.msra.mxu0 %v3581
        %5458 = vmatpush.xpose.msra.mxu0 %v3578
        %5459 = vmatpush.xpose.msra.mxu0 %v3575
        %5460 = vmatpush.xpose.msra.mxu0 %v3572
        %5461 = vmatpush.xpose.msra.mxu0 %v3569
        %5462 = vmatpush.xpose.msra.mxu0 %v3566
        %5463 = vmatpush.xpose.msra.mxu0 %v3563
        %5464 = vmatpush.xpose.msra.mxu0 %v3560
        %5465 = vmatpush.xpose.msra.mxu0 %v3557
        %5466 = vmatpush.xpose.msra.mxu0 %v3554
        %5467 = vmatpush.xpose.msra.mxu0 %v3551
        %5468 = vmatpush.xpose.msra.mxu0 %v3548
        %5469 = vmatpush.xpose.msra.mxu0 %v3545
        %5470 = vmatpush.xpose.msra.mxu0 %v3542
        %5471 = vmatpush.xpose.msra.mxu0 %v3539
        %5472 = vmatpush.xpose.msra.mxu0 %v3536
        %5473 = vmatmul.f32.gmra.mxu0 %v1322
        %v5474 = vpop.f32.mrf.mxu0
        %v5475 = vadd.f32 %v1313, %v5474
        %5476 = vmatmul.f32.gmra.mxu0 %v1325
        %v5477 = vpop.f32.mrf.mxu0
        %v5478 = vadd.f32 %v1318, %v5477
        %5479 = vdwg.mxu0
        %5480 = vmatpush.xpose.msra.mxu0 %v3629
        %5481 = vmatpush.xpose.msra.mxu0 %v3626
        %5482 = vmatpush.xpose.msra.mxu0 %v3623
        %5483 = vmatpush.xpose.msra.mxu0 %v3620
        %5484 = vmatpush.xpose.msra.mxu0 %v3617
        %5485 = vmatpush.xpose.msra.mxu0 %v3614
        %5486 = vmatpush.xpose.msra.mxu0 %v3611
        %5487 = vmatpush.xpose.msra.mxu0 %v3608
        %5488 = vmatpush.xpose.msra.mxu0 %v3605
        %5489 = vmatpush.xpose.msra.mxu0 %v3602
        %5490 = vmatpush.xpose.msra.mxu0 %v3599
        %5491 = vmatpush.xpose.msra.mxu0 %v3596
        %5492 = vmatpush.xpose.msra.mxu0 %v3593
        %5493 = vmatpush.xpose.msra.mxu0 %v3590
        %5494 = vmatpush.xpose.msra.mxu0 %v3587
        %5495 = vmatpush.xpose.msra.mxu0 %v3584
        %5496 = vmatmul.f32.gmra.mxu0 %v1322
        %v5497 = vpop.f32.mrf.mxu0
        %v5498 = vadd.f32 %v1313, %v5497
        %5499 = vmatmul.f32.gmra.mxu0 %v1325
        %v5500 = vpop.f32.mrf.mxu0
        %v5501 = vadd.f32 %v1318, %v5500
        %5502 = vdwg.mxu0
        %5503 = vmatpush.xpose.msra.mxu0 %v3677
        %5504 = vmatpush.xpose.msra.mxu0 %v3674
        %5505 = vmatpush.xpose.msra.mxu0 %v3671
        %5506 = vmatpush.xpose.msra.mxu0 %v3668
        %5507 = vmatpush.xpose.msra.mxu0 %v3665
        %5508 = vmatpush.xpose.msra.mxu0 %v3662
        %5509 = vmatpush.xpose.msra.mxu0 %v3659
        %5510 = vmatpush.xpose.msra.mxu0 %v3656
        %5511 = vmatpush.xpose.msra.mxu0 %v3653
        %5512 = vmatpush.xpose.msra.mxu0 %v3650
        %5513 = vmatpush.xpose.msra.mxu0 %v3647
        %5514 = vmatpush.xpose.msra.mxu0 %v3644
        %5515 = vmatpush.xpose.msra.mxu0 %v3641
        %5516 = vmatpush.xpose.msra.mxu0 %v3638
        %5517 = vmatpush.xpose.msra.mxu0 %v3635
        %5518 = vmatpush.xpose.msra.mxu0 %v3632
        %5519 = vmatmul.f32.gmra.mxu0 %v1322
        %v5520 = vpop.f32.mrf.mxu0
        %v5521 = vadd.f32 %v1313, %v5520
        %5522 = vmatmul.f32.gmra.mxu0 %v1325
        %v5523 = vpop.f32.mrf.mxu0
        %v5524 = vadd.f32 %v1318, %v5523
        %5525 = vdwg.mxu0
        %5526 = vmatpush.xpose.msra.mxu0 %v3725
        %5527 = vmatpush.xpose.msra.mxu0 %v3722
        %5528 = vmatpush.xpose.msra.mxu0 %v3719
        %5529 = vmatpush.xpose.msra.mxu0 %v3716
        %5530 = vmatpush.xpose.msra.mxu0 %v3713
        %5531 = vmatpush.xpose.msra.mxu0 %v3710
        %5532 = vmatpush.xpose.msra.mxu0 %v3707
        %5533 = vmatpush.xpose.msra.mxu0 %v3704
        %5534 = vmatpush.xpose.msra.mxu0 %v3701
        %5535 = vmatpush.xpose.msra.mxu0 %v3698
        %5536 = vmatpush.xpose.msra.mxu0 %v3695
        %5537 = vmatpush.xpose.msra.mxu0 %v3692
        %5538 = vmatpush.xpose.msra.mxu0 %v3689
        %5539 = vmatpush.xpose.msra.mxu0 %v3686
        %5540 = vmatpush.xpose.msra.mxu0 %v3683
        %5541 = vmatpush.xpose.msra.mxu0 %v3680
        %5542 = vmatmul.f32.gmra.mxu0 %v1322
        %v5543 = vpop.f32.mrf.mxu0
        %v5544 = vadd.f32 %v1313, %v5543
        %5545 = vmatmul.f32.gmra.mxu0 %v1325
        %v5546 = vpop.f32.mrf.mxu0
        %v5547 = vadd.f32 %v1318, %v5546
        %5548 = vdwg.mxu0
        %5549 = vmatpush.xpose.msra.mxu0 %v3773
        %5550 = vmatpush.xpose.msra.mxu0 %v3770
        %5551 = vmatpush.xpose.msra.mxu0 %v3767
        %5552 = vmatpush.xpose.msra.mxu0 %v3764
        %5553 = vmatpush.xpose.msra.mxu0 %v3761
        %5554 = vmatpush.xpose.msra.mxu0 %v3758
        %5555 = vmatpush.xpose.msra.mxu0 %v3755
        %5556 = vmatpush.xpose.msra.mxu0 %v3752
        %5557 = vmatpush.xpose.msra.mxu0 %v3749
        %5558 = vmatpush.xpose.msra.mxu0 %v3746
        %5559 = vmatpush.xpose.msra.mxu0 %v3743
        %5560 = vmatpush.xpose.msra.mxu0 %v3740
        %5561 = vmatpush.xpose.msra.mxu0 %v3737
        %5562 = vmatpush.xpose.msra.mxu0 %v3734
        %5563 = vmatpush.xpose.msra.mxu0 %v3731
        %5564 = vmatpush.xpose.msra.mxu0 %v3728
        %5565 = vmatmul.f32.gmra.mxu0 %v1322
        %v5566 = vpop.f32.mrf.mxu0
        %v5567 = vadd.f32 %v1313, %v5566
        %5568 = vmatmul.f32.gmra.mxu0 %v1325
        %v5569 = vpop.f32.mrf.mxu0
        %v5570 = vadd.f32 %v1318, %v5569
        %5571 = vdwg.mxu0
        %5572 = vmatpush.xpose.msra.mxu0 %v3821
        %5573 = vmatpush.xpose.msra.mxu0 %v3818
        %5574 = vmatpush.xpose.msra.mxu0 %v3815
        %5575 = vmatpush.xpose.msra.mxu0 %v3812
        %5576 = vmatpush.xpose.msra.mxu0 %v3809
        %5577 = vmatpush.xpose.msra.mxu0 %v3806
        %5578 = vmatpush.xpose.msra.mxu0 %v3803
        %5579 = vmatpush.xpose.msra.mxu0 %v3800
        %5580 = vmatpush.xpose.msra.mxu0 %v3797
        %5581 = vmatpush.xpose.msra.mxu0 %v3794
        %5582 = vmatpush.xpose.msra.mxu0 %v3791
        %5583 = vmatpush.xpose.msra.mxu0 %v3788
        %5584 = vmatpush.xpose.msra.mxu0 %v3785
        %5585 = vmatpush.xpose.msra.mxu0 %v3782
        %5586 = vmatpush.xpose.msra.mxu0 %v3779
        %5587 = vmatpush.xpose.msra.mxu0 %v3776
        %5588 = vmatmul.f32.gmra.mxu0 %v1322
        %v5589 = vpop.f32.mrf.mxu0
        %v5590 = vadd.f32 %v1313, %v5589
        %5591 = vmatmul.f32.gmra.mxu0 %v1325
        %v5592 = vpop.f32.mrf.mxu0
        %v5593 = vadd.f32 %v1318, %v5592
        %5594 = vdwg.mxu0
        %5595 = vmatpush.xpose.msra.mxu0 %v3869
        %5596 = vmatpush.xpose.msra.mxu0 %v3866
        %5597 = vmatpush.xpose.msra.mxu0 %v3863
        %5598 = vmatpush.xpose.msra.mxu0 %v3860
        %5599 = vmatpush.xpose.msra.mxu0 %v3857
        %5600 = vmatpush.xpose.msra.mxu0 %v3854
        %5601 = vmatpush.xpose.msra.mxu0 %v3851
        %5602 = vmatpush.xpose.msra.mxu0 %v3848
        %5603 = vmatpush.xpose.msra.mxu0 %v3845
        %5604 = vmatpush.xpose.msra.mxu0 %v3842
        %5605 = vmatpush.xpose.msra.mxu0 %v3839
        %5606 = vmatpush.xpose.msra.mxu0 %v3836
        %5607 = vmatpush.xpose.msra.mxu0 %v3833
        %5608 = vmatpush.xpose.msra.mxu0 %v3830
        %5609 = vmatpush.xpose.msra.mxu0 %v3827
        %5610 = vmatpush.xpose.msra.mxu0 %v3824
        %5611 = vmatmul.f32.gmra.mxu0 %v1322
        %v5612 = vpop.f32.mrf.mxu0
        %v5613 = vadd.f32 %v1313, %v5612
        %5614 = vmatmul.f32.gmra.mxu0 %v1325
        %v5615 = vpop.f32.mrf.mxu0
        %v5616 = vadd.f32 %v1318, %v5615
        %5617 = vdwg.mxu0
        %5618 = vmatpush.xpose.msra.mxu0 %v3917
        %5619 = vmatpush.xpose.msra.mxu0 %v3914
        %5620 = vmatpush.xpose.msra.mxu0 %v3911
        %5621 = vmatpush.xpose.msra.mxu0 %v3908
        %5622 = vmatpush.xpose.msra.mxu0 %v3905
        %5623 = vmatpush.xpose.msra.mxu0 %v3902
        %5624 = vmatpush.xpose.msra.mxu0 %v3899
        %5625 = vmatpush.xpose.msra.mxu0 %v3896
        %5626 = vmatpush.xpose.msra.mxu0 %v3893
        %5627 = vmatpush.xpose.msra.mxu0 %v3890
        %5628 = vmatpush.xpose.msra.mxu0 %v3887
        %5629 = vmatpush.xpose.msra.mxu0 %v3884
        %5630 = vmatpush.xpose.msra.mxu0 %v3881
        %5631 = vmatpush.xpose.msra.mxu0 %v3878
        %5632 = vmatpush.xpose.msra.mxu0 %v3875
        %5633 = vmatpush.xpose.msra.mxu0 %v3872
        %5634 = vmatmul.f32.gmra.mxu0 %v1322
        %v5635 = vpop.f32.mrf.mxu0
        %v5636 = vadd.f32 %v1313, %v5635
        %5637 = vmatmul.f32.gmra.mxu0 %v1325
        %v5638 = vpop.f32.mrf.mxu0
        %v5639 = vadd.f32 %v1318, %v5638
        %5640 = vdwg.mxu0
        %5641 = vmatpush.xpose.msra.mxu0 %v3965
        %5642 = vmatpush.xpose.msra.mxu0 %v3962
        %5643 = vmatpush.xpose.msra.mxu0 %v3959
        %5644 = vmatpush.xpose.msra.mxu0 %v3956
        %5645 = vmatpush.xpose.msra.mxu0 %v3953
        %5646 = vmatpush.xpose.msra.mxu0 %v3950
        %5647 = vmatpush.xpose.msra.mxu0 %v3947
        %5648 = vmatpush.xpose.msra.mxu0 %v3944
        %5649 = vmatpush.xpose.msra.mxu0 %v3941
        %5650 = vmatpush.xpose.msra.mxu0 %v3938
        %5651 = vmatpush.xpose.msra.mxu0 %v3935
        %5652 = vmatpush.xpose.msra.mxu0 %v3932
        %5653 = vmatpush.xpose.msra.mxu0 %v3929
        %5654 = vmatpush.xpose.msra.mxu0 %v3926
        %5655 = vmatpush.xpose.msra.mxu0 %v3923
        %5656 = vmatpush.xpose.msra.mxu0 %v3920
        %5657 = vmatmul.f32.gmra.mxu0 %v1322
        %v5658 = vpop.f32.mrf.mxu0
        %v5659 = vadd.f32 %v1313, %v5658
        %5660 = vmatmul.f32.gmra.mxu0 %v1325
        %v5661 = vpop.f32.mrf.mxu0
        %v5662 = vadd.f32 %v1318, %v5661
        %5663 = vdwg.mxu0
        %5664 = vmatpush.xpose.msra.mxu0 %v4013
        %5665 = vmatpush.xpose.msra.mxu0 %v4010
        %5666 = vmatpush.xpose.msra.mxu0 %v4007
        %5667 = vmatpush.xpose.msra.mxu0 %v4004
        %5668 = vmatpush.xpose.msra.mxu0 %v4001
        %5669 = vmatpush.xpose.msra.mxu0 %v3998
        %5670 = vmatpush.xpose.msra.mxu0 %v3995
        %5671 = vmatpush.xpose.msra.mxu0 %v3992
        %5672 = vmatpush.xpose.msra.mxu0 %v3989
        %5673 = vmatpush.xpose.msra.mxu0 %v3986
        %5674 = vmatpush.xpose.msra.mxu0 %v3983
        %5675 = vmatpush.xpose.msra.mxu0 %v3980
        %5676 = vmatpush.xpose.msra.mxu0 %v3977
        %5677 = vmatpush.xpose.msra.mxu0 %v3974
        %5678 = vmatpush.xpose.msra.mxu0 %v3971
        %5679 = vmatpush.xpose.msra.mxu0 %v3968
        %5680 = vmatmul.f32.gmra.mxu0 %v1322
        %v5681 = vpop.f32.mrf.mxu0
        %v5682 = vadd.f32 %v1313, %v5681
        %5683 = vmatmul.f32.gmra.mxu0 %v1325
        %v5684 = vpop.f32.mrf.mxu0
        %v5685 = vadd.f32 %v1318, %v5684
        %5686 = vdwg.mxu0
        %5687 = vmatpush.xpose.msra.mxu0 %v4061
        %5688 = vmatpush.xpose.msra.mxu0 %v4058
        %5689 = vmatpush.xpose.msra.mxu0 %v4055
        %5690 = vmatpush.xpose.msra.mxu0 %v4052
        %5691 = vmatpush.xpose.msra.mxu0 %v4049
        %5692 = vmatpush.xpose.msra.mxu0 %v4046
        %5693 = vmatpush.xpose.msra.mxu0 %v4043
        %5694 = vmatpush.xpose.msra.mxu0 %v4040
        %5695 = vmatpush.xpose.msra.mxu0 %v4037
        %5696 = vmatpush.xpose.msra.mxu0 %v4034
        %5697 = vmatpush.xpose.msra.mxu0 %v4031
        %5698 = vmatpush.xpose.msra.mxu0 %v4028
        %5699 = vmatpush.xpose.msra.mxu0 %v4025
        %5700 = vmatpush.xpose.msra.mxu0 %v4022
        %5701 = vmatpush.xpose.msra.mxu0 %v4019
        %5702 = vmatpush.xpose.msra.mxu0 %v4016
        %5703 = vmatmul.f32.gmra.mxu0 %v1322
        %v5704 = vpop.f32.mrf.mxu0
        %v5705 = vadd.f32 %v1313, %v5704
        %5706 = vmatmul.f32.gmra.mxu0 %v1325
        %v5707 = vpop.f32.mrf.mxu0
        %v5708 = vadd.f32 %v1318, %v5707
        %5709 = vdwg.mxu0
        %5710 = vmatpush.xpose.msra.mxu0 %v4109
        %5711 = vmatpush.xpose.msra.mxu0 %v4106
        %5712 = vmatpush.xpose.msra.mxu0 %v4103
        %5713 = vmatpush.xpose.msra.mxu0 %v4100
        %5714 = vmatpush.xpose.msra.mxu0 %v4097
        %5715 = vmatpush.xpose.msra.mxu0 %v4094
        %5716 = vmatpush.xpose.msra.mxu0 %v4091
        %5717 = vmatpush.xpose.msra.mxu0 %v4088
        %5718 = vmatpush.xpose.msra.mxu0 %v4085
        %5719 = vmatpush.xpose.msra.mxu0 %v4082
        %5720 = vmatpush.xpose.msra.mxu0 %v4079
        %5721 = vmatpush.xpose.msra.mxu0 %v4076
        %5722 = vmatpush.xpose.msra.mxu0 %v4073
        %5723 = vmatpush.xpose.msra.mxu0 %v4070
        %5724 = vmatpush.xpose.msra.mxu0 %v4067
        %5725 = vmatpush.xpose.msra.mxu0 %v4064
        %5726 = vmatmul.f32.gmra.mxu0 %v1322
        %v5727 = vpop.f32.mrf.mxu0
        %v5728 = vadd.f32 %v1313, %v5727
        %5729 = vmatmul.f32.gmra.mxu0 %v1325
        %v5730 = vpop.f32.mrf.mxu0
        %v5731 = vadd.f32 %v1318, %v5730
        %5732 = vdwg.mxu0
        %5733 = vmatpush.xpose.msra.mxu0 %v4157
        %5734 = vmatpush.xpose.msra.mxu0 %v4154
        %5735 = vmatpush.xpose.msra.mxu0 %v4151
        %5736 = vmatpush.xpose.msra.mxu0 %v4148
        %5737 = vmatpush.xpose.msra.mxu0 %v4145
        %5738 = vmatpush.xpose.msra.mxu0 %v4142
        %5739 = vmatpush.xpose.msra.mxu0 %v4139
        %5740 = vmatpush.xpose.msra.mxu0 %v4136
        %5741 = vmatpush.xpose.msra.mxu0 %v4133
        %5742 = vmatpush.xpose.msra.mxu0 %v4130
        %5743 = vmatpush.xpose.msra.mxu0 %v4127
        %5744 = vmatpush.xpose.msra.mxu0 %v4124
        %5745 = vmatpush.xpose.msra.mxu0 %v4121
        %5746 = vmatpush.xpose.msra.mxu0 %v4118
        %5747 = vmatpush.xpose.msra.mxu0 %v4115
        %5748 = vmatpush.xpose.msra.mxu0 %v4112
        %5749 = vmatmul.f32.gmra.mxu0 %v1322
        %v5750 = vpop.f32.mrf.mxu0
        %v5751 = vadd.f32 %v1313, %v5750
        %5752 = vmatmul.f32.gmra.mxu0 %v1325
        %v5753 = vpop.f32.mrf.mxu0
        %v5754 = vadd.f32 %v1318, %v5753
        %5755 = vdwg.mxu0
        %5756 = vmatpush.xpose.msra.mxu0 %v4205
        %5757 = vmatpush.xpose.msra.mxu0 %v4202
        %5758 = vmatpush.xpose.msra.mxu0 %v4199
        %5759 = vmatpush.xpose.msra.mxu0 %v4196
        %5760 = vmatpush.xpose.msra.mxu0 %v4193
        %5761 = vmatpush.xpose.msra.mxu0 %v4190
        %5762 = vmatpush.xpose.msra.mxu0 %v4187
        %5763 = vmatpush.xpose.msra.mxu0 %v4184
        %5764 = vmatpush.xpose.msra.mxu0 %v4181
        %5765 = vmatpush.xpose.msra.mxu0 %v4178
        %5766 = vmatpush.xpose.msra.mxu0 %v4175
        %5767 = vmatpush.xpose.msra.mxu0 %v4172
        %5768 = vmatpush.xpose.msra.mxu0 %v4169
        %5769 = vmatpush.xpose.msra.mxu0 %v4166
        %5770 = vmatpush.xpose.msra.mxu0 %v4163
        %5771 = vmatpush.xpose.msra.mxu0 %v4160
        %5772 = vmatmul.f32.gmra.mxu0 %v1322
        %v5773 = vpop.f32.mrf.mxu0
        %v5774 = vadd.f32 %v1313, %v5773
        %5775 = vmatmul.f32.gmra.mxu0 %v1325
        %v5776 = vpop.f32.mrf.mxu0
        %v5777 = vadd.f32 %v1318, %v5776
        %5778 = vdwg.mxu0
        %5779 = vmatpush.xpose.msra.mxu0 %v4253
        %5780 = vmatpush.xpose.msra.mxu0 %v4250
        %5781 = vmatpush.xpose.msra.mxu0 %v4247
        %5782 = vmatpush.xpose.msra.mxu0 %v4244
        %5783 = vmatpush.xpose.msra.mxu0 %v4241
        %5784 = vmatpush.xpose.msra.mxu0 %v4238
        %5785 = vmatpush.xpose.msra.mxu0 %v4235
        %5786 = vmatpush.xpose.msra.mxu0 %v4232
        %5787 = vmatpush.xpose.msra.mxu0 %v4229
        %5788 = vmatpush.xpose.msra.mxu0 %v4226
        %5789 = vmatpush.xpose.msra.mxu0 %v4223
        %5790 = vmatpush.xpose.msra.mxu0 %v4220
        %5791 = vmatpush.xpose.msra.mxu0 %v4217
        %5792 = vmatpush.xpose.msra.mxu0 %v4214
        %5793 = vmatpush.xpose.msra.mxu0 %v4211
        %5794 = vmatpush.xpose.msra.mxu0 %v4208
        %5795 = vmatmul.f32.gmra.mxu0 %v1322
        %v5796 = vpop.f32.mrf.mxu0
        %v5797 = vadd.f32 %v1313, %v5796
        %5798 = vmatmul.f32.gmra.mxu0 %v1325
        %v5799 = vpop.f32.mrf.mxu0
        %v5800 = vadd.f32 %v1318, %v5799
        %5801 = vdwg.mxu0
        %5802 = vmatpush.xpose.msra.mxu0 %v4301
        %5803 = vmatpush.xpose.msra.mxu0 %v4298
        %5804 = vmatpush.xpose.msra.mxu0 %v4295
        %5805 = vmatpush.xpose.msra.mxu0 %v4292
        %5806 = vmatpush.xpose.msra.mxu0 %v4289
        %5807 = vmatpush.xpose.msra.mxu0 %v4286
        %5808 = vmatpush.xpose.msra.mxu0 %v4283
        %5809 = vmatpush.xpose.msra.mxu0 %v4280
        %5810 = vmatpush.xpose.msra.mxu0 %v4277
        %5811 = vmatpush.xpose.msra.mxu0 %v4274
        %5812 = vmatpush.xpose.msra.mxu0 %v4271
        %5813 = vmatpush.xpose.msra.mxu0 %v4268
        %5814 = vmatpush.xpose.msra.mxu0 %v4265
        %5815 = vmatpush.xpose.msra.mxu0 %v4262
        %5816 = vmatpush.xpose.msra.mxu0 %v4259
        %5817 = vmatpush.xpose.msra.mxu0 %v4256
        %5818 = vmatmul.f32.gmra.mxu0 %v1322
        %v5819 = vpop.f32.mrf.mxu0
        %v5820 = vadd.f32 %v1313, %v5819
        %5821 = vmatmul.f32.gmra.mxu0 %v1325
        %v5822 = vpop.f32.mrf.mxu0
        %v5823 = vadd.f32 %v1318, %v5822
        %5824 = vdwg.mxu0
        %5825 = vmatpush.xpose.msra.mxu0 %v4349
        %5826 = vmatpush.xpose.msra.mxu0 %v4346
        %5827 = vmatpush.xpose.msra.mxu0 %v4343
        %5828 = vmatpush.xpose.msra.mxu0 %v4340
        %5829 = vmatpush.xpose.msra.mxu0 %v4337
        %5830 = vmatpush.xpose.msra.mxu0 %v4334
        %5831 = vmatpush.xpose.msra.mxu0 %v4331
        %5832 = vmatpush.xpose.msra.mxu0 %v4328
        %5833 = vmatpush.xpose.msra.mxu0 %v4325
        %5834 = vmatpush.xpose.msra.mxu0 %v4322
        %5835 = vmatpush.xpose.msra.mxu0 %v4319
        %5836 = vmatpush.xpose.msra.mxu0 %v4316
        %5837 = vmatpush.xpose.msra.mxu0 %v4313
        %5838 = vmatpush.xpose.msra.mxu0 %v4310
        %5839 = vmatpush.xpose.msra.mxu0 %v4307
        %5840 = vmatpush.xpose.msra.mxu0 %v4304
        %5841 = vmatmul.f32.gmra.mxu0 %v1322
        %v5842 = vpop.f32.mrf.mxu0
        %v5843 = vadd.f32 %v1313, %v5842
        %5844 = vmatmul.f32.gmra.mxu0 %v1325
        %v5845 = vpop.f32.mrf.mxu0
        %v5846 = vadd.f32 %v1318, %v5845
        %5847 = vdwg.mxu0
        %5848 = vmatpush.xpose.msra.mxu0 %v4397
        %5849 = vmatpush.xpose.msra.mxu0 %v4394
        %5850 = vmatpush.xpose.msra.mxu0 %v4391
        %5851 = vmatpush.xpose.msra.mxu0 %v4388
        %5852 = vmatpush.xpose.msra.mxu0 %v4385
        %5853 = vmatpush.xpose.msra.mxu0 %v4382
        %5854 = vmatpush.xpose.msra.mxu0 %v4379
        %5855 = vmatpush.xpose.msra.mxu0 %v4376
        %5856 = vmatpush.xpose.msra.mxu0 %v4373
        %5857 = vmatpush.xpose.msra.mxu0 %v4370
        %5858 = vmatpush.xpose.msra.mxu0 %v4367
        %5859 = vmatpush.xpose.msra.mxu0 %v4364
        %5860 = vmatpush.xpose.msra.mxu0 %v4361
        %5861 = vmatpush.xpose.msra.mxu0 %v4358
        %5862 = vmatpush.xpose.msra.mxu0 %v4355
        %5863 = vmatpush.xpose.msra.mxu0 %v4352
        %5864 = vmatmul.f32.gmra.mxu0 %v1322
        %v5865 = vpop.f32.mrf.mxu0
        %v5866 = vadd.f32 %v1313, %v5865
        %5867 = vmatmul.f32.gmra.mxu0 %v1325
        %v5868 = vpop.f32.mrf.mxu0
        %v5869 = vadd.f32 %v1318, %v5868
        %5870 = vdwg.mxu0
        %v5871 = vmax.f32 %v4417, 0.0
        %v5872 = vmax.f32 %v4440, 0.0
        %v5873 = vmax.f32 %v4463, 0.0
        %v5874 = vmax.f32 %v4486, 0.0
        %v5875 = vmax.f32 %v4509, 0.0
        %v5876 = vmax.f32 %v4532, 0.0
        %v5877 = vmax.f32 %v4555, 0.0
        %v5878 = vmax.f32 %v4578, 0.0
        %v5879 = vmax.f32 %v4601, 0.0
        %v5880 = vmax.f32 %v4624, 0.0
        %v5881 = vmax.f32 %v4647, 0.0
        %v5882 = vmax.f32 %v4670, 0.0
        %v5883 = vmax.f32 %v4693, 0.0
        %v5884 = vmax.f32 %v4716, 0.0
        %v5885 = vmax.f32 %v4739, 0.0
        %v5886 = vmax.f32 %v4762, 0.0
        %v5887 = vmax.f32 %v4785, 0.0
        %v5888 = vmax.f32 %v4808, 0.0
        %v5889 = vmax.f32 %v4831, 0.0
        %v5890 = vmax.f32 %v4854, 0.0
        %v5891 = vmax.f32 %v4877, 0.0
        %v5892 = vmax.f32 %v4900, 0.0
        %v5893 = vmax.f32 %v4923, 0.0
        %v5894 = vmax.f32 %v4946, 0.0
        %v5895 = vmax.f32 %v4969, 0.0
        %v5896 = vmax.f32 %v4992, 0.0
        %v5897 = vmax.f32 %v5015, 0.0
        %v5898 = vmax.f32 %v5038, 0.0
        %v5899 = vmax.f32 %v5061, 0.0
        %v5900 = vmax.f32 %v5084, 0.0
        %v5901 = vmax.f32 %v5107, 0.0
        %v5902 = vmax.f32 %v5130, 0.0
        %v5903 = vmax.f32 %v5153, 0.0
        %v5904 = vmax.f32 %v5176, 0.0
        %v5905 = vmax.f32 %v5199, 0.0
        %v5906 = vmax.f32 %v5222, 0.0
        %v5907 = vmax.f32 %v5245, 0.0
        %v5908 = vmax.f32 %v5268, 0.0
        %v5909 = vmax.f32 %v5291, 0.0
        %v5910 = vmax.f32 %v5314, 0.0
        %v5911 = vmax.f32 %v5337, 0.0
        %v5912 = vmax.f32 %v5360, 0.0
        %v5913 = vmax.f32 %v5383, 0.0
        %v5914 = vmax.f32 %v5406, 0.0
        %v5915 = vmax.f32 %v5429, 0.0
        %v5916 = vmax.f32 %v5452, 0.0
        %v5917 = vmax.f32 %v5475, 0.0
        %v5918 = vmax.f32 %v5498, 0.0
        %v5919 = vmax.f32 %v5521, 0.0
        %v5920 = vmax.f32 %v5544, 0.0
        %v5921 = vmax.f32 %v5567, 0.0
        %v5922 = vmax.f32 %v5590, 0.0
        %v5923 = vmax.f32 %v5613, 0.0
        %v5924 = vmax.f32 %v5636, 0.0
        %v5925 = vmax.f32 %v5659, 0.0
        %v5926 = vmax.f32 %v5682, 0.0
        %v5927 = vmax.f32 %v5705, 0.0
        %v5928 = vmax.f32 %v5728, 0.0
        %v5929 = vmax.f32 %v5751, 0.0
        %v5930 = vmax.f32 %v5774, 0.0
        %v5931 = vmax.f32 %v5797, 0.0
        %v5932 = vmax.f32 %v5820, 0.0
        %v5933 = vmax.f32 %v5843, 0.0
        %v5934 = vmax.f32 %v5866, 0.0
        %v5935 = vmax.f32 %v4420, 0.0
        %v5936 = vmax.f32 %v4443, 0.0
        %v5937 = vmax.f32 %v4466, 0.0
        %v5938 = vmax.f32 %v4489, 0.0
        %v5939 = vmax.f32 %v4512, 0.0
        %v5940 = vmax.f32 %v4535, 0.0
        %v5941 = vmax.f32 %v4558, 0.0
        %v5942 = vmax.f32 %v4581, 0.0
        %v5943 = vmax.f32 %v4604, 0.0
        %v5944 = vmax.f32 %v4627, 0.0
        %v5945 = vmax.f32 %v4650, 0.0
        %v5946 = vmax.f32 %v4673, 0.0
        %v5947 = vmax.f32 %v4696, 0.0
        %v5948 = vmax.f32 %v4719, 0.0
        %v5949 = vmax.f32 %v4742, 0.0
        %v5950 = vmax.f32 %v4765, 0.0
        %v5951 = vmax.f32 %v4788, 0.0
        %v5952 = vmax.f32 %v4811, 0.0
        %v5953 = vmax.f32 %v4834, 0.0
        %v5954 = vmax.f32 %v4857, 0.0
        %v5955 = vmax.f32 %v4880, 0.0
        %v5956 = vmax.f32 %v4903, 0.0
        %v5957 = vmax.f32 %v4926, 0.0
        %v5958 = vmax.f32 %v4949, 0.0
        %v5959 = vmax.f32 %v4972, 0.0
        %v5960 = vmax.f32 %v4995, 0.0
        %v5961 = vmax.f32 %v5018, 0.0
        %v5962 = vmax.f32 %v5041, 0.0
        %v5963 = vmax.f32 %v5064, 0.0
        %v5964 = vmax.f32 %v5087, 0.0
        %v5965 = vmax.f32 %v5110, 0.0
        %v5966 = vmax.f32 %v5133, 0.0
        %v5967 = vmax.f32 %v5156, 0.0
        %v5968 = vmax.f32 %v5179, 0.0
        %v5969 = vmax.f32 %v5202, 0.0
        %v5970 = vmax.f32 %v5225, 0.0
        %v5971 = vmax.f32 %v5248, 0.0
        %v5972 = vmax.f32 %v5271, 0.0
        %v5973 = vmax.f32 %v5294, 0.0
        %v5974 = vmax.f32 %v5317, 0.0
        %v5975 = vmax.f32 %v5340, 0.0
        %v5976 = vmax.f32 %v5363, 0.0
        %v5977 = vmax.f32 %v5386, 0.0
        %v5978 = vmax.f32 %v5409, 0.0
        %v5979 = vmax.f32 %v5432, 0.0
        %v5980 = vmax.f32 %v5455, 0.0
        %v5981 = vmax.f32 %v5478, 0.0
        %v5982 = vmax.f32 %v5501, 0.0
        %v5983 = vmax.f32 %v5524, 0.0
        %v5984 = vmax.f32 %v5547, 0.0
        %v5985 = vmax.f32 %v5570, 0.0
        %v5986 = vmax.f32 %v5593, 0.0
        %v5987 = vmax.f32 %v5616, 0.0
        %v5988 = vmax.f32 %v5639, 0.0
        %v5989 = vmax.f32 %v5662, 0.0
        %v5990 = vmax.f32 %v5685, 0.0
        %v5991 = vmax.f32 %v5708, 0.0
        %v5992 = vmax.f32 %v5731, 0.0
        %v5993 = vmax.f32 %v5754, 0.0
        %v5994 = vmax.f32 %v5777, 0.0
        %v5995 = vmax.f32 %v5800, 0.0
        %v5996 = vmax.f32 %v5823, 0.0
        %v5997 = vmax.f32 %v5846, 0.0
        %v5998 = vmax.f32 %v5869, 0.0
        %v5999 = vld [vmem:[%s3] sm:$0xff]
        %v6000 = vld [vmem:[%s4] sm:$0xff]
        %6002 = vset.pattern.permute.xlu0 0
        %6003 = vperm.xlu0 %6002, %v6000
        %v6004 = vpop.permute.xlu0 %6003
        %vm6006 = vcmask 130048
        %v6008 = vsel %vm6006, %v5999, 0
        %6010 = vmatpush.msra.mxu0 0.0
        %6011 = vmatpush.msra.mxu0 0.0
        %6012 = vmatpush.msra.mxu0 0.0
        %6013 = vmatpush.msra.mxu0 0.0
        %6014 = vmatpush.msra.mxu0 0.0
        %6015 = vmatpush.msra.mxu0 0.0
        %6016 = vmatpush.msra.mxu0 0.0
        %6017 = vmatpush.msra.mxu0 0.0
        %6018 = vmatpush.msra.mxu0 0.0
        %6019 = vmatpush.msra.mxu0 0.0
        %6020 = vmatpush.msra.mxu0 0.0
        %6021 = vmatpush.msra.mxu0 0.0
        %6022 = vmatpush.msra.mxu0 0.0
        %6023 = vmatpush.msra.mxu0 0.0
        %6024 = vmatpush.msra.mxu0 %v5935
        %6025 = vmatpush.msra.mxu0 %v5871
        %6026 = vmatmul.f32.gmra.mxu0 %v6008
        %v6027 = vpop.f32.mrf.mxu0
        %v6028 = vadd.f32 %v6004, %v6027
        %6029 = vdwg.mxu0
        %6030 = vmatpush.msra.mxu0 0.0
        %6031 = vmatpush.msra.mxu0 0.0
        %6032 = vmatpush.msra.mxu0 0.0
        %6033 = vmatpush.msra.mxu0 0.0
        %6034 = vmatpush.msra.mxu0 0.0
        %6035 = vmatpush.msra.mxu0 0.0
        %6036 = vmatpush.msra.mxu0 0.0
        %6037 = vmatpush.msra.mxu0 0.0
        %6038 = vmatpush.msra.mxu0 0.0
        %6039 = vmatpush.msra.mxu0 0.0
        %6040 = vmatpush.msra.mxu0 0.0
        %6041 = vmatpush.msra.mxu0 0.0
        %6042 = vmatpush.msra.mxu0 0.0
        %6043 = vmatpush.msra.mxu0 0.0
        %6044 = vmatpush.msra.mxu0 %v5936
        %6045 = vmatpush.msra.mxu0 %v5872
        %6046 = vmatmul.f32.gmra.mxu0 %v6008
        %v6047 = vpop.f32.mrf.mxu0
        %v6048 = vadd.f32 %v6004, %v6047
        %6049 = vdwg.mxu0
        %6050 = vmatpush.msra.mxu0 0.0
        %6051 = vmatpush.msra.mxu0 0.0
        %6052 = vmatpush.msra.mxu0 0.0
        %6053 = vmatpush.msra.mxu0 0.0
        %6054 = vmatpush.msra.mxu0 0.0
        %6055 = vmatpush.msra.mxu0 0.0
        %6056 = vmatpush.msra.mxu0 0.0
        %6057 = vmatpush.msra.mxu0 0.0
        %6058 = vmatpush.msra.mxu0 0.0
        %6059 = vmatpush.msra.mxu0 0.0
        %6060 = vmatpush.msra.mxu0 0.0
        %6061 = vmatpush.msra.mxu0 0.0
        %6062 = vmatpush.msra.mxu0 0.0
        %6063 = vmatpush.msra.mxu0 0.0
        %6064 = vmatpush.msra.mxu0 %v5937
        %6065 = vmatpush.msra.mxu0 %v5873
        %6066 = vmatmul.f32.gmra.mxu0 %v6008
        %v6067 = vpop.f32.mrf.mxu0
        %v6068 = vadd.f32 %v6004, %v6067
        %6069 = vdwg.mxu0
        %6070 = vmatpush.msra.mxu0 0.0
        %6071 = vmatpush.msra.mxu0 0.0
        %6072 = vmatpush.msra.mxu0 0.0
        %6073 = vmatpush.msra.mxu0 0.0
        %6074 = vmatpush.msra.mxu0 0.0
        %6075 = vmatpush.msra.mxu0 0.0
        %6076 = vmatpush.msra.mxu0 0.0
        %6077 = vmatpush.msra.mxu0 0.0
        %6078 = vmatpush.msra.mxu0 0.0
        %6079 = vmatpush.msra.mxu0 0.0
        %6080 = vmatpush.msra.mxu0 0.0
        %6081 = vmatpush.msra.mxu0 0.0
        %6082 = vmatpush.msra.mxu0 0.0
        %6083 = vmatpush.msra.mxu0 0.0
        %6084 = vmatpush.msra.mxu0 %v5938
        %6085 = vmatpush.msra.mxu0 %v5874
        %6086 = vmatmul.f32.gmra.mxu0 %v6008
        %v6087 = vpop.f32.mrf.mxu0
        %v6088 = vadd.f32 %v6004, %v6087
        %6089 = vdwg.mxu0
        %6090 = vmatpush.msra.mxu0 0.0
        %6091 = vmatpush.msra.mxu0 0.0
        %6092 = vmatpush.msra.mxu0 0.0
        %6093 = vmatpush.msra.mxu0 0.0
        %6094 = vmatpush.msra.mxu0 0.0
        %6095 = vmatpush.msra.mxu0 0.0
        %6096 = vmatpush.msra.mxu0 0.0
        %6097 = vmatpush.msra.mxu0 0.0
        %6098 = vmatpush.msra.mxu0 0.0
        %6099 = vmatpush.msra.mxu0 0.0
        %6100 = vmatpush.msra.mxu0 0.0
        %6101 = vmatpush.msra.mxu0 0.0
        %6102 = vmatpush.msra.mxu0 0.0
        %6103 = vmatpush.msra.mxu0 0.0
        %6104 = vmatpush.msra.mxu0 %v5939
        %6105 = vmatpush.msra.mxu0 %v5875
        %6106 = vmatmul.f32.gmra.mxu0 %v6008
        %v6107 = vpop.f32.mrf.mxu0
        %v6108 = vadd.f32 %v6004, %v6107
        %6109 = vdwg.mxu0
        %6110 = vmatpush.msra.mxu0 0.0
        %6111 = vmatpush.msra.mxu0 0.0
        %6112 = vmatpush.msra.mxu0 0.0
        %6113 = vmatpush.msra.mxu0 0.0
        %6114 = vmatpush.msra.mxu0 0.0
        %6115 = vmatpush.msra.mxu0 0.0
        %6116 = vmatpush.msra.mxu0 0.0
        %6117 = vmatpush.msra.mxu0 0.0
        %6118 = vmatpush.msra.mxu0 0.0
        %6119 = vmatpush.msra.mxu0 0.0
        %6120 = vmatpush.msra.mxu0 0.0
        %6121 = vmatpush.msra.mxu0 0.0
        %6122 = vmatpush.msra.mxu0 0.0
        %6123 = vmatpush.msra.mxu0 0.0
        %6124 = vmatpush.msra.mxu0 %v5940
        %6125 = vmatpush.msra.mxu0 %v5876
        %6126 = vmatmul.f32.gmra.mxu0 %v6008
        %v6127 = vpop.f32.mrf.mxu0
        %v6128 = vadd.f32 %v6004, %v6127
        %6129 = vdwg.mxu0
        %6130 = vmatpush.msra.mxu0 0.0
        %6131 = vmatpush.msra.mxu0 0.0
        %6132 = vmatpush.msra.mxu0 0.0
        %6133 = vmatpush.msra.mxu0 0.0
        %6134 = vmatpush.msra.mxu0 0.0
        %6135 = vmatpush.msra.mxu0 0.0
        %6136 = vmatpush.msra.mxu0 0.0
        %6137 = vmatpush.msra.mxu0 0.0
        %6138 = vmatpush.msra.mxu0 0.0
        %6139 = vmatpush.msra.mxu0 0.0
        %6140 = vmatpush.msra.mxu0 0.0
        %6141 = vmatpush.msra.mxu0 0.0
        %6142 = vmatpush.msra.mxu0 0.0
        %6143 = vmatpush.msra.mxu0 0.0
        %6144 = vmatpush.msra.mxu0 %v5941
        %6145 = vmatpush.msra.mxu0 %v5877
        %6146 = vmatmul.f32.gmra.mxu0 %v6008
        %v6147 = vpop.f32.mrf.mxu0
        %v6148 = vadd.f32 %v6004, %v6147
        %6149 = vdwg.mxu0
        %6150 = vmatpush.msra.mxu0 0.0
        %6151 = vmatpush.msra.mxu0 0.0
        %6152 = vmatpush.msra.mxu0 0.0
        %6153 = vmatpush.msra.mxu0 0.0
        %6154 = vmatpush.msra.mxu0 0.0
        %6155 = vmatpush.msra.mxu0 0.0
        %6156 = vmatpush.msra.mxu0 0.0
        %6157 = vmatpush.msra.mxu0 0.0
        %6158 = vmatpush.msra.mxu0 0.0
        %6159 = vmatpush.msra.mxu0 0.0
        %6160 = vmatpush.msra.mxu0 0.0
        %6161 = vmatpush.msra.mxu0 0.0
        %6162 = vmatpush.msra.mxu0 0.0
        %6163 = vmatpush.msra.mxu0 0.0
        %6164 = vmatpush.msra.mxu0 %v5942
        %6165 = vmatpush.msra.mxu0 %v5878
        %6166 = vmatmul.f32.gmra.mxu0 %v6008
        %v6167 = vpop.f32.mrf.mxu0
        %v6168 = vadd.f32 %v6004, %v6167
        %6169 = vdwg.mxu0
        %6170 = vmatpush.msra.mxu0 0.0
        %6171 = vmatpush.msra.mxu0 0.0
        %6172 = vmatpush.msra.mxu0 0.0
        %6173 = vmatpush.msra.mxu0 0.0
        %6174 = vmatpush.msra.mxu0 0.0
        %6175 = vmatpush.msra.mxu0 0.0
        %6176 = vmatpush.msra.mxu0 0.0
        %6177 = vmatpush.msra.mxu0 0.0
        %6178 = vmatpush.msra.mxu0 0.0
        %6179 = vmatpush.msra.mxu0 0.0
        %6180 = vmatpush.msra.mxu0 0.0
        %6181 = vmatpush.msra.mxu0 0.0
        %6182 = vmatpush.msra.mxu0 0.0
        %6183 = vmatpush.msra.mxu0 0.0
        %6184 = vmatpush.msra.mxu0 %v5943
        %6185 = vmatpush.msra.mxu0 %v5879
        %6186 = vmatmul.f32.gmra.mxu0 %v6008
        %v6187 = vpop.f32.mrf.mxu0
        %v6188 = vadd.f32 %v6004, %v6187
        %6189 = vdwg.mxu0
        %6190 = vmatpush.msra.mxu0 0.0
        %6191 = vmatpush.msra.mxu0 0.0
        %6192 = vmatpush.msra.mxu0 0.0
        %6193 = vmatpush.msra.mxu0 0.0
        %6194 = vmatpush.msra.mxu0 0.0
        %6195 = vmatpush.msra.mxu0 0.0
        %6196 = vmatpush.msra.mxu0 0.0
        %6197 = vmatpush.msra.mxu0 0.0
        %6198 = vmatpush.msra.mxu0 0.0
        %6199 = vmatpush.msra.mxu0 0.0
        %6200 = vmatpush.msra.mxu0 0.0
        %6201 = vmatpush.msra.mxu0 0.0
        %6202 = vmatpush.msra.mxu0 0.0
        %6203 = vmatpush.msra.mxu0 0.0
        %6204 = vmatpush.msra.mxu0 %v5944
        %6205 = vmatpush.msra.mxu0 %v5880
        %6206 = vmatmul.f32.gmra.mxu0 %v6008
        %v6207 = vpop.f32.mrf.mxu0
        %v6208 = vadd.f32 %v6004, %v6207
        %6209 = vdwg.mxu0
        %6210 = vmatpush.msra.mxu0 0.0
        %6211 = vmatpush.msra.mxu0 0.0
        %6212 = vmatpush.msra.mxu0 0.0
        %6213 = vmatpush.msra.mxu0 0.0
        %6214 = vmatpush.msra.mxu0 0.0
        %6215 = vmatpush.msra.mxu0 0.0
        %6216 = vmatpush.msra.mxu0 0.0
        %6217 = vmatpush.msra.mxu0 0.0
        %6218 = vmatpush.msra.mxu0 0.0
        %6219 = vmatpush.msra.mxu0 0.0
        %6220 = vmatpush.msra.mxu0 0.0
        %6221 = vmatpush.msra.mxu0 0.0
        %6222 = vmatpush.msra.mxu0 0.0
        %6223 = vmatpush.msra.mxu0 0.0
        %6224 = vmatpush.msra.mxu0 %v5945
        %6225 = vmatpush.msra.mxu0 %v5881
        %6226 = vmatmul.f32.gmra.mxu0 %v6008
        %v6227 = vpop.f32.mrf.mxu0
        %v6228 = vadd.f32 %v6004, %v6227
        %6229 = vdwg.mxu0
        %6230 = vmatpush.msra.mxu0 0.0
        %6231 = vmatpush.msra.mxu0 0.0
        %6232 = vmatpush.msra.mxu0 0.0
        %6233 = vmatpush.msra.mxu0 0.0
        %6234 = vmatpush.msra.mxu0 0.0
        %6235 = vmatpush.msra.mxu0 0.0
        %6236 = vmatpush.msra.mxu0 0.0
        %6237 = vmatpush.msra.mxu0 0.0
        %6238 = vmatpush.msra.mxu0 0.0
        %6239 = vmatpush.msra.mxu0 0.0
        %6240 = vmatpush.msra.mxu0 0.0
        %6241 = vmatpush.msra.mxu0 0.0
        %6242 = vmatpush.msra.mxu0 0.0
        %6243 = vmatpush.msra.mxu0 0.0
        %6244 = vmatpush.msra.mxu0 %v5946
        %6245 = vmatpush.msra.mxu0 %v5882
        %6246 = vmatmul.f32.gmra.mxu0 %v6008
        %v6247 = vpop.f32.mrf.mxu0
        %v6248 = vadd.f32 %v6004, %v6247
        %6249 = vdwg.mxu0
        %6250 = vmatpush.msra.mxu0 0.0
        %6251 = vmatpush.msra.mxu0 0.0
        %6252 = vmatpush.msra.mxu0 0.0
        %6253 = vmatpush.msra.mxu0 0.0
        %6254 = vmatpush.msra.mxu0 0.0
        %6255 = vmatpush.msra.mxu0 0.0
        %6256 = vmatpush.msra.mxu0 0.0
        %6257 = vmatpush.msra.mxu0 0.0
        %6258 = vmatpush.msra.mxu0 0.0
        %6259 = vmatpush.msra.mxu0 0.0
        %6260 = vmatpush.msra.mxu0 0.0
        %6261 = vmatpush.msra.mxu0 0.0
        %6262 = vmatpush.msra.mxu0 0.0
        %6263 = vmatpush.msra.mxu0 0.0
        %6264 = vmatpush.msra.mxu0 %v5947
        %6265 = vmatpush.msra.mxu0 %v5883
        %6266 = vmatmul.f32.gmra.mxu0 %v6008
        %v6267 = vpop.f32.mrf.mxu0
        %v6268 = vadd.f32 %v6004, %v6267
        %6269 = vdwg.mxu0
        %6270 = vmatpush.msra.mxu0 0.0
        %6271 = vmatpush.msra.mxu0 0.0
        %6272 = vmatpush.msra.mxu0 0.0
        %6273 = vmatpush.msra.mxu0 0.0
        %6274 = vmatpush.msra.mxu0 0.0
        %6275 = vmatpush.msra.mxu0 0.0
        %6276 = vmatpush.msra.mxu0 0.0
        %6277 = vmatpush.msra.mxu0 0.0
        %6278 = vmatpush.msra.mxu0 0.0
        %6279 = vmatpush.msra.mxu0 0.0
        %6280 = vmatpush.msra.mxu0 0.0
        %6281 = vmatpush.msra.mxu0 0.0
        %6282 = vmatpush.msra.mxu0 0.0
        %6283 = vmatpush.msra.mxu0 0.0
        %6284 = vmatpush.msra.mxu0 %v5948
        %6285 = vmatpush.msra.mxu0 %v5884
        %6286 = vmatmul.f32.gmra.mxu0 %v6008
        %v6287 = vpop.f32.mrf.mxu0
        %v6288 = vadd.f32 %v6004, %v6287
        %6289 = vdwg.mxu0
        %6290 = vmatpush.msra.mxu0 0.0
        %6291 = vmatpush.msra.mxu0 0.0
        %6292 = vmatpush.msra.mxu0 0.0
        %6293 = vmatpush.msra.mxu0 0.0
        %6294 = vmatpush.msra.mxu0 0.0
        %6295 = vmatpush.msra.mxu0 0.0
        %6296 = vmatpush.msra.mxu0 0.0
        %6297 = vmatpush.msra.mxu0 0.0
        %6298 = vmatpush.msra.mxu0 0.0
        %6299 = vmatpush.msra.mxu0 0.0
        %6300 = vmatpush.msra.mxu0 0.0
        %6301 = vmatpush.msra.mxu0 0.0
        %6302 = vmatpush.msra.mxu0 0.0
        %6303 = vmatpush.msra.mxu0 0.0
        %6304 = vmatpush.msra.mxu0 %v5949
        %6305 = vmatpush.msra.mxu0 %v5885
        %6306 = vmatmul.f32.gmra.mxu0 %v6008
        %v6307 = vpop.f32.mrf.mxu0
        %v6308 = vadd.f32 %v6004, %v6307
        %6309 = vdwg.mxu0
        %6310 = vmatpush.msra.mxu0 0.0
        %6311 = vmatpush.msra.mxu0 0.0
        %6312 = vmatpush.msra.mxu0 0.0
        %6313 = vmatpush.msra.mxu0 0.0
        %6314 = vmatpush.msra.mxu0 0.0
        %6315 = vmatpush.msra.mxu0 0.0
        %6316 = vmatpush.msra.mxu0 0.0
        %6317 = vmatpush.msra.mxu0 0.0
        %6318 = vmatpush.msra.mxu0 0.0
        %6319 = vmatpush.msra.mxu0 0.0
        %6320 = vmatpush.msra.mxu0 0.0
        %6321 = vmatpush.msra.mxu0 0.0
        %6322 = vmatpush.msra.mxu0 0.0
        %6323 = vmatpush.msra.mxu0 0.0
        %6324 = vmatpush.msra.mxu0 %v5950
        %6325 = vmatpush.msra.mxu0 %v5886
        %6326 = vmatmul.f32.gmra.mxu0 %v6008
        %v6327 = vpop.f32.mrf.mxu0
        %v6328 = vadd.f32 %v6004, %v6327
        %6329 = vdwg.mxu0
        %6330 = vmatpush.msra.mxu0 0.0
        %6331 = vmatpush.msra.mxu0 0.0
        %6332 = vmatpush.msra.mxu0 0.0
        %6333 = vmatpush.msra.mxu0 0.0
        %6334 = vmatpush.msra.mxu0 0.0
        %6335 = vmatpush.msra.mxu0 0.0
        %6336 = vmatpush.msra.mxu0 0.0
        %6337 = vmatpush.msra.mxu0 0.0
        %6338 = vmatpush.msra.mxu0 0.0
        %6339 = vmatpush.msra.mxu0 0.0
        %6340 = vmatpush.msra.mxu0 0.0
        %6341 = vmatpush.msra.mxu0 0.0
        %6342 = vmatpush.msra.mxu0 0.0
        %6343 = vmatpush.msra.mxu0 0.0
        %6344 = vmatpush.msra.mxu0 %v5951
        %6345 = vmatpush.msra.mxu0 %v5887
        %6346 = vmatmul.f32.gmra.mxu0 %v6008
        %v6347 = vpop.f32.mrf.mxu0
        %v6348 = vadd.f32 %v6004, %v6347
        %6349 = vdwg.mxu0
        %6350 = vmatpush.msra.mxu0 0.0
        %6351 = vmatpush.msra.mxu0 0.0
        %6352 = vmatpush.msra.mxu0 0.0
        %6353 = vmatpush.msra.mxu0 0.0
        %6354 = vmatpush.msra.mxu0 0.0
        %6355 = vmatpush.msra.mxu0 0.0
        %6356 = vmatpush.msra.mxu0 0.0
        %6357 = vmatpush.msra.mxu0 0.0
        %6358 = vmatpush.msra.mxu0 0.0
        %6359 = vmatpush.msra.mxu0 0.0
        %6360 = vmatpush.msra.mxu0 0.0
        %6361 = vmatpush.msra.mxu0 0.0
        %6362 = vmatpush.msra.mxu0 0.0
        %6363 = vmatpush.msra.mxu0 0.0
        %6364 = vmatpush.msra.mxu0 %v5952
        %6365 = vmatpush.msra.mxu0 %v5888
        %6366 = vmatmul.f32.gmra.mxu0 %v6008
        %v6367 = vpop.f32.mrf.mxu0
        %v6368 = vadd.f32 %v6004, %v6367
        %6369 = vdwg.mxu0
        %6370 = vmatpush.msra.mxu0 0.0
        %6371 = vmatpush.msra.mxu0 0.0
        %6372 = vmatpush.msra.mxu0 0.0
        %6373 = vmatpush.msra.mxu0 0.0
        %6374 = vmatpush.msra.mxu0 0.0
        %6375 = vmatpush.msra.mxu0 0.0
        %6376 = vmatpush.msra.mxu0 0.0
        %6377 = vmatpush.msra.mxu0 0.0
        %6378 = vmatpush.msra.mxu0 0.0
        %6379 = vmatpush.msra.mxu0 0.0
        %6380 = vmatpush.msra.mxu0 0.0
        %6381 = vmatpush.msra.mxu0 0.0
        %6382 = vmatpush.msra.mxu0 0.0
        %6383 = vmatpush.msra.mxu0 0.0
        %6384 = vmatpush.msra.mxu0 %v5953
        %6385 = vmatpush.msra.mxu0 %v5889
        %6386 = vmatmul.f32.gmra.mxu0 %v6008
        %v6387 = vpop.f32.mrf.mxu0
        %v6388 = vadd.f32 %v6004, %v6387
        %6389 = vdwg.mxu0
        %6390 = vmatpush.msra.mxu0 0.0
        %6391 = vmatpush.msra.mxu0 0.0
        %6392 = vmatpush.msra.mxu0 0.0
        %6393 = vmatpush.msra.mxu0 0.0
        %6394 = vmatpush.msra.mxu0 0.0
        %6395 = vmatpush.msra.mxu0 0.0
        %6396 = vmatpush.msra.mxu0 0.0
        %6397 = vmatpush.msra.mxu0 0.0
        %6398 = vmatpush.msra.mxu0 0.0
        %6399 = vmatpush.msra.mxu0 0.0
        %6400 = vmatpush.msra.mxu0 0.0
        %6401 = vmatpush.msra.mxu0 0.0
        %6402 = vmatpush.msra.mxu0 0.0
        %6403 = vmatpush.msra.mxu0 0.0
        %6404 = vmatpush.msra.mxu0 %v5954
        %6405 = vmatpush.msra.mxu0 %v5890
        %6406 = vmatmul.f32.gmra.mxu0 %v6008
        %v6407 = vpop.f32.mrf.mxu0
        %v6408 = vadd.f32 %v6004, %v6407
        %6409 = vdwg.mxu0
        %6410 = vmatpush.msra.mxu0 0.0
        %6411 = vmatpush.msra.mxu0 0.0
        %6412 = vmatpush.msra.mxu0 0.0
        %6413 = vmatpush.msra.mxu0 0.0
        %6414 = vmatpush.msra.mxu0 0.0
        %6415 = vmatpush.msra.mxu0 0.0
        %6416 = vmatpush.msra.mxu0 0.0
        %6417 = vmatpush.msra.mxu0 0.0
        %6418 = vmatpush.msra.mxu0 0.0
        %6419 = vmatpush.msra.mxu0 0.0
        %6420 = vmatpush.msra.mxu0 0.0
        %6421 = vmatpush.msra.mxu0 0.0
        %6422 = vmatpush.msra.mxu0 0.0
        %6423 = vmatpush.msra.mxu0 0.0
        %6424 = vmatpush.msra.mxu0 %v5955
        %6425 = vmatpush.msra.mxu0 %v5891
        %6426 = vmatmul.f32.gmra.mxu0 %v6008
        %v6427 = vpop.f32.mrf.mxu0
        %v6428 = vadd.f32 %v6004, %v6427
        %6429 = vdwg.mxu0
        %6430 = vmatpush.msra.mxu0 0.0
        %6431 = vmatpush.msra.mxu0 0.0
        %6432 = vmatpush.msra.mxu0 0.0
        %6433 = vmatpush.msra.mxu0 0.0
        %6434 = vmatpush.msra.mxu0 0.0
        %6435 = vmatpush.msra.mxu0 0.0
        %6436 = vmatpush.msra.mxu0 0.0
        %6437 = vmatpush.msra.mxu0 0.0
        %6438 = vmatpush.msra.mxu0 0.0
        %6439 = vmatpush.msra.mxu0 0.0
        %6440 = vmatpush.msra.mxu0 0.0
        %6441 = vmatpush.msra.mxu0 0.0
        %6442 = vmatpush.msra.mxu0 0.0
        %6443 = vmatpush.msra.mxu0 0.0
        %6444 = vmatpush.msra.mxu0 %v5956
        %6445 = vmatpush.msra.mxu0 %v5892
        %6446 = vmatmul.f32.gmra.mxu0 %v6008
        %v6447 = vpop.f32.mrf.mxu0
        %v6448 = vadd.f32 %v6004, %v6447
        %6449 = vdwg.mxu0
        %6450 = vmatpush.msra.mxu0 0.0
        %6451 = vmatpush.msra.mxu0 0.0
        %6452 = vmatpush.msra.mxu0 0.0
        %6453 = vmatpush.msra.mxu0 0.0
        %6454 = vmatpush.msra.mxu0 0.0
        %6455 = vmatpush.msra.mxu0 0.0
        %6456 = vmatpush.msra.mxu0 0.0
        %6457 = vmatpush.msra.mxu0 0.0
        %6458 = vmatpush.msra.mxu0 0.0
        %6459 = vmatpush.msra.mxu0 0.0
        %6460 = vmatpush.msra.mxu0 0.0
        %6461 = vmatpush.msra.mxu0 0.0
        %6462 = vmatpush.msra.mxu0 0.0
        %6463 = vmatpush.msra.mxu0 0.0
        %6464 = vmatpush.msra.mxu0 %v5957
        %6465 = vmatpush.msra.mxu0 %v5893
        %6466 = vmatmul.f32.gmra.mxu0 %v6008
        %v6467 = vpop.f32.mrf.mxu0
        %v6468 = vadd.f32 %v6004, %v6467
        %6469 = vdwg.mxu0
        %6470 = vmatpush.msra.mxu0 0.0
        %6471 = vmatpush.msra.mxu0 0.0
        %6472 = vmatpush.msra.mxu0 0.0
        %6473 = vmatpush.msra.mxu0 0.0
        %6474 = vmatpush.msra.mxu0 0.0
        %6475 = vmatpush.msra.mxu0 0.0
        %6476 = vmatpush.msra.mxu0 0.0
        %6477 = vmatpush.msra.mxu0 0.0
        %6478 = vmatpush.msra.mxu0 0.0
        %6479 = vmatpush.msra.mxu0 0.0
        %6480 = vmatpush.msra.mxu0 0.0
        %6481 = vmatpush.msra.mxu0 0.0
        %6482 = vmatpush.msra.mxu0 0.0
        %6483 = vmatpush.msra.mxu0 0.0
        %6484 = vmatpush.msra.mxu0 %v5958
        %6485 = vmatpush.msra.mxu0 %v5894
        %6486 = vmatmul.f32.gmra.mxu0 %v6008
        %v6487 = vpop.f32.mrf.mxu0
        %v6488 = vadd.f32 %v6004, %v6487
        %6489 = vdwg.mxu0
        %6490 = vmatpush.msra.mxu0 0.0
        %6491 = vmatpush.msra.mxu0 0.0
        %6492 = vmatpush.msra.mxu0 0.0
        %6493 = vmatpush.msra.mxu0 0.0
        %6494 = vmatpush.msra.mxu0 0.0
        %6495 = vmatpush.msra.mxu0 0.0
        %6496 = vmatpush.msra.mxu0 0.0
        %6497 = vmatpush.msra.mxu0 0.0
        %6498 = vmatpush.msra.mxu0 0.0
        %6499 = vmatpush.msra.mxu0 0.0
        %6500 = vmatpush.msra.mxu0 0.0
        %6501 = vmatpush.msra.mxu0 0.0
        %6502 = vmatpush.msra.mxu0 0.0
        %6503 = vmatpush.msra.mxu0 0.0
        %6504 = vmatpush.msra.mxu0 %v5959
        %6505 = vmatpush.msra.mxu0 %v5895
        %6506 = vmatmul.f32.gmra.mxu0 %v6008
        %v6507 = vpop.f32.mrf.mxu0
        %v6508 = vadd.f32 %v6004, %v6507
        %6509 = vdwg.mxu0
        %6510 = vmatpush.msra.mxu0 0.0
        %6511 = vmatpush.msra.mxu0 0.0
        %6512 = vmatpush.msra.mxu0 0.0
        %6513 = vmatpush.msra.mxu0 0.0
        %6514 = vmatpush.msra.mxu0 0.0
        %6515 = vmatpush.msra.mxu0 0.0
        %6516 = vmatpush.msra.mxu0 0.0
        %6517 = vmatpush.msra.mxu0 0.0
        %6518 = vmatpush.msra.mxu0 0.0
        %6519 = vmatpush.msra.mxu0 0.0
        %6520 = vmatpush.msra.mxu0 0.0
        %6521 = vmatpush.msra.mxu0 0.0
        %6522 = vmatpush.msra.mxu0 0.0
        %6523 = vmatpush.msra.mxu0 0.0
        %6524 = vmatpush.msra.mxu0 %v5960
        %6525 = vmatpush.msra.mxu0 %v5896
        %6526 = vmatmul.f32.gmra.mxu0 %v6008
        %v6527 = vpop.f32.mrf.mxu0
        %v6528 = vadd.f32 %v6004, %v6527
        %6529 = vdwg.mxu0
        %6530 = vmatpush.msra.mxu0 0.0
        %6531 = vmatpush.msra.mxu0 0.0
        %6532 = vmatpush.msra.mxu0 0.0
        %6533 = vmatpush.msra.mxu0 0.0
        %6534 = vmatpush.msra.mxu0 0.0
        %6535 = vmatpush.msra.mxu0 0.0
        %6536 = vmatpush.msra.mxu0 0.0
        %6537 = vmatpush.msra.mxu0 0.0
        %6538 = vmatpush.msra.mxu0 0.0
        %6539 = vmatpush.msra.mxu0 0.0
        %6540 = vmatpush.msra.mxu0 0.0
        %6541 = vmatpush.msra.mxu0 0.0
        %6542 = vmatpush.msra.mxu0 0.0
        %6543 = vmatpush.msra.mxu0 0.0
        %6544 = vmatpush.msra.mxu0 %v5961
        %6545 = vmatpush.msra.mxu0 %v5897
        %6546 = vmatmul.f32.gmra.mxu0 %v6008
        %v6547 = vpop.f32.mrf.mxu0
        %v6548 = vadd.f32 %v6004, %v6547
        %6549 = vdwg.mxu0
        %6550 = vmatpush.msra.mxu0 0.0
        %6551 = vmatpush.msra.mxu0 0.0
        %6552 = vmatpush.msra.mxu0 0.0
        %6553 = vmatpush.msra.mxu0 0.0
        %6554 = vmatpush.msra.mxu0 0.0
        %6555 = vmatpush.msra.mxu0 0.0
        %6556 = vmatpush.msra.mxu0 0.0
        %6557 = vmatpush.msra.mxu0 0.0
        %6558 = vmatpush.msra.mxu0 0.0
        %6559 = vmatpush.msra.mxu0 0.0
        %6560 = vmatpush.msra.mxu0 0.0
        %6561 = vmatpush.msra.mxu0 0.0
        %6562 = vmatpush.msra.mxu0 0.0
        %6563 = vmatpush.msra.mxu0 0.0
        %6564 = vmatpush.msra.mxu0 %v5962
        %6565 = vmatpush.msra.mxu0 %v5898
        %6566 = vmatmul.f32.gmra.mxu0 %v6008
        %v6567 = vpop.f32.mrf.mxu0
        %v6568 = vadd.f32 %v6004, %v6567
        %6569 = vdwg.mxu0
        %6570 = vmatpush.msra.mxu0 0.0
        %6571 = vmatpush.msra.mxu0 0.0
        %6572 = vmatpush.msra.mxu0 0.0
        %6573 = vmatpush.msra.mxu0 0.0
        %6574 = vmatpush.msra.mxu0 0.0
        %6575 = vmatpush.msra.mxu0 0.0
        %6576 = vmatpush.msra.mxu0 0.0
        %6577 = vmatpush.msra.mxu0 0.0
        %6578 = vmatpush.msra.mxu0 0.0
        %6579 = vmatpush.msra.mxu0 0.0
        %6580 = vmatpush.msra.mxu0 0.0
        %6581 = vmatpush.msra.mxu0 0.0
        %6582 = vmatpush.msra.mxu0 0.0
        %6583 = vmatpush.msra.mxu0 0.0
        %6584 = vmatpush.msra.mxu0 %v5963
        %6585 = vmatpush.msra.mxu0 %v5899
        %6586 = vmatmul.f32.gmra.mxu0 %v6008
        %v6587 = vpop.f32.mrf.mxu0
        %v6588 = vadd.f32 %v6004, %v6587
        %6589 = vdwg.mxu0
        %6590 = vmatpush.msra.mxu0 0.0
        %6591 = vmatpush.msra.mxu0 0.0
        %6592 = vmatpush.msra.mxu0 0.0
        %6593 = vmatpush.msra.mxu0 0.0
        %6594 = vmatpush.msra.mxu0 0.0
        %6595 = vmatpush.msra.mxu0 0.0
        %6596 = vmatpush.msra.mxu0 0.0
        %6597 = vmatpush.msra.mxu0 0.0
        %6598 = vmatpush.msra.mxu0 0.0
        %6599 = vmatpush.msra.mxu0 0.0
        %6600 = vmatpush.msra.mxu0 0.0
        %6601 = vmatpush.msra.mxu0 0.0
        %6602 = vmatpush.msra.mxu0 0.0
        %6603 = vmatpush.msra.mxu0 0.0
        %6604 = vmatpush.msra.mxu0 %v5964
        %6605 = vmatpush.msra.mxu0 %v5900
        %6606 = vmatmul.f32.gmra.mxu0 %v6008
        %v6607 = vpop.f32.mrf.mxu0
        %v6608 = vadd.f32 %v6004, %v6607
        %6609 = vdwg.mxu0
        %6610 = vmatpush.msra.mxu0 0.0
        %6611 = vmatpush.msra.mxu0 0.0
        %6612 = vmatpush.msra.mxu0 0.0
        %6613 = vmatpush.msra.mxu0 0.0
        %6614 = vmatpush.msra.mxu0 0.0
        %6615 = vmatpush.msra.mxu0 0.0
        %6616 = vmatpush.msra.mxu0 0.0
        %6617 = vmatpush.msra.mxu0 0.0
        %6618 = vmatpush.msra.mxu0 0.0
        %6619 = vmatpush.msra.mxu0 0.0
        %6620 = vmatpush.msra.mxu0 0.0
        %6621 = vmatpush.msra.mxu0 0.0
        %6622 = vmatpush.msra.mxu0 0.0
        %6623 = vmatpush.msra.mxu0 0.0
        %6624 = vmatpush.msra.mxu0 %v5965
        %6625 = vmatpush.msra.mxu0 %v5901
        %6626 = vmatmul.f32.gmra.mxu0 %v6008
        %v6627 = vpop.f32.mrf.mxu0
        %v6628 = vadd.f32 %v6004, %v6627
        %6629 = vdwg.mxu0
        %6630 = vmatpush.msra.mxu0 0.0
        %6631 = vmatpush.msra.mxu0 0.0
        %6632 = vmatpush.msra.mxu0 0.0
        %6633 = vmatpush.msra.mxu0 0.0
        %6634 = vmatpush.msra.mxu0 0.0
        %6635 = vmatpush.msra.mxu0 0.0
        %6636 = vmatpush.msra.mxu0 0.0
        %6637 = vmatpush.msra.mxu0 0.0
        %6638 = vmatpush.msra.mxu0 0.0
        %6639 = vmatpush.msra.mxu0 0.0
        %6640 = vmatpush.msra.mxu0 0.0
        %6641 = vmatpush.msra.mxu0 0.0
        %6642 = vmatpush.msra.mxu0 0.0
        %6643 = vmatpush.msra.mxu0 0.0
        %6644 = vmatpush.msra.mxu0 %v5966
        %6645 = vmatpush.msra.mxu0 %v5902
        %6646 = vmatmul.f32.gmra.mxu0 %v6008
        %v6647 = vpop.f32.mrf.mxu0
        %v6648 = vadd.f32 %v6004, %v6647
        %6649 = vdwg.mxu0
        %6650 = vmatpush.msra.mxu0 0.0
        %6651 = vmatpush.msra.mxu0 0.0
        %6652 = vmatpush.msra.mxu0 0.0
        %6653 = vmatpush.msra.mxu0 0.0
        %6654 = vmatpush.msra.mxu0 0.0
        %6655 = vmatpush.msra.mxu0 0.0
        %6656 = vmatpush.msra.mxu0 0.0
        %6657 = vmatpush.msra.mxu0 0.0
        %6658 = vmatpush.msra.mxu0 0.0
        %6659 = vmatpush.msra.mxu0 0.0
        %6660 = vmatpush.msra.mxu0 0.0
        %6661 = vmatpush.msra.mxu0 0.0
        %6662 = vmatpush.msra.mxu0 0.0
        %6663 = vmatpush.msra.mxu0 0.0
        %6664 = vmatpush.msra.mxu0 %v5967
        %6665 = vmatpush.msra.mxu0 %v5903
        %6666 = vmatmul.f32.gmra.mxu0 %v6008
        %v6667 = vpop.f32.mrf.mxu0
        %v6668 = vadd.f32 %v6004, %v6667
        %6669 = vdwg.mxu0
        %6670 = vmatpush.msra.mxu0 0.0
        %6671 = vmatpush.msra.mxu0 0.0
        %6672 = vmatpush.msra.mxu0 0.0
        %6673 = vmatpush.msra.mxu0 0.0
        %6674 = vmatpush.msra.mxu0 0.0
        %6675 = vmatpush.msra.mxu0 0.0
        %6676 = vmatpush.msra.mxu0 0.0
        %6677 = vmatpush.msra.mxu0 0.0
        %6678 = vmatpush.msra.mxu0 0.0
        %6679 = vmatpush.msra.mxu0 0.0
        %6680 = vmatpush.msra.mxu0 0.0
        %6681 = vmatpush.msra.mxu0 0.0
        %6682 = vmatpush.msra.mxu0 0.0
        %6683 = vmatpush.msra.mxu0 0.0
        %6684 = vmatpush.msra.mxu0 %v5968
        %6685 = vmatpush.msra.mxu0 %v5904
        %6686 = vmatmul.f32.gmra.mxu0 %v6008
        %v6687 = vpop.f32.mrf.mxu0
        %v6688 = vadd.f32 %v6004, %v6687
        %6689 = vdwg.mxu0
        %6690 = vmatpush.msra.mxu0 0.0
        %6691 = vmatpush.msra.mxu0 0.0
        %6692 = vmatpush.msra.mxu0 0.0
        %6693 = vmatpush.msra.mxu0 0.0
        %6694 = vmatpush.msra.mxu0 0.0
        %6695 = vmatpush.msra.mxu0 0.0
        %6696 = vmatpush.msra.mxu0 0.0
        %6697 = vmatpush.msra.mxu0 0.0
        %6698 = vmatpush.msra.mxu0 0.0
        %6699 = vmatpush.msra.mxu0 0.0
        %6700 = vmatpush.msra.mxu0 0.0
        %6701 = vmatpush.msra.mxu0 0.0
        %6702 = vmatpush.msra.mxu0 0.0
        %6703 = vmatpush.msra.mxu0 0.0
        %6704 = vmatpush.msra.mxu0 %v5969
        %6705 = vmatpush.msra.mxu0 %v5905
        %6706 = vmatmul.f32.gmra.mxu0 %v6008
        %v6707 = vpop.f32.mrf.mxu0
        %v6708 = vadd.f32 %v6004, %v6707
        %6709 = vdwg.mxu0
        %6710 = vmatpush.msra.mxu0 0.0
        %6711 = vmatpush.msra.mxu0 0.0
        %6712 = vmatpush.msra.mxu0 0.0
        %6713 = vmatpush.msra.mxu0 0.0
        %6714 = vmatpush.msra.mxu0 0.0
        %6715 = vmatpush.msra.mxu0 0.0
        %6716 = vmatpush.msra.mxu0 0.0
        %6717 = vmatpush.msra.mxu0 0.0
        %6718 = vmatpush.msra.mxu0 0.0
        %6719 = vmatpush.msra.mxu0 0.0
        %6720 = vmatpush.msra.mxu0 0.0
        %6721 = vmatpush.msra.mxu0 0.0
        %6722 = vmatpush.msra.mxu0 0.0
        %6723 = vmatpush.msra.mxu0 0.0
        %6724 = vmatpush.msra.mxu0 %v5970
        %6725 = vmatpush.msra.mxu0 %v5906
        %6726 = vmatmul.f32.gmra.mxu0 %v6008
        %v6727 = vpop.f32.mrf.mxu0
        %v6728 = vadd.f32 %v6004, %v6727
        %6729 = vdwg.mxu0
        %6730 = vmatpush.msra.mxu0 0.0
        %6731 = vmatpush.msra.mxu0 0.0
        %6732 = vmatpush.msra.mxu0 0.0
        %6733 = vmatpush.msra.mxu0 0.0
        %6734 = vmatpush.msra.mxu0 0.0
        %6735 = vmatpush.msra.mxu0 0.0
        %6736 = vmatpush.msra.mxu0 0.0
        %6737 = vmatpush.msra.mxu0 0.0
        %6738 = vmatpush.msra.mxu0 0.0
        %6739 = vmatpush.msra.mxu0 0.0
        %6740 = vmatpush.msra.mxu0 0.0
        %6741 = vmatpush.msra.mxu0 0.0
        %6742 = vmatpush.msra.mxu0 0.0
        %6743 = vmatpush.msra.mxu0 0.0
        %6744 = vmatpush.msra.mxu0 %v5971
        %6745 = vmatpush.msra.mxu0 %v5907
        %6746 = vmatmul.f32.gmra.mxu0 %v6008
        %v6747 = vpop.f32.mrf.mxu0
        %v6748 = vadd.f32 %v6004, %v6747
        %6749 = vdwg.mxu0
        %6750 = vmatpush.msra.mxu0 0.0
        %6751 = vmatpush.msra.mxu0 0.0
        %6752 = vmatpush.msra.mxu0 0.0
        %6753 = vmatpush.msra.mxu0 0.0
        %6754 = vmatpush.msra.mxu0 0.0
        %6755 = vmatpush.msra.mxu0 0.0
        %6756 = vmatpush.msra.mxu0 0.0
        %6757 = vmatpush.msra.mxu0 0.0
        %6758 = vmatpush.msra.mxu0 0.0
        %6759 = vmatpush.msra.mxu0 0.0
        %6760 = vmatpush.msra.mxu0 0.0
        %6761 = vmatpush.msra.mxu0 0.0
        %6762 = vmatpush.msra.mxu0 0.0
        %6763 = vmatpush.msra.mxu0 0.0
        %6764 = vmatpush.msra.mxu0 %v5972
        %6765 = vmatpush.msra.mxu0 %v5908
        %6766 = vmatmul.f32.gmra.mxu0 %v6008
        %v6767 = vpop.f32.mrf.mxu0
        %v6768 = vadd.f32 %v6004, %v6767
        %6769 = vdwg.mxu0
        %6770 = vmatpush.msra.mxu0 0.0
        %6771 = vmatpush.msra.mxu0 0.0
        %6772 = vmatpush.msra.mxu0 0.0
        %6773 = vmatpush.msra.mxu0 0.0
        %6774 = vmatpush.msra.mxu0 0.0
        %6775 = vmatpush.msra.mxu0 0.0
        %6776 = vmatpush.msra.mxu0 0.0
        %6777 = vmatpush.msra.mxu0 0.0
        %6778 = vmatpush.msra.mxu0 0.0
        %6779 = vmatpush.msra.mxu0 0.0
        %6780 = vmatpush.msra.mxu0 0.0
        %6781 = vmatpush.msra.mxu0 0.0
        %6782 = vmatpush.msra.mxu0 0.0
        %6783 = vmatpush.msra.mxu0 0.0
        %6784 = vmatpush.msra.mxu0 %v5973
        %6785 = vmatpush.msra.mxu0 %v5909
        %6786 = vmatmul.f32.gmra.mxu0 %v6008
        %v6787 = vpop.f32.mrf.mxu0
        %v6788 = vadd.f32 %v6004, %v6787
        %6789 = vdwg.mxu0
        %6790 = vmatpush.msra.mxu0 0.0
        %6791 = vmatpush.msra.mxu0 0.0
        %6792 = vmatpush.msra.mxu0 0.0
        %6793 = vmatpush.msra.mxu0 0.0
        %6794 = vmatpush.msra.mxu0 0.0
        %6795 = vmatpush.msra.mxu0 0.0
        %6796 = vmatpush.msra.mxu0 0.0
        %6797 = vmatpush.msra.mxu0 0.0
        %6798 = vmatpush.msra.mxu0 0.0
        %6799 = vmatpush.msra.mxu0 0.0
        %6800 = vmatpush.msra.mxu0 0.0
        %6801 = vmatpush.msra.mxu0 0.0
        %6802 = vmatpush.msra.mxu0 0.0
        %6803 = vmatpush.msra.mxu0 0.0
        %6804 = vmatpush.msra.mxu0 %v5974
        %6805 = vmatpush.msra.mxu0 %v5910
        %6806 = vmatmul.f32.gmra.mxu0 %v6008
        %v6807 = vpop.f32.mrf.mxu0
        %v6808 = vadd.f32 %v6004, %v6807
        %6809 = vdwg.mxu0
        %6810 = vmatpush.msra.mxu0 0.0
        %6811 = vmatpush.msra.mxu0 0.0
        %6812 = vmatpush.msra.mxu0 0.0
        %6813 = vmatpush.msra.mxu0 0.0
        %6814 = vmatpush.msra.mxu0 0.0
        %6815 = vmatpush.msra.mxu0 0.0
        %6816 = vmatpush.msra.mxu0 0.0
        %6817 = vmatpush.msra.mxu0 0.0
        %6818 = vmatpush.msra.mxu0 0.0
        %6819 = vmatpush.msra.mxu0 0.0
        %6820 = vmatpush.msra.mxu0 0.0
        %6821 = vmatpush.msra.mxu0 0.0
        %6822 = vmatpush.msra.mxu0 0.0
        %6823 = vmatpush.msra.mxu0 0.0
        %6824 = vmatpush.msra.mxu0 %v5975
        %6825 = vmatpush.msra.mxu0 %v5911
        %6826 = vmatmul.f32.gmra.mxu0 %v6008
        %v6827 = vpop.f32.mrf.mxu0
        %v6828 = vadd.f32 %v6004, %v6827
        %6829 = vdwg.mxu0
        %6830 = vmatpush.msra.mxu0 0.0
        %6831 = vmatpush.msra.mxu0 0.0
        %6832 = vmatpush.msra.mxu0 0.0
        %6833 = vmatpush.msra.mxu0 0.0
        %6834 = vmatpush.msra.mxu0 0.0
        %6835 = vmatpush.msra.mxu0 0.0
        %6836 = vmatpush.msra.mxu0 0.0
        %6837 = vmatpush.msra.mxu0 0.0
        %6838 = vmatpush.msra.mxu0 0.0
        %6839 = vmatpush.msra.mxu0 0.0
        %6840 = vmatpush.msra.mxu0 0.0
        %6841 = vmatpush.msra.mxu0 0.0
        %6842 = vmatpush.msra.mxu0 0.0
        %6843 = vmatpush.msra.mxu0 0.0
        %6844 = vmatpush.msra.mxu0 %v5976
        %6845 = vmatpush.msra.mxu0 %v5912
        %6846 = vmatmul.f32.gmra.mxu0 %v6008
        %v6847 = vpop.f32.mrf.mxu0
        %v6848 = vadd.f32 %v6004, %v6847
        %6849 = vdwg.mxu0
        %6850 = vmatpush.msra.mxu0 0.0
        %6851 = vmatpush.msra.mxu0 0.0
        %6852 = vmatpush.msra.mxu0 0.0
        %6853 = vmatpush.msra.mxu0 0.0
        %6854 = vmatpush.msra.mxu0 0.0
        %6855 = vmatpush.msra.mxu0 0.0
        %6856 = vmatpush.msra.mxu0 0.0
        %6857 = vmatpush.msra.mxu0 0.0
        %6858 = vmatpush.msra.mxu0 0.0
        %6859 = vmatpush.msra.mxu0 0.0
        %6860 = vmatpush.msra.mxu0 0.0
        %6861 = vmatpush.msra.mxu0 0.0
        %6862 = vmatpush.msra.mxu0 0.0
        %6863 = vmatpush.msra.mxu0 0.0
        %6864 = vmatpush.msra.mxu0 %v5977
        %6865 = vmatpush.msra.mxu0 %v5913
        %6866 = vmatmul.f32.gmra.mxu0 %v6008
        %v6867 = vpop.f32.mrf.mxu0
        %v6868 = vadd.f32 %v6004, %v6867
        %6869 = vdwg.mxu0
        %6870 = vmatpush.msra.mxu0 0.0
        %6871 = vmatpush.msra.mxu0 0.0
        %6872 = vmatpush.msra.mxu0 0.0
        %6873 = vmatpush.msra.mxu0 0.0
        %6874 = vmatpush.msra.mxu0 0.0
        %6875 = vmatpush.msra.mxu0 0.0
        %6876 = vmatpush.msra.mxu0 0.0
        %6877 = vmatpush.msra.mxu0 0.0
        %6878 = vmatpush.msra.mxu0 0.0
        %6879 = vmatpush.msra.mxu0 0.0
        %6880 = vmatpush.msra.mxu0 0.0
        %6881 = vmatpush.msra.mxu0 0.0
        %6882 = vmatpush.msra.mxu0 0.0
        %6883 = vmatpush.msra.mxu0 0.0
        %6884 = vmatpush.msra.mxu0 %v5978
        %6885 = vmatpush.msra.mxu0 %v5914
        %6886 = vmatmul.f32.gmra.mxu0 %v6008
        %v6887 = vpop.f32.mrf.mxu0
        %v6888 = vadd.f32 %v6004, %v6887
        %6889 = vdwg.mxu0
        %6890 = vmatpush.msra.mxu0 0.0
        %6891 = vmatpush.msra.mxu0 0.0
        %6892 = vmatpush.msra.mxu0 0.0
        %6893 = vmatpush.msra.mxu0 0.0
        %6894 = vmatpush.msra.mxu0 0.0
        %6895 = vmatpush.msra.mxu0 0.0
        %6896 = vmatpush.msra.mxu0 0.0
        %6897 = vmatpush.msra.mxu0 0.0
        %6898 = vmatpush.msra.mxu0 0.0
        %6899 = vmatpush.msra.mxu0 0.0
        %6900 = vmatpush.msra.mxu0 0.0
        %6901 = vmatpush.msra.mxu0 0.0
        %6902 = vmatpush.msra.mxu0 0.0
        %6903 = vmatpush.msra.mxu0 0.0
        %6904 = vmatpush.msra.mxu0 %v5979
        %6905 = vmatpush.msra.mxu0 %v5915
        %6906 = vmatmul.f32.gmra.mxu0 %v6008
        %v6907 = vpop.f32.mrf.mxu0
        %v6908 = vadd.f32 %v6004, %v6907
        %6909 = vdwg.mxu0
        %6910 = vmatpush.msra.mxu0 0.0
        %6911 = vmatpush.msra.mxu0 0.0
        %6912 = vmatpush.msra.mxu0 0.0
        %6913 = vmatpush.msra.mxu0 0.0
        %6914 = vmatpush.msra.mxu0 0.0
        %6915 = vmatpush.msra.mxu0 0.0
        %6916 = vmatpush.msra.mxu0 0.0
        %6917 = vmatpush.msra.mxu0 0.0
        %6918 = vmatpush.msra.mxu0 0.0
        %6919 = vmatpush.msra.mxu0 0.0
        %6920 = vmatpush.msra.mxu0 0.0
        %6921 = vmatpush.msra.mxu0 0.0
        %6922 = vmatpush.msra.mxu0 0.0
        %6923 = vmatpush.msra.mxu0 0.0
        %6924 = vmatpush.msra.mxu0 %v5980
        %6925 = vmatpush.msra.mxu0 %v5916
        %6926 = vmatmul.f32.gmra.mxu0 %v6008
        %v6927 = vpop.f32.mrf.mxu0
        %v6928 = vadd.f32 %v6004, %v6927
        %6929 = vdwg.mxu0
        %6930 = vmatpush.msra.mxu0 0.0
        %6931 = vmatpush.msra.mxu0 0.0
        %6932 = vmatpush.msra.mxu0 0.0
        %6933 = vmatpush.msra.mxu0 0.0
        %6934 = vmatpush.msra.mxu0 0.0
        %6935 = vmatpush.msra.mxu0 0.0
        %6936 = vmatpush.msra.mxu0 0.0
        %6937 = vmatpush.msra.mxu0 0.0
        %6938 = vmatpush.msra.mxu0 0.0
        %6939 = vmatpush.msra.mxu0 0.0
        %6940 = vmatpush.msra.mxu0 0.0
        %6941 = vmatpush.msra.mxu0 0.0
        %6942 = vmatpush.msra.mxu0 0.0
        %6943 = vmatpush.msra.mxu0 0.0
        %6944 = vmatpush.msra.mxu0 %v5981
        %6945 = vmatpush.msra.mxu0 %v5917
        %6946 = vmatmul.f32.gmra.mxu0 %v6008
        %v6947 = vpop.f32.mrf.mxu0
        %v6948 = vadd.f32 %v6004, %v6947
        %6949 = vdwg.mxu0
        %6950 = vmatpush.msra.mxu0 0.0
        %6951 = vmatpush.msra.mxu0 0.0
        %6952 = vmatpush.msra.mxu0 0.0
        %6953 = vmatpush.msra.mxu0 0.0
        %6954 = vmatpush.msra.mxu0 0.0
        %6955 = vmatpush.msra.mxu0 0.0
        %6956 = vmatpush.msra.mxu0 0.0
        %6957 = vmatpush.msra.mxu0 0.0
        %6958 = vmatpush.msra.mxu0 0.0
        %6959 = vmatpush.msra.mxu0 0.0
        %6960 = vmatpush.msra.mxu0 0.0
        %6961 = vmatpush.msra.mxu0 0.0
        %6962 = vmatpush.msra.mxu0 0.0
        %6963 = vmatpush.msra.mxu0 0.0
        %6964 = vmatpush.msra.mxu0 %v5982
        %6965 = vmatpush.msra.mxu0 %v5918
        %6966 = vmatmul.f32.gmra.mxu0 %v6008
        %v6967 = vpop.f32.mrf.mxu0
        %v6968 = vadd.f32 %v6004, %v6967
        %6969 = vdwg.mxu0
        %6970 = vmatpush.msra.mxu0 0.0
        %6971 = vmatpush.msra.mxu0 0.0
        %6972 = vmatpush.msra.mxu0 0.0
        %6973 = vmatpush.msra.mxu0 0.0
        %6974 = vmatpush.msra.mxu0 0.0
        %6975 = vmatpush.msra.mxu0 0.0
        %6976 = vmatpush.msra.mxu0 0.0
        %6977 = vmatpush.msra.mxu0 0.0
        %6978 = vmatpush.msra.mxu0 0.0
        %6979 = vmatpush.msra.mxu0 0.0
        %6980 = vmatpush.msra.mxu0 0.0
        %6981 = vmatpush.msra.mxu0 0.0
        %6982 = vmatpush.msra.mxu0 0.0
        %6983 = vmatpush.msra.mxu0 0.0
        %6984 = vmatpush.msra.mxu0 %v5983
        %6985 = vmatpush.msra.mxu0 %v5919
        %6986 = vmatmul.f32.gmra.mxu0 %v6008
        %v6987 = vpop.f32.mrf.mxu0
        %v6988 = vadd.f32 %v6004, %v6987
        %6989 = vdwg.mxu0
        %6990 = vmatpush.msra.mxu0 0.0
        %6991 = vmatpush.msra.mxu0 0.0
        %6992 = vmatpush.msra.mxu0 0.0
        %6993 = vmatpush.msra.mxu0 0.0
        %6994 = vmatpush.msra.mxu0 0.0
        %6995 = vmatpush.msra.mxu0 0.0
        %6996 = vmatpush.msra.mxu0 0.0
        %6997 = vmatpush.msra.mxu0 0.0
        %6998 = vmatpush.msra.mxu0 0.0
        %6999 = vmatpush.msra.mxu0 0.0
        %7000 = vmatpush.msra.mxu0 0.0
        %7001 = vmatpush.msra.mxu0 0.0
        %7002 = vmatpush.msra.mxu0 0.0
        %7003 = vmatpush.msra.mxu0 0.0
        %7004 = vmatpush.msra.mxu0 %v5984
        %7005 = vmatpush.msra.mxu0 %v5920
        %7006 = vmatmul.f32.gmra.mxu0 %v6008
        %v7007 = vpop.f32.mrf.mxu0
        %v7008 = vadd.f32 %v6004, %v7007
        %7009 = vdwg.mxu0
        %7010 = vmatpush.msra.mxu0 0.0
        %7011 = vmatpush.msra.mxu0 0.0
        %7012 = vmatpush.msra.mxu0 0.0
        %7013 = vmatpush.msra.mxu0 0.0
        %7014 = vmatpush.msra.mxu0 0.0
        %7015 = vmatpush.msra.mxu0 0.0
        %7016 = vmatpush.msra.mxu0 0.0
        %7017 = vmatpush.msra.mxu0 0.0
        %7018 = vmatpush.msra.mxu0 0.0
        %7019 = vmatpush.msra.mxu0 0.0
        %7020 = vmatpush.msra.mxu0 0.0
        %7021 = vmatpush.msra.mxu0 0.0
        %7022 = vmatpush.msra.mxu0 0.0
        %7023 = vmatpush.msra.mxu0 0.0
        %7024 = vmatpush.msra.mxu0 %v5985
        %7025 = vmatpush.msra.mxu0 %v5921
        %7026 = vmatmul.f32.gmra.mxu0 %v6008
        %v7027 = vpop.f32.mrf.mxu0
        %v7028 = vadd.f32 %v6004, %v7027
        %7029 = vdwg.mxu0
        %7030 = vmatpush.msra.mxu0 0.0
        %7031 = vmatpush.msra.mxu0 0.0
        %7032 = vmatpush.msra.mxu0 0.0
        %7033 = vmatpush.msra.mxu0 0.0
        %7034 = vmatpush.msra.mxu0 0.0
        %7035 = vmatpush.msra.mxu0 0.0
        %7036 = vmatpush.msra.mxu0 0.0
        %7037 = vmatpush.msra.mxu0 0.0
        %7038 = vmatpush.msra.mxu0 0.0
        %7039 = vmatpush.msra.mxu0 0.0
        %7040 = vmatpush.msra.mxu0 0.0
        %7041 = vmatpush.msra.mxu0 0.0
        %7042 = vmatpush.msra.mxu0 0.0
        %7043 = vmatpush.msra.mxu0 0.0
        %7044 = vmatpush.msra.mxu0 %v5986
        %7045 = vmatpush.msra.mxu0 %v5922
        %7046 = vmatmul.f32.gmra.mxu0 %v6008
        %v7047 = vpop.f32.mrf.mxu0
        %v7048 = vadd.f32 %v6004, %v7047
        %7049 = vdwg.mxu0
        %7050 = vmatpush.msra.mxu0 0.0
        %7051 = vmatpush.msra.mxu0 0.0
        %7052 = vmatpush.msra.mxu0 0.0
        %7053 = vmatpush.msra.mxu0 0.0
        %7054 = vmatpush.msra.mxu0 0.0
        %7055 = vmatpush.msra.mxu0 0.0
        %7056 = vmatpush.msra.mxu0 0.0
        %7057 = vmatpush.msra.mxu0 0.0
        %7058 = vmatpush.msra.mxu0 0.0
        %7059 = vmatpush.msra.mxu0 0.0
        %7060 = vmatpush.msra.mxu0 0.0
        %7061 = vmatpush.msra.mxu0 0.0
        %7062 = vmatpush.msra.mxu0 0.0
        %7063 = vmatpush.msra.mxu0 0.0
        %7064 = vmatpush.msra.mxu0 %v5987
        %7065 = vmatpush.msra.mxu0 %v5923
        %7066 = vmatmul.f32.gmra.mxu0 %v6008
        %v7067 = vpop.f32.mrf.mxu0
        %v7068 = vadd.f32 %v6004, %v7067
        %7069 = vdwg.mxu0
        %7070 = vmatpush.msra.mxu0 0.0
        %7071 = vmatpush.msra.mxu0 0.0
        %7072 = vmatpush.msra.mxu0 0.0
        %7073 = vmatpush.msra.mxu0 0.0
        %7074 = vmatpush.msra.mxu0 0.0
        %7075 = vmatpush.msra.mxu0 0.0
        %7076 = vmatpush.msra.mxu0 0.0
        %7077 = vmatpush.msra.mxu0 0.0
        %7078 = vmatpush.msra.mxu0 0.0
        %7079 = vmatpush.msra.mxu0 0.0
        %7080 = vmatpush.msra.mxu0 0.0
        %7081 = vmatpush.msra.mxu0 0.0
        %7082 = vmatpush.msra.mxu0 0.0
        %7083 = vmatpush.msra.mxu0 0.0
        %7084 = vmatpush.msra.mxu0 %v5988
        %7085 = vmatpush.msra.mxu0 %v5924
        %7086 = vmatmul.f32.gmra.mxu0 %v6008
        %v7087 = vpop.f32.mrf.mxu0
        %v7088 = vadd.f32 %v6004, %v7087
        %7089 = vdwg.mxu0
        %7090 = vmatpush.msra.mxu0 0.0
        %7091 = vmatpush.msra.mxu0 0.0
        %7092 = vmatpush.msra.mxu0 0.0
        %7093 = vmatpush.msra.mxu0 0.0
        %7094 = vmatpush.msra.mxu0 0.0
        %7095 = vmatpush.msra.mxu0 0.0
        %7096 = vmatpush.msra.mxu0 0.0
        %7097 = vmatpush.msra.mxu0 0.0
        %7098 = vmatpush.msra.mxu0 0.0
        %7099 = vmatpush.msra.mxu0 0.0
        %7100 = vmatpush.msra.mxu0 0.0
        %7101 = vmatpush.msra.mxu0 0.0
        %7102 = vmatpush.msra.mxu0 0.0
        %7103 = vmatpush.msra.mxu0 0.0
        %7104 = vmatpush.msra.mxu0 %v5989
        %7105 = vmatpush.msra.mxu0 %v5925
        %7106 = vmatmul.f32.gmra.mxu0 %v6008
        %v7107 = vpop.f32.mrf.mxu0
        %v7108 = vadd.f32 %v6004, %v7107
        %7109 = vdwg.mxu0
        %7110 = vmatpush.msra.mxu0 0.0
        %7111 = vmatpush.msra.mxu0 0.0
        %7112 = vmatpush.msra.mxu0 0.0
        %7113 = vmatpush.msra.mxu0 0.0
        %7114 = vmatpush.msra.mxu0 0.0
        %7115 = vmatpush.msra.mxu0 0.0
        %7116 = vmatpush.msra.mxu0 0.0
        %7117 = vmatpush.msra.mxu0 0.0
        %7118 = vmatpush.msra.mxu0 0.0
        %7119 = vmatpush.msra.mxu0 0.0
        %7120 = vmatpush.msra.mxu0 0.0
        %7121 = vmatpush.msra.mxu0 0.0
        %7122 = vmatpush.msra.mxu0 0.0
        %7123 = vmatpush.msra.mxu0 0.0
        %7124 = vmatpush.msra.mxu0 %v5990
        %7125 = vmatpush.msra.mxu0 %v5926
        %7126 = vmatmul.f32.gmra.mxu0 %v6008
        %v7127 = vpop.f32.mrf.mxu0
        %v7128 = vadd.f32 %v6004, %v7127
        %7129 = vdwg.mxu0
        %7130 = vmatpush.msra.mxu0 0.0
        %7131 = vmatpush.msra.mxu0 0.0
        %7132 = vmatpush.msra.mxu0 0.0
        %7133 = vmatpush.msra.mxu0 0.0
        %7134 = vmatpush.msra.mxu0 0.0
        %7135 = vmatpush.msra.mxu0 0.0
        %7136 = vmatpush.msra.mxu0 0.0
        %7137 = vmatpush.msra.mxu0 0.0
        %7138 = vmatpush.msra.mxu0 0.0
        %7139 = vmatpush.msra.mxu0 0.0
        %7140 = vmatpush.msra.mxu0 0.0
        %7141 = vmatpush.msra.mxu0 0.0
        %7142 = vmatpush.msra.mxu0 0.0
        %7143 = vmatpush.msra.mxu0 0.0
        %7144 = vmatpush.msra.mxu0 %v5991
        %7145 = vmatpush.msra.mxu0 %v5927
        %7146 = vmatmul.f32.gmra.mxu0 %v6008
        %v7147 = vpop.f32.mrf.mxu0
        %v7148 = vadd.f32 %v6004, %v7147
        %7149 = vdwg.mxu0
        %7150 = vmatpush.msra.mxu0 0.0
        %7151 = vmatpush.msra.mxu0 0.0
        %7152 = vmatpush.msra.mxu0 0.0
        %7153 = vmatpush.msra.mxu0 0.0
        %7154 = vmatpush.msra.mxu0 0.0
        %7155 = vmatpush.msra.mxu0 0.0
        %7156 = vmatpush.msra.mxu0 0.0
        %7157 = vmatpush.msra.mxu0 0.0
        %7158 = vmatpush.msra.mxu0 0.0
        %7159 = vmatpush.msra.mxu0 0.0
        %7160 = vmatpush.msra.mxu0 0.0
        %7161 = vmatpush.msra.mxu0 0.0
        %7162 = vmatpush.msra.mxu0 0.0
        %7163 = vmatpush.msra.mxu0 0.0
        %7164 = vmatpush.msra.mxu0 %v5992
        %7165 = vmatpush.msra.mxu0 %v5928
        %7166 = vmatmul.f32.gmra.mxu0 %v6008
        %v7167 = vpop.f32.mrf.mxu0
        %v7168 = vadd.f32 %v6004, %v7167
        %7169 = vdwg.mxu0
        %7170 = vmatpush.msra.mxu0 0.0
        %7171 = vmatpush.msra.mxu0 0.0
        %7172 = vmatpush.msra.mxu0 0.0
        %7173 = vmatpush.msra.mxu0 0.0
        %7174 = vmatpush.msra.mxu0 0.0
        %7175 = vmatpush.msra.mxu0 0.0
        %7176 = vmatpush.msra.mxu0 0.0
        %7177 = vmatpush.msra.mxu0 0.0
        %7178 = vmatpush.msra.mxu0 0.0
        %7179 = vmatpush.msra.mxu0 0.0
        %7180 = vmatpush.msra.mxu0 0.0
        %7181 = vmatpush.msra.mxu0 0.0
        %7182 = vmatpush.msra.mxu0 0.0
        %7183 = vmatpush.msra.mxu0 0.0
        %7184 = vmatpush.msra.mxu0 %v5993
        %7185 = vmatpush.msra.mxu0 %v5929
        %7186 = vmatmul.f32.gmra.mxu0 %v6008
        %v7187 = vpop.f32.mrf.mxu0
        %v7188 = vadd.f32 %v6004, %v7187
        %7189 = vdwg.mxu0
        %7190 = vmatpush.msra.mxu0 0.0
        %7191 = vmatpush.msra.mxu0 0.0
        %7192 = vmatpush.msra.mxu0 0.0
        %7193 = vmatpush.msra.mxu0 0.0
        %7194 = vmatpush.msra.mxu0 0.0
        %7195 = vmatpush.msra.mxu0 0.0
        %7196 = vmatpush.msra.mxu0 0.0
        %7197 = vmatpush.msra.mxu0 0.0
        %7198 = vmatpush.msra.mxu0 0.0
        %7199 = vmatpush.msra.mxu0 0.0
        %7200 = vmatpush.msra.mxu0 0.0
        %7201 = vmatpush.msra.mxu0 0.0
        %7202 = vmatpush.msra.mxu0 0.0
        %7203 = vmatpush.msra.mxu0 0.0
        %7204 = vmatpush.msra.mxu0 %v5994
        %7205 = vmatpush.msra.mxu0 %v5930
        %7206 = vmatmul.f32.gmra.mxu0 %v6008
        %v7207 = vpop.f32.mrf.mxu0
        %v7208 = vadd.f32 %v6004, %v7207
        %7209 = vdwg.mxu0
        %7210 = vmatpush.msra.mxu0 0.0
        %7211 = vmatpush.msra.mxu0 0.0
        %7212 = vmatpush.msra.mxu0 0.0
        %7213 = vmatpush.msra.mxu0 0.0
        %7214 = vmatpush.msra.mxu0 0.0
        %7215 = vmatpush.msra.mxu0 0.0
        %7216 = vmatpush.msra.mxu0 0.0
        %7217 = vmatpush.msra.mxu0 0.0
        %7218 = vmatpush.msra.mxu0 0.0
        %7219 = vmatpush.msra.mxu0 0.0
        %7220 = vmatpush.msra.mxu0 0.0
        %7221 = vmatpush.msra.mxu0 0.0
        %7222 = vmatpush.msra.mxu0 0.0
        %7223 = vmatpush.msra.mxu0 0.0
        %7224 = vmatpush.msra.mxu0 %v5995
        %7225 = vmatpush.msra.mxu0 %v5931
        %7226 = vmatmul.f32.gmra.mxu0 %v6008
        %v7227 = vpop.f32.mrf.mxu0
        %v7228 = vadd.f32 %v6004, %v7227
        %7229 = vdwg.mxu0
        %7230 = vmatpush.msra.mxu0 0.0
        %7231 = vmatpush.msra.mxu0 0.0
        %7232 = vmatpush.msra.mxu0 0.0
        %7233 = vmatpush.msra.mxu0 0.0
        %7234 = vmatpush.msra.mxu0 0.0
        %7235 = vmatpush.msra.mxu0 0.0
        %7236 = vmatpush.msra.mxu0 0.0
        %7237 = vmatpush.msra.mxu0 0.0
        %7238 = vmatpush.msra.mxu0 0.0
        %7239 = vmatpush.msra.mxu0 0.0
        %7240 = vmatpush.msra.mxu0 0.0
        %7241 = vmatpush.msra.mxu0 0.0
        %7242 = vmatpush.msra.mxu0 0.0
        %7243 = vmatpush.msra.mxu0 0.0
        %7244 = vmatpush.msra.mxu0 %v5996
        %7245 = vmatpush.msra.mxu0 %v5932
        %7246 = vmatmul.f32.gmra.mxu0 %v6008
        %v7247 = vpop.f32.mrf.mxu0
        %v7248 = vadd.f32 %v6004, %v7247
        %7249 = vdwg.mxu0
        %7250 = vmatpush.msra.mxu0 0.0
        %7251 = vmatpush.msra.mxu0 0.0
        %7252 = vmatpush.msra.mxu0 0.0
        %7253 = vmatpush.msra.mxu0 0.0
        %7254 = vmatpush.msra.mxu0 0.0
        %7255 = vmatpush.msra.mxu0 0.0
        %7256 = vmatpush.msra.mxu0 0.0
        %7257 = vmatpush.msra.mxu0 0.0
        %7258 = vmatpush.msra.mxu0 0.0
        %7259 = vmatpush.msra.mxu0 0.0
        %7260 = vmatpush.msra.mxu0 0.0
        %7261 = vmatpush.msra.mxu0 0.0
        %7262 = vmatpush.msra.mxu0 0.0
        %7263 = vmatpush.msra.mxu0 0.0
        %7264 = vmatpush.msra.mxu0 %v5997
        %7265 = vmatpush.msra.mxu0 %v5933
        %7266 = vmatmul.f32.gmra.mxu0 %v6008
        %v7267 = vpop.f32.mrf.mxu0
        %v7268 = vadd.f32 %v6004, %v7267
        %7269 = vdwg.mxu0
        %7270 = vmatpush.msra.mxu0 0.0
        %7271 = vmatpush.msra.mxu0 0.0
        %7272 = vmatpush.msra.mxu0 0.0
        %7273 = vmatpush.msra.mxu0 0.0
        %7274 = vmatpush.msra.mxu0 0.0
        %7275 = vmatpush.msra.mxu0 0.0
        %7276 = vmatpush.msra.mxu0 0.0
        %7277 = vmatpush.msra.mxu0 0.0
        %7278 = vmatpush.msra.mxu0 0.0
        %7279 = vmatpush.msra.mxu0 0.0
        %7280 = vmatpush.msra.mxu0 0.0
        %7281 = vmatpush.msra.mxu0 0.0
        %7282 = vmatpush.msra.mxu0 0.0
        %7283 = vmatpush.msra.mxu0 0.0
        %7284 = vmatpush.msra.mxu0 %v5998
        %7285 = vmatpush.msra.mxu0 %v5934
        %7286 = vmatmul.f32.gmra.mxu0 %v6008
        %v7287 = vpop.f32.mrf.mxu0
        %v7288 = vadd.f32 %v6004, %v7287
        %7289 = vdwg.mxu0
        %v7290 = vmax.f32 %v6028, 0.0
        %v7291 = vmax.f32 %v6048, 0.0
        %v7292 = vmax.f32 %v6068, 0.0
        %v7293 = vmax.f32 %v6088, 0.0
        %v7294 = vmax.f32 %v6108, 0.0
        %v7295 = vmax.f32 %v6128, 0.0
        %v7296 = vmax.f32 %v6148, 0.0
        %v7297 = vmax.f32 %v6168, 0.0
        %v7298 = vmax.f32 %v6188, 0.0
        %v7299 = vmax.f32 %v6208, 0.0
        %v7300 = vmax.f32 %v6228, 0.0
        %v7301 = vmax.f32 %v6248, 0.0
        %v7302 = vmax.f32 %v6268, 0.0
        %v7303 = vmax.f32 %v6288, 0.0
        %v7304 = vmax.f32 %v6308, 0.0
        %v7305 = vmax.f32 %v6328, 0.0
        %v7306 = vmax.f32 %v6348, 0.0
        %v7307 = vmax.f32 %v6368, 0.0
        %v7308 = vmax.f32 %v6388, 0.0
        %v7309 = vmax.f32 %v6408, 0.0
        %v7310 = vmax.f32 %v6428, 0.0
        %v7311 = vmax.f32 %v6448, 0.0
        %v7312 = vmax.f32 %v6468, 0.0
        %v7313 = vmax.f32 %v6488, 0.0
        %v7314 = vmax.f32 %v6508, 0.0
        %v7315 = vmax.f32 %v6528, 0.0
        %v7316 = vmax.f32 %v6548, 0.0
        %v7317 = vmax.f32 %v6568, 0.0
        %v7318 = vmax.f32 %v6588, 0.0
        %v7319 = vmax.f32 %v6608, 0.0
        %v7320 = vmax.f32 %v6628, 0.0
        %v7321 = vmax.f32 %v6648, 0.0
        %v7322 = vmax.f32 %v6668, 0.0
        %v7323 = vmax.f32 %v6688, 0.0
        %v7324 = vmax.f32 %v6708, 0.0
        %v7325 = vmax.f32 %v6728, 0.0
        %v7326 = vmax.f32 %v6748, 0.0
        %v7327 = vmax.f32 %v6768, 0.0
        %v7328 = vmax.f32 %v6788, 0.0
        %v7329 = vmax.f32 %v6808, 0.0
        %v7330 = vmax.f32 %v6828, 0.0
        %v7331 = vmax.f32 %v6848, 0.0
        %v7332 = vmax.f32 %v6868, 0.0
        %v7333 = vmax.f32 %v6888, 0.0
        %v7334 = vmax.f32 %v6908, 0.0
        %v7335 = vmax.f32 %v6928, 0.0
        %v7336 = vmax.f32 %v6948, 0.0
        %v7337 = vmax.f32 %v6968, 0.0
        %v7338 = vmax.f32 %v6988, 0.0
        %v7339 = vmax.f32 %v7008, 0.0
        %v7340 = vmax.f32 %v7028, 0.0
        %v7341 = vmax.f32 %v7048, 0.0
        %v7342 = vmax.f32 %v7068, 0.0
        %v7343 = vmax.f32 %v7088, 0.0
        %v7344 = vmax.f32 %v7108, 0.0
        %v7345 = vmax.f32 %v7128, 0.0
        %v7346 = vmax.f32 %v7148, 0.0
        %v7347 = vmax.f32 %v7168, 0.0
        %v7348 = vmax.f32 %v7188, 0.0
        %v7349 = vmax.f32 %v7208, 0.0
        %v7350 = vmax.f32 %v7228, 0.0
        %v7351 = vmax.f32 %v7248, 0.0
        %v7352 = vmax.f32 %v7268, 0.0
        %v7353 = vmax.f32 %v7288, 0.0
        %v7354 = vld [vmem:[%s5] sm:$0x1]
        %v7355 = vld [vmem:[#allocation2] sm:$0x1]
        %7357 = vset.pattern.permute.xlu0 0
        %7358 = vperm.xlu0 %7357, %v7355
        %v7359 = vpop.permute.xlu0 %7358
        %v7361 = vperm.slane %v7359, 0
        %vm7362 = vcmask 64512
        %v7364 = vsel %vm7362, %v7354, 0
        %7366 = vmatpush.msra.mxu0 0.0
        %7367 = vmatpush.msra.mxu0 0.0
        %7368 = vmatpush.msra.mxu0 0.0
        %7369 = vmatpush.msra.mxu0 0.0
        %7370 = vmatpush.msra.mxu0 0.0
        %7371 = vmatpush.msra.mxu0 0.0
        %7372 = vmatpush.msra.mxu0 0.0
        %7373 = vmatpush.msra.mxu0 0.0
        %7374 = vmatpush.msra.mxu0 0.0
        %7375 = vmatpush.msra.mxu0 0.0
        %7376 = vmatpush.msra.mxu0 0.0
        %7377 = vmatpush.msra.mxu0 0.0
        %7378 = vmatpush.msra.mxu0 0.0
        %7379 = vmatpush.msra.mxu0 0.0
        %7380 = vmatpush.msra.mxu0 0.0
        %7381 = vmatpush.msra.mxu0 %v7290
        %7382 = vmatmul.f32.gmra.mxu0 %v7364
        %v7383 = vpop.f32.mrf.mxu0
        %v7384 = vadd.f32 %v7361, %v7383
        %7385 = vdwg.mxu0
        %7386 = vmatpush.msra.mxu0 0.0
        %7387 = vmatpush.msra.mxu0 0.0
        %7388 = vmatpush.msra.mxu0 0.0
        %7389 = vmatpush.msra.mxu0 0.0
        %7390 = vmatpush.msra.mxu0 0.0
        %7391 = vmatpush.msra.mxu0 0.0
        %7392 = vmatpush.msra.mxu0 0.0
        %7393 = vmatpush.msra.mxu0 0.0
        %7394 = vmatpush.msra.mxu0 0.0
        %7395 = vmatpush.msra.mxu0 0.0
        %7396 = vmatpush.msra.mxu0 0.0
        %7397 = vmatpush.msra.mxu0 0.0
        %7398 = vmatpush.msra.mxu0 0.0
        %7399 = vmatpush.msra.mxu0 0.0
        %7400 = vmatpush.msra.mxu0 0.0
        %7401 = vmatpush.msra.mxu0 %v7291
        %7402 = vmatmul.f32.gmra.mxu0 %v7364
        %v7403 = vpop.f32.mrf.mxu0
        %v7404 = vadd.f32 %v7361, %v7403
        %7405 = vdwg.mxu0
        %7406 = vmatpush.msra.mxu0 0.0
        %7407 = vmatpush.msra.mxu0 0.0
        %7408 = vmatpush.msra.mxu0 0.0
        %7409 = vmatpush.msra.mxu0 0.0
        %7410 = vmatpush.msra.mxu0 0.0
        %7411 = vmatpush.msra.mxu0 0.0
        %7412 = vmatpush.msra.mxu0 0.0
        %7413 = vmatpush.msra.mxu0 0.0
        %7414 = vmatpush.msra.mxu0 0.0
        %7415 = vmatpush.msra.mxu0 0.0
        %7416 = vmatpush.msra.mxu0 0.0
        %7417 = vmatpush.msra.mxu0 0.0
        %7418 = vmatpush.msra.mxu0 0.0
        %7419 = vmatpush.msra.mxu0 0.0
        %7420 = vmatpush.msra.mxu0 0.0
        %7421 = vmatpush.msra.mxu0 %v7292
        %7422 = vmatmul.f32.gmra.mxu0 %v7364
        %v7423 = vpop.f32.mrf.mxu0
        %v7424 = vadd.f32 %v7361, %v7423
        %7425 = vdwg.mxu0
        %7426 = vmatpush.msra.mxu0 0.0
        %7427 = vmatpush.msra.mxu0 0.0
        %7428 = vmatpush.msra.mxu0 0.0
        %7429 = vmatpush.msra.mxu0 0.0
        %7430 = vmatpush.msra.mxu0 0.0
        %7431 = vmatpush.msra.mxu0 0.0
        %7432 = vmatpush.msra.mxu0 0.0
        %7433 = vmatpush.msra.mxu0 0.0
        %7434 = vmatpush.msra.mxu0 0.0
        %7435 = vmatpush.msra.mxu0 0.0
        %7436 = vmatpush.msra.mxu0 0.0
        %7437 = vmatpush.msra.mxu0 0.0
        %7438 = vmatpush.msra.mxu0 0.0
        %7439 = vmatpush.msra.mxu0 0.0
        %7440 = vmatpush.msra.mxu0 0.0
        %7441 = vmatpush.msra.mxu0 %v7293
        %7442 = vmatmul.f32.gmra.mxu0 %v7364
        %v7443 = vpop.f32.mrf.mxu0
        %v7444 = vadd.f32 %v7361, %v7443
        %7445 = vdwg.mxu0
        %7446 = vmatpush.msra.mxu0 0.0
        %7447 = vmatpush.msra.mxu0 0.0
        %7448 = vmatpush.msra.mxu0 0.0
        %7449 = vmatpush.msra.mxu0 0.0
        %7450 = vmatpush.msra.mxu0 0.0
        %7451 = vmatpush.msra.mxu0 0.0
        %7452 = vmatpush.msra.mxu0 0.0
        %7453 = vmatpush.msra.mxu0 0.0
        %7454 = vmatpush.msra.mxu0 0.0
        %7455 = vmatpush.msra.mxu0 0.0
        %7456 = vmatpush.msra.mxu0 0.0
        %7457 = vmatpush.msra.mxu0 0.0
        %7458 = vmatpush.msra.mxu0 0.0
        %7459 = vmatpush.msra.mxu0 0.0
        %7460 = vmatpush.msra.mxu0 0.0
        %7461 = vmatpush.msra.mxu0 %v7294
        %7462 = vmatmul.f32.gmra.mxu0 %v7364
        %v7463 = vpop.f32.mrf.mxu0
        %v7464 = vadd.f32 %v7361, %v7463
        %7465 = vdwg.mxu0
        %7466 = vmatpush.msra.mxu0 0.0
        %7467 = vmatpush.msra.mxu0 0.0
        %7468 = vmatpush.msra.mxu0 0.0
        %7469 = vmatpush.msra.mxu0 0.0
        %7470 = vmatpush.msra.mxu0 0.0
        %7471 = vmatpush.msra.mxu0 0.0
        %7472 = vmatpush.msra.mxu0 0.0
        %7473 = vmatpush.msra.mxu0 0.0
        %7474 = vmatpush.msra.mxu0 0.0
        %7475 = vmatpush.msra.mxu0 0.0
        %7476 = vmatpush.msra.mxu0 0.0
        %7477 = vmatpush.msra.mxu0 0.0
        %7478 = vmatpush.msra.mxu0 0.0
        %7479 = vmatpush.msra.mxu0 0.0
        %7480 = vmatpush.msra.mxu0 0.0
        %7481 = vmatpush.msra.mxu0 %v7295
        %7482 = vmatmul.f32.gmra.mxu0 %v7364
        %v7483 = vpop.f32.mrf.mxu0
        %v7484 = vadd.f32 %v7361, %v7483
        %7485 = vdwg.mxu0
        %7486 = vmatpush.msra.mxu0 0.0
        %7487 = vmatpush.msra.mxu0 0.0
        %7488 = vmatpush.msra.mxu0 0.0
        %7489 = vmatpush.msra.mxu0 0.0
        %7490 = vmatpush.msra.mxu0 0.0
        %7491 = vmatpush.msra.mxu0 0.0
        %7492 = vmatpush.msra.mxu0 0.0
        %7493 = vmatpush.msra.mxu0 0.0
        %7494 = vmatpush.msra.mxu0 0.0
        %7495 = vmatpush.msra.mxu0 0.0
        %7496 = vmatpush.msra.mxu0 0.0
        %7497 = vmatpush.msra.mxu0 0.0
        %7498 = vmatpush.msra.mxu0 0.0
        %7499 = vmatpush.msra.mxu0 0.0
        %7500 = vmatpush.msra.mxu0 0.0
        %7501 = vmatpush.msra.mxu0 %v7296
        %7502 = vmatmul.f32.gmra.mxu0 %v7364
        %v7503 = vpop.f32.mrf.mxu0
        %v7504 = vadd.f32 %v7361, %v7503
        %7505 = vdwg.mxu0
        %7506 = vmatpush.msra.mxu0 0.0
        %7507 = vmatpush.msra.mxu0 0.0
        %7508 = vmatpush.msra.mxu0 0.0
        %7509 = vmatpush.msra.mxu0 0.0
        %7510 = vmatpush.msra.mxu0 0.0
        %7511 = vmatpush.msra.mxu0 0.0
        %7512 = vmatpush.msra.mxu0 0.0
        %7513 = vmatpush.msra.mxu0 0.0
        %7514 = vmatpush.msra.mxu0 0.0
        %7515 = vmatpush.msra.mxu0 0.0
        %7516 = vmatpush.msra.mxu0 0.0
        %7517 = vmatpush.msra.mxu0 0.0
        %7518 = vmatpush.msra.mxu0 0.0
        %7519 = vmatpush.msra.mxu0 0.0
        %7520 = vmatpush.msra.mxu0 0.0
        %7521 = vmatpush.msra.mxu0 %v7297
        %7522 = vmatmul.f32.gmra.mxu0 %v7364
        %v7523 = vpop.f32.mrf.mxu0
        %v7524 = vadd.f32 %v7361, %v7523
        %7525 = vdwg.mxu0
        %7526 = vmatpush.msra.mxu0 0.0
        %7527 = vmatpush.msra.mxu0 0.0
        %7528 = vmatpush.msra.mxu0 0.0
        %7529 = vmatpush.msra.mxu0 0.0
        %7530 = vmatpush.msra.mxu0 0.0
        %7531 = vmatpush.msra.mxu0 0.0
        %7532 = vmatpush.msra.mxu0 0.0
        %7533 = vmatpush.msra.mxu0 0.0
        %7534 = vmatpush.msra.mxu0 0.0
        %7535 = vmatpush.msra.mxu0 0.0
        %7536 = vmatpush.msra.mxu0 0.0
        %7537 = vmatpush.msra.mxu0 0.0
        %7538 = vmatpush.msra.mxu0 0.0
        %7539 = vmatpush.msra.mxu0 0.0
        %7540 = vmatpush.msra.mxu0 0.0
        %7541 = vmatpush.msra.mxu0 %v7298
        %7542 = vmatmul.f32.gmra.mxu0 %v7364
        %v7543 = vpop.f32.mrf.mxu0
        %v7544 = vadd.f32 %v7361, %v7543
        %7545 = vdwg.mxu0
        %7546 = vmatpush.msra.mxu0 0.0
        %7547 = vmatpush.msra.mxu0 0.0
        %7548 = vmatpush.msra.mxu0 0.0
        %7549 = vmatpush.msra.mxu0 0.0
        %7550 = vmatpush.msra.mxu0 0.0
        %7551 = vmatpush.msra.mxu0 0.0
        %7552 = vmatpush.msra.mxu0 0.0
        %7553 = vmatpush.msra.mxu0 0.0
        %7554 = vmatpush.msra.mxu0 0.0
        %7555 = vmatpush.msra.mxu0 0.0
        %7556 = vmatpush.msra.mxu0 0.0
        %7557 = vmatpush.msra.mxu0 0.0
        %7558 = vmatpush.msra.mxu0 0.0
        %7559 = vmatpush.msra.mxu0 0.0
        %7560 = vmatpush.msra.mxu0 0.0
        %7561 = vmatpush.msra.mxu0 %v7299
        %7562 = vmatmul.f32.gmra.mxu0 %v7364
        %v7563 = vpop.f32.mrf.mxu0
        %v7564 = vadd.f32 %v7361, %v7563
        %7565 = vdwg.mxu0
        %7566 = vmatpush.msra.mxu0 0.0
        %7567 = vmatpush.msra.mxu0 0.0
        %7568 = vmatpush.msra.mxu0 0.0
        %7569 = vmatpush.msra.mxu0 0.0
        %7570 = vmatpush.msra.mxu0 0.0
        %7571 = vmatpush.msra.mxu0 0.0
        %7572 = vmatpush.msra.mxu0 0.0
        %7573 = vmatpush.msra.mxu0 0.0
        %7574 = vmatpush.msra.mxu0 0.0
        %7575 = vmatpush.msra.mxu0 0.0
        %7576 = vmatpush.msra.mxu0 0.0
        %7577 = vmatpush.msra.mxu0 0.0
        %7578 = vmatpush.msra.mxu0 0.0
        %7579 = vmatpush.msra.mxu0 0.0
        %7580 = vmatpush.msra.mxu0 0.0
        %7581 = vmatpush.msra.mxu0 %v7300
        %7582 = vmatmul.f32.gmra.mxu0 %v7364
        %v7583 = vpop.f32.mrf.mxu0
        %v7584 = vadd.f32 %v7361, %v7583
        %7585 = vdwg.mxu0
        %7586 = vmatpush.msra.mxu0 0.0
        %7587 = vmatpush.msra.mxu0 0.0
        %7588 = vmatpush.msra.mxu0 0.0
        %7589 = vmatpush.msra.mxu0 0.0
        %7590 = vmatpush.msra.mxu0 0.0
        %7591 = vmatpush.msra.mxu0 0.0
        %7592 = vmatpush.msra.mxu0 0.0
        %7593 = vmatpush.msra.mxu0 0.0
        %7594 = vmatpush.msra.mxu0 0.0
        %7595 = vmatpush.msra.mxu0 0.0
        %7596 = vmatpush.msra.mxu0 0.0
        %7597 = vmatpush.msra.mxu0 0.0
        %7598 = vmatpush.msra.mxu0 0.0
        %7599 = vmatpush.msra.mxu0 0.0
        %7600 = vmatpush.msra.mxu0 0.0
        %7601 = vmatpush.msra.mxu0 %v7301
        %7602 = vmatmul.f32.gmra.mxu0 %v7364
        %v7603 = vpop.f32.mrf.mxu0
        %v7604 = vadd.f32 %v7361, %v7603
        %7605 = vdwg.mxu0
        %7606 = vmatpush.msra.mxu0 0.0
        %7607 = vmatpush.msra.mxu0 0.0
        %7608 = vmatpush.msra.mxu0 0.0
        %7609 = vmatpush.msra.mxu0 0.0
        %7610 = vmatpush.msra.mxu0 0.0
        %7611 = vmatpush.msra.mxu0 0.0
        %7612 = vmatpush.msra.mxu0 0.0
        %7613 = vmatpush.msra.mxu0 0.0
        %7614 = vmatpush.msra.mxu0 0.0
        %7615 = vmatpush.msra.mxu0 0.0
        %7616 = vmatpush.msra.mxu0 0.0
        %7617 = vmatpush.msra.mxu0 0.0
        %7618 = vmatpush.msra.mxu0 0.0
        %7619 = vmatpush.msra.mxu0 0.0
        %7620 = vmatpush.msra.mxu0 0.0
        %7621 = vmatpush.msra.mxu0 %v7302
        %7622 = vmatmul.f32.gmra.mxu0 %v7364
        %v7623 = vpop.f32.mrf.mxu0
        %v7624 = vadd.f32 %v7361, %v7623
        %7625 = vdwg.mxu0
        %7626 = vmatpush.msra.mxu0 0.0
        %7627 = vmatpush.msra.mxu0 0.0
        %7628 = vmatpush.msra.mxu0 0.0
        %7629 = vmatpush.msra.mxu0 0.0
        %7630 = vmatpush.msra.mxu0 0.0
        %7631 = vmatpush.msra.mxu0 0.0
        %7632 = vmatpush.msra.mxu0 0.0
        %7633 = vmatpush.msra.mxu0 0.0
        %7634 = vmatpush.msra.mxu0 0.0
        %7635 = vmatpush.msra.mxu0 0.0
        %7636 = vmatpush.msra.mxu0 0.0
        %7637 = vmatpush.msra.mxu0 0.0
        %7638 = vmatpush.msra.mxu0 0.0
        %7639 = vmatpush.msra.mxu0 0.0
        %7640 = vmatpush.msra.mxu0 0.0
        %7641 = vmatpush.msra.mxu0 %v7303
        %7642 = vmatmul.f32.gmra.mxu0 %v7364
        %v7643 = vpop.f32.mrf.mxu0
        %v7644 = vadd.f32 %v7361, %v7643
        %7645 = vdwg.mxu0
        %7646 = vmatpush.msra.mxu0 0.0
        %7647 = vmatpush.msra.mxu0 0.0
        %7648 = vmatpush.msra.mxu0 0.0
        %7649 = vmatpush.msra.mxu0 0.0
        %7650 = vmatpush.msra.mxu0 0.0
        %7651 = vmatpush.msra.mxu0 0.0
        %7652 = vmatpush.msra.mxu0 0.0
        %7653 = vmatpush.msra.mxu0 0.0
        %7654 = vmatpush.msra.mxu0 0.0
        %7655 = vmatpush.msra.mxu0 0.0
        %7656 = vmatpush.msra.mxu0 0.0
        %7657 = vmatpush.msra.mxu0 0.0
        %7658 = vmatpush.msra.mxu0 0.0
        %7659 = vmatpush.msra.mxu0 0.0
        %7660 = vmatpush.msra.mxu0 0.0
        %7661 = vmatpush.msra.mxu0 %v7304
        %7662 = vmatmul.f32.gmra.mxu0 %v7364
        %v7663 = vpop.f32.mrf.mxu0
        %v7664 = vadd.f32 %v7361, %v7663
        %7665 = vdwg.mxu0
        %7666 = vmatpush.msra.mxu0 0.0
        %7667 = vmatpush.msra.mxu0 0.0
        %7668 = vmatpush.msra.mxu0 0.0
        %7669 = vmatpush.msra.mxu0 0.0
        %7670 = vmatpush.msra.mxu0 0.0
        %7671 = vmatpush.msra.mxu0 0.0
        %7672 = vmatpush.msra.mxu0 0.0
        %7673 = vmatpush.msra.mxu0 0.0
        %7674 = vmatpush.msra.mxu0 0.0
        %7675 = vmatpush.msra.mxu0 0.0
        %7676 = vmatpush.msra.mxu0 0.0
        %7677 = vmatpush.msra.mxu0 0.0
        %7678 = vmatpush.msra.mxu0 0.0
        %7679 = vmatpush.msra.mxu0 0.0
        %7680 = vmatpush.msra.mxu0 0.0
        %7681 = vmatpush.msra.mxu0 %v7305
        %7682 = vmatmul.f32.gmra.mxu0 %v7364
        %v7683 = vpop.f32.mrf.mxu0
        %v7684 = vadd.f32 %v7361, %v7683
        %7685 = vdwg.mxu0
        %7686 = vmatpush.msra.mxu0 0.0
        %7687 = vmatpush.msra.mxu0 0.0
        %7688 = vmatpush.msra.mxu0 0.0
        %7689 = vmatpush.msra.mxu0 0.0
        %7690 = vmatpush.msra.mxu0 0.0
        %7691 = vmatpush.msra.mxu0 0.0
        %7692 = vmatpush.msra.mxu0 0.0
        %7693 = vmatpush.msra.mxu0 0.0
        %7694 = vmatpush.msra.mxu0 0.0
        %7695 = vmatpush.msra.mxu0 0.0
        %7696 = vmatpush.msra.mxu0 0.0
        %7697 = vmatpush.msra.mxu0 0.0
        %7698 = vmatpush.msra.mxu0 0.0
        %7699 = vmatpush.msra.mxu0 0.0
        %7700 = vmatpush.msra.mxu0 0.0
        %7701 = vmatpush.msra.mxu0 %v7306
        %7702 = vmatmul.f32.gmra.mxu0 %v7364
        %v7703 = vpop.f32.mrf.mxu0
        %v7704 = vadd.f32 %v7361, %v7703
        %7705 = vdwg.mxu0
        %7706 = vmatpush.msra.mxu0 0.0
        %7707 = vmatpush.msra.mxu0 0.0
        %7708 = vmatpush.msra.mxu0 0.0
        %7709 = vmatpush.msra.mxu0 0.0
        %7710 = vmatpush.msra.mxu0 0.0
        %7711 = vmatpush.msra.mxu0 0.0
        %7712 = vmatpush.msra.mxu0 0.0
        %7713 = vmatpush.msra.mxu0 0.0
        %7714 = vmatpush.msra.mxu0 0.0
        %7715 = vmatpush.msra.mxu0 0.0
        %7716 = vmatpush.msra.mxu0 0.0
        %7717 = vmatpush.msra.mxu0 0.0
        %7718 = vmatpush.msra.mxu0 0.0
        %7719 = vmatpush.msra.mxu0 0.0
        %7720 = vmatpush.msra.mxu0 0.0
        %7721 = vmatpush.msra.mxu0 %v7307
        %7722 = vmatmul.f32.gmra.mxu0 %v7364
        %v7723 = vpop.f32.mrf.mxu0
        %v7724 = vadd.f32 %v7361, %v7723
        %7725 = vdwg.mxu0
        %7726 = vmatpush.msra.mxu0 0.0
        %7727 = vmatpush.msra.mxu0 0.0
        %7728 = vmatpush.msra.mxu0 0.0
        %7729 = vmatpush.msra.mxu0 0.0
        %7730 = vmatpush.msra.mxu0 0.0
        %7731 = vmatpush.msra.mxu0 0.0
        %7732 = vmatpush.msra.mxu0 0.0
        %7733 = vmatpush.msra.mxu0 0.0
        %7734 = vmatpush.msra.mxu0 0.0
        %7735 = vmatpush.msra.mxu0 0.0
        %7736 = vmatpush.msra.mxu0 0.0
        %7737 = vmatpush.msra.mxu0 0.0
        %7738 = vmatpush.msra.mxu0 0.0
        %7739 = vmatpush.msra.mxu0 0.0
        %7740 = vmatpush.msra.mxu0 0.0
        %7741 = vmatpush.msra.mxu0 %v7308
        %7742 = vmatmul.f32.gmra.mxu0 %v7364
        %v7743 = vpop.f32.mrf.mxu0
        %v7744 = vadd.f32 %v7361, %v7743
        %7745 = vdwg.mxu0
        %7746 = vmatpush.msra.mxu0 0.0
        %7747 = vmatpush.msra.mxu0 0.0
        %7748 = vmatpush.msra.mxu0 0.0
        %7749 = vmatpush.msra.mxu0 0.0
        %7750 = vmatpush.msra.mxu0 0.0
        %7751 = vmatpush.msra.mxu0 0.0
        %7752 = vmatpush.msra.mxu0 0.0
        %7753 = vmatpush.msra.mxu0 0.0
        %7754 = vmatpush.msra.mxu0 0.0
        %7755 = vmatpush.msra.mxu0 0.0
        %7756 = vmatpush.msra.mxu0 0.0
        %7757 = vmatpush.msra.mxu0 0.0
        %7758 = vmatpush.msra.mxu0 0.0
        %7759 = vmatpush.msra.mxu0 0.0
        %7760 = vmatpush.msra.mxu0 0.0
        %7761 = vmatpush.msra.mxu0 %v7309
        %7762 = vmatmul.f32.gmra.mxu0 %v7364
        %v7763 = vpop.f32.mrf.mxu0
        %v7764 = vadd.f32 %v7361, %v7763
        %7765 = vdwg.mxu0
        %7766 = vmatpush.msra.mxu0 0.0
        %7767 = vmatpush.msra.mxu0 0.0
        %7768 = vmatpush.msra.mxu0 0.0
        %7769 = vmatpush.msra.mxu0 0.0
        %7770 = vmatpush.msra.mxu0 0.0
        %7771 = vmatpush.msra.mxu0 0.0
        %7772 = vmatpush.msra.mxu0 0.0
        %7773 = vmatpush.msra.mxu0 0.0
        %7774 = vmatpush.msra.mxu0 0.0
        %7775 = vmatpush.msra.mxu0 0.0
        %7776 = vmatpush.msra.mxu0 0.0
        %7777 = vmatpush.msra.mxu0 0.0
        %7778 = vmatpush.msra.mxu0 0.0
        %7779 = vmatpush.msra.mxu0 0.0
        %7780 = vmatpush.msra.mxu0 0.0
        %7781 = vmatpush.msra.mxu0 %v7310
        %7782 = vmatmul.f32.gmra.mxu0 %v7364
        %v7783 = vpop.f32.mrf.mxu0
        %v7784 = vadd.f32 %v7361, %v7783
        %7785 = vdwg.mxu0
        %7786 = vmatpush.msra.mxu0 0.0
        %7787 = vmatpush.msra.mxu0 0.0
        %7788 = vmatpush.msra.mxu0 0.0
        %7789 = vmatpush.msra.mxu0 0.0
        %7790 = vmatpush.msra.mxu0 0.0
        %7791 = vmatpush.msra.mxu0 0.0
        %7792 = vmatpush.msra.mxu0 0.0
        %7793 = vmatpush.msra.mxu0 0.0
        %7794 = vmatpush.msra.mxu0 0.0
        %7795 = vmatpush.msra.mxu0 0.0
        %7796 = vmatpush.msra.mxu0 0.0
        %7797 = vmatpush.msra.mxu0 0.0
        %7798 = vmatpush.msra.mxu0 0.0
        %7799 = vmatpush.msra.mxu0 0.0
        %7800 = vmatpush.msra.mxu0 0.0
        %7801 = vmatpush.msra.mxu0 %v7311
        %7802 = vmatmul.f32.gmra.mxu0 %v7364
        %v7803 = vpop.f32.mrf.mxu0
        %v7804 = vadd.f32 %v7361, %v7803
        %7805 = vdwg.mxu0
        %7806 = vmatpush.msra.mxu0 0.0
        %7807 = vmatpush.msra.mxu0 0.0
        %7808 = vmatpush.msra.mxu0 0.0
        %7809 = vmatpush.msra.mxu0 0.0
        %7810 = vmatpush.msra.mxu0 0.0
        %7811 = vmatpush.msra.mxu0 0.0
        %7812 = vmatpush.msra.mxu0 0.0
        %7813 = vmatpush.msra.mxu0 0.0
        %7814 = vmatpush.msra.mxu0 0.0
        %7815 = vmatpush.msra.mxu0 0.0
        %7816 = vmatpush.msra.mxu0 0.0
        %7817 = vmatpush.msra.mxu0 0.0
        %7818 = vmatpush.msra.mxu0 0.0
        %7819 = vmatpush.msra.mxu0 0.0
        %7820 = vmatpush.msra.mxu0 0.0
        %7821 = vmatpush.msra.mxu0 %v7312
        %7822 = vmatmul.f32.gmra.mxu0 %v7364
        %v7823 = vpop.f32.mrf.mxu0
        %v7824 = vadd.f32 %v7361, %v7823
        %7825 = vdwg.mxu0
        %7826 = vmatpush.msra.mxu0 0.0
        %7827 = vmatpush.msra.mxu0 0.0
        %7828 = vmatpush.msra.mxu0 0.0
        %7829 = vmatpush.msra.mxu0 0.0
        %7830 = vmatpush.msra.mxu0 0.0
        %7831 = vmatpush.msra.mxu0 0.0
        %7832 = vmatpush.msra.mxu0 0.0
        %7833 = vmatpush.msra.mxu0 0.0
        %7834 = vmatpush.msra.mxu0 0.0
        %7835 = vmatpush.msra.mxu0 0.0
        %7836 = vmatpush.msra.mxu0 0.0
        %7837 = vmatpush.msra.mxu0 0.0
        %7838 = vmatpush.msra.mxu0 0.0
        %7839 = vmatpush.msra.mxu0 0.0
        %7840 = vmatpush.msra.mxu0 0.0
        %7841 = vmatpush.msra.mxu0 %v7313
        %7842 = vmatmul.f32.gmra.mxu0 %v7364
        %v7843 = vpop.f32.mrf.mxu0
        %v7844 = vadd.f32 %v7361, %v7843
        %7845 = vdwg.mxu0
        %7846 = vmatpush.msra.mxu0 0.0
        %7847 = vmatpush.msra.mxu0 0.0
        %7848 = vmatpush.msra.mxu0 0.0
        %7849 = vmatpush.msra.mxu0 0.0
        %7850 = vmatpush.msra.mxu0 0.0
        %7851 = vmatpush.msra.mxu0 0.0
        %7852 = vmatpush.msra.mxu0 0.0
        %7853 = vmatpush.msra.mxu0 0.0
        %7854 = vmatpush.msra.mxu0 0.0
        %7855 = vmatpush.msra.mxu0 0.0
        %7856 = vmatpush.msra.mxu0 0.0
        %7857 = vmatpush.msra.mxu0 0.0
        %7858 = vmatpush.msra.mxu0 0.0
        %7859 = vmatpush.msra.mxu0 0.0
        %7860 = vmatpush.msra.mxu0 0.0
        %7861 = vmatpush.msra.mxu0 %v7314
        %7862 = vmatmul.f32.gmra.mxu0 %v7364
        %v7863 = vpop.f32.mrf.mxu0
        %v7864 = vadd.f32 %v7361, %v7863
        %7865 = vdwg.mxu0
        %7866 = vmatpush.msra.mxu0 0.0
        %7867 = vmatpush.msra.mxu0 0.0
        %7868 = vmatpush.msra.mxu0 0.0
        %7869 = vmatpush.msra.mxu0 0.0
        %7870 = vmatpush.msra.mxu0 0.0
        %7871 = vmatpush.msra.mxu0 0.0
        %7872 = vmatpush.msra.mxu0 0.0
        %7873 = vmatpush.msra.mxu0 0.0
        %7874 = vmatpush.msra.mxu0 0.0
        %7875 = vmatpush.msra.mxu0 0.0
        %7876 = vmatpush.msra.mxu0 0.0
        %7877 = vmatpush.msra.mxu0 0.0
        %7878 = vmatpush.msra.mxu0 0.0
        %7879 = vmatpush.msra.mxu0 0.0
        %7880 = vmatpush.msra.mxu0 0.0
        %7881 = vmatpush.msra.mxu0 %v7315
        %7882 = vmatmul.f32.gmra.mxu0 %v7364
        %v7883 = vpop.f32.mrf.mxu0
        %v7884 = vadd.f32 %v7361, %v7883
        %7885 = vdwg.mxu0
        %7886 = vmatpush.msra.mxu0 0.0
        %7887 = vmatpush.msra.mxu0 0.0
        %7888 = vmatpush.msra.mxu0 0.0
        %7889 = vmatpush.msra.mxu0 0.0
        %7890 = vmatpush.msra.mxu0 0.0
        %7891 = vmatpush.msra.mxu0 0.0
        %7892 = vmatpush.msra.mxu0 0.0
        %7893 = vmatpush.msra.mxu0 0.0
        %7894 = vmatpush.msra.mxu0 0.0
        %7895 = vmatpush.msra.mxu0 0.0
        %7896 = vmatpush.msra.mxu0 0.0
        %7897 = vmatpush.msra.mxu0 0.0
        %7898 = vmatpush.msra.mxu0 0.0
        %7899 = vmatpush.msra.mxu0 0.0
        %7900 = vmatpush.msra.mxu0 0.0
        %7901 = vmatpush.msra.mxu0 %v7316
        %7902 = vmatmul.f32.gmra.mxu0 %v7364
        %v7903 = vpop.f32.mrf.mxu0
        %v7904 = vadd.f32 %v7361, %v7903
        %7905 = vdwg.mxu0
        %7906 = vmatpush.msra.mxu0 0.0
        %7907 = vmatpush.msra.mxu0 0.0
        %7908 = vmatpush.msra.mxu0 0.0
        %7909 = vmatpush.msra.mxu0 0.0
        %7910 = vmatpush.msra.mxu0 0.0
        %7911 = vmatpush.msra.mxu0 0.0
        %7912 = vmatpush.msra.mxu0 0.0
        %7913 = vmatpush.msra.mxu0 0.0
        %7914 = vmatpush.msra.mxu0 0.0
        %7915 = vmatpush.msra.mxu0 0.0
        %7916 = vmatpush.msra.mxu0 0.0
        %7917 = vmatpush.msra.mxu0 0.0
        %7918 = vmatpush.msra.mxu0 0.0
        %7919 = vmatpush.msra.mxu0 0.0
        %7920 = vmatpush.msra.mxu0 0.0
        %7921 = vmatpush.msra.mxu0 %v7317
        %7922 = vmatmul.f32.gmra.mxu0 %v7364
        %v7923 = vpop.f32.mrf.mxu0
        %v7924 = vadd.f32 %v7361, %v7923
        %7925 = vdwg.mxu0
        %7926 = vmatpush.msra.mxu0 0.0
        %7927 = vmatpush.msra.mxu0 0.0
        %7928 = vmatpush.msra.mxu0 0.0
        %7929 = vmatpush.msra.mxu0 0.0
        %7930 = vmatpush.msra.mxu0 0.0
        %7931 = vmatpush.msra.mxu0 0.0
        %7932 = vmatpush.msra.mxu0 0.0
        %7933 = vmatpush.msra.mxu0 0.0
        %7934 = vmatpush.msra.mxu0 0.0
        %7935 = vmatpush.msra.mxu0 0.0
        %7936 = vmatpush.msra.mxu0 0.0
        %7937 = vmatpush.msra.mxu0 0.0
        %7938 = vmatpush.msra.mxu0 0.0
        %7939 = vmatpush.msra.mxu0 0.0
        %7940 = vmatpush.msra.mxu0 0.0
        %7941 = vmatpush.msra.mxu0 %v7318
        %7942 = vmatmul.f32.gmra.mxu0 %v7364
        %v7943 = vpop.f32.mrf.mxu0
        %v7944 = vadd.f32 %v7361, %v7943
        %7945 = vdwg.mxu0
        %7946 = vmatpush.msra.mxu0 0.0
        %7947 = vmatpush.msra.mxu0 0.0
        %7948 = vmatpush.msra.mxu0 0.0
        %7949 = vmatpush.msra.mxu0 0.0
        %7950 = vmatpush.msra.mxu0 0.0
        %7951 = vmatpush.msra.mxu0 0.0
        %7952 = vmatpush.msra.mxu0 0.0
        %7953 = vmatpush.msra.mxu0 0.0
        %7954 = vmatpush.msra.mxu0 0.0
        %7955 = vmatpush.msra.mxu0 0.0
        %7956 = vmatpush.msra.mxu0 0.0
        %7957 = vmatpush.msra.mxu0 0.0
        %7958 = vmatpush.msra.mxu0 0.0
        %7959 = vmatpush.msra.mxu0 0.0
        %7960 = vmatpush.msra.mxu0 0.0
        %7961 = vmatpush.msra.mxu0 %v7319
        %7962 = vmatmul.f32.gmra.mxu0 %v7364
        %v7963 = vpop.f32.mrf.mxu0
        %v7964 = vadd.f32 %v7361, %v7963
        %7965 = vdwg.mxu0
        %7966 = vmatpush.msra.mxu0 0.0
        %7967 = vmatpush.msra.mxu0 0.0
        %7968 = vmatpush.msra.mxu0 0.0
        %7969 = vmatpush.msra.mxu0 0.0
        %7970 = vmatpush.msra.mxu0 0.0
        %7971 = vmatpush.msra.mxu0 0.0
        %7972 = vmatpush.msra.mxu0 0.0
        %7973 = vmatpush.msra.mxu0 0.0
        %7974 = vmatpush.msra.mxu0 0.0
        %7975 = vmatpush.msra.mxu0 0.0
        %7976 = vmatpush.msra.mxu0 0.0
        %7977 = vmatpush.msra.mxu0 0.0
        %7978 = vmatpush.msra.mxu0 0.0
        %7979 = vmatpush.msra.mxu0 0.0
        %7980 = vmatpush.msra.mxu0 0.0
        %7981 = vmatpush.msra.mxu0 %v7320
        %7982 = vmatmul.f32.gmra.mxu0 %v7364
        %v7983 = vpop.f32.mrf.mxu0
        %v7984 = vadd.f32 %v7361, %v7983
        %7985 = vdwg.mxu0
        %7986 = vmatpush.msra.mxu0 0.0
        %7987 = vmatpush.msra.mxu0 0.0
        %7988 = vmatpush.msra.mxu0 0.0
        %7989 = vmatpush.msra.mxu0 0.0
        %7990 = vmatpush.msra.mxu0 0.0
        %7991 = vmatpush.msra.mxu0 0.0
        %7992 = vmatpush.msra.mxu0 0.0
        %7993 = vmatpush.msra.mxu0 0.0
        %7994 = vmatpush.msra.mxu0 0.0
        %7995 = vmatpush.msra.mxu0 0.0
        %7996 = vmatpush.msra.mxu0 0.0
        %7997 = vmatpush.msra.mxu0 0.0
        %7998 = vmatpush.msra.mxu0 0.0
        %7999 = vmatpush.msra.mxu0 0.0
        %8000 = vmatpush.msra.mxu0 0.0
        %8001 = vmatpush.msra.mxu0 %v7321
        %8002 = vmatmul.f32.gmra.mxu0 %v7364
        %v8003 = vpop.f32.mrf.mxu0
        %v8004 = vadd.f32 %v7361, %v8003
        %8005 = vdwg.mxu0
        %8006 = vmatpush.msra.mxu0 0.0
        %8007 = vmatpush.msra.mxu0 0.0
        %8008 = vmatpush.msra.mxu0 0.0
        %8009 = vmatpush.msra.mxu0 0.0
        %8010 = vmatpush.msra.mxu0 0.0
        %8011 = vmatpush.msra.mxu0 0.0
        %8012 = vmatpush.msra.mxu0 0.0
        %8013 = vmatpush.msra.mxu0 0.0
        %8014 = vmatpush.msra.mxu0 0.0
        %8015 = vmatpush.msra.mxu0 0.0
        %8016 = vmatpush.msra.mxu0 0.0
        %8017 = vmatpush.msra.mxu0 0.0
        %8018 = vmatpush.msra.mxu0 0.0
        %8019 = vmatpush.msra.mxu0 0.0
        %8020 = vmatpush.msra.mxu0 0.0
        %8021 = vmatpush.msra.mxu0 %v7322
        %8022 = vmatmul.f32.gmra.mxu0 %v7364
        %v8023 = vpop.f32.mrf.mxu0
        %v8024 = vadd.f32 %v7361, %v8023
        %8025 = vdwg.mxu0
        %8026 = vmatpush.msra.mxu0 0.0
        %8027 = vmatpush.msra.mxu0 0.0
        %8028 = vmatpush.msra.mxu0 0.0
        %8029 = vmatpush.msra.mxu0 0.0
        %8030 = vmatpush.msra.mxu0 0.0
        %8031 = vmatpush.msra.mxu0 0.0
        %8032 = vmatpush.msra.mxu0 0.0
        %8033 = vmatpush.msra.mxu0 0.0
        %8034 = vmatpush.msra.mxu0 0.0
        %8035 = vmatpush.msra.mxu0 0.0
        %8036 = vmatpush.msra.mxu0 0.0
        %8037 = vmatpush.msra.mxu0 0.0
        %8038 = vmatpush.msra.mxu0 0.0
        %8039 = vmatpush.msra.mxu0 0.0
        %8040 = vmatpush.msra.mxu0 0.0
        %8041 = vmatpush.msra.mxu0 %v7323
        %8042 = vmatmul.f32.gmra.mxu0 %v7364
        %v8043 = vpop.f32.mrf.mxu0
        %v8044 = vadd.f32 %v7361, %v8043
        %8045 = vdwg.mxu0
        %8046 = vmatpush.msra.mxu0 0.0
        %8047 = vmatpush.msra.mxu0 0.0
        %8048 = vmatpush.msra.mxu0 0.0
        %8049 = vmatpush.msra.mxu0 0.0
        %8050 = vmatpush.msra.mxu0 0.0
        %8051 = vmatpush.msra.mxu0 0.0
        %8052 = vmatpush.msra.mxu0 0.0
        %8053 = vmatpush.msra.mxu0 0.0
        %8054 = vmatpush.msra.mxu0 0.0
        %8055 = vmatpush.msra.mxu0 0.0
        %8056 = vmatpush.msra.mxu0 0.0
        %8057 = vmatpush.msra.mxu0 0.0
        %8058 = vmatpush.msra.mxu0 0.0
        %8059 = vmatpush.msra.mxu0 0.0
        %8060 = vmatpush.msra.mxu0 0.0
        %8061 = vmatpush.msra.mxu0 %v7324
        %8062 = vmatmul.f32.gmra.mxu0 %v7364
        %v8063 = vpop.f32.mrf.mxu0
        %v8064 = vadd.f32 %v7361, %v8063
        %8065 = vdwg.mxu0
        %8066 = vmatpush.msra.mxu0 0.0
        %8067 = vmatpush.msra.mxu0 0.0
        %8068 = vmatpush.msra.mxu0 0.0
        %8069 = vmatpush.msra.mxu0 0.0
        %8070 = vmatpush.msra.mxu0 0.0
        %8071 = vmatpush.msra.mxu0 0.0
        %8072 = vmatpush.msra.mxu0 0.0
        %8073 = vmatpush.msra.mxu0 0.0
        %8074 = vmatpush.msra.mxu0 0.0
        %8075 = vmatpush.msra.mxu0 0.0
        %8076 = vmatpush.msra.mxu0 0.0
        %8077 = vmatpush.msra.mxu0 0.0
        %8078 = vmatpush.msra.mxu0 0.0
        %8079 = vmatpush.msra.mxu0 0.0
        %8080 = vmatpush.msra.mxu0 0.0
        %8081 = vmatpush.msra.mxu0 %v7325
        %8082 = vmatmul.f32.gmra.mxu0 %v7364
        %v8083 = vpop.f32.mrf.mxu0
        %v8084 = vadd.f32 %v7361, %v8083
        %8085 = vdwg.mxu0
        %8086 = vmatpush.msra.mxu0 0.0
        %8087 = vmatpush.msra.mxu0 0.0
        %8088 = vmatpush.msra.mxu0 0.0
        %8089 = vmatpush.msra.mxu0 0.0
        %8090 = vmatpush.msra.mxu0 0.0
        %8091 = vmatpush.msra.mxu0 0.0
        %8092 = vmatpush.msra.mxu0 0.0
        %8093 = vmatpush.msra.mxu0 0.0
        %8094 = vmatpush.msra.mxu0 0.0
        %8095 = vmatpush.msra.mxu0 0.0
        %8096 = vmatpush.msra.mxu0 0.0
        %8097 = vmatpush.msra.mxu0 0.0
        %8098 = vmatpush.msra.mxu0 0.0
        %8099 = vmatpush.msra.mxu0 0.0
        %8100 = vmatpush.msra.mxu0 0.0
        %8101 = vmatpush.msra.mxu0 %v7326
        %8102 = vmatmul.f32.gmra.mxu0 %v7364
        %v8103 = vpop.f32.mrf.mxu0
        %v8104 = vadd.f32 %v7361, %v8103
        %8105 = vdwg.mxu0
        %8106 = vmatpush.msra.mxu0 0.0
        %8107 = vmatpush.msra.mxu0 0.0
        %8108 = vmatpush.msra.mxu0 0.0
        %8109 = vmatpush.msra.mxu0 0.0
        %8110 = vmatpush.msra.mxu0 0.0
        %8111 = vmatpush.msra.mxu0 0.0
        %8112 = vmatpush.msra.mxu0 0.0
        %8113 = vmatpush.msra.mxu0 0.0
        %8114 = vmatpush.msra.mxu0 0.0
        %8115 = vmatpush.msra.mxu0 0.0
        %8116 = vmatpush.msra.mxu0 0.0
        %8117 = vmatpush.msra.mxu0 0.0
        %8118 = vmatpush.msra.mxu0 0.0
        %8119 = vmatpush.msra.mxu0 0.0
        %8120 = vmatpush.msra.mxu0 0.0
        %8121 = vmatpush.msra.mxu0 %v7327
        %8122 = vmatmul.f32.gmra.mxu0 %v7364
        %v8123 = vpop.f32.mrf.mxu0
        %v8124 = vadd.f32 %v7361, %v8123
        %8125 = vdwg.mxu0
        %8126 = vmatpush.msra.mxu0 0.0
        %8127 = vmatpush.msra.mxu0 0.0
        %8128 = vmatpush.msra.mxu0 0.0
        %8129 = vmatpush.msra.mxu0 0.0
        %8130 = vmatpush.msra.mxu0 0.0
        %8131 = vmatpush.msra.mxu0 0.0
        %8132 = vmatpush.msra.mxu0 0.0
        %8133 = vmatpush.msra.mxu0 0.0
        %8134 = vmatpush.msra.mxu0 0.0
        %8135 = vmatpush.msra.mxu0 0.0
        %8136 = vmatpush.msra.mxu0 0.0
        %8137 = vmatpush.msra.mxu0 0.0
        %8138 = vmatpush.msra.mxu0 0.0
        %8139 = vmatpush.msra.mxu0 0.0
        %8140 = vmatpush.msra.mxu0 0.0
        %8141 = vmatpush.msra.mxu0 %v7328
        %8142 = vmatmul.f32.gmra.mxu0 %v7364
        %v8143 = vpop.f32.mrf.mxu0
        %v8144 = vadd.f32 %v7361, %v8143
        %8145 = vdwg.mxu0
        %8146 = vmatpush.msra.mxu0 0.0
        %8147 = vmatpush.msra.mxu0 0.0
        %8148 = vmatpush.msra.mxu0 0.0
        %8149 = vmatpush.msra.mxu0 0.0
        %8150 = vmatpush.msra.mxu0 0.0
        %8151 = vmatpush.msra.mxu0 0.0
        %8152 = vmatpush.msra.mxu0 0.0
        %8153 = vmatpush.msra.mxu0 0.0
        %8154 = vmatpush.msra.mxu0 0.0
        %8155 = vmatpush.msra.mxu0 0.0
        %8156 = vmatpush.msra.mxu0 0.0
        %8157 = vmatpush.msra.mxu0 0.0
        %8158 = vmatpush.msra.mxu0 0.0
        %8159 = vmatpush.msra.mxu0 0.0
        %8160 = vmatpush.msra.mxu0 0.0
        %8161 = vmatpush.msra.mxu0 %v7329
        %8162 = vmatmul.f32.gmra.mxu0 %v7364
        %v8163 = vpop.f32.mrf.mxu0
        %v8164 = vadd.f32 %v7361, %v8163
        %8165 = vdwg.mxu0
        %8166 = vmatpush.msra.mxu0 0.0
        %8167 = vmatpush.msra.mxu0 0.0
        %8168 = vmatpush.msra.mxu0 0.0
        %8169 = vmatpush.msra.mxu0 0.0
        %8170 = vmatpush.msra.mxu0 0.0
        %8171 = vmatpush.msra.mxu0 0.0
        %8172 = vmatpush.msra.mxu0 0.0
        %8173 = vmatpush.msra.mxu0 0.0
        %8174 = vmatpush.msra.mxu0 0.0
        %8175 = vmatpush.msra.mxu0 0.0
        %8176 = vmatpush.msra.mxu0 0.0
        %8177 = vmatpush.msra.mxu0 0.0
        %8178 = vmatpush.msra.mxu0 0.0
        %8179 = vmatpush.msra.mxu0 0.0
        %8180 = vmatpush.msra.mxu0 0.0
        %8181 = vmatpush.msra.mxu0 %v7330
        %8182 = vmatmul.f32.gmra.mxu0 %v7364
        %v8183 = vpop.f32.mrf.mxu0
        %v8184 = vadd.f32 %v7361, %v8183
        %8185 = vdwg.mxu0
        %8186 = vmatpush.msra.mxu0 0.0
        %8187 = vmatpush.msra.mxu0 0.0
        %8188 = vmatpush.msra.mxu0 0.0
        %8189 = vmatpush.msra.mxu0 0.0
        %8190 = vmatpush.msra.mxu0 0.0
        %8191 = vmatpush.msra.mxu0 0.0
        %8192 = vmatpush.msra.mxu0 0.0
        %8193 = vmatpush.msra.mxu0 0.0
        %8194 = vmatpush.msra.mxu0 0.0
        %8195 = vmatpush.msra.mxu0 0.0
        %8196 = vmatpush.msra.mxu0 0.0
        %8197 = vmatpush.msra.mxu0 0.0
        %8198 = vmatpush.msra.mxu0 0.0
        %8199 = vmatpush.msra.mxu0 0.0
        %8200 = vmatpush.msra.mxu0 0.0
        %8201 = vmatpush.msra.mxu0 %v7331
        %8202 = vmatmul.f32.gmra.mxu0 %v7364
        %v8203 = vpop.f32.mrf.mxu0
        %v8204 = vadd.f32 %v7361, %v8203
        %8205 = vdwg.mxu0
        %8206 = vmatpush.msra.mxu0 0.0
        %8207 = vmatpush.msra.mxu0 0.0
        %8208 = vmatpush.msra.mxu0 0.0
        %8209 = vmatpush.msra.mxu0 0.0
        %8210 = vmatpush.msra.mxu0 0.0
        %8211 = vmatpush.msra.mxu0 0.0
        %8212 = vmatpush.msra.mxu0 0.0
        %8213 = vmatpush.msra.mxu0 0.0
        %8214 = vmatpush.msra.mxu0 0.0
        %8215 = vmatpush.msra.mxu0 0.0
        %8216 = vmatpush.msra.mxu0 0.0
        %8217 = vmatpush.msra.mxu0 0.0
        %8218 = vmatpush.msra.mxu0 0.0
        %8219 = vmatpush.msra.mxu0 0.0
        %8220 = vmatpush.msra.mxu0 0.0
        %8221 = vmatpush.msra.mxu0 %v7332
        %8222 = vmatmul.f32.gmra.mxu0 %v7364
        %v8223 = vpop.f32.mrf.mxu0
        %v8224 = vadd.f32 %v7361, %v8223
        %8225 = vdwg.mxu0
        %8226 = vmatpush.msra.mxu0 0.0
        %8227 = vmatpush.msra.mxu0 0.0
        %8228 = vmatpush.msra.mxu0 0.0
        %8229 = vmatpush.msra.mxu0 0.0
        %8230 = vmatpush.msra.mxu0 0.0
        %8231 = vmatpush.msra.mxu0 0.0
        %8232 = vmatpush.msra.mxu0 0.0
        %8233 = vmatpush.msra.mxu0 0.0
        %8234 = vmatpush.msra.mxu0 0.0
        %8235 = vmatpush.msra.mxu0 0.0
        %8236 = vmatpush.msra.mxu0 0.0
        %8237 = vmatpush.msra.mxu0 0.0
        %8238 = vmatpush.msra.mxu0 0.0
        %8239 = vmatpush.msra.mxu0 0.0
        %8240 = vmatpush.msra.mxu0 0.0
        %8241 = vmatpush.msra.mxu0 %v7333
        %8242 = vmatmul.f32.gmra.mxu0 %v7364
        %v8243 = vpop.f32.mrf.mxu0
        %v8244 = vadd.f32 %v7361, %v8243
        %8245 = vdwg.mxu0
        %8246 = vmatpush.msra.mxu0 0.0
        %8247 = vmatpush.msra.mxu0 0.0
        %8248 = vmatpush.msra.mxu0 0.0
        %8249 = vmatpush.msra.mxu0 0.0
        %8250 = vmatpush.msra.mxu0 0.0
        %8251 = vmatpush.msra.mxu0 0.0
        %8252 = vmatpush.msra.mxu0 0.0
        %8253 = vmatpush.msra.mxu0 0.0
        %8254 = vmatpush.msra.mxu0 0.0
        %8255 = vmatpush.msra.mxu0 0.0
        %8256 = vmatpush.msra.mxu0 0.0
        %8257 = vmatpush.msra.mxu0 0.0
        %8258 = vmatpush.msra.mxu0 0.0
        %8259 = vmatpush.msra.mxu0 0.0
        %8260 = vmatpush.msra.mxu0 0.0
        %8261 = vmatpush.msra.mxu0 %v7334
        %8262 = vmatmul.f32.gmra.mxu0 %v7364
        %v8263 = vpop.f32.mrf.mxu0
        %v8264 = vadd.f32 %v7361, %v8263
        %8265 = vdwg.mxu0
        %8266 = vmatpush.msra.mxu0 0.0
        %8267 = vmatpush.msra.mxu0 0.0
        %8268 = vmatpush.msra.mxu0 0.0
        %8269 = vmatpush.msra.mxu0 0.0
        %8270 = vmatpush.msra.mxu0 0.0
        %8271 = vmatpush.msra.mxu0 0.0
        %8272 = vmatpush.msra.mxu0 0.0
        %8273 = vmatpush.msra.mxu0 0.0
        %8274 = vmatpush.msra.mxu0 0.0
        %8275 = vmatpush.msra.mxu0 0.0
        %8276 = vmatpush.msra.mxu0 0.0
        %8277 = vmatpush.msra.mxu0 0.0
        %8278 = vmatpush.msra.mxu0 0.0
        %8279 = vmatpush.msra.mxu0 0.0
        %8280 = vmatpush.msra.mxu0 0.0
        %8281 = vmatpush.msra.mxu0 %v7335
        %8282 = vmatmul.f32.gmra.mxu0 %v7364
        %v8283 = vpop.f32.mrf.mxu0
        %v8284 = vadd.f32 %v7361, %v8283
        %8285 = vdwg.mxu0
        %8286 = vmatpush.msra.mxu0 0.0
        %8287 = vmatpush.msra.mxu0 0.0
        %8288 = vmatpush.msra.mxu0 0.0
        %8289 = vmatpush.msra.mxu0 0.0
        %8290 = vmatpush.msra.mxu0 0.0
        %8291 = vmatpush.msra.mxu0 0.0
        %8292 = vmatpush.msra.mxu0 0.0
        %8293 = vmatpush.msra.mxu0 0.0
        %8294 = vmatpush.msra.mxu0 0.0
        %8295 = vmatpush.msra.mxu0 0.0
        %8296 = vmatpush.msra.mxu0 0.0
        %8297 = vmatpush.msra.mxu0 0.0
        %8298 = vmatpush.msra.mxu0 0.0
        %8299 = vmatpush.msra.mxu0 0.0
        %8300 = vmatpush.msra.mxu0 0.0
        %8301 = vmatpush.msra.mxu0 %v7336
        %8302 = vmatmul.f32.gmra.mxu0 %v7364
        %v8303 = vpop.f32.mrf.mxu0
        %v8304 = vadd.f32 %v7361, %v8303
        %8305 = vdwg.mxu0
        %8306 = vmatpush.msra.mxu0 0.0
        %8307 = vmatpush.msra.mxu0 0.0
        %8308 = vmatpush.msra.mxu0 0.0
        %8309 = vmatpush.msra.mxu0 0.0
        %8310 = vmatpush.msra.mxu0 0.0
        %8311 = vmatpush.msra.mxu0 0.0
        %8312 = vmatpush.msra.mxu0 0.0
        %8313 = vmatpush.msra.mxu0 0.0
        %8314 = vmatpush.msra.mxu0 0.0
        %8315 = vmatpush.msra.mxu0 0.0
        %8316 = vmatpush.msra.mxu0 0.0
        %8317 = vmatpush.msra.mxu0 0.0
        %8318 = vmatpush.msra.mxu0 0.0
        %8319 = vmatpush.msra.mxu0 0.0
        %8320 = vmatpush.msra.mxu0 0.0
        %8321 = vmatpush.msra.mxu0 %v7337
        %8322 = vmatmul.f32.gmra.mxu0 %v7364
        %v8323 = vpop.f32.mrf.mxu0
        %v8324 = vadd.f32 %v7361, %v8323
        %8325 = vdwg.mxu0
        %8326 = vmatpush.msra.mxu0 0.0
        %8327 = vmatpush.msra.mxu0 0.0
        %8328 = vmatpush.msra.mxu0 0.0
        %8329 = vmatpush.msra.mxu0 0.0
        %8330 = vmatpush.msra.mxu0 0.0
        %8331 = vmatpush.msra.mxu0 0.0
        %8332 = vmatpush.msra.mxu0 0.0
        %8333 = vmatpush.msra.mxu0 0.0
        %8334 = vmatpush.msra.mxu0 0.0
        %8335 = vmatpush.msra.mxu0 0.0
        %8336 = vmatpush.msra.mxu0 0.0
        %8337 = vmatpush.msra.mxu0 0.0
        %8338 = vmatpush.msra.mxu0 0.0
        %8339 = vmatpush.msra.mxu0 0.0
        %8340 = vmatpush.msra.mxu0 0.0
        %8341 = vmatpush.msra.mxu0 %v7338
        %8342 = vmatmul.f32.gmra.mxu0 %v7364
        %v8343 = vpop.f32.mrf.mxu0
        %v8344 = vadd.f32 %v7361, %v8343
        %8345 = vdwg.mxu0
        %8346 = vmatpush.msra.mxu0 0.0
        %8347 = vmatpush.msra.mxu0 0.0
        %8348 = vmatpush.msra.mxu0 0.0
        %8349 = vmatpush.msra.mxu0 0.0
        %8350 = vmatpush.msra.mxu0 0.0
        %8351 = vmatpush.msra.mxu0 0.0
        %8352 = vmatpush.msra.mxu0 0.0
        %8353 = vmatpush.msra.mxu0 0.0
        %8354 = vmatpush.msra.mxu0 0.0
        %8355 = vmatpush.msra.mxu0 0.0
        %8356 = vmatpush.msra.mxu0 0.0
        %8357 = vmatpush.msra.mxu0 0.0
        %8358 = vmatpush.msra.mxu0 0.0
        %8359 = vmatpush.msra.mxu0 0.0
        %8360 = vmatpush.msra.mxu0 0.0
        %8361 = vmatpush.msra.mxu0 %v7339
        %8362 = vmatmul.f32.gmra.mxu0 %v7364
        %v8363 = vpop.f32.mrf.mxu0
        %v8364 = vadd.f32 %v7361, %v8363
        %8365 = vdwg.mxu0
        %8366 = vmatpush.msra.mxu0 0.0
        %8367 = vmatpush.msra.mxu0 0.0
        %8368 = vmatpush.msra.mxu0 0.0
        %8369 = vmatpush.msra.mxu0 0.0
        %8370 = vmatpush.msra.mxu0 0.0
        %8371 = vmatpush.msra.mxu0 0.0
        %8372 = vmatpush.msra.mxu0 0.0
        %8373 = vmatpush.msra.mxu0 0.0
        %8374 = vmatpush.msra.mxu0 0.0
        %8375 = vmatpush.msra.mxu0 0.0
        %8376 = vmatpush.msra.mxu0 0.0
        %8377 = vmatpush.msra.mxu0 0.0
        %8378 = vmatpush.msra.mxu0 0.0
        %8379 = vmatpush.msra.mxu0 0.0
        %8380 = vmatpush.msra.mxu0 0.0
        %8381 = vmatpush.msra.mxu0 %v7340
        %8382 = vmatmul.f32.gmra.mxu0 %v7364
        %v8383 = vpop.f32.mrf.mxu0
        %v8384 = vadd.f32 %v7361, %v8383
        %8385 = vdwg.mxu0
        %8386 = vmatpush.msra.mxu0 0.0
        %8387 = vmatpush.msra.mxu0 0.0
        %8388 = vmatpush.msra.mxu0 0.0
        %8389 = vmatpush.msra.mxu0 0.0
        %8390 = vmatpush.msra.mxu0 0.0
        %8391 = vmatpush.msra.mxu0 0.0
        %8392 = vmatpush.msra.mxu0 0.0
        %8393 = vmatpush.msra.mxu0 0.0
        %8394 = vmatpush.msra.mxu0 0.0
        %8395 = vmatpush.msra.mxu0 0.0
        %8396 = vmatpush.msra.mxu0 0.0
        %8397 = vmatpush.msra.mxu0 0.0
        %8398 = vmatpush.msra.mxu0 0.0
        %8399 = vmatpush.msra.mxu0 0.0
        %8400 = vmatpush.msra.mxu0 0.0
        %8401 = vmatpush.msra.mxu0 %v7341
        %8402 = vmatmul.f32.gmra.mxu0 %v7364
        %v8403 = vpop.f32.mrf.mxu0
        %v8404 = vadd.f32 %v7361, %v8403
        %8405 = vdwg.mxu0
        %8406 = vmatpush.msra.mxu0 0.0
        %8407 = vmatpush.msra.mxu0 0.0
        %8408 = vmatpush.msra.mxu0 0.0
        %8409 = vmatpush.msra.mxu0 0.0
        %8410 = vmatpush.msra.mxu0 0.0
        %8411 = vmatpush.msra.mxu0 0.0
        %8412 = vmatpush.msra.mxu0 0.0
        %8413 = vmatpush.msra.mxu0 0.0
        %8414 = vmatpush.msra.mxu0 0.0
        %8415 = vmatpush.msra.mxu0 0.0
        %8416 = vmatpush.msra.mxu0 0.0
        %8417 = vmatpush.msra.mxu0 0.0
        %8418 = vmatpush.msra.mxu0 0.0
        %8419 = vmatpush.msra.mxu0 0.0
        %8420 = vmatpush.msra.mxu0 0.0
        %8421 = vmatpush.msra.mxu0 %v7342
        %8422 = vmatmul.f32.gmra.mxu0 %v7364
        %v8423 = vpop.f32.mrf.mxu0
        %v8424 = vadd.f32 %v7361, %v8423
        %8425 = vdwg.mxu0
        %8426 = vmatpush.msra.mxu0 0.0
        %8427 = vmatpush.msra.mxu0 0.0
        %8428 = vmatpush.msra.mxu0 0.0
        %8429 = vmatpush.msra.mxu0 0.0
        %8430 = vmatpush.msra.mxu0 0.0
        %8431 = vmatpush.msra.mxu0 0.0
        %8432 = vmatpush.msra.mxu0 0.0
        %8433 = vmatpush.msra.mxu0 0.0
        %8434 = vmatpush.msra.mxu0 0.0
        %8435 = vmatpush.msra.mxu0 0.0
        %8436 = vmatpush.msra.mxu0 0.0
        %8437 = vmatpush.msra.mxu0 0.0
        %8438 = vmatpush.msra.mxu0 0.0
        %8439 = vmatpush.msra.mxu0 0.0
        %8440 = vmatpush.msra.mxu0 0.0
        %8441 = vmatpush.msra.mxu0 %v7343
        %8442 = vmatmul.f32.gmra.mxu0 %v7364
        %v8443 = vpop.f32.mrf.mxu0
        %v8444 = vadd.f32 %v7361, %v8443
        %8445 = vdwg.mxu0
        %8446 = vmatpush.msra.mxu0 0.0
        %8447 = vmatpush.msra.mxu0 0.0
        %8448 = vmatpush.msra.mxu0 0.0
        %8449 = vmatpush.msra.mxu0 0.0
        %8450 = vmatpush.msra.mxu0 0.0
        %8451 = vmatpush.msra.mxu0 0.0
        %8452 = vmatpush.msra.mxu0 0.0
        %8453 = vmatpush.msra.mxu0 0.0
        %8454 = vmatpush.msra.mxu0 0.0
        %8455 = vmatpush.msra.mxu0 0.0
        %8456 = vmatpush.msra.mxu0 0.0
        %8457 = vmatpush.msra.mxu0 0.0
        %8458 = vmatpush.msra.mxu0 0.0
        %8459 = vmatpush.msra.mxu0 0.0
        %8460 = vmatpush.msra.mxu0 0.0
        %8461 = vmatpush.msra.mxu0 %v7344
        %8462 = vmatmul.f32.gmra.mxu0 %v7364
        %v8463 = vpop.f32.mrf.mxu0
        %v8464 = vadd.f32 %v7361, %v8463
        %8465 = vdwg.mxu0
        %8466 = vmatpush.msra.mxu0 0.0
        %8467 = vmatpush.msra.mxu0 0.0
        %8468 = vmatpush.msra.mxu0 0.0
        %8469 = vmatpush.msra.mxu0 0.0
        %8470 = vmatpush.msra.mxu0 0.0
        %8471 = vmatpush.msra.mxu0 0.0
        %8472 = vmatpush.msra.mxu0 0.0
        %8473 = vmatpush.msra.mxu0 0.0
        %8474 = vmatpush.msra.mxu0 0.0
        %8475 = vmatpush.msra.mxu0 0.0
        %8476 = vmatpush.msra.mxu0 0.0
        %8477 = vmatpush.msra.mxu0 0.0
        %8478 = vmatpush.msra.mxu0 0.0
        %8479 = vmatpush.msra.mxu0 0.0
        %8480 = vmatpush.msra.mxu0 0.0
        %8481 = vmatpush.msra.mxu0 %v7345
        %8482 = vmatmul.f32.gmra.mxu0 %v7364
        %v8483 = vpop.f32.mrf.mxu0
        %v8484 = vadd.f32 %v7361, %v8483
        %8485 = vdwg.mxu0
        %8486 = vmatpush.msra.mxu0 0.0
        %8487 = vmatpush.msra.mxu0 0.0
        %8488 = vmatpush.msra.mxu0 0.0
        %8489 = vmatpush.msra.mxu0 0.0
        %8490 = vmatpush.msra.mxu0 0.0
        %8491 = vmatpush.msra.mxu0 0.0
        %8492 = vmatpush.msra.mxu0 0.0
        %8493 = vmatpush.msra.mxu0 0.0
        %8494 = vmatpush.msra.mxu0 0.0
        %8495 = vmatpush.msra.mxu0 0.0
        %8496 = vmatpush.msra.mxu0 0.0
        %8497 = vmatpush.msra.mxu0 0.0
        %8498 = vmatpush.msra.mxu0 0.0
        %8499 = vmatpush.msra.mxu0 0.0
        %8500 = vmatpush.msra.mxu0 0.0
        %8501 = vmatpush.msra.mxu0 %v7346
        %8502 = vmatmul.f32.gmra.mxu0 %v7364
        %v8503 = vpop.f32.mrf.mxu0
        %v8504 = vadd.f32 %v7361, %v8503
        %8505 = vdwg.mxu0
        %8506 = vmatpush.msra.mxu0 0.0
        %8507 = vmatpush.msra.mxu0 0.0
        %8508 = vmatpush.msra.mxu0 0.0
        %8509 = vmatpush.msra.mxu0 0.0
        %8510 = vmatpush.msra.mxu0 0.0
        %8511 = vmatpush.msra.mxu0 0.0
        %8512 = vmatpush.msra.mxu0 0.0
        %8513 = vmatpush.msra.mxu0 0.0
        %8514 = vmatpush.msra.mxu0 0.0
        %8515 = vmatpush.msra.mxu0 0.0
        %8516 = vmatpush.msra.mxu0 0.0
        %8517 = vmatpush.msra.mxu0 0.0
        %8518 = vmatpush.msra.mxu0 0.0
        %8519 = vmatpush.msra.mxu0 0.0
        %8520 = vmatpush.msra.mxu0 0.0
        %8521 = vmatpush.msra.mxu0 %v7347
        %8522 = vmatmul.f32.gmra.mxu0 %v7364
        %v8523 = vpop.f32.mrf.mxu0
        %v8524 = vadd.f32 %v7361, %v8523
        %8525 = vdwg.mxu0
        %8526 = vmatpush.msra.mxu0 0.0
        %8527 = vmatpush.msra.mxu0 0.0
        %8528 = vmatpush.msra.mxu0 0.0
        %8529 = vmatpush.msra.mxu0 0.0
        %8530 = vmatpush.msra.mxu0 0.0
        %8531 = vmatpush.msra.mxu0 0.0
        %8532 = vmatpush.msra.mxu0 0.0
        %8533 = vmatpush.msra.mxu0 0.0
        %8534 = vmatpush.msra.mxu0 0.0
        %8535 = vmatpush.msra.mxu0 0.0
        %8536 = vmatpush.msra.mxu0 0.0
        %8537 = vmatpush.msra.mxu0 0.0
        %8538 = vmatpush.msra.mxu0 0.0
        %8539 = vmatpush.msra.mxu0 0.0
        %8540 = vmatpush.msra.mxu0 0.0
        %8541 = vmatpush.msra.mxu0 %v7348
        %8542 = vmatmul.f32.gmra.mxu0 %v7364
        %v8543 = vpop.f32.mrf.mxu0
        %v8544 = vadd.f32 %v7361, %v8543
        %8545 = vdwg.mxu0
        %8546 = vmatpush.msra.mxu0 0.0
        %8547 = vmatpush.msra.mxu0 0.0
        %8548 = vmatpush.msra.mxu0 0.0
        %8549 = vmatpush.msra.mxu0 0.0
        %8550 = vmatpush.msra.mxu0 0.0
        %8551 = vmatpush.msra.mxu0 0.0
        %8552 = vmatpush.msra.mxu0 0.0
        %8553 = vmatpush.msra.mxu0 0.0
        %8554 = vmatpush.msra.mxu0 0.0
        %8555 = vmatpush.msra.mxu0 0.0
        %8556 = vmatpush.msra.mxu0 0.0
        %8557 = vmatpush.msra.mxu0 0.0
        %8558 = vmatpush.msra.mxu0 0.0
        %8559 = vmatpush.msra.mxu0 0.0
        %8560 = vmatpush.msra.mxu0 0.0
        %8561 = vmatpush.msra.mxu0 %v7349
        %8562 = vmatmul.f32.gmra.mxu0 %v7364
        %v8563 = vpop.f32.mrf.mxu0
        %v8564 = vadd.f32 %v7361, %v8563
        %8565 = vdwg.mxu0
        %8566 = vmatpush.msra.mxu0 0.0
        %8567 = vmatpush.msra.mxu0 0.0
        %8568 = vmatpush.msra.mxu0 0.0
        %8569 = vmatpush.msra.mxu0 0.0
        %8570 = vmatpush.msra.mxu0 0.0
        %8571 = vmatpush.msra.mxu0 0.0
        %8572 = vmatpush.msra.mxu0 0.0
        %8573 = vmatpush.msra.mxu0 0.0
        %8574 = vmatpush.msra.mxu0 0.0
        %8575 = vmatpush.msra.mxu0 0.0
        %8576 = vmatpush.msra.mxu0 0.0
        %8577 = vmatpush.msra.mxu0 0.0
        %8578 = vmatpush.msra.mxu0 0.0
        %8579 = vmatpush.msra.mxu0 0.0
        %8580 = vmatpush.msra.mxu0 0.0
        %8581 = vmatpush.msra.mxu0 %v7350
        %8582 = vmatmul.f32.gmra.mxu0 %v7364
        %v8583 = vpop.f32.mrf.mxu0
        %v8584 = vadd.f32 %v7361, %v8583
        %8585 = vdwg.mxu0
        %8586 = vmatpush.msra.mxu0 0.0
        %8587 = vmatpush.msra.mxu0 0.0
        %8588 = vmatpush.msra.mxu0 0.0
        %8589 = vmatpush.msra.mxu0 0.0
        %8590 = vmatpush.msra.mxu0 0.0
        %8591 = vmatpush.msra.mxu0 0.0
        %8592 = vmatpush.msra.mxu0 0.0
        %8593 = vmatpush.msra.mxu0 0.0
        %8594 = vmatpush.msra.mxu0 0.0
        %8595 = vmatpush.msra.mxu0 0.0
        %8596 = vmatpush.msra.mxu0 0.0
        %8597 = vmatpush.msra.mxu0 0.0
        %8598 = vmatpush.msra.mxu0 0.0
        %8599 = vmatpush.msra.mxu0 0.0
        %8600 = vmatpush.msra.mxu0 0.0
        %8601 = vmatpush.msra.mxu0 %v7351
        %8602 = vmatmul.f32.gmra.mxu0 %v7364
        %v8603 = vpop.f32.mrf.mxu0
        %v8604 = vadd.f32 %v7361, %v8603
        %8605 = vdwg.mxu0
        %8606 = vmatpush.msra.mxu0 0.0
        %8607 = vmatpush.msra.mxu0 0.0
        %8608 = vmatpush.msra.mxu0 0.0
        %8609 = vmatpush.msra.mxu0 0.0
        %8610 = vmatpush.msra.mxu0 0.0
        %8611 = vmatpush.msra.mxu0 0.0
        %8612 = vmatpush.msra.mxu0 0.0
        %8613 = vmatpush.msra.mxu0 0.0
        %8614 = vmatpush.msra.mxu0 0.0
        %8615 = vmatpush.msra.mxu0 0.0
        %8616 = vmatpush.msra.mxu0 0.0
        %8617 = vmatpush.msra.mxu0 0.0
        %8618 = vmatpush.msra.mxu0 0.0
        %8619 = vmatpush.msra.mxu0 0.0
        %8620 = vmatpush.msra.mxu0 0.0
        %8621 = vmatpush.msra.mxu0 %v7352
        %8622 = vmatmul.f32.gmra.mxu0 %v7364
        %v8623 = vpop.f32.mrf.mxu0
        %v8624 = vadd.f32 %v7361, %v8623
        %8625 = vdwg.mxu0
        %8626 = vmatpush.msra.mxu0 0.0
        %8627 = vmatpush.msra.mxu0 0.0
        %8628 = vmatpush.msra.mxu0 0.0
        %8629 = vmatpush.msra.mxu0 0.0
        %8630 = vmatpush.msra.mxu0 0.0
        %8631 = vmatpush.msra.mxu0 0.0
        %8632 = vmatpush.msra.mxu0 0.0
        %8633 = vmatpush.msra.mxu0 0.0
        %8634 = vmatpush.msra.mxu0 0.0
        %8635 = vmatpush.msra.mxu0 0.0
        %8636 = vmatpush.msra.mxu0 0.0
        %8637 = vmatpush.msra.mxu0 0.0
        %8638 = vmatpush.msra.mxu0 0.0
        %8639 = vmatpush.msra.mxu0 0.0
        %8640 = vmatpush.msra.mxu0 0.0
        %8641 = vmatpush.msra.mxu0 %v7353
        %8642 = vmatmul.f32.gmra.mxu0 %v7364
        %v8643 = vpop.f32.mrf.mxu0
        %v8644 = vadd.f32 %v7361, %v8643
        %8645 = vdwg.mxu0
        %v8646 = vxor.u32 %v7384, 2147483648
        %v8647 = vxor.u32 %v7404, 2147483648
        %v8648 = vxor.u32 %v7424, 2147483648
        %v8649 = vxor.u32 %v7444, 2147483648
        %v8650 = vxor.u32 %v7464, 2147483648
        %v8651 = vxor.u32 %v7484, 2147483648
        %v8652 = vxor.u32 %v7504, 2147483648
        %v8653 = vxor.u32 %v7524, 2147483648
        %v8654 = vxor.u32 %v7544, 2147483648
        %v8655 = vxor.u32 %v7564, 2147483648
        %v8656 = vxor.u32 %v7584, 2147483648
        %v8657 = vxor.u32 %v7604, 2147483648
        %v8658 = vxor.u32 %v7624, 2147483648
        %v8659 = vxor.u32 %v7644, 2147483648
        %v8660 = vxor.u32 %v7664, 2147483648
        %v8661 = vxor.u32 %v7684, 2147483648
        %v8662 = vxor.u32 %v7704, 2147483648
        %v8663 = vxor.u32 %v7724, 2147483648
        %v8664 = vxor.u32 %v7744, 2147483648
        %v8665 = vxor.u32 %v7764, 2147483648
        %v8666 = vxor.u32 %v7784, 2147483648
        %v8667 = vxor.u32 %v7804, 2147483648
        %v8668 = vxor.u32 %v7824, 2147483648
        %v8669 = vxor.u32 %v7844, 2147483648
        %v8670 = vxor.u32 %v7864, 2147483648
        %v8671 = vxor.u32 %v7884, 2147483648
        %v8672 = vxor.u32 %v7904, 2147483648
        %v8673 = vxor.u32 %v7924, 2147483648
        %v8674 = vxor.u32 %v7944, 2147483648
        %v8675 = vxor.u32 %v7964, 2147483648
        %v8676 = vxor.u32 %v7984, 2147483648
        %v8677 = vxor.u32 %v8004, 2147483648
        %v8678 = vxor.u32 %v8024, 2147483648
        %v8679 = vxor.u32 %v8044, 2147483648
        %v8680 = vxor.u32 %v8064, 2147483648
        %v8681 = vxor.u32 %v8084, 2147483648
        %v8682 = vxor.u32 %v8104, 2147483648
        %v8683 = vxor.u32 %v8124, 2147483648
        %v8684 = vxor.u32 %v8144, 2147483648
        %v8685 = vxor.u32 %v8164, 2147483648
        %v8686 = vxor.u32 %v8184, 2147483648
        %v8687 = vxor.u32 %v8204, 2147483648
        %v8688 = vxor.u32 %v8224, 2147483648
        %v8689 = vxor.u32 %v8244, 2147483648
        %v8690 = vxor.u32 %v8264, 2147483648
        %v8691 = vxor.u32 %v8284, 2147483648
        %v8692 = vxor.u32 %v8304, 2147483648
        %v8693 = vxor.u32 %v8324, 2147483648
        %v8694 = vxor.u32 %v8344, 2147483648
        %v8695 = vxor.u32 %v8364, 2147483648
        %v8696 = vxor.u32 %v8384, 2147483648
        %v8697 = vxor.u32 %v8404, 2147483648
        %v8698 = vxor.u32 %v8424, 2147483648
        %v8699 = vxor.u32 %v8444, 2147483648
        %v8700 = vxor.u32 %v8464, 2147483648
        %v8701 = vxor.u32 %v8484, 2147483648
        %v8702 = vxor.u32 %v8504, 2147483648
        %v8703 = vxor.u32 %v8524, 2147483648
        %v8704 = vxor.u32 %v8544, 2147483648
        %v8705 = vxor.u32 %v8564, 2147483648
        %v8706 = vxor.u32 %v8584, 2147483648
        %v8707 = vxor.u32 %v8604, 2147483648
        %v8708 = vxor.u32 %v8624, 2147483648
        %v8709 = vxor.u32 %v8644, 2147483648
        %v8710 = vmul.f32 %v8646, 1.442695
        %v8711 = vpow.pop %v8710
        %v8712 = vmul.f32 %v8647, 1.442695
        %v8713 = vpow.pop %v8712
        %v8714 = vmul.f32 %v8648, 1.442695
        %v8715 = vpow.pop %v8714
        %v8716 = vmul.f32 %v8649, 1.442695
        %v8717 = vpow.pop %v8716
        %v8718 = vmul.f32 %v8650, 1.442695
        %v8719 = vpow.pop %v8718
        %v8720 = vmul.f32 %v8651, 1.442695
        %v8721 = vpow.pop %v8720
        %v8722 = vmul.f32 %v8652, 1.442695
        %v8723 = vpow.pop %v8722
        %v8724 = vmul.f32 %v8653, 1.442695
        %v8725 = vpow.pop %v8724
        %v8726 = vmul.f32 %v8654, 1.442695
        %v8727 = vpow.pop %v8726
        %v8728 = vmul.f32 %v8655, 1.442695
        %v8729 = vpow.pop %v8728
        %v8730 = vmul.f32 %v8656, 1.442695
        %v8731 = vpow.pop %v8730
        %v8732 = vmul.f32 %v8657, 1.442695
        %v8733 = vpow.pop %v8732
        %v8734 = vmul.f32 %v8658, 1.442695
        %v8735 = vpow.pop %v8734
        %v8736 = vmul.f32 %v8659, 1.442695
        %v8737 = vpow.pop %v8736
        %v8738 = vmul.f32 %v8660, 1.442695
        %v8739 = vpow.pop %v8738
        %v8740 = vmul.f32 %v8661, 1.442695
        %v8741 = vpow.pop %v8740
        %v8742 = vmul.f32 %v8662, 1.442695
        %v8743 = vpow.pop %v8742
        %v8744 = vmul.f32 %v8663, 1.442695
        %v8745 = vpow.pop %v8744
        %v8746 = vmul.f32 %v8664, 1.442695
        %v8747 = vpow.pop %v8746
        %v8748 = vmul.f32 %v8665, 1.442695
        %v8749 = vpow.pop %v8748
        %v8750 = vmul.f32 %v8666, 1.442695
        %v8751 = vpow.pop %v8750
        %v8752 = vmul.f32 %v8667, 1.442695
        %v8753 = vpow.pop %v8752
        %v8754 = vmul.f32 %v8668, 1.442695
        %v8755 = vpow.pop %v8754
        %v8756 = vmul.f32 %v8669, 1.442695
        %v8757 = vpow.pop %v8756
        %v8758 = vmul.f32 %v8670, 1.442695
        %v8759 = vpow.pop %v8758
        %v8760 = vmul.f32 %v8671, 1.442695
        %v8761 = vpow.pop %v8760
        %v8762 = vmul.f32 %v8672, 1.442695
        %v8763 = vpow.pop %v8762
        %v8764 = vmul.f32 %v8673, 1.442695
        %v8765 = vpow.pop %v8764
        %v8766 = vmul.f32 %v8674, 1.442695
        %v8767 = vpow.pop %v8766
        %v8768 = vmul.f32 %v8675, 1.442695
        %v8769 = vpow.pop %v8768
        %v8770 = vmul.f32 %v8676, 1.442695
        %v8771 = vpow.pop %v8770
        %v8772 = vmul.f32 %v8677, 1.442695
        %v8773 = vpow.pop %v8772
        %v8774 = vmul.f32 %v8678, 1.442695
        %v8775 = vpow.pop %v8774
        %v8776 = vmul.f32 %v8679, 1.442695
        %v8777 = vpow.pop %v8776
        %v8778 = vmul.f32 %v8680, 1.442695
        %v8779 = vpow.pop %v8778
        %v8780 = vmul.f32 %v8681, 1.442695
        %v8781 = vpow.pop %v8780
        %v8782 = vmul.f32 %v8682, 1.442695
        %v8783 = vpow.pop %v8782
        %v8784 = vmul.f32 %v8683, 1.442695
        %v8785 = vpow.pop %v8784
        %v8786 = vmul.f32 %v8684, 1.442695
        %v8787 = vpow.pop %v8786
        %v8788 = vmul.f32 %v8685, 1.442695
        %v8789 = vpow.pop %v8788
        %v8790 = vmul.f32 %v8686, 1.442695
        %v8791 = vpow.pop %v8790
        %v8792 = vmul.f32 %v8687, 1.442695
        %v8793 = vpow.pop %v8792
        %v8794 = vmul.f32 %v8688, 1.442695
        %v8795 = vpow.pop %v8794
        %v8796 = vmul.f32 %v8689, 1.442695
        %v8797 = vpow.pop %v8796
        %v8798 = vmul.f32 %v8690, 1.442695
        %v8799 = vpow.pop %v8798
        %v8800 = vmul.f32 %v8691, 1.442695
        %v8801 = vpow.pop %v8800
        %v8802 = vmul.f32 %v8692, 1.442695
        %v8803 = vpow.pop %v8802
        %v8804 = vmul.f32 %v8693, 1.442695
        %v8805 = vpow.pop %v8804
        %v8806 = vmul.f32 %v8694, 1.442695
        %v8807 = vpow.pop %v8806
        %v8808 = vmul.f32 %v8695, 1.442695
        %v8809 = vpow.pop %v8808
        %v8810 = vmul.f32 %v8696, 1.442695
        %v8811 = vpow.pop %v8810
        %v8812 = vmul.f32 %v8697, 1.442695
        %v8813 = vpow.pop %v8812
        %v8814 = vmul.f32 %v8698, 1.442695
        %v8815 = vpow.pop %v8814
        %v8816 = vmul.f32 %v8699, 1.442695
        %v8817 = vpow.pop %v8816
        %v8818 = vmul.f32 %v8700, 1.442695
        %v8819 = vpow.pop %v8818
        %v8820 = vmul.f32 %v8701, 1.442695
        %v8821 = vpow.pop %v8820
        %v8822 = vmul.f32 %v8702, 1.442695
        %v8823 = vpow.pop %v8822
        %v8824 = vmul.f32 %v8703, 1.442695
        %v8825 = vpow.pop %v8824
        %v8826 = vmul.f32 %v8704, 1.442695
        %v8827 = vpow.pop %v8826
        %v8828 = vmul.f32 %v8705, 1.442695
        %v8829 = vpow.pop %v8828
        %v8830 = vmul.f32 %v8706, 1.442695
        %v8831 = vpow.pop %v8830
        %v8832 = vmul.f32 %v8707, 1.442695
        %v8833 = vpow.pop %v8832
        %v8834 = vmul.f32 %v8708, 1.442695
        %v8835 = vpow.pop %v8834
        %v8836 = vmul.f32 %v8709, 1.442695
        %v8837 = vpow.pop %v8836
        %v8838 = vadd.f32 %v8711, 1.0
        %v8839 = vadd.f32 %v8713, 1.0
        %v8840 = vadd.f32 %v8715, 1.0
        %v8841 = vadd.f32 %v8717, 1.0
        %v8842 = vadd.f32 %v8719, 1.0
        %v8843 = vadd.f32 %v8721, 1.0
        %v8844 = vadd.f32 %v8723, 1.0
        %v8845 = vadd.f32 %v8725, 1.0
        %v8846 = vadd.f32 %v8727, 1.0
        %v8847 = vadd.f32 %v8729, 1.0
        %v8848 = vadd.f32 %v8731, 1.0
        %v8849 = vadd.f32 %v8733, 1.0
        %v8850 = vadd.f32 %v8735, 1.0
        %v8851 = vadd.f32 %v8737, 1.0
        %v8852 = vadd.f32 %v8739, 1.0
        %v8853 = vadd.f32 %v8741, 1.0
        %v8854 = vadd.f32 %v8743, 1.0
        %v8855 = vadd.f32 %v8745, 1.0
        %v8856 = vadd.f32 %v8747, 1.0
        %v8857 = vadd.f32 %v8749, 1.0
        %v8858 = vadd.f32 %v8751, 1.0
        %v8859 = vadd.f32 %v8753, 1.0
        %v8860 = vadd.f32 %v8755, 1.0
        %v8861 = vadd.f32 %v8757, 1.0
        %v8862 = vadd.f32 %v8759, 1.0
        %v8863 = vadd.f32 %v8761, 1.0
        %v8864 = vadd.f32 %v8763, 1.0
        %v8865 = vadd.f32 %v8765, 1.0
        %v8866 = vadd.f32 %v8767, 1.0
        %v8867 = vadd.f32 %v8769, 1.0
        %v8868 = vadd.f32 %v8771, 1.0
        %v8869 = vadd.f32 %v8773, 1.0
        %v8870 = vadd.f32 %v8775, 1.0
        %v8871 = vadd.f32 %v8777, 1.0
        %v8872 = vadd.f32 %v8779, 1.0
        %v8873 = vadd.f32 %v8781, 1.0
        %v8874 = vadd.f32 %v8783, 1.0
        %v8875 = vadd.f32 %v8785, 1.0
        %v8876 = vadd.f32 %v8787, 1.0
        %v8877 = vadd.f32 %v8789, 1.0
        %v8878 = vadd.f32 %v8791, 1.0
        %v8879 = vadd.f32 %v8793, 1.0
        %v8880 = vadd.f32 %v8795, 1.0
        %v8881 = vadd.f32 %v8797, 1.0
        %v8882 = vadd.f32 %v8799, 1.0
        %v8883 = vadd.f32 %v8801, 1.0
        %v8884 = vadd.f32 %v8803, 1.0
        %v8885 = vadd.f32 %v8805, 1.0
        %v8886 = vadd.f32 %v8807, 1.0
        %v8887 = vadd.f32 %v8809, 1.0
        %v8888 = vadd.f32 %v8811, 1.0
        %v8889 = vadd.f32 %v8813, 1.0
        %v8890 = vadd.f32 %v8815, 1.0
        %v8891 = vadd.f32 %v8817, 1.0
        %v8892 = vadd.f32 %v8819, 1.0
        %v8893 = vadd.f32 %v8821, 1.0
        %v8894 = vadd.f32 %v8823, 1.0
        %v8895 = vadd.f32 %v8825, 1.0
        %v8896 = vadd.f32 %v8827, 1.0
        %v8897 = vadd.f32 %v8829, 1.0
        %v8898 = vadd.f32 %v8831, 1.0
        %v8899 = vadd.f32 %v8833, 1.0
        %v8900 = vadd.f32 %v8835, 1.0
        %v8901 = vadd.f32 %v8837, 1.0
        %v8902 = vrcp.pop %v8838
        %v8903 = vmul.f32 %v8838, %v8902
        %v8904 = vsub.f32 1.0, %v8903
        %v8905 = vmul.f32 %v8902, %v8904
        %v8906 = vadd.f32 %v8902, %v8905
        %vm8907 = vweird.f32 %v8838
        %vm8908 = vweird.f32 %v8902
        %vm8909 = vmor %vm8907, %vm8908
        %v8910 = vsel %vm8909, %v8902, %v8906
        %v8911 = vand.u32 2147483647, %v8838
        %vm8912 = vcmp.eq.f32.partialorder %v8911, 8.507059e+37
        %v8913 = vand.u32 %v8838, 2147483648
        %v8914 = vor.u32 1.1754944e-38, %v8913
        %v8915 = vsel %vm8912, %v8914, %v8910
        %v8916 = vmul.f32 1.0, %v8915
        %v8917 = vrcp.pop %v8839
        %v8918 = vmul.f32 %v8839, %v8917
        %v8919 = vsub.f32 1.0, %v8918
        %v8920 = vmul.f32 %v8917, %v8919
        %v8921 = vadd.f32 %v8917, %v8920
        %vm8922 = vweird.f32 %v8839
        %vm8923 = vweird.f32 %v8917
        %vm8924 = vmor %vm8922, %vm8923
        %v8925 = vsel %vm8924, %v8917, %v8921
        %v8926 = vand.u32 2147483647, %v8839
        %vm8927 = vcmp.eq.f32.partialorder %v8926, 8.507059e+37
        %v8928 = vand.u32 %v8839, 2147483648
        %v8929 = vor.u32 1.1754944e-38, %v8928
        %v8930 = vsel %vm8927, %v8929, %v8925
        %v8931 = vmul.f32 1.0, %v8930
        %v8932 = vrcp.pop %v8840
        %v8933 = vmul.f32 %v8840, %v8932
        %v8934 = vsub.f32 1.0, %v8933
        %v8935 = vmul.f32 %v8932, %v8934
        %v8936 = vadd.f32 %v8932, %v8935
        %vm8937 = vweird.f32 %v8840
        %vm8938 = vweird.f32 %v8932
        %vm8939 = vmor %vm8937, %vm8938
        %v8940 = vsel %vm8939, %v8932, %v8936
        %v8941 = vand.u32 2147483647, %v8840
        %vm8942 = vcmp.eq.f32.partialorder %v8941, 8.507059e+37
        %v8943 = vand.u32 %v8840, 2147483648
        %v8944 = vor.u32 1.1754944e-38, %v8943
        %v8945 = vsel %vm8942, %v8944, %v8940
        %v8946 = vmul.f32 1.0, %v8945
        %v8947 = vrcp.pop %v8841
        %v8948 = vmul.f32 %v8841, %v8947
        %v8949 = vsub.f32 1.0, %v8948
        %v8950 = vmul.f32 %v8947, %v8949
        %v8951 = vadd.f32 %v8947, %v8950
        %vm8952 = vweird.f32 %v8841
        %vm8953 = vweird.f32 %v8947
        %vm8954 = vmor %vm8952, %vm8953
        %v8955 = vsel %vm8954, %v8947, %v8951
        %v8956 = vand.u32 2147483647, %v8841
        %vm8957 = vcmp.eq.f32.partialorder %v8956, 8.507059e+37
        %v8958 = vand.u32 %v8841, 2147483648
        %v8959 = vor.u32 1.1754944e-38, %v8958
        %v8960 = vsel %vm8957, %v8959, %v8955
        %v8961 = vmul.f32 1.0, %v8960
        %v8962 = vrcp.pop %v8842
        %v8963 = vmul.f32 %v8842, %v8962
        %v8964 = vsub.f32 1.0, %v8963
        %v8965 = vmul.f32 %v8962, %v8964
        %v8966 = vadd.f32 %v8962, %v8965
        %vm8967 = vweird.f32 %v8842
        %vm8968 = vweird.f32 %v8962
        %vm8969 = vmor %vm8967, %vm8968
        %v8970 = vsel %vm8969, %v8962, %v8966
        %v8971 = vand.u32 2147483647, %v8842
        %vm8972 = vcmp.eq.f32.partialorder %v8971, 8.507059e+37
        %v8973 = vand.u32 %v8842, 2147483648
        %v8974 = vor.u32 1.1754944e-38, %v8973
        %v8975 = vsel %vm8972, %v8974, %v8970
        %v8976 = vmul.f32 1.0, %v8975
        %v8977 = vrcp.pop %v8843
        %v8978 = vmul.f32 %v8843, %v8977
        %v8979 = vsub.f32 1.0, %v8978
        %v8980 = vmul.f32 %v8977, %v8979
        %v8981 = vadd.f32 %v8977, %v8980
        %vm8982 = vweird.f32 %v8843
        %vm8983 = vweird.f32 %v8977
        %vm8984 = vmor %vm8982, %vm8983
        %v8985 = vsel %vm8984, %v8977, %v8981
        %v8986 = vand.u32 2147483647, %v8843
        %vm8987 = vcmp.eq.f32.partialorder %v8986, 8.507059e+37
        %v8988 = vand.u32 %v8843, 2147483648
        %v8989 = vor.u32 1.1754944e-38, %v8988
        %v8990 = vsel %vm8987, %v8989, %v8985
        %v8991 = vmul.f32 1.0, %v8990
        %v8992 = vrcp.pop %v8844
        %v8993 = vmul.f32 %v8844, %v8992
        %v8994 = vsub.f32 1.0, %v8993
        %v8995 = vmul.f32 %v8992, %v8994
        %v8996 = vadd.f32 %v8992, %v8995
        %vm8997 = vweird.f32 %v8844
        %vm8998 = vweird.f32 %v8992
        %vm8999 = vmor %vm8997, %vm8998
        %v9000 = vsel %vm8999, %v8992, %v8996
        %v9001 = vand.u32 2147483647, %v8844
        %vm9002 = vcmp.eq.f32.partialorder %v9001, 8.507059e+37
        %v9003 = vand.u32 %v8844, 2147483648
        %v9004 = vor.u32 1.1754944e-38, %v9003
        %v9005 = vsel %vm9002, %v9004, %v9000
        %v9006 = vmul.f32 1.0, %v9005
        %v9007 = vrcp.pop %v8845
        %v9008 = vmul.f32 %v8845, %v9007
        %v9009 = vsub.f32 1.0, %v9008
        %v9010 = vmul.f32 %v9007, %v9009
        %v9011 = vadd.f32 %v9007, %v9010
        %vm9012 = vweird.f32 %v8845
        %vm9013 = vweird.f32 %v9007
        %vm9014 = vmor %vm9012, %vm9013
        %v9015 = vsel %vm9014, %v9007, %v9011
        %v9016 = vand.u32 2147483647, %v8845
        %vm9017 = vcmp.eq.f32.partialorder %v9016, 8.507059e+37
        %v9018 = vand.u32 %v8845, 2147483648
        %v9019 = vor.u32 1.1754944e-38, %v9018
        %v9020 = vsel %vm9017, %v9019, %v9015
        %v9021 = vmul.f32 1.0, %v9020
        %v9022 = vrcp.pop %v8846
        %v9023 = vmul.f32 %v8846, %v9022
        %v9024 = vsub.f32 1.0, %v9023
        %v9025 = vmul.f32 %v9022, %v9024
        %v9026 = vadd.f32 %v9022, %v9025
        %vm9027 = vweird.f32 %v8846
        %vm9028 = vweird.f32 %v9022
        %vm9029 = vmor %vm9027, %vm9028
        %v9030 = vsel %vm9029, %v9022, %v9026
        %v9031 = vand.u32 2147483647, %v8846
        %vm9032 = vcmp.eq.f32.partialorder %v9031, 8.507059e+37
        %v9033 = vand.u32 %v8846, 2147483648
        %v9034 = vor.u32 1.1754944e-38, %v9033
        %v9035 = vsel %vm9032, %v9034, %v9030
        %v9036 = vmul.f32 1.0, %v9035
        %v9037 = vrcp.pop %v8847
        %v9038 = vmul.f32 %v8847, %v9037
        %v9039 = vsub.f32 1.0, %v9038
        %v9040 = vmul.f32 %v9037, %v9039
        %v9041 = vadd.f32 %v9037, %v9040
        %vm9042 = vweird.f32 %v8847
        %vm9043 = vweird.f32 %v9037
        %vm9044 = vmor %vm9042, %vm9043
        %v9045 = vsel %vm9044, %v9037, %v9041
        %v9046 = vand.u32 2147483647, %v8847
        %vm9047 = vcmp.eq.f32.partialorder %v9046, 8.507059e+37
        %v9048 = vand.u32 %v8847, 2147483648
        %v9049 = vor.u32 1.1754944e-38, %v9048
        %v9050 = vsel %vm9047, %v9049, %v9045
        %v9051 = vmul.f32 1.0, %v9050
        %v9052 = vrcp.pop %v8848
        %v9053 = vmul.f32 %v8848, %v9052
        %v9054 = vsub.f32 1.0, %v9053
        %v9055 = vmul.f32 %v9052, %v9054
        %v9056 = vadd.f32 %v9052, %v9055
        %vm9057 = vweird.f32 %v8848
        %vm9058 = vweird.f32 %v9052
        %vm9059 = vmor %vm9057, %vm9058
        %v9060 = vsel %vm9059, %v9052, %v9056
        %v9061 = vand.u32 2147483647, %v8848
        %vm9062 = vcmp.eq.f32.partialorder %v9061, 8.507059e+37
        %v9063 = vand.u32 %v8848, 2147483648
        %v9064 = vor.u32 1.1754944e-38, %v9063
        %v9065 = vsel %vm9062, %v9064, %v9060
        %v9066 = vmul.f32 1.0, %v9065
        %v9067 = vrcp.pop %v8849
        %v9068 = vmul.f32 %v8849, %v9067
        %v9069 = vsub.f32 1.0, %v9068
        %v9070 = vmul.f32 %v9067, %v9069
        %v9071 = vadd.f32 %v9067, %v9070
        %vm9072 = vweird.f32 %v8849
        %vm9073 = vweird.f32 %v9067
        %vm9074 = vmor %vm9072, %vm9073
        %v9075 = vsel %vm9074, %v9067, %v9071
        %v9076 = vand.u32 2147483647, %v8849
        %vm9077 = vcmp.eq.f32.partialorder %v9076, 8.507059e+37
        %v9078 = vand.u32 %v8849, 2147483648
        %v9079 = vor.u32 1.1754944e-38, %v9078
        %v9080 = vsel %vm9077, %v9079, %v9075
        %v9081 = vmul.f32 1.0, %v9080
        %v9082 = vrcp.pop %v8850
        %v9083 = vmul.f32 %v8850, %v9082
        %v9084 = vsub.f32 1.0, %v9083
        %v9085 = vmul.f32 %v9082, %v9084
        %v9086 = vadd.f32 %v9082, %v9085
        %vm9087 = vweird.f32 %v8850
        %vm9088 = vweird.f32 %v9082
        %vm9089 = vmor %vm9087, %vm9088
        %v9090 = vsel %vm9089, %v9082, %v9086
        %v9091 = vand.u32 2147483647, %v8850
        %vm9092 = vcmp.eq.f32.partialorder %v9091, 8.507059e+37
        %v9093 = vand.u32 %v8850, 2147483648
        %v9094 = vor.u32 1.1754944e-38, %v9093
        %v9095 = vsel %vm9092, %v9094, %v9090
        %v9096 = vmul.f32 1.0, %v9095
        %v9097 = vrcp.pop %v8851
        %v9098 = vmul.f32 %v8851, %v9097
        %v9099 = vsub.f32 1.0, %v9098
        %v9100 = vmul.f32 %v9097, %v9099
        %v9101 = vadd.f32 %v9097, %v9100
        %vm9102 = vweird.f32 %v8851
        %vm9103 = vweird.f32 %v9097
        %vm9104 = vmor %vm9102, %vm9103
        %v9105 = vsel %vm9104, %v9097, %v9101
        %v9106 = vand.u32 2147483647, %v8851
        %vm9107 = vcmp.eq.f32.partialorder %v9106, 8.507059e+37
        %v9108 = vand.u32 %v8851, 2147483648
        %v9109 = vor.u32 1.1754944e-38, %v9108
        %v9110 = vsel %vm9107, %v9109, %v9105
        %v9111 = vmul.f32 1.0, %v9110
        %v9112 = vrcp.pop %v8852
        %v9113 = vmul.f32 %v8852, %v9112
        %v9114 = vsub.f32 1.0, %v9113
        %v9115 = vmul.f32 %v9112, %v9114
        %v9116 = vadd.f32 %v9112, %v9115
        %vm9117 = vweird.f32 %v8852
        %vm9118 = vweird.f32 %v9112
        %vm9119 = vmor %vm9117, %vm9118
        %v9120 = vsel %vm9119, %v9112, %v9116
        %v9121 = vand.u32 2147483647, %v8852
        %vm9122 = vcmp.eq.f32.partialorder %v9121, 8.507059e+37
        %v9123 = vand.u32 %v8852, 2147483648
        %v9124 = vor.u32 1.1754944e-38, %v9123
        %v9125 = vsel %vm9122, %v9124, %v9120
        %v9126 = vmul.f32 1.0, %v9125
        %v9127 = vrcp.pop %v8853
        %v9128 = vmul.f32 %v8853, %v9127
        %v9129 = vsub.f32 1.0, %v9128
        %v9130 = vmul.f32 %v9127, %v9129
        %v9131 = vadd.f32 %v9127, %v9130
        %vm9132 = vweird.f32 %v8853
        %vm9133 = vweird.f32 %v9127
        %vm9134 = vmor %vm9132, %vm9133
        %v9135 = vsel %vm9134, %v9127, %v9131
        %v9136 = vand.u32 2147483647, %v8853
        %vm9137 = vcmp.eq.f32.partialorder %v9136, 8.507059e+37
        %v9138 = vand.u32 %v8853, 2147483648
        %v9139 = vor.u32 1.1754944e-38, %v9138
        %v9140 = vsel %vm9137, %v9139, %v9135
        %v9141 = vmul.f32 1.0, %v9140
        %v9142 = vrcp.pop %v8854
        %v9143 = vmul.f32 %v8854, %v9142
        %v9144 = vsub.f32 1.0, %v9143
        %v9145 = vmul.f32 %v9142, %v9144
        %v9146 = vadd.f32 %v9142, %v9145
        %vm9147 = vweird.f32 %v8854
        %vm9148 = vweird.f32 %v9142
        %vm9149 = vmor %vm9147, %vm9148
        %v9150 = vsel %vm9149, %v9142, %v9146
        %v9151 = vand.u32 2147483647, %v8854
        %vm9152 = vcmp.eq.f32.partialorder %v9151, 8.507059e+37
        %v9153 = vand.u32 %v8854, 2147483648
        %v9154 = vor.u32 1.1754944e-38, %v9153
        %v9155 = vsel %vm9152, %v9154, %v9150
        %v9156 = vmul.f32 1.0, %v9155
        %v9157 = vrcp.pop %v8855
        %v9158 = vmul.f32 %v8855, %v9157
        %v9159 = vsub.f32 1.0, %v9158
        %v9160 = vmul.f32 %v9157, %v9159
        %v9161 = vadd.f32 %v9157, %v9160
        %vm9162 = vweird.f32 %v8855
        %vm9163 = vweird.f32 %v9157
        %vm9164 = vmor %vm9162, %vm9163
        %v9165 = vsel %vm9164, %v9157, %v9161
        %v9166 = vand.u32 2147483647, %v8855
        %vm9167 = vcmp.eq.f32.partialorder %v9166, 8.507059e+37
        %v9168 = vand.u32 %v8855, 2147483648
        %v9169 = vor.u32 1.1754944e-38, %v9168
        %v9170 = vsel %vm9167, %v9169, %v9165
        %v9171 = vmul.f32 1.0, %v9170
        %v9172 = vrcp.pop %v8856
        %v9173 = vmul.f32 %v8856, %v9172
        %v9174 = vsub.f32 1.0, %v9173
        %v9175 = vmul.f32 %v9172, %v9174
        %v9176 = vadd.f32 %v9172, %v9175
        %vm9177 = vweird.f32 %v8856
        %vm9178 = vweird.f32 %v9172
        %vm9179 = vmor %vm9177, %vm9178
        %v9180 = vsel %vm9179, %v9172, %v9176
        %v9181 = vand.u32 2147483647, %v8856
        %vm9182 = vcmp.eq.f32.partialorder %v9181, 8.507059e+37
        %v9183 = vand.u32 %v8856, 2147483648
        %v9184 = vor.u32 1.1754944e-38, %v9183
        %v9185 = vsel %vm9182, %v9184, %v9180
        %v9186 = vmul.f32 1.0, %v9185
        %v9187 = vrcp.pop %v8857
        %v9188 = vmul.f32 %v8857, %v9187
        %v9189 = vsub.f32 1.0, %v9188
        %v9190 = vmul.f32 %v9187, %v9189
        %v9191 = vadd.f32 %v9187, %v9190
        %vm9192 = vweird.f32 %v8857
        %vm9193 = vweird.f32 %v9187
        %vm9194 = vmor %vm9192, %vm9193
        %v9195 = vsel %vm9194, %v9187, %v9191
        %v9196 = vand.u32 2147483647, %v8857
        %vm9197 = vcmp.eq.f32.partialorder %v9196, 8.507059e+37
        %v9198 = vand.u32 %v8857, 2147483648
        %v9199 = vor.u32 1.1754944e-38, %v9198
        %v9200 = vsel %vm9197, %v9199, %v9195
        %v9201 = vmul.f32 1.0, %v9200
        %v9202 = vrcp.pop %v8858
        %v9203 = vmul.f32 %v8858, %v9202
        %v9204 = vsub.f32 1.0, %v9203
        %v9205 = vmul.f32 %v9202, %v9204
        %v9206 = vadd.f32 %v9202, %v9205
        %vm9207 = vweird.f32 %v8858
        %vm9208 = vweird.f32 %v9202
        %vm9209 = vmor %vm9207, %vm9208
        %v9210 = vsel %vm9209, %v9202, %v9206
        %v9211 = vand.u32 2147483647, %v8858
        %vm9212 = vcmp.eq.f32.partialorder %v9211, 8.507059e+37
        %v9213 = vand.u32 %v8858, 2147483648
        %v9214 = vor.u32 1.1754944e-38, %v9213
        %v9215 = vsel %vm9212, %v9214, %v9210
        %v9216 = vmul.f32 1.0, %v9215
        %v9217 = vrcp.pop %v8859
        %v9218 = vmul.f32 %v8859, %v9217
        %v9219 = vsub.f32 1.0, %v9218
        %v9220 = vmul.f32 %v9217, %v9219
        %v9221 = vadd.f32 %v9217, %v9220
        %vm9222 = vweird.f32 %v8859
        %vm9223 = vweird.f32 %v9217
        %vm9224 = vmor %vm9222, %vm9223
        %v9225 = vsel %vm9224, %v9217, %v9221
        %v9226 = vand.u32 2147483647, %v8859
        %vm9227 = vcmp.eq.f32.partialorder %v9226, 8.507059e+37
        %v9228 = vand.u32 %v8859, 2147483648
        %v9229 = vor.u32 1.1754944e-38, %v9228
        %v9230 = vsel %vm9227, %v9229, %v9225
        %v9231 = vmul.f32 1.0, %v9230
        %v9232 = vrcp.pop %v8860
        %v9233 = vmul.f32 %v8860, %v9232
        %v9234 = vsub.f32 1.0, %v9233
        %v9235 = vmul.f32 %v9232, %v9234
        %v9236 = vadd.f32 %v9232, %v9235
        %vm9237 = vweird.f32 %v8860
        %vm9238 = vweird.f32 %v9232
        %vm9239 = vmor %vm9237, %vm9238
        %v9240 = vsel %vm9239, %v9232, %v9236
        %v9241 = vand.u32 2147483647, %v8860
        %vm9242 = vcmp.eq.f32.partialorder %v9241, 8.507059e+37
        %v9243 = vand.u32 %v8860, 2147483648
        %v9244 = vor.u32 1.1754944e-38, %v9243
        %v9245 = vsel %vm9242, %v9244, %v9240
        %v9246 = vmul.f32 1.0, %v9245
        %v9247 = vrcp.pop %v8861
        %v9248 = vmul.f32 %v8861, %v9247
        %v9249 = vsub.f32 1.0, %v9248
        %v9250 = vmul.f32 %v9247, %v9249
        %v9251 = vadd.f32 %v9247, %v9250
        %vm9252 = vweird.f32 %v8861
        %vm9253 = vweird.f32 %v9247
        %vm9254 = vmor %vm9252, %vm9253
        %v9255 = vsel %vm9254, %v9247, %v9251
        %v9256 = vand.u32 2147483647, %v8861
        %vm9257 = vcmp.eq.f32.partialorder %v9256, 8.507059e+37
        %v9258 = vand.u32 %v8861, 2147483648
        %v9259 = vor.u32 1.1754944e-38, %v9258
        %v9260 = vsel %vm9257, %v9259, %v9255
        %v9261 = vmul.f32 1.0, %v9260
        %v9262 = vrcp.pop %v8862
        %v9263 = vmul.f32 %v8862, %v9262
        %v9264 = vsub.f32 1.0, %v9263
        %v9265 = vmul.f32 %v9262, %v9264
        %v9266 = vadd.f32 %v9262, %v9265
        %vm9267 = vweird.f32 %v8862
        %vm9268 = vweird.f32 %v9262
        %vm9269 = vmor %vm9267, %vm9268
        %v9270 = vsel %vm9269, %v9262, %v9266
        %v9271 = vand.u32 2147483647, %v8862
        %vm9272 = vcmp.eq.f32.partialorder %v9271, 8.507059e+37
        %v9273 = vand.u32 %v8862, 2147483648
        %v9274 = vor.u32 1.1754944e-38, %v9273
        %v9275 = vsel %vm9272, %v9274, %v9270
        %v9276 = vmul.f32 1.0, %v9275
        %v9277 = vrcp.pop %v8863
        %v9278 = vmul.f32 %v8863, %v9277
        %v9279 = vsub.f32 1.0, %v9278
        %v9280 = vmul.f32 %v9277, %v9279
        %v9281 = vadd.f32 %v9277, %v9280
        %vm9282 = vweird.f32 %v8863
        %vm9283 = vweird.f32 %v9277
        %vm9284 = vmor %vm9282, %vm9283
        %v9285 = vsel %vm9284, %v9277, %v9281
        %v9286 = vand.u32 2147483647, %v8863
        %vm9287 = vcmp.eq.f32.partialorder %v9286, 8.507059e+37
        %v9288 = vand.u32 %v8863, 2147483648
        %v9289 = vor.u32 1.1754944e-38, %v9288
        %v9290 = vsel %vm9287, %v9289, %v9285
        %v9291 = vmul.f32 1.0, %v9290
        %v9292 = vrcp.pop %v8864
        %v9293 = vmul.f32 %v8864, %v9292
        %v9294 = vsub.f32 1.0, %v9293
        %v9295 = vmul.f32 %v9292, %v9294
        %v9296 = vadd.f32 %v9292, %v9295
        %vm9297 = vweird.f32 %v8864
        %vm9298 = vweird.f32 %v9292
        %vm9299 = vmor %vm9297, %vm9298
        %v9300 = vsel %vm9299, %v9292, %v9296
        %v9301 = vand.u32 2147483647, %v8864
        %vm9302 = vcmp.eq.f32.partialorder %v9301, 8.507059e+37
        %v9303 = vand.u32 %v8864, 2147483648
        %v9304 = vor.u32 1.1754944e-38, %v9303
        %v9305 = vsel %vm9302, %v9304, %v9300
        %v9306 = vmul.f32 1.0, %v9305
        %v9307 = vrcp.pop %v8865
        %v9308 = vmul.f32 %v8865, %v9307
        %v9309 = vsub.f32 1.0, %v9308
        %v9310 = vmul.f32 %v9307, %v9309
        %v9311 = vadd.f32 %v9307, %v9310
        %vm9312 = vweird.f32 %v8865
        %vm9313 = vweird.f32 %v9307
        %vm9314 = vmor %vm9312, %vm9313
        %v9315 = vsel %vm9314, %v9307, %v9311
        %v9316 = vand.u32 2147483647, %v8865
        %vm9317 = vcmp.eq.f32.partialorder %v9316, 8.507059e+37
        %v9318 = vand.u32 %v8865, 2147483648
        %v9319 = vor.u32 1.1754944e-38, %v9318
        %v9320 = vsel %vm9317, %v9319, %v9315
        %v9321 = vmul.f32 1.0, %v9320
        %v9322 = vrcp.pop %v8866
        %v9323 = vmul.f32 %v8866, %v9322
        %v9324 = vsub.f32 1.0, %v9323
        %v9325 = vmul.f32 %v9322, %v9324
        %v9326 = vadd.f32 %v9322, %v9325
        %vm9327 = vweird.f32 %v8866
        %vm9328 = vweird.f32 %v9322
        %vm9329 = vmor %vm9327, %vm9328
        %v9330 = vsel %vm9329, %v9322, %v9326
        %v9331 = vand.u32 2147483647, %v8866
        %vm9332 = vcmp.eq.f32.partialorder %v9331, 8.507059e+37
        %v9333 = vand.u32 %v8866, 2147483648
        %v9334 = vor.u32 1.1754944e-38, %v9333
        %v9335 = vsel %vm9332, %v9334, %v9330
        %v9336 = vmul.f32 1.0, %v9335
        %v9337 = vrcp.pop %v8867
        %v9338 = vmul.f32 %v8867, %v9337
        %v9339 = vsub.f32 1.0, %v9338
        %v9340 = vmul.f32 %v9337, %v9339
        %v9341 = vadd.f32 %v9337, %v9340
        %vm9342 = vweird.f32 %v8867
        %vm9343 = vweird.f32 %v9337
        %vm9344 = vmor %vm9342, %vm9343
        %v9345 = vsel %vm9344, %v9337, %v9341
        %v9346 = vand.u32 2147483647, %v8867
        %vm9347 = vcmp.eq.f32.partialorder %v9346, 8.507059e+37
        %v9348 = vand.u32 %v8867, 2147483648
        %v9349 = vor.u32 1.1754944e-38, %v9348
        %v9350 = vsel %vm9347, %v9349, %v9345
        %v9351 = vmul.f32 1.0, %v9350
        %v9352 = vrcp.pop %v8868
        %v9353 = vmul.f32 %v8868, %v9352
        %v9354 = vsub.f32 1.0, %v9353
        %v9355 = vmul.f32 %v9352, %v9354
        %v9356 = vadd.f32 %v9352, %v9355
        %vm9357 = vweird.f32 %v8868
        %vm9358 = vweird.f32 %v9352
        %vm9359 = vmor %vm9357, %vm9358
        %v9360 = vsel %vm9359, %v9352, %v9356
        %v9361 = vand.u32 2147483647, %v8868
        %vm9362 = vcmp.eq.f32.partialorder %v9361, 8.507059e+37
        %v9363 = vand.u32 %v8868, 2147483648
        %v9364 = vor.u32 1.1754944e-38, %v9363
        %v9365 = vsel %vm9362, %v9364, %v9360
        %v9366 = vmul.f32 1.0, %v9365
        %v9367 = vrcp.pop %v8869
        %v9368 = vmul.f32 %v8869, %v9367
        %v9369 = vsub.f32 1.0, %v9368
        %v9370 = vmul.f32 %v9367, %v9369
        %v9371 = vadd.f32 %v9367, %v9370
        %vm9372 = vweird.f32 %v8869
        %vm9373 = vweird.f32 %v9367
        %vm9374 = vmor %vm9372, %vm9373
        %v9375 = vsel %vm9374, %v9367, %v9371
        %v9376 = vand.u32 2147483647, %v8869
        %vm9377 = vcmp.eq.f32.partialorder %v9376, 8.507059e+37
        %v9378 = vand.u32 %v8869, 2147483648
        %v9379 = vor.u32 1.1754944e-38, %v9378
        %v9380 = vsel %vm9377, %v9379, %v9375
        %v9381 = vmul.f32 1.0, %v9380
        %v9382 = vrcp.pop %v8870
        %v9383 = vmul.f32 %v8870, %v9382
        %v9384 = vsub.f32 1.0, %v9383
        %v9385 = vmul.f32 %v9382, %v9384
        %v9386 = vadd.f32 %v9382, %v9385
        %vm9387 = vweird.f32 %v8870
        %vm9388 = vweird.f32 %v9382
        %vm9389 = vmor %vm9387, %vm9388
        %v9390 = vsel %vm9389, %v9382, %v9386
        %v9391 = vand.u32 2147483647, %v8870
        %vm9392 = vcmp.eq.f32.partialorder %v9391, 8.507059e+37
        %v9393 = vand.u32 %v8870, 2147483648
        %v9394 = vor.u32 1.1754944e-38, %v9393
        %v9395 = vsel %vm9392, %v9394, %v9390
        %v9396 = vmul.f32 1.0, %v9395
        %v9397 = vrcp.pop %v8871
        %v9398 = vmul.f32 %v8871, %v9397
        %v9399 = vsub.f32 1.0, %v9398
        %v9400 = vmul.f32 %v9397, %v9399
        %v9401 = vadd.f32 %v9397, %v9400
        %vm9402 = vweird.f32 %v8871
        %vm9403 = vweird.f32 %v9397
        %vm9404 = vmor %vm9402, %vm9403
        %v9405 = vsel %vm9404, %v9397, %v9401
        %v9406 = vand.u32 2147483647, %v8871
        %vm9407 = vcmp.eq.f32.partialorder %v9406, 8.507059e+37
        %v9408 = vand.u32 %v8871, 2147483648
        %v9409 = vor.u32 1.1754944e-38, %v9408
        %v9410 = vsel %vm9407, %v9409, %v9405
        %v9411 = vmul.f32 1.0, %v9410
        %v9412 = vrcp.pop %v8872
        %v9413 = vmul.f32 %v8872, %v9412
        %v9414 = vsub.f32 1.0, %v9413
        %v9415 = vmul.f32 %v9412, %v9414
        %v9416 = vadd.f32 %v9412, %v9415
        %vm9417 = vweird.f32 %v8872
        %vm9418 = vweird.f32 %v9412
        %vm9419 = vmor %vm9417, %vm9418
        %v9420 = vsel %vm9419, %v9412, %v9416
        %v9421 = vand.u32 2147483647, %v8872
        %vm9422 = vcmp.eq.f32.partialorder %v9421, 8.507059e+37
        %v9423 = vand.u32 %v8872, 2147483648
        %v9424 = vor.u32 1.1754944e-38, %v9423
        %v9425 = vsel %vm9422, %v9424, %v9420
        %v9426 = vmul.f32 1.0, %v9425
        %v9427 = vrcp.pop %v8873
        %v9428 = vmul.f32 %v8873, %v9427
        %v9429 = vsub.f32 1.0, %v9428
        %v9430 = vmul.f32 %v9427, %v9429
        %v9431 = vadd.f32 %v9427, %v9430
        %vm9432 = vweird.f32 %v8873
        %vm9433 = vweird.f32 %v9427
        %vm9434 = vmor %vm9432, %vm9433
        %v9435 = vsel %vm9434, %v9427, %v9431
        %v9436 = vand.u32 2147483647, %v8873
        %vm9437 = vcmp.eq.f32.partialorder %v9436, 8.507059e+37
        %v9438 = vand.u32 %v8873, 2147483648
        %v9439 = vor.u32 1.1754944e-38, %v9438
        %v9440 = vsel %vm9437, %v9439, %v9435
        %v9441 = vmul.f32 1.0, %v9440
        %v9442 = vrcp.pop %v8874
        %v9443 = vmul.f32 %v8874, %v9442
        %v9444 = vsub.f32 1.0, %v9443
        %v9445 = vmul.f32 %v9442, %v9444
        %v9446 = vadd.f32 %v9442, %v9445
        %vm9447 = vweird.f32 %v8874
        %vm9448 = vweird.f32 %v9442
        %vm9449 = vmor %vm9447, %vm9448
        %v9450 = vsel %vm9449, %v9442, %v9446
        %v9451 = vand.u32 2147483647, %v8874
        %vm9452 = vcmp.eq.f32.partialorder %v9451, 8.507059e+37
        %v9453 = vand.u32 %v8874, 2147483648
        %v9454 = vor.u32 1.1754944e-38, %v9453
        %v9455 = vsel %vm9452, %v9454, %v9450
        %v9456 = vmul.f32 1.0, %v9455
        %v9457 = vrcp.pop %v8875
        %v9458 = vmul.f32 %v8875, %v9457
        %v9459 = vsub.f32 1.0, %v9458
        %v9460 = vmul.f32 %v9457, %v9459
        %v9461 = vadd.f32 %v9457, %v9460
        %vm9462 = vweird.f32 %v8875
        %vm9463 = vweird.f32 %v9457
        %vm9464 = vmor %vm9462, %vm9463
        %v9465 = vsel %vm9464, %v9457, %v9461
        %v9466 = vand.u32 2147483647, %v8875
        %vm9467 = vcmp.eq.f32.partialorder %v9466, 8.507059e+37
        %v9468 = vand.u32 %v8875, 2147483648
        %v9469 = vor.u32 1.1754944e-38, %v9468
        %v9470 = vsel %vm9467, %v9469, %v9465
        %v9471 = vmul.f32 1.0, %v9470
        %v9472 = vrcp.pop %v8876
        %v9473 = vmul.f32 %v8876, %v9472
        %v9474 = vsub.f32 1.0, %v9473
        %v9475 = vmul.f32 %v9472, %v9474
        %v9476 = vadd.f32 %v9472, %v9475
        %vm9477 = vweird.f32 %v8876
        %vm9478 = vweird.f32 %v9472
        %vm9479 = vmor %vm9477, %vm9478
        %v9480 = vsel %vm9479, %v9472, %v9476
        %v9481 = vand.u32 2147483647, %v8876
        %vm9482 = vcmp.eq.f32.partialorder %v9481, 8.507059e+37
        %v9483 = vand.u32 %v8876, 2147483648
        %v9484 = vor.u32 1.1754944e-38, %v9483
        %v9485 = vsel %vm9482, %v9484, %v9480
        %v9486 = vmul.f32 1.0, %v9485
        %v9487 = vrcp.pop %v8877
        %v9488 = vmul.f32 %v8877, %v9487
        %v9489 = vsub.f32 1.0, %v9488
        %v9490 = vmul.f32 %v9487, %v9489
        %v9491 = vadd.f32 %v9487, %v9490
        %vm9492 = vweird.f32 %v8877
        %vm9493 = vweird.f32 %v9487
        %vm9494 = vmor %vm9492, %vm9493
        %v9495 = vsel %vm9494, %v9487, %v9491
        %v9496 = vand.u32 2147483647, %v8877
        %vm9497 = vcmp.eq.f32.partialorder %v9496, 8.507059e+37
        %v9498 = vand.u32 %v8877, 2147483648
        %v9499 = vor.u32 1.1754944e-38, %v9498
        %v9500 = vsel %vm9497, %v9499, %v9495
        %v9501 = vmul.f32 1.0, %v9500
        %v9502 = vrcp.pop %v8878
        %v9503 = vmul.f32 %v8878, %v9502
        %v9504 = vsub.f32 1.0, %v9503
        %v9505 = vmul.f32 %v9502, %v9504
        %v9506 = vadd.f32 %v9502, %v9505
        %vm9507 = vweird.f32 %v8878
        %vm9508 = vweird.f32 %v9502
        %vm9509 = vmor %vm9507, %vm9508
        %v9510 = vsel %vm9509, %v9502, %v9506
        %v9511 = vand.u32 2147483647, %v8878
        %vm9512 = vcmp.eq.f32.partialorder %v9511, 8.507059e+37
        %v9513 = vand.u32 %v8878, 2147483648
        %v9514 = vor.u32 1.1754944e-38, %v9513
        %v9515 = vsel %vm9512, %v9514, %v9510
        %v9516 = vmul.f32 1.0, %v9515
        %v9517 = vrcp.pop %v8879
        %v9518 = vmul.f32 %v8879, %v9517
        %v9519 = vsub.f32 1.0, %v9518
        %v9520 = vmul.f32 %v9517, %v9519
        %v9521 = vadd.f32 %v9517, %v9520
        %vm9522 = vweird.f32 %v8879
        %vm9523 = vweird.f32 %v9517
        %vm9524 = vmor %vm9522, %vm9523
        %v9525 = vsel %vm9524, %v9517, %v9521
        %v9526 = vand.u32 2147483647, %v8879
        %vm9527 = vcmp.eq.f32.partialorder %v9526, 8.507059e+37
        %v9528 = vand.u32 %v8879, 2147483648
        %v9529 = vor.u32 1.1754944e-38, %v9528
        %v9530 = vsel %vm9527, %v9529, %v9525
        %v9531 = vmul.f32 1.0, %v9530
        %v9532 = vrcp.pop %v8880
        %v9533 = vmul.f32 %v8880, %v9532
        %v9534 = vsub.f32 1.0, %v9533
        %v9535 = vmul.f32 %v9532, %v9534
        %v9536 = vadd.f32 %v9532, %v9535
        %vm9537 = vweird.f32 %v8880
        %vm9538 = vweird.f32 %v9532
        %vm9539 = vmor %vm9537, %vm9538
        %v9540 = vsel %vm9539, %v9532, %v9536
        %v9541 = vand.u32 2147483647, %v8880
        %vm9542 = vcmp.eq.f32.partialorder %v9541, 8.507059e+37
        %v9543 = vand.u32 %v8880, 2147483648
        %v9544 = vor.u32 1.1754944e-38, %v9543
        %v9545 = vsel %vm9542, %v9544, %v9540
        %v9546 = vmul.f32 1.0, %v9545
        %v9547 = vrcp.pop %v8881
        %v9548 = vmul.f32 %v8881, %v9547
        %v9549 = vsub.f32 1.0, %v9548
        %v9550 = vmul.f32 %v9547, %v9549
        %v9551 = vadd.f32 %v9547, %v9550
        %vm9552 = vweird.f32 %v8881
        %vm9553 = vweird.f32 %v9547
        %vm9554 = vmor %vm9552, %vm9553
        %v9555 = vsel %vm9554, %v9547, %v9551
        %v9556 = vand.u32 2147483647, %v8881
        %vm9557 = vcmp.eq.f32.partialorder %v9556, 8.507059e+37
        %v9558 = vand.u32 %v8881, 2147483648
        %v9559 = vor.u32 1.1754944e-38, %v9558
        %v9560 = vsel %vm9557, %v9559, %v9555
        %v9561 = vmul.f32 1.0, %v9560
        %v9562 = vrcp.pop %v8882
        %v9563 = vmul.f32 %v8882, %v9562
        %v9564 = vsub.f32 1.0, %v9563
        %v9565 = vmul.f32 %v9562, %v9564
        %v9566 = vadd.f32 %v9562, %v9565
        %vm9567 = vweird.f32 %v8882
        %vm9568 = vweird.f32 %v9562
        %vm9569 = vmor %vm9567, %vm9568
        %v9570 = vsel %vm9569, %v9562, %v9566
        %v9571 = vand.u32 2147483647, %v8882
        %vm9572 = vcmp.eq.f32.partialorder %v9571, 8.507059e+37
        %v9573 = vand.u32 %v8882, 2147483648
        %v9574 = vor.u32 1.1754944e-38, %v9573
        %v9575 = vsel %vm9572, %v9574, %v9570
        %v9576 = vmul.f32 1.0, %v9575
        %v9577 = vrcp.pop %v8883
        %v9578 = vmul.f32 %v8883, %v9577
        %v9579 = vsub.f32 1.0, %v9578
        %v9580 = vmul.f32 %v9577, %v9579
        %v9581 = vadd.f32 %v9577, %v9580
        %vm9582 = vweird.f32 %v8883
        %vm9583 = vweird.f32 %v9577
        %vm9584 = vmor %vm9582, %vm9583
        %v9585 = vsel %vm9584, %v9577, %v9581
        %v9586 = vand.u32 2147483647, %v8883
        %vm9587 = vcmp.eq.f32.partialorder %v9586, 8.507059e+37
        %v9588 = vand.u32 %v8883, 2147483648
        %v9589 = vor.u32 1.1754944e-38, %v9588
        %v9590 = vsel %vm9587, %v9589, %v9585
        %v9591 = vmul.f32 1.0, %v9590
        %v9592 = vrcp.pop %v8884
        %v9593 = vmul.f32 %v8884, %v9592
        %v9594 = vsub.f32 1.0, %v9593
        %v9595 = vmul.f32 %v9592, %v9594
        %v9596 = vadd.f32 %v9592, %v9595
        %vm9597 = vweird.f32 %v8884
        %vm9598 = vweird.f32 %v9592
        %vm9599 = vmor %vm9597, %vm9598
        %v9600 = vsel %vm9599, %v9592, %v9596
        %v9601 = vand.u32 2147483647, %v8884
        %vm9602 = vcmp.eq.f32.partialorder %v9601, 8.507059e+37
        %v9603 = vand.u32 %v8884, 2147483648
        %v9604 = vor.u32 1.1754944e-38, %v9603
        %v9605 = vsel %vm9602, %v9604, %v9600
        %v9606 = vmul.f32 1.0, %v9605
        %v9607 = vrcp.pop %v8885
        %v9608 = vmul.f32 %v8885, %v9607
        %v9609 = vsub.f32 1.0, %v9608
        %v9610 = vmul.f32 %v9607, %v9609
        %v9611 = vadd.f32 %v9607, %v9610
        %vm9612 = vweird.f32 %v8885
        %vm9613 = vweird.f32 %v9607
        %vm9614 = vmor %vm9612, %vm9613
        %v9615 = vsel %vm9614, %v9607, %v9611
        %v9616 = vand.u32 2147483647, %v8885
        %vm9617 = vcmp.eq.f32.partialorder %v9616, 8.507059e+37
        %v9618 = vand.u32 %v8885, 2147483648
        %v9619 = vor.u32 1.1754944e-38, %v9618
        %v9620 = vsel %vm9617, %v9619, %v9615
        %v9621 = vmul.f32 1.0, %v9620
        %v9622 = vrcp.pop %v8886
        %v9623 = vmul.f32 %v8886, %v9622
        %v9624 = vsub.f32 1.0, %v9623
        %v9625 = vmul.f32 %v9622, %v9624
        %v9626 = vadd.f32 %v9622, %v9625
        %vm9627 = vweird.f32 %v8886
        %vm9628 = vweird.f32 %v9622
        %vm9629 = vmor %vm9627, %vm9628
        %v9630 = vsel %vm9629, %v9622, %v9626
        %v9631 = vand.u32 2147483647, %v8886
        %vm9632 = vcmp.eq.f32.partialorder %v9631, 8.507059e+37
        %v9633 = vand.u32 %v8886, 2147483648
        %v9634 = vor.u32 1.1754944e-38, %v9633
        %v9635 = vsel %vm9632, %v9634, %v9630
        %v9636 = vmul.f32 1.0, %v9635
        %v9637 = vrcp.pop %v8887
        %v9638 = vmul.f32 %v8887, %v9637
        %v9639 = vsub.f32 1.0, %v9638
        %v9640 = vmul.f32 %v9637, %v9639
        %v9641 = vadd.f32 %v9637, %v9640
        %vm9642 = vweird.f32 %v8887
        %vm9643 = vweird.f32 %v9637
        %vm9644 = vmor %vm9642, %vm9643
        %v9645 = vsel %vm9644, %v9637, %v9641
        %v9646 = vand.u32 2147483647, %v8887
        %vm9647 = vcmp.eq.f32.partialorder %v9646, 8.507059e+37
        %v9648 = vand.u32 %v8887, 2147483648
        %v9649 = vor.u32 1.1754944e-38, %v9648
        %v9650 = vsel %vm9647, %v9649, %v9645
        %v9651 = vmul.f32 1.0, %v9650
        %v9652 = vrcp.pop %v8888
        %v9653 = vmul.f32 %v8888, %v9652
        %v9654 = vsub.f32 1.0, %v9653
        %v9655 = vmul.f32 %v9652, %v9654
        %v9656 = vadd.f32 %v9652, %v9655
        %vm9657 = vweird.f32 %v8888
        %vm9658 = vweird.f32 %v9652
        %vm9659 = vmor %vm9657, %vm9658
        %v9660 = vsel %vm9659, %v9652, %v9656
        %v9661 = vand.u32 2147483647, %v8888
        %vm9662 = vcmp.eq.f32.partialorder %v9661, 8.507059e+37
        %v9663 = vand.u32 %v8888, 2147483648
        %v9664 = vor.u32 1.1754944e-38, %v9663
        %v9665 = vsel %vm9662, %v9664, %v9660
        %v9666 = vmul.f32 1.0, %v9665
        %v9667 = vrcp.pop %v8889
        %v9668 = vmul.f32 %v8889, %v9667
        %v9669 = vsub.f32 1.0, %v9668
        %v9670 = vmul.f32 %v9667, %v9669
        %v9671 = vadd.f32 %v9667, %v9670
        %vm9672 = vweird.f32 %v8889
        %vm9673 = vweird.f32 %v9667
        %vm9674 = vmor %vm9672, %vm9673
        %v9675 = vsel %vm9674, %v9667, %v9671
        %v9676 = vand.u32 2147483647, %v8889
        %vm9677 = vcmp.eq.f32.partialorder %v9676, 8.507059e+37
        %v9678 = vand.u32 %v8889, 2147483648
        %v9679 = vor.u32 1.1754944e-38, %v9678
        %v9680 = vsel %vm9677, %v9679, %v9675
        %v9681 = vmul.f32 1.0, %v9680
        %v9682 = vrcp.pop %v8890
        %v9683 = vmul.f32 %v8890, %v9682
        %v9684 = vsub.f32 1.0, %v9683
        %v9685 = vmul.f32 %v9682, %v9684
        %v9686 = vadd.f32 %v9682, %v9685
        %vm9687 = vweird.f32 %v8890
        %vm9688 = vweird.f32 %v9682
        %vm9689 = vmor %vm9687, %vm9688
        %v9690 = vsel %vm9689, %v9682, %v9686
        %v9691 = vand.u32 2147483647, %v8890
        %vm9692 = vcmp.eq.f32.partialorder %v9691, 8.507059e+37
        %v9693 = vand.u32 %v8890, 2147483648
        %v9694 = vor.u32 1.1754944e-38, %v9693
        %v9695 = vsel %vm9692, %v9694, %v9690
        %v9696 = vmul.f32 1.0, %v9695
        %v9697 = vrcp.pop %v8891
        %v9698 = vmul.f32 %v8891, %v9697
        %v9699 = vsub.f32 1.0, %v9698
        %v9700 = vmul.f32 %v9697, %v9699
        %v9701 = vadd.f32 %v9697, %v9700
        %vm9702 = vweird.f32 %v8891
        %vm9703 = vweird.f32 %v9697
        %vm9704 = vmor %vm9702, %vm9703
        %v9705 = vsel %vm9704, %v9697, %v9701
        %v9706 = vand.u32 2147483647, %v8891
        %vm9707 = vcmp.eq.f32.partialorder %v9706, 8.507059e+37
        %v9708 = vand.u32 %v8891, 2147483648
        %v9709 = vor.u32 1.1754944e-38, %v9708
        %v9710 = vsel %vm9707, %v9709, %v9705
        %v9711 = vmul.f32 1.0, %v9710
        %v9712 = vrcp.pop %v8892
        %v9713 = vmul.f32 %v8892, %v9712
        %v9714 = vsub.f32 1.0, %v9713
        %v9715 = vmul.f32 %v9712, %v9714
        %v9716 = vadd.f32 %v9712, %v9715
        %vm9717 = vweird.f32 %v8892
        %vm9718 = vweird.f32 %v9712
        %vm9719 = vmor %vm9717, %vm9718
        %v9720 = vsel %vm9719, %v9712, %v9716
        %v9721 = vand.u32 2147483647, %v8892
        %vm9722 = vcmp.eq.f32.partialorder %v9721, 8.507059e+37
        %v9723 = vand.u32 %v8892, 2147483648
        %v9724 = vor.u32 1.1754944e-38, %v9723
        %v9725 = vsel %vm9722, %v9724, %v9720
        %v9726 = vmul.f32 1.0, %v9725
        %v9727 = vrcp.pop %v8893
        %v9728 = vmul.f32 %v8893, %v9727
        %v9729 = vsub.f32 1.0, %v9728
        %v9730 = vmul.f32 %v9727, %v9729
        %v9731 = vadd.f32 %v9727, %v9730
        %vm9732 = vweird.f32 %v8893
        %vm9733 = vweird.f32 %v9727
        %vm9734 = vmor %vm9732, %vm9733
        %v9735 = vsel %vm9734, %v9727, %v9731
        %v9736 = vand.u32 2147483647, %v8893
        %vm9737 = vcmp.eq.f32.partialorder %v9736, 8.507059e+37
        %v9738 = vand.u32 %v8893, 2147483648
        %v9739 = vor.u32 1.1754944e-38, %v9738
        %v9740 = vsel %vm9737, %v9739, %v9735
        %v9741 = vmul.f32 1.0, %v9740
        %v9742 = vrcp.pop %v8894
        %v9743 = vmul.f32 %v8894, %v9742
        %v9744 = vsub.f32 1.0, %v9743
        %v9745 = vmul.f32 %v9742, %v9744
        %v9746 = vadd.f32 %v9742, %v9745
        %vm9747 = vweird.f32 %v8894
        %vm9748 = vweird.f32 %v9742
        %vm9749 = vmor %vm9747, %vm9748
        %v9750 = vsel %vm9749, %v9742, %v9746
        %v9751 = vand.u32 2147483647, %v8894
        %vm9752 = vcmp.eq.f32.partialorder %v9751, 8.507059e+37
        %v9753 = vand.u32 %v8894, 2147483648
        %v9754 = vor.u32 1.1754944e-38, %v9753
        %v9755 = vsel %vm9752, %v9754, %v9750
        %v9756 = vmul.f32 1.0, %v9755
        %v9757 = vrcp.pop %v8895
        %v9758 = vmul.f32 %v8895, %v9757
        %v9759 = vsub.f32 1.0, %v9758
        %v9760 = vmul.f32 %v9757, %v9759
        %v9761 = vadd.f32 %v9757, %v9760
        %vm9762 = vweird.f32 %v8895
        %vm9763 = vweird.f32 %v9757
        %vm9764 = vmor %vm9762, %vm9763
        %v9765 = vsel %vm9764, %v9757, %v9761
        %v9766 = vand.u32 2147483647, %v8895
        %vm9767 = vcmp.eq.f32.partialorder %v9766, 8.507059e+37
        %v9768 = vand.u32 %v8895, 2147483648
        %v9769 = vor.u32 1.1754944e-38, %v9768
        %v9770 = vsel %vm9767, %v9769, %v9765
        %v9771 = vmul.f32 1.0, %v9770
        %v9772 = vrcp.pop %v8896
        %v9773 = vmul.f32 %v8896, %v9772
        %v9774 = vsub.f32 1.0, %v9773
        %v9775 = vmul.f32 %v9772, %v9774
        %v9776 = vadd.f32 %v9772, %v9775
        %vm9777 = vweird.f32 %v8896
        %vm9778 = vweird.f32 %v9772
        %vm9779 = vmor %vm9777, %vm9778
        %v9780 = vsel %vm9779, %v9772, %v9776
        %v9781 = vand.u32 2147483647, %v8896
        %vm9782 = vcmp.eq.f32.partialorder %v9781, 8.507059e+37
        %v9783 = vand.u32 %v8896, 2147483648
        %v9784 = vor.u32 1.1754944e-38, %v9783
        %v9785 = vsel %vm9782, %v9784, %v9780
        %v9786 = vmul.f32 1.0, %v9785
        %v9787 = vrcp.pop %v8897
        %v9788 = vmul.f32 %v8897, %v9787
        %v9789 = vsub.f32 1.0, %v9788
        %v9790 = vmul.f32 %v9787, %v9789
        %v9791 = vadd.f32 %v9787, %v9790
        %vm9792 = vweird.f32 %v8897
        %vm9793 = vweird.f32 %v9787
        %vm9794 = vmor %vm9792, %vm9793
        %v9795 = vsel %vm9794, %v9787, %v9791
        %v9796 = vand.u32 2147483647, %v8897
        %vm9797 = vcmp.eq.f32.partialorder %v9796, 8.507059e+37
        %v9798 = vand.u32 %v8897, 2147483648
        %v9799 = vor.u32 1.1754944e-38, %v9798
        %v9800 = vsel %vm9797, %v9799, %v9795
        %v9801 = vmul.f32 1.0, %v9800
        %v9802 = vrcp.pop %v8898
        %v9803 = vmul.f32 %v8898, %v9802
        %v9804 = vsub.f32 1.0, %v9803
        %v9805 = vmul.f32 %v9802, %v9804
        %v9806 = vadd.f32 %v9802, %v9805
        %vm9807 = vweird.f32 %v8898
        %vm9808 = vweird.f32 %v9802
        %vm9809 = vmor %vm9807, %vm9808
        %v9810 = vsel %vm9809, %v9802, %v9806
        %v9811 = vand.u32 2147483647, %v8898
        %vm9812 = vcmp.eq.f32.partialorder %v9811, 8.507059e+37
        %v9813 = vand.u32 %v8898, 2147483648
        %v9814 = vor.u32 1.1754944e-38, %v9813
        %v9815 = vsel %vm9812, %v9814, %v9810
        %v9816 = vmul.f32 1.0, %v9815
        %v9817 = vrcp.pop %v8899
        %v9818 = vmul.f32 %v8899, %v9817
        %v9819 = vsub.f32 1.0, %v9818
        %v9820 = vmul.f32 %v9817, %v9819
        %v9821 = vadd.f32 %v9817, %v9820
        %vm9822 = vweird.f32 %v8899
        %vm9823 = vweird.f32 %v9817
        %vm9824 = vmor %vm9822, %vm9823
        %v9825 = vsel %vm9824, %v9817, %v9821
        %v9826 = vand.u32 2147483647, %v8899
        %vm9827 = vcmp.eq.f32.partialorder %v9826, 8.507059e+37
        %v9828 = vand.u32 %v8899, 2147483648
        %v9829 = vor.u32 1.1754944e-38, %v9828
        %v9830 = vsel %vm9827, %v9829, %v9825
        %v9831 = vmul.f32 1.0, %v9830
        %v9832 = vrcp.pop %v8900
        %v9833 = vmul.f32 %v8900, %v9832
        %v9834 = vsub.f32 1.0, %v9833
        %v9835 = vmul.f32 %v9832, %v9834
        %v9836 = vadd.f32 %v9832, %v9835
        %vm9837 = vweird.f32 %v8900
        %vm9838 = vweird.f32 %v9832
        %vm9839 = vmor %vm9837, %vm9838
        %v9840 = vsel %vm9839, %v9832, %v9836
        %v9841 = vand.u32 2147483647, %v8900
        %vm9842 = vcmp.eq.f32.partialorder %v9841, 8.507059e+37
        %v9843 = vand.u32 %v8900, 2147483648
        %v9844 = vor.u32 1.1754944e-38, %v9843
        %v9845 = vsel %vm9842, %v9844, %v9840
        %v9846 = vmul.f32 1.0, %v9845
        %v9847 = vrcp.pop %v8901
        %v9848 = vmul.f32 %v8901, %v9847
        %v9849 = vsub.f32 1.0, %v9848
        %v9850 = vmul.f32 %v9847, %v9849
        %v9851 = vadd.f32 %v9847, %v9850
        %vm9852 = vweird.f32 %v8901
        %vm9853 = vweird.f32 %v9847
        %vm9854 = vmor %vm9852, %vm9853
        %v9855 = vsel %vm9854, %v9847, %v9851
        %v9856 = vand.u32 2147483647, %v8901
        %vm9857 = vcmp.eq.f32.partialorder %v9856, 8.507059e+37
        %v9858 = vand.u32 %v8901, 2147483648
        %v9859 = vor.u32 1.1754944e-38, %v9858
        %v9860 = vsel %vm9857, %v9859, %v9855
        %v9861 = vmul.f32 1.0, %v9860
        %v9926 = vrot.slane %v8931, 7
        %v9927 = vrot.slane %v8946, 6
        %v9928 = vrot.slane %v8961, 5
        %v9929 = vrot.slane %v8976, 4
        %v9930 = vrot.slane %v8991, 3
        %v9931 = vrot.slane %v9006, 2
        %v9932 = vrot.slane %v9021, 1
        %v9933 = vrot.slane %v9051, 7
        %v9934 = vrot.slane %v9066, 6
        %v9935 = vrot.slane %v9081, 5
        %v9936 = vrot.slane %v9096, 4
        %v9937 = vrot.slane %v9111, 3
        %v9938 = vrot.slane %v9126, 2
        %v9939 = vrot.slane %v9141, 1
        %v9940 = vrot.slane %v9171, 7
        %v9941 = vrot.slane %v9186, 6
        %v9942 = vrot.slane %v9201, 5
        %v9943 = vrot.slane %v9216, 4
        %v9944 = vrot.slane %v9231, 3
        %v9945 = vrot.slane %v9246, 2
        %v9946 = vrot.slane %v9261, 1
        %v9947 = vrot.slane %v9291, 7
        %v9948 = vrot.slane %v9306, 6
        %v9949 = vrot.slane %v9321, 5
        %v9950 = vrot.slane %v9336, 4
        %v9951 = vrot.slane %v9351, 3
        %v9952 = vrot.slane %v9366, 2
        %v9953 = vrot.slane %v9381, 1
        %v9954 = vrot.slane %v9411, 7
        %v9955 = vrot.slane %v9426, 6
        %v9956 = vrot.slane %v9441, 5
        %v9957 = vrot.slane %v9456, 4
        %v9958 = vrot.slane %v9471, 3
        %v9959 = vrot.slane %v9486, 2
        %v9960 = vrot.slane %v9501, 1
        %v9961 = vrot.slane %v9531, 7
        %v9962 = vrot.slane %v9546, 6
        %v9963 = vrot.slane %v9561, 5
        %v9964 = vrot.slane %v9576, 4
        %v9965 = vrot.slane %v9591, 3
        %v9966 = vrot.slane %v9606, 2
        %v9967 = vrot.slane %v9621, 1
        %v9968 = vrot.slane %v9651, 7
        %v9969 = vrot.slane %v9666, 6
        %v9970 = vrot.slane %v9681, 5
        %v9971 = vrot.slane %v9696, 4
        %v9972 = vrot.slane %v9711, 3
        %v9973 = vrot.slane %v9726, 2
        %v9974 = vrot.slane %v9741, 1
        %v9975 = vrot.slane %v9771, 7
        %v9976 = vrot.slane %v9786, 6
        %v9977 = vrot.slane %v9801, 5
        %v9978 = vrot.slane %v9816, 4
        %v9979 = vrot.slane %v9831, 3
        %v9980 = vrot.slane %v9846, 2
        %v9981 = vrot.slane %v9861, 1
        %vm9982 = vcmask 1040384
        %v9983 = vsel %vm9982, %v8916, %v9926
        %vm9984 = vcmask 1042434
        %v9985 = vsel %vm9984, %v9927, %v9928
        %vm9986 = vcmask 1041408
        %v9987 = vsel %vm9986, %v9983, %v9985
        %vm9988 = vcmask 1044484
        %v9989 = vsel %vm9988, %v9929, %v9930
        %vm9990 = vcmask 1046534
        %v9991 = vsel %vm9990, %v9931, %v9932
        %vm9992 = vcmask 1045508
        %v9993 = vsel %vm9992, %v9989, %v9991
        %vm9994 = vcmask 1043456
        %v9995 = vsel %vm9994, %v9987, %v9993
        %v9996 = vsel %vm9982, %v9036, %v9933
        %v9997 = vsel %vm9984, %v9934, %v9935
        %v9998 = vsel %vm9986, %v9996, %v9997
        %v9999 = vsel %vm9988, %v9936, %v9937
        %v10000 = vsel %vm9990, %v9938, %v9939
        %v10001 = vsel %vm9992, %v9999, %v10000
        %v10002 = vsel %vm9994, %v9998, %v10001
        %v10003 = vsel %vm9982, %v9156, %v9940
        %v10004 = vsel %vm9984, %v9941, %v9942
        %v10005 = vsel %vm9986, %v10003, %v10004
        %v10006 = vsel %vm9988, %v9943, %v9944
        %v10007 = vsel %vm9990, %v9945, %v9946
        %v10008 = vsel %vm9992, %v10006, %v10007
        %v10009 = vsel %vm9994, %v10005, %v10008
        %v10010 = vsel %vm9982, %v9276, %v9947
        %v10011 = vsel %vm9984, %v9948, %v9949
        %v10012 = vsel %vm9986, %v10010, %v10011
        %v10013 = vsel %vm9988, %v9950, %v9951
        %v10014 = vsel %vm9990, %v9952, %v9953
        %v10015 = vsel %vm9992, %v10013, %v10014
        %v10016 = vsel %vm9994, %v10012, %v10015
        %v10017 = vsel %vm9982, %v9396, %v9954
        %v10018 = vsel %vm9984, %v9955, %v9956
        %v10019 = vsel %vm9986, %v10017, %v10018
        %v10020 = vsel %vm9988, %v9957, %v9958
        %v10021 = vsel %vm9990, %v9959, %v9960
        %v10022 = vsel %vm9992, %v10020, %v10021
        %v10023 = vsel %vm9994, %v10019, %v10022
        %v10024 = vsel %vm9982, %v9516, %v9961
        %v10025 = vsel %vm9984, %v9962, %v9963
        %v10026 = vsel %vm9986, %v10024, %v10025
        %v10027 = vsel %vm9988, %v9964, %v9965
        %v10028 = vsel %vm9990, %v9966, %v9967
        %v10029 = vsel %vm9992, %v10027, %v10028
        %v10030 = vsel %vm9994, %v10026, %v10029
        %v10031 = vsel %vm9982, %v9636, %v9968
        %v10032 = vsel %vm9984, %v9969, %v9970
        %v10033 = vsel %vm9986, %v10031, %v10032
        %v10034 = vsel %vm9988, %v9971, %v9972
        %v10035 = vsel %vm9990, %v9973, %v9974
        %v10036 = vsel %vm9992, %v10034, %v10035
        %v10037 = vsel %vm9994, %v10033, %v10036
        %v10038 = vsel %vm9982, %v9756, %v9975
        %v10039 = vsel %vm9984, %v9976, %v9977
        %v10040 = vsel %vm9986, %v10038, %v10039
        %v10041 = vsel %vm9988, %v9978, %v9979
        %v10042 = vsel %vm9990, %v9980, %v9981
        %v10043 = vsel %vm9992, %v10041, %v10042
        %v10044 = vsel %vm9994, %v10040, %v10043
        %10053 = vst [vmem:[%s274] sm:$0xff] %v9995
        %10054 = vst [vmem:[%s274 + $0x8] sm:$0xff] %v10002
        %10055 = vst [vmem:[%s274 + $0x10] sm:$0xff] %v10009
        %10056 = vst [vmem:[%s274 + $0x18] sm:$0xff] %v10016
        %10057 = vst [vmem:[%s274 + $0x20] sm:$0xff] %v10023
        %10058 = vst [vmem:[%s274 + $0x28] sm:$0xff] %v10030
        %10059 = vst [vmem:[%s274 + $0x30] sm:$0xff] %v10037
        %10060 = vst [vmem:[%s274 + $0x38] sm:$0xff] %v10044
        %s10061 = sand.u32 %s183, 1
        %s10062 = scalar_lea.sflag [#allocation4], %s10061
        %s10063 = sand.u32 %s183, 1
        %s10064 = smul.addr %s10063, 64
        %s10065 = scalar_lea.vmem [#allocation3], %s10064
        // Predicated region
        $region49: #{tpu_custom_call.1} parent=47 // pred_check
          %p10066 = pneg %p193
        $region50: #{tpu_custom_call.1} parent=47 // pred_check_branch
          %10068 = sbr.rel (%p10066) target = $region52
        $region51: #{tpu_custom_call.1} parent=47 // pred_region
          %s10069 = smul.u32 64, %s23
          %10071 = vsyncadd %s10062, 0
          %s10072 = scalar_lea.hbm %s7, %s10069
          %s10074 = sshll.u32 %s10065, 4
          %s10075 = int_to_ptr.vmem [resolvable:$true] %s10074
          %s10076 = sshll.u32 %s10072, 4
          %s10077 = int_to_ptr.hbm [resolvable:$true] %s10076
          %10079 = dma.vmem_to_hbm [thread:$0]  %s10075, 1024, %s10077, %s10062
        $region52: #{tpu_custom_call.1} parent=47 // pred_fallthru
          _
      $region48: #{tpu_custom_call.1} parent=5 // pred_fallthru
        _
      %p10080 = scmp.le.s32.totalorder 2, %s18
      // Predicated region
      $region53: #{tpu_custom_call.1} parent=5 // pred_check
        %p10081 = pneg %p10080
      $region54: #{tpu_custom_call.1} parent=5 // pred_check_branch
        %10083 = sbr.rel (%p10081) target = $region56
      $region55: #{tpu_custom_call.1} parent=5 // pred_region
        %s10084 = ssub.s32 %s18, 2
        // Predicated region
        $region57: #{tpu_custom_call.1} parent=55 // pred_check
          %p10085 = pneg %p199
        $region58: #{tpu_custom_call.1} parent=55 // pred_check_branch
          %10087 = sbr.rel (%p10085) target = $region60
        $region59: #{tpu_custom_call.1} parent=55 // pred_region
          %s10088 = sand.u32 %s184, 1
          %s10089 = scalar_lea.sflag [#allocation4], %s10088
          %s10090 = sand.u32 %s184, 1
          %s10091 = smul.addr %s10090, 64
          %s10092 = scalar_lea.vmem [#allocation3], %s10091
          %10094 = dma.done %s10089, 1024
        $region60: #{tpu_custom_call.1} parent=55 // pred_fallthru
          _
      $region56: #{tpu_custom_call.1} parent=5 // pred_fallthru
        _
    $region6: #{tpu_custom_call.1} parent=1 // loop_footer
      %s22 = sadd.s32 1, %s18
    $region7: #{tpu_custom_call.1} parent=1 // loop_footer_branch
      %17 = sbr.rel target = $region3
    $region8: #{tpu_custom_call.1} parent=1 // loop_exit
      _
    %10095 = vsyncpa [#allocation4], 1
    %s10096 = scalar_lea.sflag [#allocation4], 1
    %10097 = vsyncpa %s10096, 1

</llo_original>
